<compile_context>
chip_gen: v7x
topology: tpu7x:2x2x1
jax: 0.10.0
libtpu: 0.0.40
codegen_flags: <defaults>
</compile_context>

<pallas_src>
import numpy as np
import jax
import jax.numpy as jnp
from jax.experimental import pallas as pl
from jax.experimental.pallas import tpu as pltpu


# ----------------------------------------------------------------------------
# Pallas kernel: the entire head for one batch element
# ----------------------------------------------------------------------------
def _mm(a, b):
    """MXU matmul: bf16 operands, f32 accumulation."""
    return jnp.dot(a.astype(jnp.bfloat16), b.astype(jnp.bfloat16),
                   preferred_element_type=jnp.float32)


def _head_kernel(x_ref,                      # (1, M1, Cin)  bf16
                 w_dsq_ref, b_dsq_ref,       # (Cin, s), (1, s)
                 w_dc_ref, b_dc_ref,         # (4, s, s) [kw,ci,co], (1, s)
                 w_de_ref, b_de_ref,         # (9, s, mid), (1, mid)
                 w_fsq_ref, b_fsq_ref,       # (mid, s), (1, s)
                 w_fe_ref, b_fe_ref,         # (9, s, 32), (1, 32)
                 w_hd_ref, b_hd_ref,         # (1, 32), (1, 1)
                 sl_ref, sr_ref,             # (M1, M1)  w-1 / w+1 shifts
                 pe_ref, po_ref,             # (M2, M1)  even/odd column scatter
                 sh_ref,                     # (9, M2, M2) 3x3 taps (zero padded)
                 rsel_ref, csel_ref,         # (H, M2) f32, (M2, Wout) f32
                 o_ref):                     # (1, H, Wout) f32
    x = x_ref[0]                                                       # (M1, Cin)

    # ---- DeFire: 1x1 squeeze + ReLU -------------------------------------
    sq = jnp.maximum(_mm(x, w_dsq_ref[...]) + b_dsq_ref[...], 0.0)     # (M1, s)

    # ---- DeFire: ConvTranspose2d (1,4) / stride (1,2) / pad (0,1) + ReLU --
    #   even output col 2m   = x[m]   @ Wt[kw=1] + x[m-1] @ Wt[kw=3]
    #   odd  output col 2m+1 = x[m+1] @ Wt[kw=0] + x[m]   @ Wt[kw=2]
    sq_prev = _mm(sl_ref[...], sq)                                     # x[m-1] (0 at m=0)
    sq_next = _mm(sr_ref[...], sq)                                     # x[m+1] (0 at m=Wf-1)
    even = jnp.maximum(_mm(sq, w_dc_ref[1]) + _mm(sq_prev, w_dc_ref[3])
                       + b_dc_ref[...], 0.0)
    odd = jnp.maximum(_mm(sq_next, w_dc_ref[0]) + _mm(sq, w_dc_ref[2])
                      + b_dc_ref[...], 0.0)
    y = _mm(pe_ref[...], even) + _mm(po_ref[...], odd)                 # (M2, s)

    # ---- DeFire: merged expand (1x1 folded into centre tap of 3x3) + ReLU -
    acc = _mm(_mm(sh_ref[0], y), w_de_ref[0])
    for k in range(1, 9):
        acc = acc + _mm(_mm(sh_ref[k], y), w_de_ref[k])
    z1 = jnp.maximum(acc + b_de_ref[...], 0.0)                         # (M2, mid) = [e1|e3]

    # ---- Fire: 1x1 squeeze + ReLU ----------------------------------------
    sq2 = jnp.maximum(_mm(z1, w_fsq_ref[...]) + b_fsq_ref[...], 0.0)   # (M2, s)

    # ---- Fire: merged expand + ReLU --------------------------------------
    acc2 = _mm(_mm(sh_ref[0], sq2), w_fe_ref[0])
    for k in range(1, 9):
        acc2 = acc2 + _mm(_mm(sh_ref[k], sq2), w_fe_ref[k])
    z2 = jnp.maximum(acc2 + b_fe_ref[...], 0.0)                        # (M2, 32) = [e1|e3]

    # ---- head 1x1 (32 -> 1): VPU multiply + lane reduce, then sigmoid -----
    logits = jnp.sum(z2 * w_hd_ref[...], axis=-1, keepdims=True) + b_hd_ref[...]  # (M2, 1)
    probs = 0.5 * (jnp.tanh(0.5 * logits) + 1.0)   # == sigmoid, stable, EUP tanh

    # ---- symmetric width crop + lane-dense (H, Wout) output ---------------
    # exact 0/1 selection matmuls in f32: out[h, w] = probs[h*W2 + lo + w]
    sel = probs * csel_ref[...]                                        # (M2, Wout)
    o_ref[0] = jnp.dot(rsel_ref[...], sel, preferred_element_type=jnp.float32)


# ----------------------------------------------------------------------------
# Parameters (deterministic synthetic init, PyTorch-native layouts)
# ----------------------------------------------------------------------------
def init_params(key, in_channels, mid_channels):
    s = mid_channels // 16        # squeeze channels
    e_de = mid_channels // 2      # DeFire expand -> 2*e_de = mid_channels
    e_fi = 16                     # Fire  expand  -> 2*16   = 32
    ks = jax.random.split(key, 16)

    def w(k, shape, fan_in):
        return jax.random.normal(k, shape, jnp.float32) / np.sqrt(fan_in)

    def b(k, n):
        return 0.1 * jax.random.normal(k, (n,), jnp.float32)

    return {
        # DeFire(in_channels, s, e_de)
        "de_sq_w": w(ks[0], (in_channels, s), in_channels), "de_sq_b": b(ks[1], s),
        "de_dc_w": w(ks[2], (s, s, 1, 4), 4 * s),           "de_dc_b": b(ks[3], s),
        "de_e1_w": w(ks[4], (s, e_de), s),                  "de_e1_b": b(ks[5], e_de),
        "de_e3_w": w(ks[6], (3, 3, s, e_de), 9 * s),        "de_e3_b": b(ks[7], e_de),
        # Fire(mid_channels, s, 16)
        "fi_sq_w": w(ks[8], (mid_channels, s), mid_channels), "fi_sq_b": b(ks[9], s),
        "fi_e1_w": w(ks[10], (s, e_fi), s),                 "fi_e1_b": b(ks[11], e_fi),
        "fi_e3_w": w(ks[12], (3, 3, s, e_fi), 9 * s),       "fi_e3_b": b(ks[13], e_fi),
        # Conv(32, 1, 1, relu=False, norm=False)
        "hd_w": w(ks[14], (32, 1), 32),                     "hd_b": b(ks[15], 1),
    }


def _pack_weights(p):
    """Fuse / re-layout module weights into the operands the kernel consumes."""
    bf, f32 = jnp.bfloat16, jnp.float32
    s = p["de_sq_w"].shape[1]
    e_de = p["de_e1_w"].shape[1]
    e_fi = p["fi_e1_w"].shape[1]

    # ConvTranspose2d taps, laid out (kw, ci, co)
    w_dc = jnp.transpose(p["de_dc_w"][:, :, 0, :], (2, 0, 1))

    # Merged expand: tap k = kh*3+kw -> (s, e1+e3).  1x1 expand occupies the first
    # e columns of the centre tap only; 3x3 expand the last e columns of every tap.
    def merge_expand(w1, w3, e):
        wm = jnp.zeros((9, s, 2 * e), f32)
        wm = wm.at[:, :, e:].set(w3.reshape(9, s, e))
        wm = wm.at[4, :, :e].set(w1)
        return wm

    w_de = merge_expand(p["de_e1_w"], p["de_e3_w"], e_de)
    w_fe = merge_expand(p["fi_e1_w"], p["fi_e3_w"], e_fi)

    row = lambda v: v.reshape(1, -1).astype(f32)
    return dict(
        w_dsq=p["de_sq_w"].astype(bf), b_dsq=row(p["de_sq_b"]),
        w_dc=w_dc.astype(bf),          b_dc=row(p["de_dc_b"]),
        w_de=w_de.astype(bf),
        b_de=row(jnp.concatenate([p["de_e1_b"], p["de_e3_b"]])),
        w_fsq=p["fi_sq_w"].astype(bf), b_fsq=row(p["fi_sq_b"]),
        w_fe=w_fe.astype(bf),
        b_fe=row(jnp.concatenate([p["fi_e1_b"], p["fi_e3_b"]])),
        w_hd=p["hd_w"].reshape(1, -1).astype(f32),
        b_hd=p["hd_b"].reshape(1, 1).astype(f32),
    )


def _spatial_constants(H, Wf, data_w):
    """Tiny 0/1 shift / interleave / crop-select matrices over the flattened grid."""
    W2 = 2 * Wf                         # deconv output width: (Wf-1)*2 - 2*1 + 4
    M1, M2 = H * Wf, H * W2

    sl = np.zeros((M1, M1), np.float32)   # row (h, m) <- (h, m-1)
    sr = np.zeros((M1, M1), np.float32)   # row (h, m) <- (h, m+1)
    pe = np.zeros((M2, M1), np.float32)   # even output column scatter
    po = np.zeros((M2, M1), np.float32)   # odd  output column scatter
    for h in range(H):
        for m in range(Wf):
            if m > 0:
                sl[h * Wf + m, h * Wf + m - 1] = 1.0
            if m + 1 < Wf:
                sr[h * Wf + m, h * Wf + m + 1] = 1.0
            pe[h * W2 + 2 * m, h * Wf + m] = 1.0
            po[h * W2 + 2 * m + 1, h * Wf + m] = 1.0

    sh = np.zeros((9, M2, M2), np.float32)   # 3x3 taps over the (H, W2) grid
    for kh in range(3):
        for kw in range(3):
            k = kh * 3 + kw
            for h in range(H):
                for w in range(W2):
                    hs, ws = h + kh - 1, w + kw - 1
                    if 0 <= hs < H and 0 <= ws < W2:
                        sh[k, h * W2 + w, hs * W2 + ws] = 1.0

    # symmetric width crop (matches PyTorch out[..., diff//2 : -(diff//2)])
    if W2 == data_w:
        lo, wout = 0, W2
    else:
        diff = W2 - data_w
        lo = diff // 2
        if lo <= 0:
            raise ValueError(f"unsupported crop: head width {W2} vs data width {data_w}")
        wout = W2 - 2 * lo

    rsel = np.zeros((H, M2), np.float32)      # output row select
    csel = np.zeros((M2, wout), np.float32)   # output lane select (+ crop)
    for h in range(H):
        for w in range(W2):
            rsel[h, h * W2 + w] = 1.0
            if lo <= w < lo + wout:
                csel[h * W2 + w, w - lo] = 1.0

    bf = jnp.bfloat16
    return dict(sl=jnp.asarray(sl, bf), sr=jnp.asarray(sr, bf),
                pe=jnp.asarray(pe, bf), po=jnp.asarray(po, bf),
                sh=jnp.asarray(sh, bf),
                rsel=jnp.asarray(rsel, jnp.float32),
                csel=jnp.asarray(csel, jnp.float32))


# ----------------------------------------------------------------------------
# Forward (single fused pallas_call)
# ----------------------------------------------------------------------------
def l2_reflect_head_forward(params, data_input_nchw, features_nchw):
    """Returns (out,) with out of shape (B, 1, H, W_cropped), matching the module."""
    B, Cin, H, Wf = features_nchw.shape
    M1 = H * Wf
    wp = _pack_weights(params)
    sc = _spatial_constants(H, Wf, data_input_nchw.shape[-1])
    wout = sc["csel"].shape[-1]

    # NCHW -> channel-last rows (B, H*Wf, Cin); bf16 feeds the MXU (f32 accumulate).
    x = jnp.transpose(features_nchw, (0, 2, 3, 1)).reshape(B, M1, Cin).astype(jnp.bfloat16)

    fixed = [wp["w_dsq"], wp["b_dsq"], wp["w_dc"], wp["b_dc"],
             wp["w_de"], wp["b_de"], wp["w_fsq"], wp["b_fsq"],
             wp["w_fe"], wp["b_fe"], wp["w_hd"], wp["b_hd"],
             sc["sl"], sc["sr"], sc["pe"], sc["po"], sc["sh"],
             sc["rsel"], sc["csel"]]

    def full_spec(a):
        nd = a.ndim
        return pl.BlockSpec(a.shape, lambda b, _nd=nd: (0,) * _nd)  # VMEM-resident, no re-DMA

    # TODO(synk): for production SqueezeSeg spatial sizes, tile H (with 1-row halos
    # for the 3x3 taps) instead of whole-image-per-batch blocks.
    out = pl.pallas_call(
        _head_kernel,
        out_shape=jax.ShapeDtypeStruct((B, H, wout), jnp.float32),
        grid=(B,),
        in_specs=[pl.BlockSpec((1, M1, Cin), lambda b: (b, 0, 0))]
                 + [full_spec(a) for a in fixed],
        out_specs=pl.BlockSpec((1, H, wout), lambda b: (b, 0, 0)),
        compiler_params=pltpu.CompilerParams(
            dimension_semantics=("parallel",),          # batch across TCs (v7x megacore)
            vmem_limit_bytes=32 * 1024 * 1024),
    )(x, *fixed)

    return (out[:, None, :, :],)                        # (B, 1, H, Wout) NCHW


# ----------------------------------------------------------------------------
# Pure-JAX f32 reference (same assumed md.* semantics) for validation
# ----------------------------------------------------------------------------
def _ref_forward(params, data_input_nchw, features_nchw):
    p = params
    x = jnp.transpose(features_nchw, (0, 2, 3, 1)).astype(jnp.float32)   # NHWC

    def conv1x1(t, w, b, relu=True):
        y = jnp.einsum("nhwc,cd->nhwd", t, w) + b
        return jnp.maximum(y, 0.0) if relu else y

    def conv3x3(t, w, b):
        N, H, W, _ = t.shape
        tp = jnp.pad(t, ((0, 0), (1, 1), (1, 1), (0, 0)))
        acc = 0.0
        for kh in range(3):
            for kw in range(3):
                acc = acc + jnp.einsum("nhwc,cd->nhwd",
                                       tp[:, kh:kh + H, kw:kw + W, :], w[kh, kw])
        return jnp.maximum(acc + b, 0.0)

    def deconv_1x4_s2(t, wt, b):
        N, H, W, _ = t.shape
        Co, W2 = wt.shape[1], 2 * W
        out = jnp.zeros((N, H, W2, Co), jnp.float32)
        for wi in range(W):
            for kw in range(4):
                wo = wi * 2 - 1 + kw
                if 0 <= wo < W2:
                    out = out.at[:, :, wo, :].add(
                        jnp.einsum("nhc,cd->nhd", t[:, :, wi, :], wt[:, :, 0, kw]))
        return jnp.maximum(out + b, 0.0)

    x = conv1x1(x, p["de_sq_w"], p["de_sq_b"])
    x = deconv_1x4_s2(x, p["de_dc_w"], p["de_dc_b"])
    x = jnp.concatenate([conv1x1(x, p["de_e1_w"], p["de_e1_b"]),
                         conv3x3(x, p["de_e3_w"], p["de_e3_b"])], axis=-1)
    x = conv1x1(x, p["fi_sq_w"], p["fi_sq_b"])
    x = jnp.concatenate([conv1x1(x, p["fi_e1_w"], p["fi_e1_b"]),
                         conv3x3(x, p["fi_e3_w"], p["fi_e3_b"])], axis=-1)
    out = jax.nn.sigmoid(conv1x1(x, p["hd_w"], p["hd_b"], relu=False))
    out = jnp.transpose(out, (0, 3, 1, 2))
    if out.shape[-1] != data_input_nchw.shape[-1]:
        diff = out.shape[-1] - data_input_nchw.shape[-1]
        out = out[..., diff // 2: out.shape[-1] - diff // 2]
    return (out,)


# ----------------------------------------------------------------------------
if __name__ == "__main__":
    key = jax.random.PRNGKey(0)
    k_param, k_feat, k_data = jax.random.split(key, 3)

    in_channels, mid_channels = 16, 32
    B, H, Wf = 2, 8, 8            # features spatial; DeFire doubles width -> 16
    Wd = 14                       # data_input width -> exercises the symmetric crop

    features = jax.random.normal(k_feat, (B, in_channels, H, Wf), jnp.float32)
    data_input = jax.random.normal(k_data, (B, 3, H, Wd), jnp.float32)
    params = init_params(k_param, in_channels, mid_channels)

    (out,) = jax.jit(l2_reflect_head_forward)(params, data_input, features)
    out = jax.block_until_ready(out)

    assert out.shape == (B, 1, H, Wd), out.shape
    assert bool(jnp.all(jnp.isfinite(out)))
    assert bool(jnp.all((out >= 0.0) & (out <= 1.0)))          # sigmoid range

    # Cross-check the fused bf16 kernel against the pure-JAX f32 reference.
    (ref,) = _ref_forward(params, data_input, features)
    max_err = float(jnp.max(jnp.abs(out - ref)))
    assert max_err < 0.1, max_err

    print("KERNEL_OK")
</pallas_src>

<mosaic_0001>
module attributes {stable_mosaic.version = 11 : i64} {
  func.func @_head_kernel(%arg0: i32, %arg1: memref<1x64x16xbf16, #tpu.memory_space<vmem>>, %arg2: memref<16x2xbf16, #tpu.memory_space<vmem>>, %arg3: memref<1x2xf32, #tpu.memory_space<vmem>>, %arg4: memref<4x2x2xbf16, #tpu.memory_space<vmem>>, %arg5: memref<1x2xf32, #tpu.memory_space<vmem>>, %arg6: memref<9x2x32xbf16, #tpu.memory_space<vmem>>, %arg7: memref<1x32xf32, #tpu.memory_space<vmem>>, %arg8: memref<32x2xbf16, #tpu.memory_space<vmem>>, %arg9: memref<1x2xf32, #tpu.memory_space<vmem>>, %arg10: memref<9x2x32xbf16, #tpu.memory_space<vmem>>, %arg11: memref<1x32xf32, #tpu.memory_space<vmem>>, %arg12: memref<1x32xf32, #tpu.memory_space<vmem>>, %arg13: memref<1x1xf32, #tpu.memory_space<vmem>>, %arg14: memref<64x64xbf16, #tpu.memory_space<vmem>>, %arg15: memref<64x64xbf16, #tpu.memory_space<vmem>>, %arg16: memref<128x64xbf16, #tpu.memory_space<vmem>>, %arg17: memref<128x64xbf16, #tpu.memory_space<vmem>>, %arg18: memref<9x128x128xbf16, #tpu.memory_space<vmem>>, %arg19: memref<8x128xf32, #tpu.memory_space<vmem>>, %arg20: memref<128x14xf32, #tpu.memory_space<vmem>>, %arg21: memref<1x8x14xf32, #tpu.memory_space<vmem>>) attributes {dimension_semantics = [#tpu.dimension_semantics<parallel>], iteration_bounds = array<i64: 2>, scalar_prefetch = 0 : i64, scratch_operands = 0 : i64, tpu.core_type = #tpu.core_type<tc>, window_params = [{transform_indices = @transform_0, window_bounds = array<i64: 1, 64, 16>}, {pipeline_mode = #tpu.pipeline_mode<synchronous>, transform_indices = @transform_1, window_bounds = array<i64: 16, 2>}, {pipeline_mode = #tpu.pipeline_mode<synchronous>, transform_indices = @transform_2, window_bounds = array<i64: 1, 2>}, {pipeline_mode = #tpu.pipeline_mode<synchronous>, transform_indices = @transform_3, window_bounds = array<i64: 4, 2, 2>}, {pipeline_mode = #tpu.pipeline_mode<synchronous>, transform_indices = @transform_4, window_bounds = array<i64: 1, 2>}, {pipeline_mode = #tpu.pipeline_mode<synchronous>, transform_indices = @transform_5, window_bounds = array<i64: 9, 2, 32>}, {pipeline_mode = #tpu.pipeline_mode<synchronous>, transform_indices = @transform_6, window_bounds = array<i64: 1, 32>}, {pipeline_mode = #tpu.pipeline_mode<synchronous>, transform_indices = @transform_7, window_bounds = array<i64: 32, 2>}, {pipeline_mode = #tpu.pipeline_mode<synchronous>, transform_indices = @transform_8, window_bounds = array<i64: 1, 2>}, {pipeline_mode = #tpu.pipeline_mode<synchronous>, transform_indices = @transform_9, window_bounds = array<i64: 9, 2, 32>}, {pipeline_mode = #tpu.pipeline_mode<synchronous>, transform_indices = @transform_10, window_bounds = array<i64: 1, 32>}, {pipeline_mode = #tpu.pipeline_mode<synchronous>, transform_indices = @transform_11, window_bounds = array<i64: 1, 32>}, {pipeline_mode = #tpu.pipeline_mode<synchronous>, transform_indices = @transform_12, window_bounds = array<i64: 1, 1>}, {pipeline_mode = #tpu.pipeline_mode<synchronous>, transform_indices = @transform_13, window_bounds = array<i64: 64, 64>}, {pipeline_mode = #tpu.pipeline_mode<synchronous>, transform_indices = @transform_14, window_bounds = array<i64: 64, 64>}, {pipeline_mode = #tpu.pipeline_mode<synchronous>, transform_indices = @transform_15, window_bounds = array<i64: 128, 64>}, {pipeline_mode = #tpu.pipeline_mode<synchronous>, transform_indices = @transform_16, window_bounds = array<i64: 128, 64>}, {pipeline_mode = #tpu.pipeline_mode<synchronous>, transform_indices = @transform_17, window_bounds = array<i64: 9, 128, 128>}, {pipeline_mode = #tpu.pipeline_mode<synchronous>, transform_indices = @transform_18, window_bounds = array<i64: 8, 128>}, {pipeline_mode = #tpu.pipeline_mode<synchronous>, transform_indices = @transform_19, window_bounds = array<i64: 128, 14>}, {transform_indices = @transform_20, window_bounds = array<i64: 1, 8, 14>}]} {
    %c0 = arith.constant 0 : index
    %c0_0 = arith.constant 0 : index
    %c0_1 = arith.constant 0 : index
    %0 = vector.load %arg1[%c0, %c0_0, %c0_1] : memref<1x64x16xbf16, #tpu.memory_space<vmem>>, vector<1x64x16xbf16>
    %1 = vector.shape_cast %0 : vector<1x64x16xbf16> to vector<64x16xbf16>
    %c0_2 = arith.constant 0 : index
    %c0_3 = arith.constant 0 : index
    %2 = vector.load %arg2[%c0_2, %c0_3] : memref<16x2xbf16, #tpu.memory_space<vmem>>, vector<16x2xbf16>
    %cst = arith.constant dense<0.000000e+00> : vector<64x2xf32>
    %3 = tpu.matmul %1, %2, %cst {dimension_numbers = #tpu.dot_dimension_numbers<[1], [0], [0], [1], [0, 0, 1, 1], [], []>} : vector<64x16xbf16>, vector<16x2xbf16>, vector<64x2xf32> -> vector<64x2xf32>
    %c0_4 = arith.constant 0 : index
    %c0_5 = arith.constant 0 : index
    %4 = vector.load %arg3[%c0_4, %c0_5] : memref<1x2xf32, #tpu.memory_space<vmem>>, vector<1x2xf32>
    %5 = vector.broadcast %4 : vector<1x2xf32> to vector<64x2xf32>
    %6 = arith.addf %3, %5 : vector<64x2xf32>
    %cst_6 = arith.constant 0.000000e+00 : f32
    %7 = vector.broadcast %cst_6 : f32 to vector<64x2xf32>
    %8 = arith.maximumf %6, %7 : vector<64x2xf32>
    %c0_7 = arith.constant 0 : index
    %c0_8 = arith.constant 0 : index
    %9 = vector.load %arg14[%c0_7, %c0_8] : memref<64x64xbf16, #tpu.memory_space<vmem>>, vector<64x64xbf16>
    %10 = arith.truncf %8 : vector<64x2xf32> to vector<64x2xbf16>
    %cst_9 = arith.constant dense<0.000000e+00> : vector<64x2xf32>
    %11 = tpu.matmul %9, %10, %cst_9 {dimension_numbers = #tpu.dot_dimension_numbers<[1], [0], [0], [1], [0, 0, 1, 1], [], []>} : vector<64x64xbf16>, vector<64x2xbf16>, vector<64x2xf32> -> vector<64x2xf32>
    %c0_10 = arith.constant 0 : index
    %c0_11 = arith.constant 0 : index
    %12 = vector.load %arg15[%c0_10, %c0_11] : memref<64x64xbf16, #tpu.memory_space<vmem>>, vector<64x64xbf16>
    %13 = arith.truncf %8 : vector<64x2xf32> to vector<64x2xbf16>
    %cst_12 = arith.constant dense<0.000000e+00> : vector<64x2xf32>
    %14 = tpu.matmul %12, %13, %cst_12 {dimension_numbers = #tpu.dot_dimension_numbers<[1], [0], [0], [1], [0, 0, 1, 1], [], []>} : vector<64x64xbf16>, vector<64x2xbf16>, vector<64x2xf32> -> vector<64x2xf32>
    %c1 = arith.constant 1 : index
    %c0_13 = arith.constant 0 : index
    %c0_14 = arith.constant 0 : index
    %15 = vector.load %arg4[%c1, %c0_13, %c0_14] : memref<4x2x2xbf16, #tpu.memory_space<vmem>>, vector<1x2x2xbf16>
    %16 = vector.shape_cast %15 : vector<1x2x2xbf16> to vector<2x2xbf16>
    %17 = arith.truncf %8 : vector<64x2xf32> to vector<64x2xbf16>
    %cst_15 = arith.constant dense<0.000000e+00> : vector<64x2xf32>
    %18 = tpu.matmul %17, %16, %cst_15 {dimension_numbers = #tpu.dot_dimension_numbers<[1], [0], [0], [1], [0, 0, 1, 1], [], []>} : vector<64x2xbf16>, vector<2x2xbf16>, vector<64x2xf32> -> vector<64x2xf32>
    %c3 = arith.constant 3 : index
    %c0_16 = arith.constant 0 : index
    %c0_17 = arith.constant 0 : index
    %19 = vector.load %arg4[%c3, %c0_16, %c0_17] : memref<4x2x2xbf16, #tpu.memory_space<vmem>>, vector<1x2x2xbf16>
    %20 = vector.shape_cast %19 : vector<1x2x2xbf16> to vector<2x2xbf16>
    %21 = arith.truncf %11 : vector<64x2xf32> to vector<64x2xbf16>
    %cst_18 = arith.constant dense<0.000000e+00> : vector<64x2xf32>
    %22 = tpu.matmul %21, %20, %cst_18 {dimension_numbers = #tpu.dot_dimension_numbers<[1], [0], [0], [1], [0, 0, 1, 1], [], []>} : vector<64x2xbf16>, vector<2x2xbf16>, vector<64x2xf32> -> vector<64x2xf32>
    %23 = arith.addf %18, %22 : vector<64x2xf32>
    %c0_19 = arith.constant 0 : index
    %c0_20 = arith.constant 0 : index
    %24 = vector.load %arg5[%c0_19, %c0_20] : memref<1x2xf32, #tpu.memory_space<vmem>>, vector<1x2xf32>
    %25 = vector.broadcast %24 : vector<1x2xf32> to vector<64x2xf32>
    %26 = arith.addf %23, %25 : vector<64x2xf32>
    %cst_21 = arith.constant 0.000000e+00 : f32
    %27 = vector.broadcast %cst_21 : f32 to vector<64x2xf32>
    %28 = arith.maximumf %26, %27 : vector<64x2xf32>
    %c0_22 = arith.constant 0 : index
    %c0_23 = arith.constant 0 : index
    %c0_24 = arith.constant 0 : index
    %29 = vector.load %arg4[%c0_22, %c0_23, %c0_24] : memref<4x2x2xbf16, #tpu.memory_space<vmem>>, vector<1x2x2xbf16>
    %30 = vector.shape_cast %29 : vector<1x2x2xbf16> to vector<2x2xbf16>
    %31 = arith.truncf %14 : vector<64x2xf32> to vector<64x2xbf16>
    %cst_25 = arith.constant dense<0.000000e+00> : vector<64x2xf32>
    %32 = tpu.matmul %31, %30, %cst_25 {dimension_numbers = #tpu.dot_dimension_numbers<[1], [0], [0], [1], [0, 0, 1, 1], [], []>} : vector<64x2xbf16>, vector<2x2xbf16>, vector<64x2xf32> -> vector<64x2xf32>
    %c2 = arith.constant 2 : index
    %c0_26 = arith.constant 0 : index
    %c0_27 = arith.constant 0 : index
    %33 = vector.load %arg4[%c2, %c0_26, %c0_27] : memref<4x2x2xbf16, #tpu.memory_space<vmem>>, vector<1x2x2xbf16>
    %34 = vector.shape_cast %33 : vector<1x2x2xbf16> to vector<2x2xbf16>
    %35 = arith.truncf %8 : vector<64x2xf32> to vector<64x2xbf16>
    %cst_28 = arith.constant dense<0.000000e+00> : vector<64x2xf32>
    %36 = tpu.matmul %35, %34, %cst_28 {dimension_numbers = #tpu.dot_dimension_numbers<[1], [0], [0], [1], [0, 0, 1, 1], [], []>} : vector<64x2xbf16>, vector<2x2xbf16>, vector<64x2xf32> -> vector<64x2xf32>
    %37 = arith.addf %32, %36 : vector<64x2xf32>
    %c0_29 = arith.constant 0 : index
    %c0_30 = arith.constant 0 : index
    %38 = vector.load %arg5[%c0_29, %c0_30] : memref<1x2xf32, #tpu.memory_space<vmem>>, vector<1x2xf32>
    %39 = vector.broadcast %38 : vector<1x2xf32> to vector<64x2xf32>
    %40 = arith.addf %37, %39 : vector<64x2xf32>
    %cst_31 = arith.constant 0.000000e+00 : f32
    %41 = vector.broadcast %cst_31 : f32 to vector<64x2xf32>
    %42 = arith.maximumf %40, %41 : vector<64x2xf32>
    %c0_32 = arith.constant 0 : index
    %c0_33 = arith.constant 0 : index
    %43 = vector.load %arg16[%c0_32, %c0_33] : memref<128x64xbf16, #tpu.memory_space<vmem>>, vector<128x64xbf16>
    %44 = arith.truncf %28 : vector<64x2xf32> to vector<64x2xbf16>
    %cst_34 = arith.constant dense<0.000000e+00> : vector<128x2xf32>
    %45 = tpu.matmul %43, %44, %cst_34 {dimension_numbers = #tpu.dot_dimension_numbers<[1], [0], [0], [1], [0, 0, 1, 1], [], []>} : vector<128x64xbf16>, vector<64x2xbf16>, vector<128x2xf32> -> vector<128x2xf32>
    %c0_35 = arith.constant 0 : index
    %c0_36 = arith.constant 0 : index
    %46 = vector.load %arg17[%c0_35, %c0_36] : memref<128x64xbf16, #tpu.memory_space<vmem>>, vector<128x64xbf16>
    %47 = arith.truncf %42 : vector<64x2xf32> to vector<64x2xbf16>
    %cst_37 = arith.constant dense<0.000000e+00> : vector<128x2xf32>
    %48 = tpu.matmul %46, %47, %cst_37 {dimension_numbers = #tpu.dot_dimension_numbers<[1], [0], [0], [1], [0, 0, 1, 1], [], []>} : vector<128x64xbf16>, vector<64x2xbf16>, vector<128x2xf32> -> vector<128x2xf32>
    %49 = arith.addf %45, %48 : vector<128x2xf32>
    %c0_38 = arith.constant 0 : index
    %c0_39 = arith.constant 0 : index
    %c0_40 = arith.constant 0 : index
    %50 = vector.load %arg18[%c0_38, %c0_39, %c0_40] : memref<9x128x128xbf16, #tpu.memory_space<vmem>>, vector<1x128x128xbf16>
    %51 = vector.shape_cast %50 : vector<1x128x128xbf16> to vector<128x128xbf16>
    %52 = arith.truncf %49 : vector<128x2xf32> to vector<128x2xbf16>
    %cst_41 = arith.constant dense<0.000000e+00> : vector<128x2xf32>
    %53 = tpu.matmul %51, %52, %cst_41 {dimension_numbers = #tpu.dot_dimension_numbers<[1], [0], [0], [1], [0, 0, 1, 1], [], []>} : vector<128x128xbf16>, vector<128x2xbf16>, vector<128x2xf32> -> vector<128x2xf32>
    %c0_42 = arith.constant 0 : index
    %c0_43 = arith.constant 0 : index
    %c0_44 = arith.constant 0 : index
    %54 = vector.load %arg6[%c0_42, %c0_43, %c0_44] : memref<9x2x32xbf16, #tpu.memory_space<vmem>>, vector<1x2x32xbf16>
    %55 = vector.shape_cast %54 : vector<1x2x32xbf16> to vector<2x32xbf16>
    %56 = arith.truncf %53 : vector<128x2xf32> to vector<128x2xbf16>
    %cst_45 = arith.constant dense<0.000000e+00> : vector<128x32xf32>
    %57 = tpu.matmul %56, %55, %cst_45 {dimension_numbers = #tpu.dot_dimension_numbers<[1], [0], [0], [1], [0, 0, 1, 1], [], []>} : vector<128x2xbf16>, vector<2x32xbf16>, vector<128x32xf32> -> vector<128x32xf32>
    %c1_46 = arith.constant 1 : index
    %c0_47 = arith.constant 0 : index
    %c0_48 = arith.constant 0 : index
    %58 = vector.load %arg18[%c1_46, %c0_47, %c0_48] : memref<9x128x128xbf16, #tpu.memory_space<vmem>>, vector<1x128x128xbf16>
    %59 = vector.shape_cast %58 : vector<1x128x128xbf16> to vector<128x128xbf16>
    %60 = arith.truncf %49 : vector<128x2xf32> to vector<128x2xbf16>
    %cst_49 = arith.constant dense<0.000000e+00> : vector<128x2xf32>
    %61 = tpu.matmul %59, %60, %cst_49 {dimension_numbers = #tpu.dot_dimension_numbers<[1], [0], [0], [1], [0, 0, 1, 1], [], []>} : vector<128x128xbf16>, vector<128x2xbf16>, vector<128x2xf32> -> vector<128x2xf32>
    %c1_50 = arith.constant 1 : index
    %c0_51 = arith.constant 0 : index
    %c0_52 = arith.constant 0 : index
    %62 = vector.load %arg6[%c1_50, %c0_51, %c0_52] : memref<9x2x32xbf16, #tpu.memory_space<vmem>>, vector<1x2x32xbf16>
    %63 = vector.shape_cast %62 : vector<1x2x32xbf16> to vector<2x32xbf16>
    %64 = arith.truncf %61 : vector<128x2xf32> to vector<128x2xbf16>
    %cst_53 = arith.constant dense<0.000000e+00> : vector<128x32xf32>
    %65 = tpu.matmul %64, %63, %cst_53 {dimension_numbers = #tpu.dot_dimension_numbers<[1], [0], [0], [1], [0, 0, 1, 1], [], []>} : vector<128x2xbf16>, vector<2x32xbf16>, vector<128x32xf32> -> vector<128x32xf32>
    %66 = arith.addf %57, %65 : vector<128x32xf32>
    %c2_54 = arith.constant 2 : index
    %c0_55 = arith.constant 0 : index
    %c0_56 = arith.constant 0 : index
    %67 = vector.load %arg18[%c2_54, %c0_55, %c0_56] : memref<9x128x128xbf16, #tpu.memory_space<vmem>>, vector<1x128x128xbf16>
    %68 = vector.shape_cast %67 : vector<1x128x128xbf16> to vector<128x128xbf16>
    %69 = arith.truncf %49 : vector<128x2xf32> to vector<128x2xbf16>
    %cst_57 = arith.constant dense<0.000000e+00> : vector<128x2xf32>
    %70 = tpu.matmul %68, %69, %cst_57 {dimension_numbers = #tpu.dot_dimension_numbers<[1], [0], [0], [1], [0, 0, 1, 1], [], []>} : vector<128x128xbf16>, vector<128x2xbf16>, vector<128x2xf32> -> vector<128x2xf32>
    %c2_58 = arith.constant 2 : index
    %c0_59 = arith.constant 0 : index
    %c0_60 = arith.constant 0 : index
    %71 = vector.load %arg6[%c2_58, %c0_59, %c0_60] : memref<9x2x32xbf16, #tpu.memory_space<vmem>>, vector<1x2x32xbf16>
    %72 = vector.shape_cast %71 : vector<1x2x32xbf16> to vector<2x32xbf16>
    %73 = arith.truncf %70 : vector<128x2xf32> to vector<128x2xbf16>
    %cst_61 = arith.constant dense<0.000000e+00> : vector<128x32xf32>
    %74 = tpu.matmul %73, %72, %cst_61 {dimension_numbers = #tpu.dot_dimension_numbers<[1], [0], [0], [1], [0, 0, 1, 1], [], []>} : vector<128x2xbf16>, vector<2x32xbf16>, vector<128x32xf32> -> vector<128x32xf32>
    %75 = arith.addf %66, %74 : vector<128x32xf32>
    %c3_62 = arith.constant 3 : index
    %c0_63 = arith.constant 0 : index
    %c0_64 = arith.constant 0 : index
    %76 = vector.load %arg18[%c3_62, %c0_63, %c0_64] : memref<9x128x128xbf16, #tpu.memory_space<vmem>>, vector<1x128x128xbf16>
    %77 = vector.shape_cast %76 : vector<1x128x128xbf16> to vector<128x128xbf16>
    %78 = arith.truncf %49 : vector<128x2xf32> to vector<128x2xbf16>
    %cst_65 = arith.constant dense<0.000000e+00> : vector<128x2xf32>
    %79 = tpu.matmul %77, %78, %cst_65 {dimension_numbers = #tpu.dot_dimension_numbers<[1], [0], [0], [1], [0, 0, 1, 1], [], []>} : vector<128x128xbf16>, vector<128x2xbf16>, vector<128x2xf32> -> vector<128x2xf32>
    %c3_66 = arith.constant 3 : index
    %c0_67 = arith.constant 0 : index
    %c0_68 = arith.constant 0 : index
    %80 = vector.load %arg6[%c3_66, %c0_67, %c0_68] : memref<9x2x32xbf16, #tpu.memory_space<vmem>>, vector<1x2x32xbf16>
    %81 = vector.shape_cast %80 : vector<1x2x32xbf16> to vector<2x32xbf16>
    %82 = arith.truncf %79 : vector<128x2xf32> to vector<128x2xbf16>
    %cst_69 = arith.constant dense<0.000000e+00> : vector<128x32xf32>
    %83 = tpu.matmul %82, %81, %cst_69 {dimension_numbers = #tpu.dot_dimension_numbers<[1], [0], [0], [1], [0, 0, 1, 1], [], []>} : vector<128x2xbf16>, vector<2x32xbf16>, vector<128x32xf32> -> vector<128x32xf32>
    %84 = arith.addf %75, %83 : vector<128x32xf32>
    %c4 = arith.constant 4 : index
    %c0_70 = arith.constant 0 : index
    %c0_71 = arith.constant 0 : index
    %85 = vector.load %arg18[%c4, %c0_70, %c0_71] : memref<9x128x128xbf16, #tpu.memory_space<vmem>>, vector<1x128x128xbf16>
    %86 = vector.shape_cast %85 : vector<1x128x128xbf16> to vector<128x128xbf16>
    %87 = arith.truncf %49 : vector<128x2xf32> to vector<128x2xbf16>
    %cst_72 = arith.constant dense<0.000000e+00> : vector<128x2xf32>
    %88 = tpu.matmul %86, %87, %cst_72 {dimension_numbers = #tpu.dot_dimension_numbers<[1], [0], [0], [1], [0, 0, 1, 1], [], []>} : vector<128x128xbf16>, vector<128x2xbf16>, vector<128x2xf32> -> vector<128x2xf32>
    %c4_73 = arith.constant 4 : index
    %c0_74 = arith.constant 0 : index
    %c0_75 = arith.constant 0 : index
    %89 = vector.load %arg6[%c4_73, %c0_74, %c0_75] : memref<9x2x32xbf16, #tpu.memory_space<vmem>>, vector<1x2x32xbf16>
    %90 = vector.shape_cast %89 : vector<1x2x32xbf16> to vector<2x32xbf16>
    %91 = arith.truncf %88 : vector<128x2xf32> to vector<128x2xbf16>
    %cst_76 = arith.constant dense<0.000000e+00> : vector<128x32xf32>
    %92 = tpu.matmul %91, %90, %cst_76 {dimension_numbers = #tpu.dot_dimension_numbers<[1], [0], [0], [1], [0, 0, 1, 1], [], []>} : vector<128x2xbf16>, vector<2x32xbf16>, vector<128x32xf32> -> vector<128x32xf32>
    %93 = arith.addf %84, %92 : vector<128x32xf32>
    %c5 = arith.constant 5 : index
    %c0_77 = arith.constant 0 : index
    %c0_78 = arith.constant 0 : index
    %94 = vector.load %arg18[%c5, %c0_77, %c0_78] : memref<9x128x128xbf16, #tpu.memory_space<vmem>>, vector<1x128x128xbf16>
    %95 = vector.shape_cast %94 : vector<1x128x128xbf16> to vector<128x128xbf16>
    %96 = arith.truncf %49 : vector<128x2xf32> to vector<128x2xbf16>
    %cst_79 = arith.constant dense<0.000000e+00> : vector<128x2xf32>
    %97 = tpu.matmul %95, %96, %cst_79 {dimension_numbers = #tpu.dot_dimension_numbers<[1], [0], [0], [1], [0, 0, 1, 1], [], []>} : vector<128x128xbf16>, vector<128x2xbf16>, vector<128x2xf32> -> vector<128x2xf32>
    %c5_80 = arith.constant 5 : index
    %c0_81 = arith.constant 0 : index
    %c0_82 = arith.constant 0 : index
    %98 = vector.load %arg6[%c5_80, %c0_81, %c0_82] : memref<9x2x32xbf16, #tpu.memory_space<vmem>>, vector<1x2x32xbf16>
    %99 = vector.shape_cast %98 : vector<1x2x32xbf16> to vector<2x32xbf16>
    %100 = arith.truncf %97 : vector<128x2xf32> to vector<128x2xbf16>
    %cst_83 = arith.constant dense<0.000000e+00> : vector<128x32xf32>
    %101 = tpu.matmul %100, %99, %cst_83 {dimension_numbers = #tpu.dot_dimension_numbers<[1], [0], [0], [1], [0, 0, 1, 1], [], []>} : vector<128x2xbf16>, vector<2x32xbf16>, vector<128x32xf32> -> vector<128x32xf32>
    %102 = arith.addf %93, %101 : vector<128x32xf32>
    %c6 = arith.constant 6 : index
    %c0_84 = arith.constant 0 : index
    %c0_85 = arith.constant 0 : index
    %103 = vector.load %arg18[%c6, %c0_84, %c0_85] : memref<9x128x128xbf16, #tpu.memory_space<vmem>>, vector<1x128x128xbf16>
    %104 = vector.shape_cast %103 : vector<1x128x128xbf16> to vector<128x128xbf16>
    %105 = arith.truncf %49 : vector<128x2xf32> to vector<128x2xbf16>
    %cst_86 = arith.constant dense<0.000000e+00> : vector<128x2xf32>
    %106 = tpu.matmul %104, %105, %cst_86 {dimension_numbers = #tpu.dot_dimension_numbers<[1], [0], [0], [1], [0, 0, 1, 1], [], []>} : vector<128x128xbf16>, vector<128x2xbf16>, vector<128x2xf32> -> vector<128x2xf32>
    %c6_87 = arith.constant 6 : index
    %c0_88 = arith.constant 0 : index
    %c0_89 = arith.constant 0 : index
    %107 = vector.load %arg6[%c6_87, %c0_88, %c0_89] : memref<9x2x32xbf16, #tpu.memory_space<vmem>>, vector<1x2x32xbf16>
    %108 = vector.shape_cast %107 : vector<1x2x32xbf16> to vector<2x32xbf16>
    %109 = arith.truncf %106 : vector<128x2xf32> to vector<128x2xbf16>
    %cst_90 = arith.constant dense<0.000000e+00> : vector<128x32xf32>
    %110 = tpu.matmul %109, %108, %cst_90 {dimension_numbers = #tpu.dot_dimension_numbers<[1], [0], [0], [1], [0, 0, 1, 1], [], []>} : vector<128x2xbf16>, vector<2x32xbf16>, vector<128x32xf32> -> vector<128x32xf32>
    %111 = arith.addf %102, %110 : vector<128x32xf32>
    %c7 = arith.constant 7 : index
    %c0_91 = arith.constant 0 : index
    %c0_92 = arith.constant 0 : index
    %112 = vector.load %arg18[%c7, %c0_91, %c0_92] : memref<9x128x128xbf16, #tpu.memory_space<vmem>>, vector<1x128x128xbf16>
    %113 = vector.shape_cast %112 : vector<1x128x128xbf16> to vector<128x128xbf16>
    %114 = arith.truncf %49 : vector<128x2xf32> to vector<128x2xbf16>
    %cst_93 = arith.constant dense<0.000000e+00> : vector<128x2xf32>
    %115 = tpu.matmul %113, %114, %cst_93 {dimension_numbers = #tpu.dot_dimension_numbers<[1], [0], [0], [1], [0, 0, 1, 1], [], []>} : vector<128x128xbf16>, vector<128x2xbf16>, vector<128x2xf32> -> vector<128x2xf32>
    %c7_94 = arith.constant 7 : index
    %c0_95 = arith.constant 0 : index
    %c0_96 = arith.constant 0 : index
    %116 = vector.load %arg6[%c7_94, %c0_95, %c0_96] : memref<9x2x32xbf16, #tpu.memory_space<vmem>>, vector<1x2x32xbf16>
    %117 = vector.shape_cast %116 : vector<1x2x32xbf16> to vector<2x32xbf16>
    %118 = arith.truncf %115 : vector<128x2xf32> to vector<128x2xbf16>
    %cst_97 = arith.constant dense<0.000000e+00> : vector<128x32xf32>
    %119 = tpu.matmul %118, %117, %cst_97 {dimension_numbers = #tpu.dot_dimension_numbers<[1], [0], [0], [1], [0, 0, 1, 1], [], []>} : vector<128x2xbf16>, vector<2x32xbf16>, vector<128x32xf32> -> vector<128x32xf32>
    %120 = arith.addf %111, %119 : vector<128x32xf32>
    %c8 = arith.constant 8 : index
    %c0_98 = arith.constant 0 : index
    %c0_99 = arith.constant 0 : index
    %121 = vector.load %arg18[%c8, %c0_98, %c0_99] : memref<9x128x128xbf16, #tpu.memory_space<vmem>>, vector<1x128x128xbf16>
    %122 = vector.shape_cast %121 : vector<1x128x128xbf16> to vector<128x128xbf16>
    %123 = arith.truncf %49 : vector<128x2xf32> to vector<128x2xbf16>
    %cst_100 = arith.constant dense<0.000000e+00> : vector<128x2xf32>
    %124 = tpu.matmul %122, %123, %cst_100 {dimension_numbers = #tpu.dot_dimension_numbers<[1], [0], [0], [1], [0, 0, 1, 1], [], []>} : vector<128x128xbf16>, vector<128x2xbf16>, vector<128x2xf32> -> vector<128x2xf32>
    %c8_101 = arith.constant 8 : index
    %c0_102 = arith.constant 0 : index
    %c0_103 = arith.constant 0 : index
    %125 = vector.load %arg6[%c8_101, %c0_102, %c0_103] : memref<9x2x32xbf16, #tpu.memory_space<vmem>>, vector<1x2x32xbf16>
    %126 = vector.shape_cast %125 : vector<1x2x32xbf16> to vector<2x32xbf16>
    %127 = arith.truncf %124 : vector<128x2xf32> to vector<128x2xbf16>
    %cst_104 = arith.constant dense<0.000000e+00> : vector<128x32xf32>
    %128 = tpu.matmul %127, %126, %cst_104 {dimension_numbers = #tpu.dot_dimension_numbers<[1], [0], [0], [1], [0, 0, 1, 1], [], []>} : vector<128x2xbf16>, vector<2x32xbf16>, vector<128x32xf32> -> vector<128x32xf32>
    %129 = arith.addf %120, %128 : vector<128x32xf32>
    %c0_105 = arith.constant 0 : index
    %c0_106 = arith.constant 0 : index
    %130 = vector.load %arg7[%c0_105, %c0_106] : memref<1x32xf32, #tpu.memory_space<vmem>>, vector<1x32xf32>
    %131 = vector.broadcast %130 : vector<1x32xf32> to vector<128x32xf32>
    %132 = arith.addf %129, %131 : vector<128x32xf32>
    %cst_107 = arith.constant 0.000000e+00 : f32
    %133 = vector.broadcast %cst_107 : f32 to vector<128x32xf32>
    %134 = arith.maximumf %132, %133 : vector<128x32xf32>
    %c0_108 = arith.constant 0 : index
    %c0_109 = arith.constant 0 : index
    %135 = vector.load %arg8[%c0_108, %c0_109] : memref<32x2xbf16, #tpu.memory_space<vmem>>, vector<32x2xbf16>
    %136 = arith.truncf %134 : vector<128x32xf32> to vector<128x32xbf16>
    %cst_110 = arith.constant dense<0.000000e+00> : vector<128x2xf32>
    %137 = tpu.matmul %136, %135, %cst_110 {dimension_numbers = #tpu.dot_dimension_numbers<[1], [0], [0], [1], [0, 0, 1, 1], [], []>} : vector<128x32xbf16>, vector<32x2xbf16>, vector<128x2xf32> -> vector<128x2xf32>
    %c0_111 = arith.constant 0 : index
    %c0_112 = arith.constant 0 : index
    %138 = vector.load %arg9[%c0_111, %c0_112] : memref<1x2xf32, #tpu.memory_space<vmem>>, vector<1x2xf32>
    %139 = vector.broadcast %138 : vector<1x2xf32> to vector<128x2xf32>
    %140 = arith.addf %137, %139 : vector<128x2xf32>
    %cst_113 = arith.constant 0.000000e+00 : f32
    %141 = vector.broadcast %cst_113 : f32 to vector<128x2xf32>
    %142 = arith.maximumf %140, %141 : vector<128x2xf32>
    %c0_114 = arith.constant 0 : index
    %c0_115 = arith.constant 0 : index
    %c0_116 = arith.constant 0 : index
    %143 = vector.load %arg18[%c0_114, %c0_115, %c0_116] : memref<9x128x128xbf16, #tpu.memory_space<vmem>>, vector<1x128x128xbf16>
    %144 = vector.shape_cast %143 : vector<1x128x128xbf16> to vector<128x128xbf16>
    %145 = arith.truncf %142 : vector<128x2xf32> to vector<128x2xbf16>
    %cst_117 = arith.constant dense<0.000000e+00> : vector<128x2xf32>
    %146 = tpu.matmul %144, %145, %cst_117 {dimension_numbers = #tpu.dot_dimension_numbers<[1], [0], [0], [1], [0, 0, 1, 1], [], []>} : vector<128x128xbf16>, vector<128x2xbf16>, vector<128x2xf32> -> vector<128x2xf32>
    %c0_118 = arith.constant 0 : index
    %c0_119 = arith.constant 0 : index
    %c0_120 = arith.constant 0 : index
    %147 = vector.load %arg10[%c0_118, %c0_119, %c0_120] : memref<9x2x32xbf16, #tpu.memory_space<vmem>>, vector<1x2x32xbf16>
    %148 = vector.shape_cast %147 : vector<1x2x32xbf16> to vector<2x32xbf16>
    %149 = arith.truncf %146 : vector<128x2xf32> to vector<128x2xbf16>
    %cst_121 = arith.constant dense<0.000000e+00> : vector<128x32xf32>
    %150 = tpu.matmul %149, %148, %cst_121 {dimension_numbers = #tpu.dot_dimension_numbers<[1], [0], [0], [1], [0, 0, 1, 1], [], []>} : vector<128x2xbf16>, vector<2x32xbf16>, vector<128x32xf32> -> vector<128x32xf32>
    %c1_122 = arith.constant 1 : index
    %c0_123 = arith.constant 0 : index
    %c0_124 = arith.constant 0 : index
    %151 = vector.load %arg18[%c1_122, %c0_123, %c0_124] : memref<9x128x128xbf16, #tpu.memory_space<vmem>>, vector<1x128x128xbf16>
    %152 = vector.shape_cast %151 : vector<1x128x128xbf16> to vector<128x128xbf16>
    %153 = arith.truncf %142 : vector<128x2xf32> to vector<128x2xbf16>
    %cst_125 = arith.constant dense<0.000000e+00> : vector<128x2xf32>
    %154 = tpu.matmul %152, %153, %cst_125 {dimension_numbers = #tpu.dot_dimension_numbers<[1], [0], [0], [1], [0, 0, 1, 1], [], []>} : vector<128x128xbf16>, vector<128x2xbf16>, vector<128x2xf32> -> vector<128x2xf32>
    %c1_126 = arith.constant 1 : index
    %c0_127 = arith.constant 0 : index
    %c0_128 = arith.constant 0 : index
    %155 = vector.load %arg10[%c1_126, %c0_127, %c0_128] : memref<9x2x32xbf16, #tpu.memory_space<vmem>>, vector<1x2x32xbf16>
    %156 = vector.shape_cast %155 : vector<1x2x32xbf16> to vector<2x32xbf16>
    %157 = arith.truncf %154 : vector<128x2xf32> to vector<128x2xbf16>
    %cst_129 = arith.constant dense<0.000000e+00> : vector<128x32xf32>
    %158 = tpu.matmul %157, %156, %cst_129 {dimension_numbers = #tpu.dot_dimension_numbers<[1], [0], [0], [1], [0, 0, 1, 1], [], []>} : vector<128x2xbf16>, vector<2x32xbf16>, vector<128x32xf32> -> vector<128x32xf32>
    %159 = arith.addf %150, %158 : vector<128x32xf32>
    %c2_130 = arith.constant 2 : index
    %c0_131 = arith.constant 0 : index
    %c0_132 = arith.constant 0 : index
    %160 = vector.load %arg18[%c2_130, %c0_131, %c0_132] : memref<9x128x128xbf16, #tpu.memory_space<vmem>>, vector<1x128x128xbf16>
    %161 = vector.shape_cast %160 : vector<1x128x128xbf16> to vector<128x128xbf16>
    %162 = arith.truncf %142 : vector<128x2xf32> to vector<128x2xbf16>
    %cst_133 = arith.constant dense<0.000000e+00> : vector<128x2xf32>
    %163 = tpu.matmul %161, %162, %cst_133 {dimension_numbers = #tpu.dot_dimension_numbers<[1], [0], [0], [1], [0, 0, 1, 1], [], []>} : vector<128x128xbf16>, vector<128x2xbf16>, vector<128x2xf32> -> vector<128x2xf32>
    %c2_134 = arith.constant 2 : index
    %c0_135 = arith.constant 0 : index
    %c0_136 = arith.constant 0 : index
    %164 = vector.load %arg10[%c2_134, %c0_135, %c0_136] : memref<9x2x32xbf16, #tpu.memory_space<vmem>>, vector<1x2x32xbf16>
    %165 = vector.shape_cast %164 : vector<1x2x32xbf16> to vector<2x32xbf16>
    %166 = arith.truncf %163 : vector<128x2xf32> to vector<128x2xbf16>
    %cst_137 = arith.constant dense<0.000000e+00> : vector<128x32xf32>
    %167 = tpu.matmul %166, %165, %cst_137 {dimension_numbers = #tpu.dot_dimension_numbers<[1], [0], [0], [1], [0, 0, 1, 1], [], []>} : vector<128x2xbf16>, vector<2x32xbf16>, vector<128x32xf32> -> vector<128x32xf32>
    %168 = arith.addf %159, %167 : vector<128x32xf32>
    %c3_138 = arith.constant 3 : index
    %c0_139 = arith.constant 0 : index
    %c0_140 = arith.constant 0 : index
    %169 = vector.load %arg18[%c3_138, %c0_139, %c0_140] : memref<9x128x128xbf16, #tpu.memory_space<vmem>>, vector<1x128x128xbf16>
    %170 = vector.shape_cast %169 : vector<1x128x128xbf16> to vector<128x128xbf16>
    %171 = arith.truncf %142 : vector<128x2xf32> to vector<128x2xbf16>
    %cst_141 = arith.constant dense<0.000000e+00> : vector<128x2xf32>
    %172 = tpu.matmul %170, %171, %cst_141 {dimension_numbers = #tpu.dot_dimension_numbers<[1], [0], [0], [1], [0, 0, 1, 1], [], []>} : vector<128x128xbf16>, vector<128x2xbf16>, vector<128x2xf32> -> vector<128x2xf32>
    %c3_142 = arith.constant 3 : index
    %c0_143 = arith.constant 0 : index
    %c0_144 = arith.constant 0 : index
    %173 = vector.load %arg10[%c3_142, %c0_143, %c0_144] : memref<9x2x32xbf16, #tpu.memory_space<vmem>>, vector<1x2x32xbf16>
    %174 = vector.shape_cast %173 : vector<1x2x32xbf16> to vector<2x32xbf16>
    %175 = arith.truncf %172 : vector<128x2xf32> to vector<128x2xbf16>
    %cst_145 = arith.constant dense<0.000000e+00> : vector<128x32xf32>
    %176 = tpu.matmul %175, %174, %cst_145 {dimension_numbers = #tpu.dot_dimension_numbers<[1], [0], [0], [1], [0, 0, 1, 1], [], []>} : vector<128x2xbf16>, vector<2x32xbf16>, vector<128x32xf32> -> vector<128x32xf32>
    %177 = arith.addf %168, %176 : vector<128x32xf32>
    %c4_146 = arith.constant 4 : index
    %c0_147 = arith.constant 0 : index
    %c0_148 = arith.constant 0 : index
    %178 = vector.load %arg18[%c4_146, %c0_147, %c0_148] : memref<9x128x128xbf16, #tpu.memory_space<vmem>>, vector<1x128x128xbf16>
    %179 = vector.shape_cast %178 : vector<1x128x128xbf16> to vector<128x128xbf16>
    %180 = arith.truncf %142 : vector<128x2xf32> to vector<128x2xbf16>
    %cst_149 = arith.constant dense<0.000000e+00> : vector<128x2xf32>
    %181 = tpu.matmul %179, %180, %cst_149 {dimension_numbers = #tpu.dot_dimension_numbers<[1], [0], [0], [1], [0, 0, 1, 1], [], []>} : vector<128x128xbf16>, vector<128x2xbf16>, vector<128x2xf32> -> vector<128x2xf32>
    %c4_150 = arith.constant 4 : index
    %c0_151 = arith.constant 0 : index
    %c0_152 = arith.constant 0 : index
    %182 = vector.load %arg10[%c4_150, %c0_151, %c0_152] : memref<9x2x32xbf16, #tpu.memory_space<vmem>>, vector<1x2x32xbf16>
    %183 = vector.shape_cast %182 : vector<1x2x32xbf16> to vector<2x32xbf16>
    %184 = arith.truncf %181 : vector<128x2xf32> to vector<128x2xbf16>
    %cst_153 = arith.constant dense<0.000000e+00> : vector<128x32xf32>
    %185 = tpu.matmul %184, %183, %cst_153 {dimension_numbers = #tpu.dot_dimension_numbers<[1], [0], [0], [1], [0, 0, 1, 1], [], []>} : vector<128x2xbf16>, vector<2x32xbf16>, vector<128x32xf32> -> vector<128x32xf32>
    %186 = arith.addf %177, %185 : vector<128x32xf32>
    %c5_154 = arith.constant 5 : index
    %c0_155 = arith.constant 0 : index
    %c0_156 = arith.constant 0 : index
    %187 = vector.load %arg18[%c5_154, %c0_155, %c0_156] : memref<9x128x128xbf16, #tpu.memory_space<vmem>>, vector<1x128x128xbf16>
    %188 = vector.shape_cast %187 : vector<1x128x128xbf16> to vector<128x128xbf16>
    %189 = arith.truncf %142 : vector<128x2xf32> to vector<128x2xbf16>
    %cst_157 = arith.constant dense<0.000000e+00> : vector<128x2xf32>
    %190 = tpu.matmul %188, %189, %cst_157 {dimension_numbers = #tpu.dot_dimension_numbers<[1], [0], [0], [1], [0, 0, 1, 1], [], []>} : vector<128x128xbf16>, vector<128x2xbf16>, vector<128x2xf32> -> vector<128x2xf32>
    %c5_158 = arith.constant 5 : index
    %c0_159 = arith.constant 0 : index
    %c0_160 = arith.constant 0 : index
    %191 = vector.load %arg10[%c5_158, %c0_159, %c0_160] : memref<9x2x32xbf16, #tpu.memory_space<vmem>>, vector<1x2x32xbf16>
    %192 = vector.shape_cast %191 : vector<1x2x32xbf16> to vector<2x32xbf16>
    %193 = arith.truncf %190 : vector<128x2xf32> to vector<128x2xbf16>
    %cst_161 = arith.constant dense<0.000000e+00> : vector<128x32xf32>
    %194 = tpu.matmul %193, %192, %cst_161 {dimension_numbers = #tpu.dot_dimension_numbers<[1], [0], [0], [1], [0, 0, 1, 1], [], []>} : vector<128x2xbf16>, vector<2x32xbf16>, vector<128x32xf32> -> vector<128x32xf32>
    %195 = arith.addf %186, %194 : vector<128x32xf32>
    %c6_162 = arith.constant 6 : index
    %c0_163 = arith.constant 0 : index
    %c0_164 = arith.constant 0 : index
    %196 = vector.load %arg18[%c6_162, %c0_163, %c0_164] : memref<9x128x128xbf16, #tpu.memory_space<vmem>>, vector<1x128x128xbf16>
    %197 = vector.shape_cast %196 : vector<1x128x128xbf16> to vector<128x128xbf16>
    %198 = arith.truncf %142 : vector<128x2xf32> to vector<128x2xbf16>
    %cst_165 = arith.constant dense<0.000000e+00> : vector<128x2xf32>
    %199 = tpu.matmul %197, %198, %cst_165 {dimension_numbers = #tpu.dot_dimension_numbers<[1], [0], [0], [1], [0, 0, 1, 1], [], []>} : vector<128x128xbf16>, vector<128x2xbf16>, vector<128x2xf32> -> vector<128x2xf32>
    %c6_166 = arith.constant 6 : index
    %c0_167 = arith.constant 0 : index
    %c0_168 = arith.constant 0 : index
    %200 = vector.load %arg10[%c6_166, %c0_167, %c0_168] : memref<9x2x32xbf16, #tpu.memory_space<vmem>>, vector<1x2x32xbf16>
    %201 = vector.shape_cast %200 : vector<1x2x32xbf16> to vector<2x32xbf16>
    %202 = arith.truncf %199 : vector<128x2xf32> to vector<128x2xbf16>
    %cst_169 = arith.constant dense<0.000000e+00> : vector<128x32xf32>
    %203 = tpu.matmul %202, %201, %cst_169 {dimension_numbers = #tpu.dot_dimension_numbers<[1], [0], [0], [1], [0, 0, 1, 1], [], []>} : vector<128x2xbf16>, vector<2x32xbf16>, vector<128x32xf32> -> vector<128x32xf32>
    %204 = arith.addf %195, %203 : vector<128x32xf32>
    %c7_170 = arith.constant 7 : index
    %c0_171 = arith.constant 0 : index
    %c0_172 = arith.constant 0 : index
    %205 = vector.load %arg18[%c7_170, %c0_171, %c0_172] : memref<9x128x128xbf16, #tpu.memory_space<vmem>>, vector<1x128x128xbf16>
    %206 = vector.shape_cast %205 : vector<1x128x128xbf16> to vector<128x128xbf16>
    %207 = arith.truncf %142 : vector<128x2xf32> to vector<128x2xbf16>
    %cst_173 = arith.constant dense<0.000000e+00> : vector<128x2xf32>
    %208 = tpu.matmul %206, %207, %cst_173 {dimension_numbers = #tpu.dot_dimension_numbers<[1], [0], [0], [1], [0, 0, 1, 1], [], []>} : vector<128x128xbf16>, vector<128x2xbf16>, vector<128x2xf32> -> vector<128x2xf32>
    %c7_174 = arith.constant 7 : index
    %c0_175 = arith.constant 0 : index
    %c0_176 = arith.constant 0 : index
    %209 = vector.load %arg10[%c7_174, %c0_175, %c0_176] : memref<9x2x32xbf16, #tpu.memory_space<vmem>>, vector<1x2x32xbf16>
    %210 = vector.shape_cast %209 : vector<1x2x32xbf16> to vector<2x32xbf16>
    %211 = arith.truncf %208 : vector<128x2xf32> to vector<128x2xbf16>
    %cst_177 = arith.constant dense<0.000000e+00> : vector<128x32xf32>
    %212 = tpu.matmul %211, %210, %cst_177 {dimension_numbers = #tpu.dot_dimension_numbers<[1], [0], [0], [1], [0, 0, 1, 1], [], []>} : vector<128x2xbf16>, vector<2x32xbf16>, vector<128x32xf32> -> vector<128x32xf32>
    %213 = arith.addf %204, %212 : vector<128x32xf32>
    %c8_178 = arith.constant 8 : index
    %c0_179 = arith.constant 0 : index
    %c0_180 = arith.constant 0 : index
    %214 = vector.load %arg18[%c8_178, %c0_179, %c0_180] : memref<9x128x128xbf16, #tpu.memory_space<vmem>>, vector<1x128x128xbf16>
    %215 = vector.shape_cast %214 : vector<1x128x128xbf16> to vector<128x128xbf16>
    %216 = arith.truncf %142 : vector<128x2xf32> to vector<128x2xbf16>
    %cst_181 = arith.constant dense<0.000000e+00> : vector<128x2xf32>
    %217 = tpu.matmul %215, %216, %cst_181 {dimension_numbers = #tpu.dot_dimension_numbers<[1], [0], [0], [1], [0, 0, 1, 1], [], []>} : vector<128x128xbf16>, vector<128x2xbf16>, vector<128x2xf32> -> vector<128x2xf32>
    %c8_182 = arith.constant 8 : index
    %c0_183 = arith.constant 0 : index
    %c0_184 = arith.constant 0 : index
    %218 = vector.load %arg10[%c8_182, %c0_183, %c0_184] : memref<9x2x32xbf16, #tpu.memory_space<vmem>>, vector<1x2x32xbf16>
    %219 = vector.shape_cast %218 : vector<1x2x32xbf16> to vector<2x32xbf16>
    %220 = arith.truncf %217 : vector<128x2xf32> to vector<128x2xbf16>
    %cst_185 = arith.constant dense<0.000000e+00> : vector<128x32xf32>
    %221 = tpu.matmul %220, %219, %cst_185 {dimension_numbers = #tpu.dot_dimension_numbers<[1], [0], [0], [1], [0, 0, 1, 1], [], []>} : vector<128x2xbf16>, vector<2x32xbf16>, vector<128x32xf32> -> vector<128x32xf32>
    %222 = arith.addf %213, %221 : vector<128x32xf32>
    %c0_186 = arith.constant 0 : index
    %c0_187 = arith.constant 0 : index
    %223 = vector.load %arg11[%c0_186, %c0_187] : memref<1x32xf32, #tpu.memory_space<vmem>>, vector<1x32xf32>
    %224 = vector.broadcast %223 : vector<1x32xf32> to vector<128x32xf32>
    %225 = arith.addf %222, %224 : vector<128x32xf32>
    %cst_188 = arith.constant 0.000000e+00 : f32
    %226 = vector.broadcast %cst_188 : f32 to vector<128x32xf32>
    %227 = arith.maximumf %225, %226 : vector<128x32xf32>
    %c0_189 = arith.constant 0 : index
    %c0_190 = arith.constant 0 : index
    %228 = vector.load %arg12[%c0_189, %c0_190] : memref<1x32xf32, #tpu.memory_space<vmem>>, vector<1x32xf32>
    %229 = vector.broadcast %228 : vector<1x32xf32> to vector<128x32xf32>
    %230 = arith.mulf %227, %229 : vector<128x32xf32>
    %cst_191 = arith.constant dense<0.000000e+00> : vector<128xf32>
    %231 = vector.multi_reduction <add>, %230, %cst_191 [1] : vector<128x32xf32> to vector<128xf32>
    %232 = vector.shape_cast %231 : vector<128xf32> to vector<128x1xf32>
    %c0_192 = arith.constant 0 : index
    %c0_193 = arith.constant 0 : index
    %233 = vector.load %arg13[%c0_192, %c0_193] : memref<1x1xf32, #tpu.memory_space<vmem>>, vector<1x1xf32>
    %234 = vector.broadcast %233 : vector<1x1xf32> to vector<128x1xf32>
    %235 = arith.addf %232, %234 : vector<128x1xf32>
    %cst_194 = arith.constant 5.000000e-01 : f32
    %236 = vector.broadcast %cst_194 : f32 to vector<128x1xf32>
    %237 = arith.mulf %236, %235 : vector<128x1xf32>
    %238 = math.tanh %237 : vector<128x1xf32>
    %cst_195 = arith.constant 1.000000e+00 : f32
    %239 = vector.broadcast %cst_195 : f32 to vector<128x1xf32>
    %240 = arith.addf %238, %239 : vector<128x1xf32>
    %cst_196 = arith.constant 5.000000e-01 : f32
    %241 = vector.broadcast %cst_196 : f32 to vector<128x1xf32>
    %242 = arith.mulf %241, %240 : vector<128x1xf32>
    %c0_197 = arith.constant 0 : index
    %c0_198 = arith.constant 0 : index
    %243 = vector.load %arg20[%c0_197, %c0_198] : memref<128x14xf32, #tpu.memory_space<vmem>>, vector<128x14xf32>
    %244 = vector.broadcast %242 : vector<128x1xf32> to vector<128x14xf32>
    %245 = arith.mulf %244, %243 : vector<128x14xf32>
    %c0_199 = arith.constant 0 : index
    %c0_200 = arith.constant 0 : index
    %246 = vector.load %arg19[%c0_199, %c0_200] : memref<8x128xf32, #tpu.memory_space<vmem>>, vector<8x128xf32>
    %cst_201 = arith.constant dense<0.000000e+00> : vector<8x14xf32>
    %247 = tpu.matmul %246, %245, %cst_201 {dimension_numbers = #tpu.dot_dimension_numbers<[1], [0], [0], [1], [0, 0, 1, 1], [], []>} : vector<8x128xf32>, vector<128x14xf32>, vector<8x14xf32> -> vector<8x14xf32>
    %c0_202 = arith.constant 0 : index
    %c0_203 = arith.constant 0 : index
    %c0_204 = arith.constant 0 : index
    %248 = vector.load %arg21[%c0_202, %c0_203, %c0_204] : memref<1x8x14xf32, #tpu.memory_space<vmem>>, vector<1x8x14xf32>
    %249 = vector.shape_cast %248 : vector<1x8x14xf32> to vector<8x14xf32>
    %250 = vector.shape_cast %247 : vector<8x14xf32> to vector<1x8x14xf32>
    tpu.vector_store %arg21[%c0_202, %c0_203, %c0_204], %250 {strides = array<i32>} : memref<1x8x14xf32, #tpu.memory_space<vmem>>, vector<1x8x14xf32>,
    return
  }
  func.func @transform_0(%arg0: i32) -> (i32, i32, i32) {
    %c0_i32 = arith.constant 0 : i32
    %c0_i32_0 = arith.constant 0 : i32
    %c0_i32_1 = arith.constant 0 : i32
    return %arg0, %c0_i32, %c0_i32_0 : i32, i32, i32
  }
  func.func @transform_1(%arg0: i32) -> (i32, i32) {
    %c0_i32 = arith.constant 0 : i32
    %c0_i32_0 = arith.constant 0 : i32
    %c0_i32_1 = arith.constant 0 : i32
    return %c0_i32, %c0_i32_0 : i32, i32
  }
  func.func @transform_2(%arg0: i32) -> (i32, i32) {
    %c0_i32 = arith.constant 0 : i32
    %c0_i32_0 = arith.constant 0 : i32
    %c0_i32_1 = arith.constant 0 : i32
    return %c0_i32, %c0_i32_0 : i32, i32
  }
  func.func @transform_3(%arg0: i32) -> (i32, i32, i32) {
    %c0_i32 = arith.constant 0 : i32
    %c0_i32_0 = arith.constant 0 : i32
    %c0_i32_1 = arith.constant 0 : i32
    %c0_i32_2 = arith.constant 0 : i32
    return %c0_i32, %c0_i32_0, %c0_i32_1 : i32, i32, i32
  }
  func.func @transform_4(%arg0: i32) -> (i32, i32) {
    %c0_i32 = arith.constant 0 : i32
    %c0_i32_0 = arith.constant 0 : i32
    %c0_i32_1 = arith.constant 0 : i32
    return %c0_i32, %c0_i32_0 : i32, i32
  }
  func.func @transform_5(%arg0: i32) -> (i32, i32, i32) {
    %c0_i32 = arith.constant 0 : i32
    %c0_i32_0 = arith.constant 0 : i32
    %c0_i32_1 = arith.constant 0 : i32
    %c0_i32_2 = arith.constant 0 : i32
    return %c0_i32, %c0_i32_0, %c0_i32_1 : i32, i32, i32
  }
  func.func @transform_6(%arg0: i32) -> (i32, i32) {
    %c0_i32 = arith.constant 0 : i32
    %c0_i32_0 = arith.constant 0 : i32
    %c0_i32_1 = arith.constant 0 : i32
    return %c0_i32, %c0_i32_0 : i32, i32
  }
  func.func @transform_7(%arg0: i32) -> (i32, i32) {
    %c0_i32 = arith.constant 0 : i32
    %c0_i32_0 = arith.constant 0 : i32
    %c0_i32_1 = arith.constant 0 : i32
    return %c0_i32, %c0_i32_0 : i32, i32
  }
  func.func @transform_8(%arg0: i32) -> (i32, i32) {
    %c0_i32 = arith.constant 0 : i32
    %c0_i32_0 = arith.constant 0 : i32
    %c0_i32_1 = arith.constant 0 : i32
    return %c0_i32, %c0_i32_0 : i32, i32
  }
  func.func @transform_9(%arg0: i32) -> (i32, i32, i32) {
    %c0_i32 = arith.constant 0 : i32
    %c0_i32_0 = arith.constant 0 : i32
    %c0_i32_1 = arith.constant 0 : i32
    %c0_i32_2 = arith.constant 0 : i32
    return %c0_i32, %c0_i32_0, %c0_i32_1 : i32, i32, i32
  }
  func.func @transform_10(%arg0: i32) -> (i32, i32) {
    %c0_i32 = arith.constant 0 : i32
    %c0_i32_0 = arith.constant 0 : i32
    %c0_i32_1 = arith.constant 0 : i32
    return %c0_i32, %c0_i32_0 : i32, i32
  }
  func.func @transform_11(%arg0: i32) -> (i32, i32) {
    %c0_i32 = arith.constant 0 : i32
    %c0_i32_0 = arith.constant 0 : i32
    %c0_i32_1 = arith.constant 0 : i32
    return %c0_i32, %c0_i32_0 : i32, i32
  }
  func.func @transform_12(%arg0: i32) -> (i32, i32) {
    %c0_i32 = arith.constant 0 : i32
    %c0_i32_0 = arith.constant 0 : i32
    %c0_i32_1 = arith.constant 0 : i32
    return %c0_i32, %c0_i32_0 : i32, i32
  }
  func.func @transform_13(%arg0: i32) -> (i32, i32) {
    %c0_i32 = arith.constant 0 : i32
    %c0_i32_0 = arith.constant 0 : i32
    %c0_i32_1 = arith.constant 0 : i32
    return %c0_i32, %c0_i32_0 : i32, i32
  }
  func.func @transform_14(%arg0: i32) -> (i32, i32) {
    %c0_i32 = arith.constant 0 : i32
    %c0_i32_0 = arith.constant 0 : i32
    %c0_i32_1 = arith.constant 0 : i32
    return %c0_i32, %c0_i32_0 : i32, i32
  }
  func.func @transform_15(%arg0: i32) -> (i32, i32) {
    %c0_i32 = arith.constant 0 : i32
    %c0_i32_0 = arith.constant 0 : i32
    %c0_i32_1 = arith.constant 0 : i32
    return %c0_i32, %c0_i32_0 : i32, i32
  }
  func.func @transform_16(%arg0: i32) -> (i32, i32) {
    %c0_i32 = arith.constant 0 : i32
    %c0_i32_0 = arith.constant 0 : i32
    %c0_i32_1 = arith.constant 0 : i32
    return %c0_i32, %c0_i32_0 : i32, i32
  }
  func.func @transform_17(%arg0: i32) -> (i32, i32, i32) {
    %c0_i32 = arith.constant 0 : i32
    %c0_i32_0 = arith.constant 0 : i32
    %c0_i32_1 = arith.constant 0 : i32
    %c0_i32_2 = arith.constant 0 : i32
    return %c0_i32, %c0_i32_0, %c0_i32_1 : i32, i32, i32
  }
  func.func @transform_18(%arg0: i32) -> (i32, i32) {
    %c0_i32 = arith.constant 0 : i32
    %c0_i32_0 = arith.constant 0 : i32
    %c0_i32_1 = arith.constant 0 : i32
    return %c0_i32, %c0_i32_0 : i32, i32
  }
  func.func @transform_19(%arg0: i32) -> (i32, i32) {
    %c0_i32 = arith.constant 0 : i32
    %c0_i32_0 = arith.constant 0 : i32
    %c0_i32_1 = arith.constant 0 : i32
    return %c0_i32, %c0_i32_0 : i32, i32
  }
  func.func @transform_20(%arg0: i32) -> (i32, i32, i32) {
    %c0_i32 = arith.constant 0 : i32
    %c0_i32_0 = arith.constant 0 : i32
    %c0_i32_1 = arith.constant 0 : i32
    return %arg0, %c0_i32, %c0_i32_0 : i32, i32, i32
  }
}

</mosaic_0001>

<llo_original>
// kernel: l2_reflect_head_forward.1
$region0: #{l2_reflect_head_forward.1}
  #allocation0 [shape = 'u32[]', space=smem, size = 0x4, offset = 0x4, fixed_abs, tag = 'smem constant byte address 0x4 - core index']
  #allocation1 [shape = 'u32[144,128]{1,0:T(1,128)}', space=vmem, size = 0x12000, scoped, tag = 'internal scratch']
  #allocation2 [shape = 'f32[1,1]{1,0:T(1,128)S(1)}', space=vmem, size = 0x200, scoped, tag = 'scoped memory for l2_reflect_head_forward.1']
  %s0 = inlined_call_operand.vmem [shape: bf16[2,64,16], index: 0, kind: input, shape index: {}]
  %s1 = inlined_call_operand.vmem [shape: bf16[16,2], index: 1, kind: input, shape index: {}]
  %s2 = inlined_call_operand.hbm [shape: f32[1,2], index: 2, kind: input, shape index: {}]
  %s3 = inlined_call_operand.vmem [shape: bf16[4,2,2], index: 3, kind: input, shape index: {}]
  %s4 = inlined_call_operand.hbm [shape: f32[1,2], index: 4, kind: input, shape index: {}]
  %s5 = inlined_call_operand.vmem [shape: bf16[9,2,32], index: 5, kind: input, shape index: {}]
  %s6 = inlined_call_operand.vmem [shape: f32[1,32], index: 6, kind: input, shape index: {}]
  %s7 = inlined_call_operand.vmem [shape: bf16[32,2], index: 7, kind: input, shape index: {}]
  %s8 = inlined_call_operand.hbm [shape: f32[1,2], index: 8, kind: input, shape index: {}]
  %s9 = inlined_call_operand.vmem [shape: bf16[9,2,32], index: 9, kind: input, shape index: {}]
  %s10 = inlined_call_operand.vmem [shape: f32[1,32], index: 10, kind: input, shape index: {}]
  %s11 = inlined_call_operand.hbm [shape: f32[1,32], index: 11, kind: input, shape index: {}]
  %s12 = inlined_call_operand.<no memory space> [shape: f32[1,1], index: 12, kind: input, shape index: {}]
  %s13 = inlined_call_operand.vmem [shape: bf16[64,64], index: 13, kind: input, shape index: {}]
  %s14 = inlined_call_operand.vmem [shape: bf16[64,64], index: 14, kind: input, shape index: {}]
  %s15 = inlined_call_operand.vmem [shape: bf16[128,64], index: 15, kind: input, shape index: {}]
  %s16 = inlined_call_operand.vmem [shape: bf16[128,64], index: 16, kind: input, shape index: {}]
  %s17 = inlined_call_operand.hbm [shape: bf16[9,128,128], index: 17, kind: input, shape index: {}]
  %s18 = inlined_call_operand.hbm [shape: f32[8,128], index: 18, kind: input, shape index: {}]
  %s19 = inlined_call_operand.vmem [shape: f32[128,14], index: 19, kind: input, shape index: {}]
  %s20 = inlined_call_operand.hbm [shape: f32[2,8,14], index: 20, kind: output, shape index: {}]
  %s21 = sld [smem:[#allocation0]]
  $region137: #{l2_reflect_head_forward.1} parent=0
    _
  %s23 = ssub.s32 1, %s21
  %s24 = scalar_select 0, %s23, %s21
  %v25 = vstv %s12
  %26 = vst [vmem:[#allocation2] sm:$0x1] %v25
  $region1: #{l2_reflect_head_forward.1} parent=0
    #allocation3 [shape = 'u8[512]{0}', space=vmem, size = 0x400, scoped, tag = 'input window, operand 2, single buffered']
    #allocation4 [shape = 's32[2]{0}', space=sflag, size = 0x8, scoped, tag = 'scoped memory for l2_reflect_head_forward.1']
    #allocation5 [shape = 's32[2]{0}', space=sflag, size = 0x8, scoped, tag = 'scoped memory for l2_reflect_head_forward.1']
    #allocation6 [shape = 'u8[512]{0}', space=vmem, size = 0x400, scoped, tag = 'input window, operand 4, single buffered']
    #allocation7 [shape = 's32[1]{0}', space=sflag, size = 0x4, scoped, tag = 'scoped memory for l2_reflect_head_forward.1']
    #allocation8 [shape = 'u8[512]{0}', space=vmem, size = 0x400, scoped, tag = 'input window, operand 8, single buffered']
    #allocation9 [shape = 'u8[512]{0}', space=vmem, size = 0x400, scoped, tag = 'input window, operand 11, single buffered']
    #allocation10 [shape = 's32[1]{0}', space=sflag, size = 0x4, scoped, tag = 'scoped memory for l2_reflect_head_forward.1']
    #allocation11 [shape = 'u8[294912]{0}', space=vmem, size = 0x48000, scoped, tag = 'input window, operand 17, single buffered']
    #allocation12 [shape = 'u8[4096]{0}', space=vmem, size = 0x1000, scoped, tag = 'input window, operand 18, single buffered']
    #allocation13 [shape = 's32[1]{0}', space=sflag, size = 0x4, scoped, tag = 'scoped memory for l2_reflect_head_forward.1']
    #allocation14 [shape = 'u8[8192]{0}', space=vmem, size = 0x2000, scoped, tag = 'output window, operand 0']
    %27 = vsyncpa [#allocation4], 0
    %28 = vsyncpa [#allocation7], 0
    %29 = vsyncpa [#allocation10], 0
    %30 = vsyncpa [#allocation13], 0
    %31 = vsyncpa [#allocation5], 0
    %s32 = scalar_lea.sflag [#allocation5], 1
    %33 = vsyncpa %s32, 0
    loop: start=0, step=1, limit=4
    $region2: #{l2_reflect_head_forward.1} parent=1 // loop_pre_header
      _
    $region3: #{l2_reflect_head_forward.1} parent=1 // loop_header
      %s35 = sphi 0, %s39
      %p36 = scmp.ge.s32.totalorder %s35, 4
      %s45 = sphi 0, %s47
      %s48 = sphi 0, %s45
      %s49 = sphi 0, %s48
      %s65 = sphi 0, %s49
      %s69 = sphi 0, %s69
      %s71 = sphi 0, %s69
      %s72 = sphi 0, %s71
      %s86 = sphi 0, %s72
      %s90 = sphi 0, %s90
      %s92 = sphi 0, %s90
      %s93 = sphi 0, %s92
      %s107 = sphi 0, %s93
      %s111 = sphi 0, %s111
      %s113 = sphi 0, %s111
      %s114 = sphi 0, %s113
      %s128 = sphi 0, %s114
      %s132 = sphi 0, %s132
      %s134 = sphi 0, %s132
      %s135 = sphi 0, %s134
      %s149 = sphi 0, %s135
      %s153 = sphi 0, %s153
      %s155 = sphi 0, %s153
      %s156 = sphi 0, %s155
      %s170 = sphi 0, %s156
      %s174 = sphi 0, %s174
      %s176 = sphi 0, %s174
      %s177 = sphi 0, %s176
      %s191 = sphi 0, %s177
      %s195 = sphi 0, %s195
      %s197 = sphi 0, %s195
      %s198 = sphi 0, %s197
      %s212 = sphi 0, %s198
      %s216 = sphi 0, %s216
      %s218 = sphi 0, %s216
      %s219 = sphi 0, %s218
      %s233 = sphi 0, %s219
      %s237 = sphi 0, %s237
      %s239 = sphi 0, %s237
      %s240 = sphi 0, %s239
      %s254 = sphi 0, %s240
      %s258 = sphi 0, %s258
      %s260 = sphi 0, %s258
      %s261 = sphi 0, %s260
      %s275 = sphi 0, %s261
      %s279 = sphi 0, %s279
      %s281 = sphi 0, %s279
      %s282 = sphi 0, %s281
      %s296 = sphi 0, %s282
      %s300 = sphi 0, %s300
      %s302 = sphi 0, %s300
      %s303 = sphi 0, %s302
      %s317 = sphi 0, %s303
      %s321 = sphi 0, %s321
      %s323 = sphi 0, %s321
      %s324 = sphi 0, %s323
      %s338 = sphi 0, %s324
      %s342 = sphi 0, %s342
      %s344 = sphi 0, %s342
      %s345 = sphi 0, %s344
      %s359 = sphi 0, %s345
      %s363 = sphi 0, %s363
      %s365 = sphi 0, %s363
      %s366 = sphi 0, %s365
      %s380 = sphi 0, %s366
      %s384 = sphi 0, %s384
      %s386 = sphi 0, %s384
      %s387 = sphi 0, %s386
      %s401 = sphi 0, %s387
      %s405 = sphi 0, %s405
      %s407 = sphi 0, %s405
      %s408 = sphi 0, %s407
      %s422 = sphi 0, %s408
      %s426 = sphi 0, %s426
      %s428 = sphi 0, %s426
      %s429 = sphi 0, %s428
      %s443 = sphi 0, %s429
      %s447 = sphi 0, %s447
      %s449 = sphi 0, %s447
      %s450 = sphi 0, %s449
      %s464 = sphi 0, %s450
      %s470 = sphi 0, %s472
      %s473 = sphi 0, %s470
      %s474 = sphi 0, %s473
      %s490 = sphi 0, %s474
    $region4: #{l2_reflect_head_forward.1} parent=1 // loop_header_branch
      %38 = sbr.rel (%p36) target = $region8
    $region5: #{l2_reflect_head_forward.1} parent=1 // loop_body
      %s40 = ssub.s32 %s35, 1
      %s41 = ssub.s32 %s35, 2
      %s42 = sadd.s32 %s35, 1
      %s43 = ssub.s32 %s35, %s42
      %p44 = scmp.eq.s32.totalorder %s43, 0
      %s46 = sadd.s32 %s45, 1
      %s47 = scalar_select %p44, %s45, %s46
      %p50 = pneg %p44
      %p51 = scmp.eq.s32.totalorder %s35, 1
      %p52 = por %p50, %p51
      %p53 = scmp.ne.s32.totalorder %s45, %s48
      %p54 = scmp.eq.s32.totalorder %s35, 0
      %p55 = por %p53, %p54
      %p56 = scmp.ne.s32.totalorder %s45, %s48
      %p57 = scmp.eq.s32.totalorder %s40, 1
      %p58 = por %p56, %p57
      %p59 = scmp.ne.s32.totalorder %s48, %s49
      %p60 = scmp.eq.s32.totalorder %s40, 0
      %p61 = por %p59, %p60
      %p62 = scmp.ne.s32.totalorder %s48, %s49
      %p63 = scmp.eq.s32.totalorder %s41, 1
      %p64 = por %p62, %p63
      %p66 = scmp.ne.s32.totalorder %s49, %s65
      %p67 = scmp.eq.s32.totalorder %s41, 0
      %p68 = por %p66, %p67
      %s70 = sadd.s32 %s69, 1
      %p73 = scmp.eq.s32.totalorder %s35, 1
      %p74 = scmp.ne.s32.totalorder %s69, %s71
      %p75 = scmp.eq.s32.totalorder %s35, 0
      %p76 = por %p74, %p75
      %p77 = scmp.ne.s32.totalorder %s69, %s71
      %p78 = scmp.eq.s32.totalorder %s40, 1
      %p79 = por %p77, %p78
      %p80 = scmp.ne.s32.totalorder %s71, %s72
      %p81 = scmp.eq.s32.totalorder %s40, 0
      %p82 = por %p80, %p81
      %p83 = scmp.ne.s32.totalorder %s71, %s72
      %p84 = scmp.eq.s32.totalorder %s41, 1
      %p85 = por %p83, %p84
      %p87 = scmp.ne.s32.totalorder %s72, %s86
      %p88 = scmp.eq.s32.totalorder %s41, 0
      %p89 = por %p87, %p88
      %s91 = sadd.s32 %s90, 1
      %p94 = scmp.eq.s32.totalorder %s35, 1
      %p95 = scmp.ne.s32.totalorder %s90, %s92
      %p96 = scmp.eq.s32.totalorder %s35, 0
      %p97 = por %p95, %p96
      %p98 = scmp.ne.s32.totalorder %s90, %s92
      %p99 = scmp.eq.s32.totalorder %s40, 1
      %p100 = por %p98, %p99
      %p101 = scmp.ne.s32.totalorder %s92, %s93
      %p102 = scmp.eq.s32.totalorder %s40, 0
      %p103 = por %p101, %p102
      %p104 = scmp.ne.s32.totalorder %s92, %s93
      %p105 = scmp.eq.s32.totalorder %s41, 1
      %p106 = por %p104, %p105
      %p108 = scmp.ne.s32.totalorder %s93, %s107
      %p109 = scmp.eq.s32.totalorder %s41, 0
      %p110 = por %p108, %p109
      %s112 = sadd.s32 %s111, 1
      %p115 = scmp.eq.s32.totalorder %s35, 1
      %p116 = scmp.ne.s32.totalorder %s111, %s113
      %p117 = scmp.eq.s32.totalorder %s35, 0
      %p118 = por %p116, %p117
      %p119 = scmp.ne.s32.totalorder %s111, %s113
      %p120 = scmp.eq.s32.totalorder %s40, 1
      %p121 = por %p119, %p120
      %p122 = scmp.ne.s32.totalorder %s113, %s114
      %p123 = scmp.eq.s32.totalorder %s40, 0
      %p124 = por %p122, %p123
      %p125 = scmp.ne.s32.totalorder %s113, %s114
      %p126 = scmp.eq.s32.totalorder %s41, 1
      %p127 = por %p125, %p126
      %p129 = scmp.ne.s32.totalorder %s114, %s128
      %p130 = scmp.eq.s32.totalorder %s41, 0
      %p131 = por %p129, %p130
      %s133 = sadd.s32 %s132, 1
      %p136 = scmp.eq.s32.totalorder %s35, 1
      %p137 = scmp.ne.s32.totalorder %s132, %s134
      %p138 = scmp.eq.s32.totalorder %s35, 0
      %p139 = por %p137, %p138
      %p140 = scmp.ne.s32.totalorder %s132, %s134
      %p141 = scmp.eq.s32.totalorder %s40, 1
      %p142 = por %p140, %p141
      %p143 = scmp.ne.s32.totalorder %s134, %s135
      %p144 = scmp.eq.s32.totalorder %s40, 0
      %p145 = por %p143, %p144
      %p146 = scmp.ne.s32.totalorder %s134, %s135
      %p147 = scmp.eq.s32.totalorder %s41, 1
      %p148 = por %p146, %p147
      %p150 = scmp.ne.s32.totalorder %s135, %s149
      %p151 = scmp.eq.s32.totalorder %s41, 0
      %p152 = por %p150, %p151
      %s154 = sadd.s32 %s153, 1
      %p157 = scmp.eq.s32.totalorder %s35, 1
      %p158 = scmp.ne.s32.totalorder %s153, %s155
      %p159 = scmp.eq.s32.totalorder %s35, 0
      %p160 = por %p158, %p159
      %p161 = scmp.ne.s32.totalorder %s153, %s155
      %p162 = scmp.eq.s32.totalorder %s40, 1
      %p163 = por %p161, %p162
      %p164 = scmp.ne.s32.totalorder %s155, %s156
      %p165 = scmp.eq.s32.totalorder %s40, 0
      %p166 = por %p164, %p165
      %p167 = scmp.ne.s32.totalorder %s155, %s156
      %p168 = scmp.eq.s32.totalorder %s41, 1
      %p169 = por %p167, %p168
      %p171 = scmp.ne.s32.totalorder %s156, %s170
      %p172 = scmp.eq.s32.totalorder %s41, 0
      %p173 = por %p171, %p172
      %s175 = sadd.s32 %s174, 1
      %p178 = scmp.eq.s32.totalorder %s35, 1
      %p179 = scmp.ne.s32.totalorder %s174, %s176
      %p180 = scmp.eq.s32.totalorder %s35, 0
      %p181 = por %p179, %p180
      %p182 = scmp.ne.s32.totalorder %s174, %s176
      %p183 = scmp.eq.s32.totalorder %s40, 1
      %p184 = por %p182, %p183
      %p185 = scmp.ne.s32.totalorder %s176, %s177
      %p186 = scmp.eq.s32.totalorder %s40, 0
      %p187 = por %p185, %p186
      %p188 = scmp.ne.s32.totalorder %s176, %s177
      %p189 = scmp.eq.s32.totalorder %s41, 1
      %p190 = por %p188, %p189
      %p192 = scmp.ne.s32.totalorder %s177, %s191
      %p193 = scmp.eq.s32.totalorder %s41, 0
      %p194 = por %p192, %p193
      %s196 = sadd.s32 %s195, 1
      %p199 = scmp.eq.s32.totalorder %s35, 1
      %p200 = scmp.ne.s32.totalorder %s195, %s197
      %p201 = scmp.eq.s32.totalorder %s35, 0
      %p202 = por %p200, %p201
      %p203 = scmp.ne.s32.totalorder %s195, %s197
      %p204 = scmp.eq.s32.totalorder %s40, 1
      %p205 = por %p203, %p204
      %p206 = scmp.ne.s32.totalorder %s197, %s198
      %p207 = scmp.eq.s32.totalorder %s40, 0
      %p208 = por %p206, %p207
      %p209 = scmp.ne.s32.totalorder %s197, %s198
      %p210 = scmp.eq.s32.totalorder %s41, 1
      %p211 = por %p209, %p210
      %p213 = scmp.ne.s32.totalorder %s198, %s212
      %p214 = scmp.eq.s32.totalorder %s41, 0
      %p215 = por %p213, %p214
      %s217 = sadd.s32 %s216, 1
      %p220 = scmp.eq.s32.totalorder %s35, 1
      %p221 = scmp.ne.s32.totalorder %s216, %s218
      %p222 = scmp.eq.s32.totalorder %s35, 0
      %p223 = por %p221, %p222
      %p224 = scmp.ne.s32.totalorder %s216, %s218
      %p225 = scmp.eq.s32.totalorder %s40, 1
      %p226 = por %p224, %p225
      %p227 = scmp.ne.s32.totalorder %s218, %s219
      %p228 = scmp.eq.s32.totalorder %s40, 0
      %p229 = por %p227, %p228
      %p230 = scmp.ne.s32.totalorder %s218, %s219
      %p231 = scmp.eq.s32.totalorder %s41, 1
      %p232 = por %p230, %p231
      %p234 = scmp.ne.s32.totalorder %s219, %s233
      %p235 = scmp.eq.s32.totalorder %s41, 0
      %p236 = por %p234, %p235
      %s238 = sadd.s32 %s237, 1
      %p241 = scmp.eq.s32.totalorder %s35, 1
      %p242 = scmp.ne.s32.totalorder %s237, %s239
      %p243 = scmp.eq.s32.totalorder %s35, 0
      %p244 = por %p242, %p243
      %p245 = scmp.ne.s32.totalorder %s237, %s239
      %p246 = scmp.eq.s32.totalorder %s40, 1
      %p247 = por %p245, %p246
      %p248 = scmp.ne.s32.totalorder %s239, %s240
      %p249 = scmp.eq.s32.totalorder %s40, 0
      %p250 = por %p248, %p249
      %p251 = scmp.ne.s32.totalorder %s239, %s240
      %p252 = scmp.eq.s32.totalorder %s41, 1
      %p253 = por %p251, %p252
      %p255 = scmp.ne.s32.totalorder %s240, %s254
      %p256 = scmp.eq.s32.totalorder %s41, 0
      %p257 = por %p255, %p256
      %s259 = sadd.s32 %s258, 1
      %p262 = scmp.eq.s32.totalorder %s35, 1
      %p263 = scmp.ne.s32.totalorder %s258, %s260
      %p264 = scmp.eq.s32.totalorder %s35, 0
      %p265 = por %p263, %p264
      %p266 = scmp.ne.s32.totalorder %s258, %s260
      %p267 = scmp.eq.s32.totalorder %s40, 1
      %p268 = por %p266, %p267
      %p269 = scmp.ne.s32.totalorder %s260, %s261
      %p270 = scmp.eq.s32.totalorder %s40, 0
      %p271 = por %p269, %p270
      %p272 = scmp.ne.s32.totalorder %s260, %s261
      %p273 = scmp.eq.s32.totalorder %s41, 1
      %p274 = por %p272, %p273
      %p276 = scmp.ne.s32.totalorder %s261, %s275
      %p277 = scmp.eq.s32.totalorder %s41, 0
      %p278 = por %p276, %p277
      %s280 = sadd.s32 %s279, 1
      %p283 = scmp.eq.s32.totalorder %s35, 1
      %p284 = scmp.ne.s32.totalorder %s279, %s281
      %p285 = scmp.eq.s32.totalorder %s35, 0
      %p286 = por %p284, %p285
      %p287 = scmp.ne.s32.totalorder %s279, %s281
      %p288 = scmp.eq.s32.totalorder %s40, 1
      %p289 = por %p287, %p288
      %p290 = scmp.ne.s32.totalorder %s281, %s282
      %p291 = scmp.eq.s32.totalorder %s40, 0
      %p292 = por %p290, %p291
      %p293 = scmp.ne.s32.totalorder %s281, %s282
      %p294 = scmp.eq.s32.totalorder %s41, 1
      %p295 = por %p293, %p294
      %p297 = scmp.ne.s32.totalorder %s282, %s296
      %p298 = scmp.eq.s32.totalorder %s41, 0
      %p299 = por %p297, %p298
      %s301 = sadd.s32 %s300, 1
      %p304 = scmp.eq.s32.totalorder %s35, 1
      %p305 = scmp.ne.s32.totalorder %s300, %s302
      %p306 = scmp.eq.s32.totalorder %s35, 0
      %p307 = por %p305, %p306
      %p308 = scmp.ne.s32.totalorder %s300, %s302
      %p309 = scmp.eq.s32.totalorder %s40, 1
      %p310 = por %p308, %p309
      %p311 = scmp.ne.s32.totalorder %s302, %s303
      %p312 = scmp.eq.s32.totalorder %s40, 0
      %p313 = por %p311, %p312
      %p314 = scmp.ne.s32.totalorder %s302, %s303
      %p315 = scmp.eq.s32.totalorder %s41, 1
      %p316 = por %p314, %p315
      %p318 = scmp.ne.s32.totalorder %s303, %s317
      %p319 = scmp.eq.s32.totalorder %s41, 0
      %p320 = por %p318, %p319
      %s322 = sadd.s32 %s321, 1
      %p325 = scmp.eq.s32.totalorder %s35, 1
      %p326 = scmp.ne.s32.totalorder %s321, %s323
      %p327 = scmp.eq.s32.totalorder %s35, 0
      %p328 = por %p326, %p327
      %p329 = scmp.ne.s32.totalorder %s321, %s323
      %p330 = scmp.eq.s32.totalorder %s40, 1
      %p331 = por %p329, %p330
      %p332 = scmp.ne.s32.totalorder %s323, %s324
      %p333 = scmp.eq.s32.totalorder %s40, 0
      %p334 = por %p332, %p333
      %p335 = scmp.ne.s32.totalorder %s323, %s324
      %p336 = scmp.eq.s32.totalorder %s41, 1
      %p337 = por %p335, %p336
      %p339 = scmp.ne.s32.totalorder %s324, %s338
      %p340 = scmp.eq.s32.totalorder %s41, 0
      %p341 = por %p339, %p340
      %s343 = sadd.s32 %s342, 1
      %p346 = scmp.eq.s32.totalorder %s35, 1
      %p347 = scmp.ne.s32.totalorder %s342, %s344
      %p348 = scmp.eq.s32.totalorder %s35, 0
      %p349 = por %p347, %p348
      %p350 = scmp.ne.s32.totalorder %s342, %s344
      %p351 = scmp.eq.s32.totalorder %s40, 1
      %p352 = por %p350, %p351
      %p353 = scmp.ne.s32.totalorder %s344, %s345
      %p354 = scmp.eq.s32.totalorder %s40, 0
      %p355 = por %p353, %p354
      %p356 = scmp.ne.s32.totalorder %s344, %s345
      %p357 = scmp.eq.s32.totalorder %s41, 1
      %p358 = por %p356, %p357
      %p360 = scmp.ne.s32.totalorder %s345, %s359
      %p361 = scmp.eq.s32.totalorder %s41, 0
      %p362 = por %p360, %p361
      %s364 = sadd.s32 %s363, 1
      %p367 = scmp.eq.s32.totalorder %s35, 1
      %p368 = scmp.ne.s32.totalorder %s363, %s365
      %p369 = scmp.eq.s32.totalorder %s35, 0
      %p370 = por %p368, %p369
      %p371 = scmp.ne.s32.totalorder %s363, %s365
      %p372 = scmp.eq.s32.totalorder %s40, 1
      %p373 = por %p371, %p372
      %p374 = scmp.ne.s32.totalorder %s365, %s366
      %p375 = scmp.eq.s32.totalorder %s40, 0
      %p376 = por %p374, %p375
      %p377 = scmp.ne.s32.totalorder %s365, %s366
      %p378 = scmp.eq.s32.totalorder %s41, 1
      %p379 = por %p377, %p378
      %p381 = scmp.ne.s32.totalorder %s366, %s380
      %p382 = scmp.eq.s32.totalorder %s41, 0
      %p383 = por %p381, %p382
      %s385 = sadd.s32 %s384, 1
      %p388 = scmp.eq.s32.totalorder %s35, 1
      %p389 = scmp.ne.s32.totalorder %s384, %s386
      %p390 = scmp.eq.s32.totalorder %s35, 0
      %p391 = por %p389, %p390
      %p392 = scmp.ne.s32.totalorder %s384, %s386
      %p393 = scmp.eq.s32.totalorder %s40, 1
      %p394 = por %p392, %p393
      %p395 = scmp.ne.s32.totalorder %s386, %s387
      %p396 = scmp.eq.s32.totalorder %s40, 0
      %p397 = por %p395, %p396
      %p398 = scmp.ne.s32.totalorder %s386, %s387
      %p399 = scmp.eq.s32.totalorder %s41, 1
      %p400 = por %p398, %p399
      %p402 = scmp.ne.s32.totalorder %s387, %s401
      %p403 = scmp.eq.s32.totalorder %s41, 0
      %p404 = por %p402, %p403
      %s406 = sadd.s32 %s405, 1
      %p409 = scmp.eq.s32.totalorder %s35, 1
      %p410 = scmp.ne.s32.totalorder %s405, %s407
      %p411 = scmp.eq.s32.totalorder %s35, 0
      %p412 = por %p410, %p411
      %p413 = scmp.ne.s32.totalorder %s405, %s407
      %p414 = scmp.eq.s32.totalorder %s40, 1
      %p415 = por %p413, %p414
      %p416 = scmp.ne.s32.totalorder %s407, %s408
      %p417 = scmp.eq.s32.totalorder %s40, 0
      %p418 = por %p416, %p417
      %p419 = scmp.ne.s32.totalorder %s407, %s408
      %p420 = scmp.eq.s32.totalorder %s41, 1
      %p421 = por %p419, %p420
      %p423 = scmp.ne.s32.totalorder %s408, %s422
      %p424 = scmp.eq.s32.totalorder %s41, 0
      %p425 = por %p423, %p424
      %s427 = sadd.s32 %s426, 1
      %p430 = scmp.eq.s32.totalorder %s35, 1
      %p431 = scmp.ne.s32.totalorder %s426, %s428
      %p432 = scmp.eq.s32.totalorder %s35, 0
      %p433 = por %p431, %p432
      %p434 = scmp.ne.s32.totalorder %s426, %s428
      %p435 = scmp.eq.s32.totalorder %s40, 1
      %p436 = por %p434, %p435
      %p437 = scmp.ne.s32.totalorder %s428, %s429
      %p438 = scmp.eq.s32.totalorder %s40, 0
      %p439 = por %p437, %p438
      %p440 = scmp.ne.s32.totalorder %s428, %s429
      %p441 = scmp.eq.s32.totalorder %s41, 1
      %p442 = por %p440, %p441
      %p444 = scmp.ne.s32.totalorder %s429, %s443
      %p445 = scmp.eq.s32.totalorder %s41, 0
      %p446 = por %p444, %p445
      %s448 = sadd.s32 %s447, 1
      %p451 = scmp.eq.s32.totalorder %s35, 1
      %p452 = scmp.ne.s32.totalorder %s447, %s449
      %p453 = scmp.eq.s32.totalorder %s35, 0
      %p454 = por %p452, %p453
      %p455 = scmp.ne.s32.totalorder %s447, %s449
      %p456 = scmp.eq.s32.totalorder %s40, 1
      %p457 = por %p455, %p456
      %p458 = scmp.ne.s32.totalorder %s449, %s450
      %p459 = scmp.eq.s32.totalorder %s40, 0
      %p460 = por %p458, %p459
      %p461 = scmp.ne.s32.totalorder %s449, %s450
      %p462 = scmp.eq.s32.totalorder %s41, 1
      %p463 = por %p461, %p462
      %p465 = scmp.ne.s32.totalorder %s450, %s464
      %p466 = scmp.eq.s32.totalorder %s41, 0
      %p467 = por %p465, %p466
      %s468 = ssub.s32 %s35, %s42
      %p469 = scmp.eq.s32.totalorder %s468, 0
      %s471 = sadd.s32 %s470, 1
      %s472 = scalar_select %p469, %s470, %s471
      %p475 = pneg %p469
      %p476 = scmp.eq.s32.totalorder %s35, 1
      %p477 = por %p475, %p476
      %p478 = scmp.ne.s32.totalorder %s470, %s473
      %p479 = scmp.eq.s32.totalorder %s35, 0
      %p480 = por %p478, %p479
      %p481 = scmp.ne.s32.totalorder %s470, %s473
      %p482 = scmp.eq.s32.totalorder %s40, 1
      %p483 = por %p481, %p482
      %p484 = scmp.ne.s32.totalorder %s473, %s474
      %p485 = scmp.eq.s32.totalorder %s40, 0
      %p486 = por %p484, %p485
      %p487 = scmp.ne.s32.totalorder %s473, %s474
      %p488 = scmp.eq.s32.totalorder %s41, 1
      %p489 = por %p487, %p488
      %p491 = scmp.ne.s32.totalorder %s474, %s490
      %p492 = scmp.eq.s32.totalorder %s41, 0
      %p493 = por %p491, %p492
      %p494 = scmp.le.s32.totalorder 1, %s35
      %p495 = scmp.lt.s32.totalorder %s35, 3
      %p496 = pnand %p494, %p495
      %p497 = pneg %p496
      // Predicated region
      $region9: #{l2_reflect_head_forward.1} parent=5 // pred_check
        _
      $region10: #{l2_reflect_head_forward.1} parent=5 // pred_check_branch
        %499 = sbr.rel (%p496) target = $region12
      $region11: #{l2_reflect_head_forward.1} parent=5 // pred_region
        %s500 = ssub.s32 %s35, 1
        // Predicated region
        $region13: #{l2_reflect_head_forward.1} parent=11 // pred_check
          %p501 = pneg %p82
        $region14: #{l2_reflect_head_forward.1} parent=11 // pred_check_branch
          %503 = sbr.rel (%p501) target = $region16
        $region15: #{l2_reflect_head_forward.1} parent=11 // pred_region
          _
        $region16: #{l2_reflect_head_forward.1} parent=11 // pred_fallthru
          _
        // Predicated region
        $region17: #{l2_reflect_head_forward.1} parent=11 // pred_check
          %p504 = pneg %p103
        $region18: #{l2_reflect_head_forward.1} parent=11 // pred_check_branch
          %506 = sbr.rel (%p504) target = $region20
        $region19: #{l2_reflect_head_forward.1} parent=11 // pred_region
          %s508 = ssub.s32 16, 16
          %509 = vsyncadd [#allocation4], %s508
          %s511 = sshll.u32 [#allocation3], 4
          %s512 = int_to_ptr.vmem [resolvable:$true] %s511
          %514 = dma.hbm_to_vmem [thread:$0]  %s2, 16, %s512, [#allocation4]
        $region20: #{l2_reflect_head_forward.1} parent=11 // pred_fallthru
          _
        // Predicated region
        $region21: #{l2_reflect_head_forward.1} parent=11 // pred_check
          %p515 = pneg %p124
        $region22: #{l2_reflect_head_forward.1} parent=11 // pred_check_branch
          %517 = sbr.rel (%p515) target = $region24
        $region23: #{l2_reflect_head_forward.1} parent=11 // pred_region
          _
        $region24: #{l2_reflect_head_forward.1} parent=11 // pred_fallthru
          _
        // Predicated region
        $region25: #{l2_reflect_head_forward.1} parent=11 // pred_check
          %p518 = pneg %p145
        $region26: #{l2_reflect_head_forward.1} parent=11 // pred_check_branch
          %520 = sbr.rel (%p518) target = $region28
        $region27: #{l2_reflect_head_forward.1} parent=11 // pred_region
          %s522 = ssub.s32 16, 16
          %523 = vsyncadd [#allocation7], %s522
          %s525 = sshll.u32 [#allocation6], 4
          %s526 = int_to_ptr.vmem [resolvable:$true] %s525
          %528 = dma.hbm_to_vmem [thread:$0]  %s4, 16, %s526, [#allocation7]
        $region28: #{l2_reflect_head_forward.1} parent=11 // pred_fallthru
          _
        // Predicated region
        $region29: #{l2_reflect_head_forward.1} parent=11 // pred_check
          %p529 = pneg %p166
        $region30: #{l2_reflect_head_forward.1} parent=11 // pred_check_branch
          %531 = sbr.rel (%p529) target = $region32
        $region31: #{l2_reflect_head_forward.1} parent=11 // pred_region
          _
        $region32: #{l2_reflect_head_forward.1} parent=11 // pred_fallthru
          _
        // Predicated region
        $region33: #{l2_reflect_head_forward.1} parent=11 // pred_check
          %p532 = pneg %p187
        $region34: #{l2_reflect_head_forward.1} parent=11 // pred_check_branch
          %534 = sbr.rel (%p532) target = $region36
        $region35: #{l2_reflect_head_forward.1} parent=11 // pred_region
          _
        $region36: #{l2_reflect_head_forward.1} parent=11 // pred_fallthru
          _
        // Predicated region
        $region37: #{l2_reflect_head_forward.1} parent=11 // pred_check
          %p535 = pneg %p208
        $region38: #{l2_reflect_head_forward.1} parent=11 // pred_check_branch
          %537 = sbr.rel (%p535) target = $region40
        $region39: #{l2_reflect_head_forward.1} parent=11 // pred_region
          _
        $region40: #{l2_reflect_head_forward.1} parent=11 // pred_fallthru
          _
        // Predicated region
        $region41: #{l2_reflect_head_forward.1} parent=11 // pred_check
          %p538 = pneg %p229
        $region42: #{l2_reflect_head_forward.1} parent=11 // pred_check_branch
          %540 = sbr.rel (%p538) target = $region44
        $region43: #{l2_reflect_head_forward.1} parent=11 // pred_region
          %s542 = ssub.s32 16, 16
          %543 = vsyncadd [#allocation7], %s542
          %s545 = sshll.u32 [#allocation8], 4
          %s546 = int_to_ptr.vmem [resolvable:$true] %s545
          %548 = dma.hbm_to_vmem [thread:$0]  %s8, 16, %s546, [#allocation7]
        $region44: #{l2_reflect_head_forward.1} parent=11 // pred_fallthru
          _
        // Predicated region
        $region45: #{l2_reflect_head_forward.1} parent=11 // pred_check
          %p549 = pneg %p250
        $region46: #{l2_reflect_head_forward.1} parent=11 // pred_check_branch
          %551 = sbr.rel (%p549) target = $region48
        $region47: #{l2_reflect_head_forward.1} parent=11 // pred_region
          _
        $region48: #{l2_reflect_head_forward.1} parent=11 // pred_fallthru
          _
        // Predicated region
        $region49: #{l2_reflect_head_forward.1} parent=11 // pred_check
          %p552 = pneg %p271
        $region50: #{l2_reflect_head_forward.1} parent=11 // pred_check_branch
          %554 = sbr.rel (%p552) target = $region52
        $region51: #{l2_reflect_head_forward.1} parent=11 // pred_region
          _
        $region52: #{l2_reflect_head_forward.1} parent=11 // pred_fallthru
          _
        // Predicated region
        $region53: #{l2_reflect_head_forward.1} parent=11 // pred_check
          %p555 = pneg %p292
        $region54: #{l2_reflect_head_forward.1} parent=11 // pred_check_branch
          %557 = sbr.rel (%p555) target = $region56
        $region55: #{l2_reflect_head_forward.1} parent=11 // pred_region
          %s559 = ssub.s32 16, 16
          %560 = vsyncadd [#allocation10], %s559
          %s562 = sshll.u32 [#allocation9], 4
          %s563 = int_to_ptr.vmem [resolvable:$true] %s562
          %565 = dma.hbm_to_vmem [thread:$0]  %s11, 16, %s563, [#allocation10]
        $region56: #{l2_reflect_head_forward.1} parent=11 // pred_fallthru
          _
        // Predicated region
        $region57: #{l2_reflect_head_forward.1} parent=11 // pred_check
          %p566 = pneg %p313
        $region58: #{l2_reflect_head_forward.1} parent=11 // pred_check_branch
          %568 = sbr.rel (%p566) target = $region60
        $region59: #{l2_reflect_head_forward.1} parent=11 // pred_region
          _
        $region60: #{l2_reflect_head_forward.1} parent=11 // pred_fallthru
          _
        // Predicated region
        $region61: #{l2_reflect_head_forward.1} parent=11 // pred_check
          %p569 = pneg %p334
        $region62: #{l2_reflect_head_forward.1} parent=11 // pred_check_branch
          %571 = sbr.rel (%p569) target = $region64
        $region63: #{l2_reflect_head_forward.1} parent=11 // pred_region
          _
        $region64: #{l2_reflect_head_forward.1} parent=11 // pred_fallthru
          _
        // Predicated region
        $region65: #{l2_reflect_head_forward.1} parent=11 // pred_check
          %p572 = pneg %p355
        $region66: #{l2_reflect_head_forward.1} parent=11 // pred_check_branch
          %574 = sbr.rel (%p572) target = $region68
        $region67: #{l2_reflect_head_forward.1} parent=11 // pred_region
          _
        $region68: #{l2_reflect_head_forward.1} parent=11 // pred_fallthru
          _
        // Predicated region
        $region69: #{l2_reflect_head_forward.1} parent=11 // pred_check
          %p575 = pneg %p376
        $region70: #{l2_reflect_head_forward.1} parent=11 // pred_check_branch
          %577 = sbr.rel (%p575) target = $region72
        $region71: #{l2_reflect_head_forward.1} parent=11 // pred_region
          _
        $region72: #{l2_reflect_head_forward.1} parent=11 // pred_fallthru
          _
        // Predicated region
        $region73: #{l2_reflect_head_forward.1} parent=11 // pred_check
          %p578 = pneg %p397
        $region74: #{l2_reflect_head_forward.1} parent=11 // pred_check_branch
          %580 = sbr.rel (%p578) target = $region76
        $region75: #{l2_reflect_head_forward.1} parent=11 // pred_region
          _
        $region76: #{l2_reflect_head_forward.1} parent=11 // pred_fallthru
          _
        // Predicated region
        $region77: #{l2_reflect_head_forward.1} parent=11 // pred_check
          %p581 = pneg %p418
        $region78: #{l2_reflect_head_forward.1} parent=11 // pred_check_branch
          %583 = sbr.rel (%p581) target = $region80
        $region79: #{l2_reflect_head_forward.1} parent=11 // pred_region
          %s585 = ssub.s32 9216, 9216
          %586 = vsyncadd [#allocation10], %s585
          %s587 = sshll.u32 [#allocation11], 4
          %s588 = int_to_ptr.vmem [resolvable:$true] %s587
          %593 = dma.hbm_to_vmem [thread:$0]  %s17, 9216, %s588, [#allocation10], 64, 64, 4
        $region80: #{l2_reflect_head_forward.1} parent=11 // pred_fallthru
          _
        // Predicated region
        $region81: #{l2_reflect_head_forward.1} parent=11 // pred_check
          %p594 = pneg %p439
        $region82: #{l2_reflect_head_forward.1} parent=11 // pred_check_branch
          %596 = sbr.rel (%p594) target = $region84
        $region83: #{l2_reflect_head_forward.1} parent=11 // pred_region
          %s598 = ssub.s32 128, 128
          %599 = vsyncadd [#allocation13], %s598
          %s601 = sshll.u32 [#allocation12], 4
          %s602 = int_to_ptr.vmem [resolvable:$true] %s601
          %604 = dma.hbm_to_vmem [thread:$0]  %s18, 128, %s602, [#allocation13]
        $region84: #{l2_reflect_head_forward.1} parent=11 // pred_fallthru
          _
        // Predicated region
        $region85: #{l2_reflect_head_forward.1} parent=11 // pred_check
          %p605 = pneg %p460
        $region86: #{l2_reflect_head_forward.1} parent=11 // pred_check_branch
          %607 = sbr.rel (%p605) target = $region88
        $region87: #{l2_reflect_head_forward.1} parent=11 // pred_region
          _
        $region88: #{l2_reflect_head_forward.1} parent=11 // pred_fallthru
          _
      $region12: #{l2_reflect_head_forward.1} parent=5 // pred_fallthru
        _
      %p608 = scmp.lt.s32.totalorder %s35, 2
      // Predicated region
      $region89: #{l2_reflect_head_forward.1} parent=5 // pred_check
        %p609 = pneg %p608
      $region90: #{l2_reflect_head_forward.1} parent=5 // pred_check_branch
        %611 = sbr.rel (%p609) target = $region92
      $region91: #{l2_reflect_head_forward.1} parent=5 // pred_region
        // Predicated region
        $region93: #{l2_reflect_head_forward.1} parent=91 // pred_check
          %p612 = pneg %p55
        $region94: #{l2_reflect_head_forward.1} parent=91 // pred_check_branch
          %614 = sbr.rel (%p612) target = $region96
        $region95: #{l2_reflect_head_forward.1} parent=91 // pred_region
          %p615 = scmp.lt.s32.totalorder %s35, 1
          %s616 = scalar_select %p615, %s35, 1
          %s617 = smul.addr %s616, 8
          %s618 = smul.addr %s617, 4
          %s619 = scalar_lea.vmem %s0, %s618
        $region96: #{l2_reflect_head_forward.1} parent=91 // pred_fallthru
          _
      $region92: #{l2_reflect_head_forward.1} parent=5 // pred_fallthru
        _
      %p620 = scmp.le.s32.totalorder 1, %s35
      %p621 = scmp.lt.s32.totalorder %s35, 3
      %p622 = pnand %p620, %p621
      %p623 = pneg %p622
      // Predicated region
      $region97: #{l2_reflect_head_forward.1} parent=5 // pred_check
        _
      $region98: #{l2_reflect_head_forward.1} parent=5 // pred_check_branch
        %625 = sbr.rel (%p622) target = $region100
      $region99: #{l2_reflect_head_forward.1} parent=5 // pred_region
        %s626 = ssub.s32 %s35, 1
        // Predicated region
        $region101: #{l2_reflect_head_forward.1} parent=99 // pred_check
          %p627 = pneg %p103
        $region102: #{l2_reflect_head_forward.1} parent=99 // pred_check_branch
          %629 = sbr.rel (%p627) target = $region104
        $region103: #{l2_reflect_head_forward.1} parent=99 // pred_region
          %630 = dma.done [#allocation4], 16
        $region104: #{l2_reflect_head_forward.1} parent=99 // pred_fallthru
          _
        // Predicated region
        $region105: #{l2_reflect_head_forward.1} parent=99 // pred_check
          %p631 = pneg %p145
        $region106: #{l2_reflect_head_forward.1} parent=99 // pred_check_branch
          %633 = sbr.rel (%p631) target = $region108
        $region107: #{l2_reflect_head_forward.1} parent=99 // pred_region
          %634 = dma.done [#allocation7], 16
        $region108: #{l2_reflect_head_forward.1} parent=99 // pred_fallthru
          _
        // Predicated region
        $region109: #{l2_reflect_head_forward.1} parent=99 // pred_check
          %p635 = pneg %p229
        $region110: #{l2_reflect_head_forward.1} parent=99 // pred_check_branch
          %637 = sbr.rel (%p635) target = $region112
        $region111: #{l2_reflect_head_forward.1} parent=99 // pred_region
          %638 = dma.done [#allocation7], 16
        $region112: #{l2_reflect_head_forward.1} parent=99 // pred_fallthru
          _
        // Predicated region
        $region113: #{l2_reflect_head_forward.1} parent=99 // pred_check
          %p639 = pneg %p292
        $region114: #{l2_reflect_head_forward.1} parent=99 // pred_check_branch
          %641 = sbr.rel (%p639) target = $region116
        $region115: #{l2_reflect_head_forward.1} parent=99 // pred_region
          %642 = dma.done [#allocation10], 16
        $region116: #{l2_reflect_head_forward.1} parent=99 // pred_fallthru
          _
        // Predicated region
        $region117: #{l2_reflect_head_forward.1} parent=99 // pred_check
          %p643 = pneg %p418
        $region118: #{l2_reflect_head_forward.1} parent=99 // pred_check_branch
          %645 = sbr.rel (%p643) target = $region120
        $region119: #{l2_reflect_head_forward.1} parent=99 // pred_region
          %646 = dma.done [#allocation10], 9216
        $region120: #{l2_reflect_head_forward.1} parent=99 // pred_fallthru
          _
        // Predicated region
        $region121: #{l2_reflect_head_forward.1} parent=99 // pred_check
          %p647 = pneg %p439
        $region122: #{l2_reflect_head_forward.1} parent=99 // pred_check_branch
          %649 = sbr.rel (%p647) target = $region124
        $region123: #{l2_reflect_head_forward.1} parent=99 // pred_region
          %650 = dma.done [#allocation13], 128
        $region124: #{l2_reflect_head_forward.1} parent=99 // pred_fallthru
          _
        %p651 = scmp.lt.s32.totalorder %s40, 1
        %s652 = scalar_select %p651, %s40, 1
        %s653 = smul.addr %s652, 8
        %s654 = smul.addr %s653, 4
        %s655 = scalar_lea.vmem %s0, %s654
        %p656 = pneg %p61
        %p657 = pneg %p58
        %p658 = pneg %p82
        %p659 = pneg %p79
        %p660 = pneg %p103
        %p661 = pneg %p100
        %p662 = pneg %p124
        %p663 = pneg %p121
        %p664 = pneg %p145
        %p665 = pneg %p142
        %p666 = pneg %p166
        %p667 = pneg %p163
        %p668 = pneg %p187
        %p669 = pneg %p184
        %p670 = pneg %p208
        %p671 = pneg %p205
        %p672 = pneg %p229
        %p673 = pneg %p226
        %p674 = pneg %p250
        %p675 = pneg %p247
        %p676 = pneg %p271
        %p677 = pneg %p268
        %p678 = pneg %p292
        %p679 = pneg %p289
        %p680 = pneg %p313
        %p681 = pneg %p310
        %p682 = pneg %p334
        %p683 = pneg %p331
        %p684 = pneg %p355
        %p685 = pneg %p352
        %p686 = pneg %p376
        %p687 = pneg %p373
        %p688 = pneg %p397
        %p689 = pneg %p394
        %p690 = pneg %p418
        %p691 = pneg %p415
        %p692 = pneg %p439
        %p693 = pneg %p436
        %p694 = pneg %p460
        %p695 = pneg %p457
        %p696 = pneg %p486
        %p697 = pneg %p483
        %s698 = sand.u32 %s473, 1
        %s699 = scalar_lea.sflag [#allocation5], %s698
        %s700 = sand.u32 %s473, 1
        %s701 = smul.addr %s700, 8
        %s702 = scalar_lea.vmem [#allocation14], %s701
        %p703 = scmp.lt.s32.totalorder %s40, 1
        %s704 = scalar_select %p703, %s40, 1
        %s705 = smul.addr %s704, 8
        %s706 = smul.addr %s705, 4
        %s707 = scalar_lea.vmem %s0, %s706
        %v709 = vld [vmem:[%s707] sm:$0xf]
        %v710 = vld [vmem:[%s707 + $0x4] sm:$0xf]
        %v711 = vld [vmem:[%s707 + $0x8] sm:$0xf]
        %v712 = vld [vmem:[%s707 + $0xc] sm:$0xf]
        %v713 = vld [vmem:[%s707 + $0x10] sm:$0xf]
        %v714 = vld [vmem:[%s707 + $0x14] sm:$0xf]
        %v715 = vld [vmem:[%s707 + $0x18] sm:$0xf]
        %v716 = vld [vmem:[%s707 + $0x1c] sm:$0xf]
        %v717 = vld [vmem:[%s1] sm:$0xf]
        %v718 = vld [vmem:[%s1 + $0x4] sm:$0xf]
        %v719 = vld [vmem:[#allocation3] sm:$0x1]
        %v721 = vlaneseq
        %v722 = vshrl.u32 %v721, 7
        %v723 = vsub.s32 0, %v722
        %v724 = vrot.slane %v719, %v723
        %v734 = vunpack.c.l.b16 %v709
        %v735 = vunpack.c.l.b16 %v710
        %v736 = vunpack.c.l.b16 %v711
        %v737 = vunpack.c.l.b16 %v712
        %v738 = vunpack.c.l.b16 %v713
        %v739 = vunpack.c.l.b16 %v714
        %v740 = vunpack.c.l.b16 %v715
        %v741 = vunpack.c.l.b16 %v716
        %v742 = vpack.c.b16 %v735, %v734
        %v743 = vpack.c.b16 %v737, %v736
        %v744 = vpack.c.b16 %v739, %v738
        %v745 = vpack.c.b16 %v741, %v740
        %v748 = vunpack.c.l.b16 %v717
        %v749 = vunpack.c.l.b16 %v718
        %v750 = vpack.c.b16 %v749, %v748
        %vm752 = vcmask 130048
        %v754 = vsel %vm752, %v742, 0
        %v757 = vsel %vm752, %v743, 0
        %v760 = vsel %vm752, %v744, 0
        %v763 = vsel %vm752, %v745, 0
        %765 = vmatprep.subr.bf16.mxu0 0
        %766 = vmatpush1.bf16.msra.mxu0 %v750
        %767 = vmatprep.subr.bf16.mxu0 0
        %768 = vmatpush1.bf16.msra.mxu0 0
        %769 = vmatprep.subr.bf16.mxu0 0
        %770 = vmatpush1.bf16.msra.mxu0 0
        %771 = vmatprep.subr.bf16.mxu0 0
        %772 = vmatpush1.bf16.msra.mxu0 0
        %773 = vmatprep.subr.bf16.mxu0 0
        %774 = vmatpush1.bf16.msra.mxu0 0
        %775 = vmatprep.subr.bf16.mxu0 0
        %776 = vmatpush1.bf16.msra.mxu0 0
        %777 = vmatprep.subr.bf16.mxu0 0
        %778 = vmatpush1.bf16.msra.mxu0 0
        %779 = vmatprep.subr.bf16.mxu0 0
        %780 = vmatpush1.bf16.msra.mxu0 0
        %781 = vmatprep.subr.bf16.mxu0 0
        %782 = vmatpush1.bf16.msra.mxu0 0
        %783 = vmatprep.subr.bf16.mxu0 0
        %784 = vmatpush1.bf16.msra.mxu0 0
        %785 = vmatprep.subr.bf16.mxu0 0
        %786 = vmatpush1.bf16.msra.mxu0 0
        %787 = vmatprep.subr.bf16.mxu0 0
        %788 = vmatpush1.bf16.msra.mxu0 0
        %789 = vmatprep.subr.bf16.mxu0 0
        %790 = vmatpush1.bf16.msra.mxu0 0
        %791 = vmatprep.subr.bf16.mxu0 0
        %792 = vmatpush1.bf16.msra.mxu0 0
        %793 = vmatprep.subr.bf16.mxu0 0
        %794 = vmatpush1.bf16.msra.mxu0 0
        %795 = vmatprep.subr.bf16.mxu0 0
        %796 = vmatpush1.bf16.msra.mxu0 0
        %797 = vmatprep.mubr.bf16.mxu0 0
        %798 = vmatmul.mubr.bf16.gmra.mrb[0].mxu0 %v754
        %v799 = vpop.f32.mrb[0].mxu0
        %v800 = vadd.f32 %v724, %v799
        %v801 = vpop.f32.mrb[0].mxu0
        %v802 = vpop.f32.mrb[0].mxu0
        %v803 = vadd.f32 %v724, %v802
        %v804 = vpop.f32.mrb[0].mxu0
        %805 = vmatprep.mubr.bf16.mxu0 0
        %806 = vmatmul.mubr.bf16.gmra.mrb[0].mxu0 %v757
        %v807 = vpop.f32.mrb[0].mxu0
        %v808 = vadd.f32 %v724, %v807
        %v809 = vpop.f32.mrb[0].mxu0
        %v810 = vpop.f32.mrb[0].mxu0
        %v811 = vadd.f32 %v724, %v810
        %v812 = vpop.f32.mrb[0].mxu0
        %813 = vmatprep.mubr.bf16.mxu0 0
        %814 = vmatmul.mubr.bf16.gmra.mrb[0].mxu0 %v760
        %v815 = vpop.f32.mrb[0].mxu0
        %v816 = vadd.f32 %v724, %v815
        %v817 = vpop.f32.mrb[0].mxu0
        %v818 = vpop.f32.mrb[0].mxu0
        %v819 = vadd.f32 %v724, %v818
        %v820 = vpop.f32.mrb[0].mxu0
        %821 = vmatprep.mubr.bf16.mxu0 0
        %822 = vmatmul.mubr.bf16.gmra.mrb[0].mxu0 %v763
        %v823 = vpop.f32.mrb[0].mxu0
        %v824 = vadd.f32 %v724, %v823
        %v825 = vpop.f32.mrb[0].mxu0
        %v826 = vpop.f32.mrb[0].mxu0
        %v827 = vadd.f32 %v724, %v826
        %v828 = vpop.f32.mrb[0].mxu0
        %829 = vdwg.mxu0
        %v830 = vmax.f32 %v800, 0.0
        %v831 = vmax.f32 %v803, 0.0
        %v832 = vmax.f32 %v808, 0.0
        %v833 = vmax.f32 %v811, 0.0
        %v834 = vmax.f32 %v816, 0.0
        %v835 = vmax.f32 %v819, 0.0
        %v836 = vmax.f32 %v824, 0.0
        %v837 = vmax.f32 %v827, 0.0
        %v838 = vld [vmem:[%s13] sm:$0xf]
        %v839 = vld [vmem:[%s13 + $0x4] sm:$0xf]
        %v840 = vld [vmem:[%s13 + $0x8] sm:$0xf]
        %v841 = vld [vmem:[%s13 + $0xc] sm:$0xf]
        %v842 = vld [vmem:[%s13 + $0x10] sm:$0xf]
        %v843 = vld [vmem:[%s13 + $0x14] sm:$0xf]
        %v844 = vld [vmem:[%s13 + $0x18] sm:$0xf]
        %v845 = vld [vmem:[%s13 + $0x1c] sm:$0xf]
        %v846 = vpack.c.bf16 %v831, %v830
        %v847 = vpack.c.bf16 %v833, %v832
        %v848 = vpack.c.bf16 %v835, %v834
        %v849 = vpack.c.bf16 %v837, %v836
        %v858 = vunpack.c.l.b16 %v838
        %v859 = vunpack.c.l.b16 %v839
        %v860 = vunpack.c.l.b16 %v840
        %v861 = vunpack.c.l.b16 %v841
        %v862 = vunpack.c.l.b16 %v842
        %v863 = vunpack.c.l.b16 %v843
        %v864 = vunpack.c.l.b16 %v844
        %v865 = vunpack.c.l.b16 %v845
        %v866 = vpack.c.b16 %v859, %v858
        %v867 = vpack.c.b16 %v861, %v860
        %v868 = vpack.c.b16 %v863, %v862
        %v869 = vpack.c.b16 %v865, %v864
        %vm870 = vcmask 523264
        %v872 = vsel %vm870, %v866, 0
        %v875 = vsel %vm870, %v867, 0
        %v878 = vsel %vm870, %v868, 0
        %v881 = vsel %vm870, %v869, 0
        %883 = vmatprep.subr.bf16.mxu0 0
        %884 = vmatpush1.bf16.msra.mxu0 %v846
        %885 = vmatprep.subr.bf16.mxu0 0
        %886 = vmatpush1.bf16.msra.mxu0 %v847
        %887 = vmatprep.subr.bf16.mxu0 0
        %888 = vmatpush1.bf16.msra.mxu0 %v848
        %889 = vmatprep.subr.bf16.mxu0 0
        %890 = vmatpush1.bf16.msra.mxu0 %v849
        %891 = vmatprep.subr.bf16.mxu0 0
        %892 = vmatpush1.bf16.msra.mxu0 0
        %893 = vmatprep.subr.bf16.mxu0 0
        %894 = vmatpush1.bf16.msra.mxu0 0
        %895 = vmatprep.subr.bf16.mxu0 0
        %896 = vmatpush1.bf16.msra.mxu0 0
        %897 = vmatprep.subr.bf16.mxu0 0
        %898 = vmatpush1.bf16.msra.mxu0 0
        %899 = vmatprep.subr.bf16.mxu0 0
        %900 = vmatpush1.bf16.msra.mxu0 0
        %901 = vmatprep.subr.bf16.mxu0 0
        %902 = vmatpush1.bf16.msra.mxu0 0
        %903 = vmatprep.subr.bf16.mxu0 0
        %904 = vmatpush1.bf16.msra.mxu0 0
        %905 = vmatprep.subr.bf16.mxu0 0
        %906 = vmatpush1.bf16.msra.mxu0 0
        %907 = vmatprep.subr.bf16.mxu0 0
        %908 = vmatpush1.bf16.msra.mxu0 0
        %909 = vmatprep.subr.bf16.mxu0 0
        %910 = vmatpush1.bf16.msra.mxu0 0
        %911 = vmatprep.subr.bf16.mxu0 0
        %912 = vmatpush1.bf16.msra.mxu0 0
        %913 = vmatprep.subr.bf16.mxu0 0
        %914 = vmatpush1.bf16.msra.mxu0 0
        %915 = vmatprep.mubr.bf16.mxu0 0
        %916 = vmatmul.mubr.bf16.gmra.mrb[0].mxu0 %v872
        %v917 = vpop.f32.mrb[0].mxu0
        %v918 = vadd.f32 0.0, %v917
        %v919 = vpop.f32.mrb[0].mxu0
        %v920 = vpop.f32.mrb[0].mxu0
        %v921 = vadd.f32 0.0, %v920
        %v922 = vpop.f32.mrb[0].mxu0
        %923 = vmatprep.mubr.bf16.mxu0 0
        %924 = vmatmul.mubr.bf16.gmra.mrb[0].mxu0 %v875
        %v925 = vpop.f32.mrb[0].mxu0
        %v926 = vadd.f32 0.0, %v925
        %v927 = vpop.f32.mrb[0].mxu0
        %v928 = vpop.f32.mrb[0].mxu0
        %v929 = vadd.f32 0.0, %v928
        %v930 = vpop.f32.mrb[0].mxu0
        %931 = vmatprep.mubr.bf16.mxu0 0
        %932 = vmatmul.mubr.bf16.gmra.mrb[0].mxu0 %v878
        %v933 = vpop.f32.mrb[0].mxu0
        %v934 = vadd.f32 0.0, %v933
        %v935 = vpop.f32.mrb[0].mxu0
        %v936 = vpop.f32.mrb[0].mxu0
        %v937 = vadd.f32 0.0, %v936
        %v938 = vpop.f32.mrb[0].mxu0
        %939 = vmatprep.mubr.bf16.mxu0 0
        %940 = vmatmul.mubr.bf16.gmra.mrb[0].mxu0 %v881
        %v941 = vpop.f32.mrb[0].mxu0
        %v942 = vadd.f32 0.0, %v941
        %v943 = vpop.f32.mrb[0].mxu0
        %v944 = vpop.f32.mrb[0].mxu0
        %v945 = vadd.f32 0.0, %v944
        %v946 = vpop.f32.mrb[0].mxu0
        %947 = vdwg.mxu0
        %v948 = vld [vmem:[%s14] sm:$0xf]
        %v949 = vld [vmem:[%s14 + $0x4] sm:$0xf]
        %v950 = vld [vmem:[%s14 + $0x8] sm:$0xf]
        %v951 = vld [vmem:[%s14 + $0xc] sm:$0xf]
        %v952 = vld [vmem:[%s14 + $0x10] sm:$0xf]
        %v953 = vld [vmem:[%s14 + $0x14] sm:$0xf]
        %v954 = vld [vmem:[%s14 + $0x18] sm:$0xf]
        %v955 = vld [vmem:[%s14 + $0x1c] sm:$0xf]
        %v964 = vunpack.c.l.b16 %v948
        %v965 = vunpack.c.l.b16 %v949
        %v966 = vunpack.c.l.b16 %v950
        %v967 = vunpack.c.l.b16 %v951
        %v968 = vunpack.c.l.b16 %v952
        %v969 = vunpack.c.l.b16 %v953
        %v970 = vunpack.c.l.b16 %v954
        %v971 = vunpack.c.l.b16 %v955
        %v972 = vpack.c.b16 %v965, %v964
        %v973 = vpack.c.b16 %v967, %v966
        %v974 = vpack.c.b16 %v969, %v968
        %v975 = vpack.c.b16 %v971, %v970
        %v977 = vsel %vm870, %v972, 0
        %v980 = vsel %vm870, %v973, 0
        %v983 = vsel %vm870, %v974, 0
        %v986 = vsel %vm870, %v975, 0
        %988 = vmatprep.subr.bf16.mxu0 0
        %989 = vmatpush1.bf16.msra.mxu0 %v846
        %990 = vmatprep.subr.bf16.mxu0 0
        %991 = vmatpush1.bf16.msra.mxu0 %v847
        %992 = vmatprep.subr.bf16.mxu0 0
        %993 = vmatpush1.bf16.msra.mxu0 %v848
        %994 = vmatprep.subr.bf16.mxu0 0
        %995 = vmatpush1.bf16.msra.mxu0 %v849
        %996 = vmatprep.subr.bf16.mxu0 0
        %997 = vmatpush1.bf16.msra.mxu0 0
        %998 = vmatprep.subr.bf16.mxu0 0
        %999 = vmatpush1.bf16.msra.mxu0 0
        %1000 = vmatprep.subr.bf16.mxu0 0
        %1001 = vmatpush1.bf16.msra.mxu0 0
        %1002 = vmatprep.subr.bf16.mxu0 0
        %1003 = vmatpush1.bf16.msra.mxu0 0
        %1004 = vmatprep.subr.bf16.mxu0 0
        %1005 = vmatpush1.bf16.msra.mxu0 0
        %1006 = vmatprep.subr.bf16.mxu0 0
        %1007 = vmatpush1.bf16.msra.mxu0 0
        %1008 = vmatprep.subr.bf16.mxu0 0
        %1009 = vmatpush1.bf16.msra.mxu0 0
        %1010 = vmatprep.subr.bf16.mxu0 0
        %1011 = vmatpush1.bf16.msra.mxu0 0
        %1012 = vmatprep.subr.bf16.mxu0 0
        %1013 = vmatpush1.bf16.msra.mxu0 0
        %1014 = vmatprep.subr.bf16.mxu0 0
        %1015 = vmatpush1.bf16.msra.mxu0 0
        %1016 = vmatprep.subr.bf16.mxu0 0
        %1017 = vmatpush1.bf16.msra.mxu0 0
        %1018 = vmatprep.subr.bf16.mxu0 0
        %1019 = vmatpush1.bf16.msra.mxu0 0
        %1020 = vmatprep.mubr.bf16.mxu0 0
        %1021 = vmatmul.mubr.bf16.gmra.mrb[0].mxu0 %v977
        %v1022 = vpop.f32.mrb[0].mxu0
        %v1023 = vadd.f32 0.0, %v1022
        %v1024 = vpop.f32.mrb[0].mxu0
        %v1025 = vpop.f32.mrb[0].mxu0
        %v1026 = vadd.f32 0.0, %v1025
        %v1027 = vpop.f32.mrb[0].mxu0
        %1028 = vmatprep.mubr.bf16.mxu0 0
        %1029 = vmatmul.mubr.bf16.gmra.mrb[0].mxu0 %v980
        %v1030 = vpop.f32.mrb[0].mxu0
        %v1031 = vadd.f32 0.0, %v1030
        %v1032 = vpop.f32.mrb[0].mxu0
        %v1033 = vpop.f32.mrb[0].mxu0
        %v1034 = vadd.f32 0.0, %v1033
        %v1035 = vpop.f32.mrb[0].mxu0
        %1036 = vmatprep.mubr.bf16.mxu0 0
        %1037 = vmatmul.mubr.bf16.gmra.mrb[0].mxu0 %v983
        %v1038 = vpop.f32.mrb[0].mxu0
        %v1039 = vadd.f32 0.0, %v1038
        %v1040 = vpop.f32.mrb[0].mxu0
        %v1041 = vpop.f32.mrb[0].mxu0
        %v1042 = vadd.f32 0.0, %v1041
        %v1043 = vpop.f32.mrb[0].mxu0
        %1044 = vmatprep.mubr.bf16.mxu0 0
        %1045 = vmatmul.mubr.bf16.gmra.mrb[0].mxu0 %v986
        %v1046 = vpop.f32.mrb[0].mxu0
        %v1047 = vadd.f32 0.0, %v1046
        %v1048 = vpop.f32.mrb[0].mxu0
        %v1049 = vpop.f32.mrb[0].mxu0
        %v1050 = vadd.f32 0.0, %v1049
        %v1051 = vpop.f32.mrb[0].mxu0
        %1052 = vdwg.mxu0
        %s1053 = scalar_lea.vmem %s3, 1
        %v1054 = vld [vmem:[%s1053] sm:$0x1]
        %s1055 = scalar_lea.vmem %s3, 3
        %v1056 = vld [vmem:[%s1055] sm:$0x1]
        %v1057 = vpack.c.bf16 %v921, %v918
        %v1058 = vpack.c.bf16 %v929, %v926
        %v1059 = vpack.c.bf16 %v937, %v934
        %v1060 = vpack.c.bf16 %v945, %v942
        %vm1061 = vcmask 15360
        %v1063 = vsel %vm1061, %v1057, 0
        %v1066 = vsel %vm1061, %v1058, 0
        %v1069 = vsel %vm1061, %v1059, 0
        %v1072 = vsel %vm1061, %v1060, 0
        %vm1074 = vcmask 1040384
        %v1076 = vsel %vm1074, %v1056, 0
        %1078 = vmatprep.subr.bf16.mxu0 0
        %1079 = vmatpush1.bf16.msra.mxu0 %v1076
        %1080 = vmatprep.subr.bf16.mxu0 0
        %1081 = vmatpush1.bf16.msra.mxu0 0
        %1082 = vmatprep.subr.bf16.mxu0 0
        %1083 = vmatpush1.bf16.msra.mxu0 0
        %1084 = vmatprep.subr.bf16.mxu0 0
        %1085 = vmatpush1.bf16.msra.mxu0 0
        %1086 = vmatprep.subr.bf16.mxu0 0
        %1087 = vmatpush1.bf16.msra.mxu0 0
        %1088 = vmatprep.subr.bf16.mxu0 0
        %1089 = vmatpush1.bf16.msra.mxu0 0
        %1090 = vmatprep.subr.bf16.mxu0 0
        %1091 = vmatpush1.bf16.msra.mxu0 0
        %1092 = vmatprep.subr.bf16.mxu0 0
        %1093 = vmatpush1.bf16.msra.mxu0 0
        %1094 = vmatprep.subr.bf16.mxu0 0
        %1095 = vmatpush1.bf16.msra.mxu0 0
        %1096 = vmatprep.subr.bf16.mxu0 0
        %1097 = vmatpush1.bf16.msra.mxu0 0
        %1098 = vmatprep.subr.bf16.mxu0 0
        %1099 = vmatpush1.bf16.msra.mxu0 0
        %1100 = vmatprep.subr.bf16.mxu0 0
        %1101 = vmatpush1.bf16.msra.mxu0 0
        %1102 = vmatprep.subr.bf16.mxu0 0
        %1103 = vmatpush1.bf16.msra.mxu0 0
        %1104 = vmatprep.subr.bf16.mxu0 0
        %1105 = vmatpush1.bf16.msra.mxu0 0
        %1106 = vmatprep.subr.bf16.mxu0 0
        %1107 = vmatpush1.bf16.msra.mxu0 0
        %1108 = vmatprep.subr.bf16.mxu0 0
        %1109 = vmatpush1.bf16.msra.mxu0 0
        %1110 = vmatprep.mubr.bf16.mxu0 0
        %1111 = vmatmul.mubr.bf16.gmra.mrb[0].mxu0 %v1063
        %v1112 = vpop.f32.mrb[0].mxu0
        %v1113 = vadd.f32 0.0, %v1112
        %v1114 = vpop.f32.mrb[0].mxu0
        %v1115 = vpop.f32.mrb[0].mxu0
        %v1116 = vadd.f32 0.0, %v1115
        %v1117 = vpop.f32.mrb[0].mxu0
        %1118 = vmatprep.mubr.bf16.mxu0 0
        %1119 = vmatmul.mubr.bf16.gmra.mrb[0].mxu0 %v1066
        %v1120 = vpop.f32.mrb[0].mxu0
        %v1121 = vadd.f32 0.0, %v1120
        %v1122 = vpop.f32.mrb[0].mxu0
        %v1123 = vpop.f32.mrb[0].mxu0
        %v1124 = vadd.f32 0.0, %v1123
        %v1125 = vpop.f32.mrb[0].mxu0
        %1126 = vmatprep.mubr.bf16.mxu0 0
        %1127 = vmatmul.mubr.bf16.gmra.mrb[0].mxu0 %v1069
        %v1128 = vpop.f32.mrb[0].mxu0
        %v1129 = vadd.f32 0.0, %v1128
        %v1130 = vpop.f32.mrb[0].mxu0
        %v1131 = vpop.f32.mrb[0].mxu0
        %v1132 = vadd.f32 0.0, %v1131
        %v1133 = vpop.f32.mrb[0].mxu0
        %1134 = vmatprep.mubr.bf16.mxu0 0
        %1135 = vmatmul.mubr.bf16.gmra.mrb[0].mxu0 %v1072
        %v1136 = vpop.f32.mrb[0].mxu0
        %v1137 = vadd.f32 0.0, %v1136
        %v1138 = vpop.f32.mrb[0].mxu0
        %v1139 = vpop.f32.mrb[0].mxu0
        %v1140 = vadd.f32 0.0, %v1139
        %v1141 = vpop.f32.mrb[0].mxu0
        %1142 = vdwg.mxu0
        %v1144 = vsel %vm1061, %v846, 0
        %v1147 = vsel %vm1061, %v847, 0
        %v1150 = vsel %vm1061, %v848, 0
        %v1153 = vsel %vm1061, %v849, 0
        %v1156 = vsel %vm1074, %v1054, 0
        %1158 = vmatprep.subr.bf16.mxu0 0
        %1159 = vmatpush1.bf16.msra.mxu0 %v1156
        %1160 = vmatprep.subr.bf16.mxu0 0
        %1161 = vmatpush1.bf16.msra.mxu0 0
        %1162 = vmatprep.subr.bf16.mxu0 0
        %1163 = vmatpush1.bf16.msra.mxu0 0
        %1164 = vmatprep.subr.bf16.mxu0 0
        %1165 = vmatpush1.bf16.msra.mxu0 0
        %1166 = vmatprep.subr.bf16.mxu0 0
        %1167 = vmatpush1.bf16.msra.mxu0 0
        %1168 = vmatprep.subr.bf16.mxu0 0
        %1169 = vmatpush1.bf16.msra.mxu0 0
        %1170 = vmatprep.subr.bf16.mxu0 0
        %1171 = vmatpush1.bf16.msra.mxu0 0
        %1172 = vmatprep.subr.bf16.mxu0 0
        %1173 = vmatpush1.bf16.msra.mxu0 0
        %1174 = vmatprep.subr.bf16.mxu0 0
        %1175 = vmatpush1.bf16.msra.mxu0 0
        %1176 = vmatprep.subr.bf16.mxu0 0
        %1177 = vmatpush1.bf16.msra.mxu0 0
        %1178 = vmatprep.subr.bf16.mxu0 0
        %1179 = vmatpush1.bf16.msra.mxu0 0
        %1180 = vmatprep.subr.bf16.mxu0 0
        %1181 = vmatpush1.bf16.msra.mxu0 0
        %1182 = vmatprep.subr.bf16.mxu0 0
        %1183 = vmatpush1.bf16.msra.mxu0 0
        %1184 = vmatprep.subr.bf16.mxu0 0
        %1185 = vmatpush1.bf16.msra.mxu0 0
        %1186 = vmatprep.subr.bf16.mxu0 0
        %1187 = vmatpush1.bf16.msra.mxu0 0
        %1188 = vmatprep.subr.bf16.mxu0 0
        %1189 = vmatpush1.bf16.msra.mxu0 0
        %1190 = vmatprep.mubr.bf16.mxu0 0
        %1191 = vmatmul.mubr.bf16.gmra.mrb[0].mxu0 %v1144
        %v1192 = vpop.f32.mrb[0].mxu0
        %v1193 = vadd.f32 %v1113, %v1192
        %v1194 = vpop.f32.mrb[0].mxu0
        %v1195 = vpop.f32.mrb[0].mxu0
        %v1196 = vadd.f32 %v1116, %v1195
        %v1197 = vpop.f32.mrb[0].mxu0
        %1198 = vmatprep.mubr.bf16.mxu0 0
        %1199 = vmatmul.mubr.bf16.gmra.mrb[0].mxu0 %v1147
        %v1200 = vpop.f32.mrb[0].mxu0
        %v1201 = vadd.f32 %v1121, %v1200
        %v1202 = vpop.f32.mrb[0].mxu0
        %v1203 = vpop.f32.mrb[0].mxu0
        %v1204 = vadd.f32 %v1124, %v1203
        %v1205 = vpop.f32.mrb[0].mxu0
        %1206 = vmatprep.mubr.bf16.mxu0 0
        %1207 = vmatmul.mubr.bf16.gmra.mrb[0].mxu0 %v1150
        %v1208 = vpop.f32.mrb[0].mxu0
        %v1209 = vadd.f32 %v1129, %v1208
        %v1210 = vpop.f32.mrb[0].mxu0
        %v1211 = vpop.f32.mrb[0].mxu0
        %v1212 = vadd.f32 %v1132, %v1211
        %v1213 = vpop.f32.mrb[0].mxu0
        %1214 = vmatprep.mubr.bf16.mxu0 0
        %1215 = vmatmul.mubr.bf16.gmra.mrb[0].mxu0 %v1153
        %v1216 = vpop.f32.mrb[0].mxu0
        %v1217 = vadd.f32 %v1137, %v1216
        %v1218 = vpop.f32.mrb[0].mxu0
        %v1219 = vpop.f32.mrb[0].mxu0
        %v1220 = vadd.f32 %v1140, %v1219
        %v1221 = vpop.f32.mrb[0].mxu0
        %1222 = vdwg.mxu0
        %v1223 = vld [vmem:[#allocation6] sm:$0x1]
        %v1225 = vlaneseq
        %v1226 = vshrl.u32 %v1225, 7
        %v1227 = vsub.s32 0, %v1226
        %v1228 = vrot.slane %v1223, %v1227
        %v1230 = vadd.f32 %v1193, %v1228
        %v1231 = vadd.f32 %v1196, %v1228
        %v1232 = vadd.f32 %v1201, %v1228
        %v1233 = vadd.f32 %v1204, %v1228
        %v1234 = vadd.f32 %v1209, %v1228
        %v1235 = vadd.f32 %v1212, %v1228
        %v1236 = vadd.f32 %v1217, %v1228
        %v1237 = vadd.f32 %v1220, %v1228
        %v1238 = vmax.f32 %v1230, 0.0
        %v1239 = vmax.f32 %v1231, 0.0
        %v1240 = vmax.f32 %v1232, 0.0
        %v1241 = vmax.f32 %v1233, 0.0
        %v1242 = vmax.f32 %v1234, 0.0
        %v1243 = vmax.f32 %v1235, 0.0
        %v1244 = vmax.f32 %v1236, 0.0
        %v1245 = vmax.f32 %v1237, 0.0
        %v1246 = vld [vmem:[%s3] sm:$0x1]
        %v1247 = vpack.c.bf16 %v1026, %v1023
        %v1248 = vpack.c.bf16 %v1034, %v1031
        %v1249 = vpack.c.bf16 %v1042, %v1039
        %v1250 = vpack.c.bf16 %v1050, %v1047
        %s1251 = scalar_lea.vmem %s3, 2
        %v1252 = vld [vmem:[%s1251] sm:$0x1]
        %v1254 = vsel %vm1074, %v1252, 0
        %1256 = vmatprep.subr.bf16.mxu0 0
        %1257 = vmatpush1.bf16.msra.mxu0 %v1254
        %1258 = vmatprep.subr.bf16.mxu0 0
        %1259 = vmatpush1.bf16.msra.mxu0 0
        %1260 = vmatprep.subr.bf16.mxu0 0
        %1261 = vmatpush1.bf16.msra.mxu0 0
        %1262 = vmatprep.subr.bf16.mxu0 0
        %1263 = vmatpush1.bf16.msra.mxu0 0
        %1264 = vmatprep.subr.bf16.mxu0 0
        %1265 = vmatpush1.bf16.msra.mxu0 0
        %1266 = vmatprep.subr.bf16.mxu0 0
        %1267 = vmatpush1.bf16.msra.mxu0 0
        %1268 = vmatprep.subr.bf16.mxu0 0
        %1269 = vmatpush1.bf16.msra.mxu0 0
        %1270 = vmatprep.subr.bf16.mxu0 0
        %1271 = vmatpush1.bf16.msra.mxu0 0
        %1272 = vmatprep.subr.bf16.mxu0 0
        %1273 = vmatpush1.bf16.msra.mxu0 0
        %1274 = vmatprep.subr.bf16.mxu0 0
        %1275 = vmatpush1.bf16.msra.mxu0 0
        %1276 = vmatprep.subr.bf16.mxu0 0
        %1277 = vmatpush1.bf16.msra.mxu0 0
        %1278 = vmatprep.subr.bf16.mxu0 0
        %1279 = vmatpush1.bf16.msra.mxu0 0
        %1280 = vmatprep.subr.bf16.mxu0 0
        %1281 = vmatpush1.bf16.msra.mxu0 0
        %1282 = vmatprep.subr.bf16.mxu0 0
        %1283 = vmatpush1.bf16.msra.mxu0 0
        %1284 = vmatprep.subr.bf16.mxu0 0
        %1285 = vmatpush1.bf16.msra.mxu0 0
        %1286 = vmatprep.subr.bf16.mxu0 0
        %1287 = vmatpush1.bf16.msra.mxu0 0
        %1288 = vmatprep.mubr.bf16.mxu0 0
        %1289 = vmatmul.mubr.bf16.gmra.mrb[0].mxu0 %v1144
        %v1290 = vpop.f32.mrb[0].mxu0
        %v1291 = vadd.f32 0.0, %v1290
        %v1292 = vpop.f32.mrb[0].mxu0
        %v1293 = vpop.f32.mrb[0].mxu0
        %v1294 = vadd.f32 0.0, %v1293
        %v1295 = vpop.f32.mrb[0].mxu0
        %1296 = vmatprep.mubr.bf16.mxu0 0
        %1297 = vmatmul.mubr.bf16.gmra.mrb[0].mxu0 %v1147
        %v1298 = vpop.f32.mrb[0].mxu0
        %v1299 = vadd.f32 0.0, %v1298
        %v1300 = vpop.f32.mrb[0].mxu0
        %v1301 = vpop.f32.mrb[0].mxu0
        %v1302 = vadd.f32 0.0, %v1301
        %v1303 = vpop.f32.mrb[0].mxu0
        %1304 = vmatprep.mubr.bf16.mxu0 0
        %1305 = vmatmul.mubr.bf16.gmra.mrb[0].mxu0 %v1150
        %v1306 = vpop.f32.mrb[0].mxu0
        %v1307 = vadd.f32 0.0, %v1306
        %v1308 = vpop.f32.mrb[0].mxu0
        %v1309 = vpop.f32.mrb[0].mxu0
        %v1310 = vadd.f32 0.0, %v1309
        %v1311 = vpop.f32.mrb[0].mxu0
        %1312 = vmatprep.mubr.bf16.mxu0 0
        %1313 = vmatmul.mubr.bf16.gmra.mrb[0].mxu0 %v1153
        %v1314 = vpop.f32.mrb[0].mxu0
        %v1315 = vadd.f32 0.0, %v1314
        %v1316 = vpop.f32.mrb[0].mxu0
        %v1317 = vpop.f32.mrb[0].mxu0
        %v1318 = vadd.f32 0.0, %v1317
        %v1319 = vpop.f32.mrb[0].mxu0
        %1320 = vdwg.mxu0
        %v1322 = vsel %vm1061, %v1247, 0
        %v1325 = vsel %vm1061, %v1248, 0
        %v1328 = vsel %vm1061, %v1249, 0
        %v1331 = vsel %vm1061, %v1250, 0
        %v1334 = vsel %vm1074, %v1246, 0
        %1336 = vmatprep.subr.bf16.mxu0 0
        %1337 = vmatpush1.bf16.msra.mxu0 %v1334
        %1338 = vmatprep.subr.bf16.mxu0 0
        %1339 = vmatpush1.bf16.msra.mxu0 0
        %1340 = vmatprep.subr.bf16.mxu0 0
        %1341 = vmatpush1.bf16.msra.mxu0 0
        %1342 = vmatprep.subr.bf16.mxu0 0
        %1343 = vmatpush1.bf16.msra.mxu0 0
        %1344 = vmatprep.subr.bf16.mxu0 0
        %1345 = vmatpush1.bf16.msra.mxu0 0
        %1346 = vmatprep.subr.bf16.mxu0 0
        %1347 = vmatpush1.bf16.msra.mxu0 0
        %1348 = vmatprep.subr.bf16.mxu0 0
        %1349 = vmatpush1.bf16.msra.mxu0 0
        %1350 = vmatprep.subr.bf16.mxu0 0
        %1351 = vmatpush1.bf16.msra.mxu0 0
        %1352 = vmatprep.subr.bf16.mxu0 0
        %1353 = vmatpush1.bf16.msra.mxu0 0
        %1354 = vmatprep.subr.bf16.mxu0 0
        %1355 = vmatpush1.bf16.msra.mxu0 0
        %1356 = vmatprep.subr.bf16.mxu0 0
        %1357 = vmatpush1.bf16.msra.mxu0 0
        %1358 = vmatprep.subr.bf16.mxu0 0
        %1359 = vmatpush1.bf16.msra.mxu0 0
        %1360 = vmatprep.subr.bf16.mxu0 0
        %1361 = vmatpush1.bf16.msra.mxu0 0
        %1362 = vmatprep.subr.bf16.mxu0 0
        %1363 = vmatpush1.bf16.msra.mxu0 0
        %1364 = vmatprep.subr.bf16.mxu0 0
        %1365 = vmatpush1.bf16.msra.mxu0 0
        %1366 = vmatprep.subr.bf16.mxu0 0
        %1367 = vmatpush1.bf16.msra.mxu0 0
        %1368 = vmatprep.mubr.bf16.mxu0 0
        %1369 = vmatmul.mubr.bf16.gmra.mrb[0].mxu0 %v1322
        %v1370 = vpop.f32.mrb[0].mxu0
        %v1371 = vadd.f32 %v1291, %v1370
        %v1372 = vpop.f32.mrb[0].mxu0
        %v1373 = vpop.f32.mrb[0].mxu0
        %v1374 = vadd.f32 %v1294, %v1373
        %v1375 = vpop.f32.mrb[0].mxu0
        %1376 = vmatprep.mubr.bf16.mxu0 0
        %1377 = vmatmul.mubr.bf16.gmra.mrb[0].mxu0 %v1325
        %v1378 = vpop.f32.mrb[0].mxu0
        %v1379 = vadd.f32 %v1299, %v1378
        %v1380 = vpop.f32.mrb[0].mxu0
        %v1381 = vpop.f32.mrb[0].mxu0
        %v1382 = vadd.f32 %v1302, %v1381
        %v1383 = vpop.f32.mrb[0].mxu0
        %1384 = vmatprep.mubr.bf16.mxu0 0
        %1385 = vmatmul.mubr.bf16.gmra.mrb[0].mxu0 %v1328
        %v1386 = vpop.f32.mrb[0].mxu0
        %v1387 = vadd.f32 %v1307, %v1386
        %v1388 = vpop.f32.mrb[0].mxu0
        %v1389 = vpop.f32.mrb[0].mxu0
        %v1390 = vadd.f32 %v1310, %v1389
        %v1391 = vpop.f32.mrb[0].mxu0
        %1392 = vmatprep.mubr.bf16.mxu0 0
        %1393 = vmatmul.mubr.bf16.gmra.mrb[0].mxu0 %v1331
        %v1394 = vpop.f32.mrb[0].mxu0
        %v1395 = vadd.f32 %v1315, %v1394
        %v1396 = vpop.f32.mrb[0].mxu0
        %v1397 = vpop.f32.mrb[0].mxu0
        %v1398 = vadd.f32 %v1318, %v1397
        %v1399 = vpop.f32.mrb[0].mxu0
        %1400 = vdwg.mxu0
        %v1401 = vadd.f32 %v1371, %v1228
        %v1402 = vadd.f32 %v1374, %v1228
        %v1403 = vadd.f32 %v1379, %v1228
        %v1404 = vadd.f32 %v1382, %v1228
        %v1405 = vadd.f32 %v1387, %v1228
        %v1406 = vadd.f32 %v1390, %v1228
        %v1407 = vadd.f32 %v1395, %v1228
        %v1408 = vadd.f32 %v1398, %v1228
        %v1409 = vmax.f32 %v1401, 0.0
        %v1410 = vmax.f32 %v1402, 0.0
        %v1411 = vmax.f32 %v1403, 0.0
        %v1412 = vmax.f32 %v1404, 0.0
        %v1413 = vmax.f32 %v1405, 0.0
        %v1414 = vmax.f32 %v1406, 0.0
        %v1415 = vmax.f32 %v1407, 0.0
        %v1416 = vmax.f32 %v1408, 0.0
        %v1417 = vld [vmem:[%s15] sm:$0xf]
        %v1418 = vld [vmem:[%s15 + $0x4] sm:$0xf]
        %v1419 = vld [vmem:[%s15 + $0x8] sm:$0xf]
        %v1420 = vld [vmem:[%s15 + $0xc] sm:$0xf]
        %v1421 = vld [vmem:[%s15 + $0x10] sm:$0xf]
        %v1422 = vld [vmem:[%s15 + $0x14] sm:$0xf]
        %v1423 = vld [vmem:[%s15 + $0x18] sm:$0xf]
        %v1424 = vld [vmem:[%s15 + $0x1c] sm:$0xf]
        %v1425 = vld [vmem:[%s15 + $0x20] sm:$0xf]
        %v1426 = vld [vmem:[%s15 + $0x24] sm:$0xf]
        %v1427 = vld [vmem:[%s15 + $0x28] sm:$0xf]
        %v1428 = vld [vmem:[%s15 + $0x2c] sm:$0xf]
        %v1429 = vld [vmem:[%s15 + $0x30] sm:$0xf]
        %v1430 = vld [vmem:[%s15 + $0x34] sm:$0xf]
        %v1431 = vld [vmem:[%s15 + $0x38] sm:$0xf]
        %v1432 = vld [vmem:[%s15 + $0x3c] sm:$0xf]
        %v1433 = vpack.c.bf16 %v1239, %v1238
        %v1434 = vpack.c.bf16 %v1241, %v1240
        %v1435 = vpack.c.bf16 %v1243, %v1242
        %v1436 = vpack.c.bf16 %v1245, %v1244
        %v1437 = vld [vmem:[%s16] sm:$0xf]
        %v1438 = vld [vmem:[%s16 + $0x4] sm:$0xf]
        %v1439 = vld [vmem:[%s16 + $0x8] sm:$0xf]
        %v1440 = vld [vmem:[%s16 + $0xc] sm:$0xf]
        %v1441 = vld [vmem:[%s16 + $0x10] sm:$0xf]
        %v1442 = vld [vmem:[%s16 + $0x14] sm:$0xf]
        %v1443 = vld [vmem:[%s16 + $0x18] sm:$0xf]
        %v1444 = vld [vmem:[%s16 + $0x1c] sm:$0xf]
        %v1445 = vld [vmem:[%s16 + $0x20] sm:$0xf]
        %v1446 = vld [vmem:[%s16 + $0x24] sm:$0xf]
        %v1447 = vld [vmem:[%s16 + $0x28] sm:$0xf]
        %v1448 = vld [vmem:[%s16 + $0x2c] sm:$0xf]
        %v1449 = vld [vmem:[%s16 + $0x30] sm:$0xf]
        %v1450 = vld [vmem:[%s16 + $0x34] sm:$0xf]
        %v1451 = vld [vmem:[%s16 + $0x38] sm:$0xf]
        %v1452 = vld [vmem:[%s16 + $0x3c] sm:$0xf]
        %v1453 = vpack.c.bf16 %v1410, %v1409
        %v1454 = vpack.c.bf16 %v1412, %v1411
        %v1455 = vpack.c.bf16 %v1414, %v1413
        %v1456 = vpack.c.bf16 %v1416, %v1415
        %v1473 = vunpack.c.l.b16 %v1437
        %v1474 = vunpack.c.l.b16 %v1438
        %v1475 = vunpack.c.l.b16 %v1439
        %v1476 = vunpack.c.l.b16 %v1440
        %v1477 = vunpack.c.l.b16 %v1441
        %v1478 = vunpack.c.l.b16 %v1442
        %v1479 = vunpack.c.l.b16 %v1443
        %v1480 = vunpack.c.l.b16 %v1444
        %v1481 = vunpack.c.l.b16 %v1445
        %v1482 = vunpack.c.l.b16 %v1446
        %v1483 = vunpack.c.l.b16 %v1447
        %v1484 = vunpack.c.l.b16 %v1448
        %v1485 = vunpack.c.l.b16 %v1449
        %v1486 = vunpack.c.l.b16 %v1450
        %v1487 = vunpack.c.l.b16 %v1451
        %v1488 = vunpack.c.l.b16 %v1452
        %v1489 = vpack.c.b16 %v1474, %v1473
        %v1490 = vpack.c.b16 %v1476, %v1475
        %v1491 = vpack.c.b16 %v1478, %v1477
        %v1492 = vpack.c.b16 %v1480, %v1479
        %v1493 = vpack.c.b16 %v1482, %v1481
        %v1494 = vpack.c.b16 %v1484, %v1483
        %v1495 = vpack.c.b16 %v1486, %v1485
        %v1496 = vpack.c.b16 %v1488, %v1487
        %v1498 = vsel %vm870, %v1489, 0
        %v1501 = vsel %vm870, %v1490, 0
        %v1504 = vsel %vm870, %v1491, 0
        %v1507 = vsel %vm870, %v1492, 0
        %v1510 = vsel %vm870, %v1493, 0
        %v1513 = vsel %vm870, %v1494, 0
        %v1516 = vsel %vm870, %v1495, 0
        %v1519 = vsel %vm870, %v1496, 0
        %1521 = vmatprep.subr.bf16.mxu0 0
        %1522 = vmatpush1.bf16.msra.mxu0 %v1453
        %1523 = vmatprep.subr.bf16.mxu0 0
        %1524 = vmatpush1.bf16.msra.mxu0 %v1454
        %1525 = vmatprep.subr.bf16.mxu0 0
        %1526 = vmatpush1.bf16.msra.mxu0 %v1455
        %1527 = vmatprep.subr.bf16.mxu0 0
        %1528 = vmatpush1.bf16.msra.mxu0 %v1456
        %1529 = vmatprep.subr.bf16.mxu0 0
        %1530 = vmatpush1.bf16.msra.mxu0 0
        %1531 = vmatprep.subr.bf16.mxu0 0
        %1532 = vmatpush1.bf16.msra.mxu0 0
        %1533 = vmatprep.subr.bf16.mxu0 0
        %1534 = vmatpush1.bf16.msra.mxu0 0
        %1535 = vmatprep.subr.bf16.mxu0 0
        %1536 = vmatpush1.bf16.msra.mxu0 0
        %1537 = vmatprep.subr.bf16.mxu0 0
        %1538 = vmatpush1.bf16.msra.mxu0 0
        %1539 = vmatprep.subr.bf16.mxu0 0
        %1540 = vmatpush1.bf16.msra.mxu0 0
        %1541 = vmatprep.subr.bf16.mxu0 0
        %1542 = vmatpush1.bf16.msra.mxu0 0
        %1543 = vmatprep.subr.bf16.mxu0 0
        %1544 = vmatpush1.bf16.msra.mxu0 0
        %1545 = vmatprep.subr.bf16.mxu0 0
        %1546 = vmatpush1.bf16.msra.mxu0 0
        %1547 = vmatprep.subr.bf16.mxu0 0
        %1548 = vmatpush1.bf16.msra.mxu0 0
        %1549 = vmatprep.subr.bf16.mxu0 0
        %1550 = vmatpush1.bf16.msra.mxu0 0
        %1551 = vmatprep.subr.bf16.mxu0 0
        %1552 = vmatpush1.bf16.msra.mxu0 0
        %1553 = vmatprep.mubr.bf16.mxu0 0
        %1554 = vmatmul.mubr.bf16.gmra.mrb[0].mxu0 %v1498
        %v1555 = vpop.f32.mrb[0].mxu0
        %v1556 = vadd.f32 0.0, %v1555
        %v1557 = vpop.f32.mrb[0].mxu0
        %v1558 = vpop.f32.mrb[0].mxu0
        %v1559 = vadd.f32 0.0, %v1558
        %v1560 = vpop.f32.mrb[0].mxu0
        %1561 = vmatprep.mubr.bf16.mxu0 0
        %1562 = vmatmul.mubr.bf16.gmra.mrb[0].mxu0 %v1501
        %v1563 = vpop.f32.mrb[0].mxu0
        %v1564 = vadd.f32 0.0, %v1563
        %v1565 = vpop.f32.mrb[0].mxu0
        %v1566 = vpop.f32.mrb[0].mxu0
        %v1567 = vadd.f32 0.0, %v1566
        %v1568 = vpop.f32.mrb[0].mxu0
        %1569 = vmatprep.mubr.bf16.mxu0 0
        %1570 = vmatmul.mubr.bf16.gmra.mrb[0].mxu0 %v1504
        %v1571 = vpop.f32.mrb[0].mxu0
        %v1572 = vadd.f32 0.0, %v1571
        %v1573 = vpop.f32.mrb[0].mxu0
        %v1574 = vpop.f32.mrb[0].mxu0
        %v1575 = vadd.f32 0.0, %v1574
        %v1576 = vpop.f32.mrb[0].mxu0
        %1577 = vmatprep.mubr.bf16.mxu0 0
        %1578 = vmatmul.mubr.bf16.gmra.mrb[0].mxu0 %v1507
        %v1579 = vpop.f32.mrb[0].mxu0
        %v1580 = vadd.f32 0.0, %v1579
        %v1581 = vpop.f32.mrb[0].mxu0
        %v1582 = vpop.f32.mrb[0].mxu0
        %v1583 = vadd.f32 0.0, %v1582
        %v1584 = vpop.f32.mrb[0].mxu0
        %1585 = vmatprep.mubr.bf16.mxu0 0
        %1586 = vmatmul.mubr.bf16.gmra.mrb[0].mxu0 %v1510
        %v1587 = vpop.f32.mrb[0].mxu0
        %v1588 = vadd.f32 0.0, %v1587
        %v1589 = vpop.f32.mrb[0].mxu0
        %v1590 = vpop.f32.mrb[0].mxu0
        %v1591 = vadd.f32 0.0, %v1590
        %v1592 = vpop.f32.mrb[0].mxu0
        %1593 = vmatprep.mubr.bf16.mxu0 0
        %1594 = vmatmul.mubr.bf16.gmra.mrb[0].mxu0 %v1513
        %v1595 = vpop.f32.mrb[0].mxu0
        %v1596 = vadd.f32 0.0, %v1595
        %v1597 = vpop.f32.mrb[0].mxu0
        %v1598 = vpop.f32.mrb[0].mxu0
        %v1599 = vadd.f32 0.0, %v1598
        %v1600 = vpop.f32.mrb[0].mxu0
        %1601 = vmatprep.mubr.bf16.mxu0 0
        %1602 = vmatmul.mubr.bf16.gmra.mrb[0].mxu0 %v1516
        %v1603 = vpop.f32.mrb[0].mxu0
        %v1604 = vadd.f32 0.0, %v1603
        %v1605 = vpop.f32.mrb[0].mxu0
        %v1606 = vpop.f32.mrb[0].mxu0
        %v1607 = vadd.f32 0.0, %v1606
        %v1608 = vpop.f32.mrb[0].mxu0
        %1609 = vmatprep.mubr.bf16.mxu0 0
        %1610 = vmatmul.mubr.bf16.gmra.mrb[0].mxu0 %v1519
        %v1611 = vpop.f32.mrb[0].mxu0
        %v1612 = vadd.f32 0.0, %v1611
        %v1613 = vpop.f32.mrb[0].mxu0
        %v1614 = vpop.f32.mrb[0].mxu0
        %v1615 = vadd.f32 0.0, %v1614
        %v1616 = vpop.f32.mrb[0].mxu0
        %1617 = vdwg.mxu0
        %v1634 = vunpack.c.l.b16 %v1417
        %v1635 = vunpack.c.l.b16 %v1418
        %v1636 = vunpack.c.l.b16 %v1419
        %v1637 = vunpack.c.l.b16 %v1420
        %v1638 = vunpack.c.l.b16 %v1421
        %v1639 = vunpack.c.l.b16 %v1422
        %v1640 = vunpack.c.l.b16 %v1423
        %v1641 = vunpack.c.l.b16 %v1424
        %v1642 = vunpack.c.l.b16 %v1425
        %v1643 = vunpack.c.l.b16 %v1426
        %v1644 = vunpack.c.l.b16 %v1427
        %v1645 = vunpack.c.l.b16 %v1428
        %v1646 = vunpack.c.l.b16 %v1429
        %v1647 = vunpack.c.l.b16 %v1430
        %v1648 = vunpack.c.l.b16 %v1431
        %v1649 = vunpack.c.l.b16 %v1432
        %v1650 = vpack.c.b16 %v1635, %v1634
        %v1651 = vpack.c.b16 %v1637, %v1636
        %v1652 = vpack.c.b16 %v1639, %v1638
        %v1653 = vpack.c.b16 %v1641, %v1640
        %v1654 = vpack.c.b16 %v1643, %v1642
        %v1655 = vpack.c.b16 %v1645, %v1644
        %v1656 = vpack.c.b16 %v1647, %v1646
        %v1657 = vpack.c.b16 %v1649, %v1648
        %v1659 = vsel %vm870, %v1650, 0
        %v1662 = vsel %vm870, %v1651, 0
        %v1665 = vsel %vm870, %v1652, 0
        %v1668 = vsel %vm870, %v1653, 0
        %v1671 = vsel %vm870, %v1654, 0
        %v1674 = vsel %vm870, %v1655, 0
        %v1677 = vsel %vm870, %v1656, 0
        %v1680 = vsel %vm870, %v1657, 0
        %1682 = vmatprep.subr.bf16.mxu0 0
        %1683 = vmatpush1.bf16.msra.mxu0 %v1433
        %1684 = vmatprep.subr.bf16.mxu0 0
        %1685 = vmatpush1.bf16.msra.mxu0 %v1434
        %1686 = vmatprep.subr.bf16.mxu0 0
        %1687 = vmatpush1.bf16.msra.mxu0 %v1435
        %1688 = vmatprep.subr.bf16.mxu0 0
        %1689 = vmatpush1.bf16.msra.mxu0 %v1436
        %1690 = vmatprep.subr.bf16.mxu0 0
        %1691 = vmatpush1.bf16.msra.mxu0 0
        %1692 = vmatprep.subr.bf16.mxu0 0
        %1693 = vmatpush1.bf16.msra.mxu0 0
        %1694 = vmatprep.subr.bf16.mxu0 0
        %1695 = vmatpush1.bf16.msra.mxu0 0
        %1696 = vmatprep.subr.bf16.mxu0 0
        %1697 = vmatpush1.bf16.msra.mxu0 0
        %1698 = vmatprep.subr.bf16.mxu0 0
        %1699 = vmatpush1.bf16.msra.mxu0 0
        %1700 = vmatprep.subr.bf16.mxu0 0
        %1701 = vmatpush1.bf16.msra.mxu0 0
        %1702 = vmatprep.subr.bf16.mxu0 0
        %1703 = vmatpush1.bf16.msra.mxu0 0
        %1704 = vmatprep.subr.bf16.mxu0 0
        %1705 = vmatpush1.bf16.msra.mxu0 0
        %1706 = vmatprep.subr.bf16.mxu0 0
        %1707 = vmatpush1.bf16.msra.mxu0 0
        %1708 = vmatprep.subr.bf16.mxu0 0
        %1709 = vmatpush1.bf16.msra.mxu0 0
        %1710 = vmatprep.subr.bf16.mxu0 0
        %1711 = vmatpush1.bf16.msra.mxu0 0
        %1712 = vmatprep.subr.bf16.mxu0 0
        %1713 = vmatpush1.bf16.msra.mxu0 0
        %1714 = vmatprep.mubr.bf16.mxu0 0
        %1715 = vmatmul.mubr.bf16.gmra.mrb[0].mxu0 %v1659
        %v1716 = vpop.f32.mrb[0].mxu0
        %v1717 = vadd.f32 %v1556, %v1716
        %v1718 = vpop.f32.mrb[0].mxu0
        %v1719 = vpop.f32.mrb[0].mxu0
        %v1720 = vadd.f32 %v1559, %v1719
        %v1721 = vpop.f32.mrb[0].mxu0
        %1722 = vmatprep.mubr.bf16.mxu0 0
        %1723 = vmatmul.mubr.bf16.gmra.mrb[0].mxu0 %v1662
        %v1724 = vpop.f32.mrb[0].mxu0
        %v1725 = vadd.f32 %v1564, %v1724
        %v1726 = vpop.f32.mrb[0].mxu0
        %v1727 = vpop.f32.mrb[0].mxu0
        %v1728 = vadd.f32 %v1567, %v1727
        %v1729 = vpop.f32.mrb[0].mxu0
        %1730 = vmatprep.mubr.bf16.mxu0 0
        %1731 = vmatmul.mubr.bf16.gmra.mrb[0].mxu0 %v1665
        %v1732 = vpop.f32.mrb[0].mxu0
        %v1733 = vadd.f32 %v1572, %v1732
        %v1734 = vpop.f32.mrb[0].mxu0
        %v1735 = vpop.f32.mrb[0].mxu0
        %v1736 = vadd.f32 %v1575, %v1735
        %v1737 = vpop.f32.mrb[0].mxu0
        %1738 = vmatprep.mubr.bf16.mxu0 0
        %1739 = vmatmul.mubr.bf16.gmra.mrb[0].mxu0 %v1668
        %v1740 = vpop.f32.mrb[0].mxu0
        %v1741 = vadd.f32 %v1580, %v1740
        %v1742 = vpop.f32.mrb[0].mxu0
        %v1743 = vpop.f32.mrb[0].mxu0
        %v1744 = vadd.f32 %v1583, %v1743
        %v1745 = vpop.f32.mrb[0].mxu0
        %1746 = vmatprep.mubr.bf16.mxu0 0
        %1747 = vmatmul.mubr.bf16.gmra.mrb[0].mxu0 %v1671
        %v1748 = vpop.f32.mrb[0].mxu0
        %v1749 = vadd.f32 %v1588, %v1748
        %v1750 = vpop.f32.mrb[0].mxu0
        %v1751 = vpop.f32.mrb[0].mxu0
        %v1752 = vadd.f32 %v1591, %v1751
        %v1753 = vpop.f32.mrb[0].mxu0
        %1754 = vmatprep.mubr.bf16.mxu0 0
        %1755 = vmatmul.mubr.bf16.gmra.mrb[0].mxu0 %v1674
        %v1756 = vpop.f32.mrb[0].mxu0
        %v1757 = vadd.f32 %v1596, %v1756
        %v1758 = vpop.f32.mrb[0].mxu0
        %v1759 = vpop.f32.mrb[0].mxu0
        %v1760 = vadd.f32 %v1599, %v1759
        %v1761 = vpop.f32.mrb[0].mxu0
        %1762 = vmatprep.mubr.bf16.mxu0 0
        %1763 = vmatmul.mubr.bf16.gmra.mrb[0].mxu0 %v1677
        %v1764 = vpop.f32.mrb[0].mxu0
        %v1765 = vadd.f32 %v1604, %v1764
        %v1766 = vpop.f32.mrb[0].mxu0
        %v1767 = vpop.f32.mrb[0].mxu0
        %v1768 = vadd.f32 %v1607, %v1767
        %v1769 = vpop.f32.mrb[0].mxu0
        %1770 = vmatprep.mubr.bf16.mxu0 0
        %1771 = vmatmul.mubr.bf16.gmra.mrb[0].mxu0 %v1680
        %v1772 = vpop.f32.mrb[0].mxu0
        %v1773 = vadd.f32 %v1612, %v1772
        %v1774 = vpop.f32.mrb[0].mxu0
        %v1775 = vpop.f32.mrb[0].mxu0
        %v1776 = vadd.f32 %v1615, %v1775
        %v1777 = vpop.f32.mrb[0].mxu0
        %1778 = vdwg.mxu0
        %v1779 = vld [vmem:[#allocation11] sm:$0xf]
        %v1780 = vld [vmem:[#allocation11 + $0x4] sm:$0xf]
        %v1781 = vld [vmem:[#allocation11 + $0x8] sm:$0xf]
        %v1782 = vld [vmem:[#allocation11 + $0xc] sm:$0xf]
        %v1783 = vld [vmem:[#allocation11 + $0x10] sm:$0xf]
        %v1784 = vld [vmem:[#allocation11 + $0x14] sm:$0xf]
        %v1785 = vld [vmem:[#allocation11 + $0x18] sm:$0xf]
        %v1786 = vld [vmem:[#allocation11 + $0x1c] sm:$0xf]
        %v1787 = vld [vmem:[#allocation11 + $0x20] sm:$0xf]
        %v1788 = vld [vmem:[#allocation11 + $0x24] sm:$0xf]
        %v1789 = vld [vmem:[#allocation11 + $0x28] sm:$0xf]
        %v1790 = vld [vmem:[#allocation11 + $0x2c] sm:$0xf]
        %v1791 = vld [vmem:[#allocation11 + $0x30] sm:$0xf]
        %v1792 = vld [vmem:[#allocation11 + $0x34] sm:$0xf]
        %v1793 = vld [vmem:[#allocation11 + $0x38] sm:$0xf]
        %v1794 = vld [vmem:[#allocation11 + $0x3c] sm:$0xf]
        %v1795 = vpack.c.bf16 %v1720, %v1717
        %v1796 = vpack.c.bf16 %v1728, %v1725
        %v1797 = vpack.c.bf16 %v1736, %v1733
        %v1798 = vpack.c.bf16 %v1744, %v1741
        %v1799 = vpack.c.bf16 %v1752, %v1749
        %v1800 = vpack.c.bf16 %v1760, %v1757
        %v1801 = vpack.c.bf16 %v1768, %v1765
        %v1802 = vpack.c.bf16 %v1776, %v1773
        %v1819 = vunpack.c.l.b16 %v1779
        %v1820 = vunpack.c.l.b16 %v1780
        %v1821 = vunpack.c.l.b16 %v1781
        %v1822 = vunpack.c.l.b16 %v1782
        %v1823 = vunpack.c.l.b16 %v1783
        %v1824 = vunpack.c.l.b16 %v1784
        %v1825 = vunpack.c.l.b16 %v1785
        %v1826 = vunpack.c.l.b16 %v1786
        %v1827 = vunpack.c.l.b16 %v1787
        %v1828 = vunpack.c.l.b16 %v1788
        %v1829 = vunpack.c.l.b16 %v1789
        %v1830 = vunpack.c.l.b16 %v1790
        %v1831 = vunpack.c.l.b16 %v1791
        %v1832 = vunpack.c.l.b16 %v1792
        %v1833 = vunpack.c.l.b16 %v1793
        %v1834 = vunpack.c.l.b16 %v1794
        %v1835 = vpack.c.b16 %v1820, %v1819
        %v1836 = vpack.c.b16 %v1822, %v1821
        %v1837 = vpack.c.b16 %v1824, %v1823
        %v1838 = vpack.c.b16 %v1826, %v1825
        %v1839 = vpack.c.b16 %v1828, %v1827
        %v1840 = vpack.c.b16 %v1830, %v1829
        %v1841 = vpack.c.b16 %v1832, %v1831
        %v1842 = vpack.c.b16 %v1834, %v1833
        %1851 = vmatprep.subr.bf16.mxu0 0
        %1852 = vmatpush1.bf16.msra.mxu0 %v1795
        %1853 = vmatprep.subr.bf16.mxu0 0
        %1854 = vmatpush1.bf16.msra.mxu0 %v1796
        %1855 = vmatprep.subr.bf16.mxu0 0
        %1856 = vmatpush1.bf16.msra.mxu0 %v1797
        %1857 = vmatprep.subr.bf16.mxu0 0
        %1858 = vmatpush1.bf16.msra.mxu0 %v1798
        %1859 = vmatprep.subr.bf16.mxu0 0
        %1860 = vmatpush1.bf16.msra.mxu0 %v1799
        %1861 = vmatprep.subr.bf16.mxu0 0
        %1862 = vmatpush1.bf16.msra.mxu0 %v1800
        %1863 = vmatprep.subr.bf16.mxu0 0
        %1864 = vmatpush1.bf16.msra.mxu0 %v1801
        %1865 = vmatprep.subr.bf16.mxu0 0
        %1866 = vmatpush1.bf16.msra.mxu0 %v1802
        %1867 = vmatprep.subr.bf16.mxu0 0
        %1868 = vmatpush1.bf16.msra.mxu0 0
        %1869 = vmatprep.subr.bf16.mxu0 0
        %1870 = vmatpush1.bf16.msra.mxu0 0
        %1871 = vmatprep.subr.bf16.mxu0 0
        %1872 = vmatpush1.bf16.msra.mxu0 0
        %1873 = vmatprep.subr.bf16.mxu0 0
        %1874 = vmatpush1.bf16.msra.mxu0 0
        %1875 = vmatprep.subr.bf16.mxu0 0
        %1876 = vmatpush1.bf16.msra.mxu0 0
        %1877 = vmatprep.subr.bf16.mxu0 0
        %1878 = vmatpush1.bf16.msra.mxu0 0
        %1879 = vmatprep.subr.bf16.mxu0 0
        %1880 = vmatpush1.bf16.msra.mxu0 0
        %1881 = vmatprep.subr.bf16.mxu0 0
        %1882 = vmatpush1.bf16.msra.mxu0 0
        %1883 = vmatprep.mubr.bf16.mxu0 0
        %1884 = vmatmul.mubr.bf16.gmra.mrb[0].mxu0 %v1835
        %v1885 = vpop.f32.mrb[0].mxu0
        %v1886 = vadd.f32 0.0, %v1885
        %v1887 = vpop.f32.mrb[0].mxu0
        %v1888 = vpop.f32.mrb[0].mxu0
        %v1889 = vadd.f32 0.0, %v1888
        %v1890 = vpop.f32.mrb[0].mxu0
        %1891 = vmatprep.mubr.bf16.mxu0 0
        %1892 = vmatmul.mubr.bf16.gmra.mrb[0].mxu0 %v1836
        %v1893 = vpop.f32.mrb[0].mxu0
        %v1894 = vadd.f32 0.0, %v1893
        %v1895 = vpop.f32.mrb[0].mxu0
        %v1896 = vpop.f32.mrb[0].mxu0
        %v1897 = vadd.f32 0.0, %v1896
        %v1898 = vpop.f32.mrb[0].mxu0
        %1899 = vmatprep.mubr.bf16.mxu0 0
        %1900 = vmatmul.mubr.bf16.gmra.mrb[0].mxu0 %v1837
        %v1901 = vpop.f32.mrb[0].mxu0
        %v1902 = vadd.f32 0.0, %v1901
        %v1903 = vpop.f32.mrb[0].mxu0
        %v1904 = vpop.f32.mrb[0].mxu0
        %v1905 = vadd.f32 0.0, %v1904
        %v1906 = vpop.f32.mrb[0].mxu0
        %1907 = vmatprep.mubr.bf16.mxu0 0
        %1908 = vmatmul.mubr.bf16.gmra.mrb[0].mxu0 %v1838
        %v1909 = vpop.f32.mrb[0].mxu0
        %v1910 = vadd.f32 0.0, %v1909
        %v1911 = vpop.f32.mrb[0].mxu0
        %v1912 = vpop.f32.mrb[0].mxu0
        %v1913 = vadd.f32 0.0, %v1912
        %v1914 = vpop.f32.mrb[0].mxu0
        %1915 = vmatprep.mubr.bf16.mxu0 0
        %1916 = vmatmul.mubr.bf16.gmra.mrb[0].mxu0 %v1839
        %v1917 = vpop.f32.mrb[0].mxu0
        %v1918 = vadd.f32 0.0, %v1917
        %v1919 = vpop.f32.mrb[0].mxu0
        %v1920 = vpop.f32.mrb[0].mxu0
        %v1921 = vadd.f32 0.0, %v1920
        %v1922 = vpop.f32.mrb[0].mxu0
        %1923 = vmatprep.mubr.bf16.mxu0 0
        %1924 = vmatmul.mubr.bf16.gmra.mrb[0].mxu0 %v1840
        %v1925 = vpop.f32.mrb[0].mxu0
        %v1926 = vadd.f32 0.0, %v1925
        %v1927 = vpop.f32.mrb[0].mxu0
        %v1928 = vpop.f32.mrb[0].mxu0
        %v1929 = vadd.f32 0.0, %v1928
        %v1930 = vpop.f32.mrb[0].mxu0
        %1931 = vmatprep.mubr.bf16.mxu0 0
        %1932 = vmatmul.mubr.bf16.gmra.mrb[0].mxu0 %v1841
        %v1933 = vpop.f32.mrb[0].mxu0
        %v1934 = vadd.f32 0.0, %v1933
        %v1935 = vpop.f32.mrb[0].mxu0
        %v1936 = vpop.f32.mrb[0].mxu0
        %v1937 = vadd.f32 0.0, %v1936
        %v1938 = vpop.f32.mrb[0].mxu0
        %1939 = vmatprep.mubr.bf16.mxu0 0
        %1940 = vmatmul.mubr.bf16.gmra.mrb[0].mxu0 %v1842
        %v1941 = vpop.f32.mrb[0].mxu0
        %v1942 = vadd.f32 0.0, %v1941
        %v1943 = vpop.f32.mrb[0].mxu0
        %v1944 = vpop.f32.mrb[0].mxu0
        %v1945 = vadd.f32 0.0, %v1944
        %v1946 = vpop.f32.mrb[0].mxu0
        %1947 = vdwg.mxu0
        %v1948 = vld [vmem:[%s5] sm:$0x1]
        %v1949 = vpack.c.bf16 %v1889, %v1886
        %v1950 = vpack.c.bf16 %v1897, %v1894
        %v1951 = vpack.c.bf16 %v1905, %v1902
        %v1952 = vpack.c.bf16 %v1913, %v1910
        %v1953 = vpack.c.bf16 %v1921, %v1918
        %v1954 = vpack.c.bf16 %v1929, %v1926
        %v1955 = vpack.c.bf16 %v1937, %v1934
        %v1956 = vpack.c.bf16 %v1945, %v1942
        %s1957 = scalar_lea.vmem [#allocation11], 64
        %v1958 = vld [vmem:[%s1957] sm:$0xf]
        %v1959 = vld [vmem:[%s1957 + $0x4] sm:$0xf]
        %v1960 = vld [vmem:[%s1957 + $0x8] sm:$0xf]
        %v1961 = vld [vmem:[%s1957 + $0xc] sm:$0xf]
        %v1962 = vld [vmem:[%s1957 + $0x10] sm:$0xf]
        %v1963 = vld [vmem:[%s1957 + $0x14] sm:$0xf]
        %v1964 = vld [vmem:[%s1957 + $0x18] sm:$0xf]
        %v1965 = vld [vmem:[%s1957 + $0x1c] sm:$0xf]
        %v1966 = vld [vmem:[%s1957 + $0x20] sm:$0xf]
        %v1967 = vld [vmem:[%s1957 + $0x24] sm:$0xf]
        %v1968 = vld [vmem:[%s1957 + $0x28] sm:$0xf]
        %v1969 = vld [vmem:[%s1957 + $0x2c] sm:$0xf]
        %v1970 = vld [vmem:[%s1957 + $0x30] sm:$0xf]
        %v1971 = vld [vmem:[%s1957 + $0x34] sm:$0xf]
        %v1972 = vld [vmem:[%s1957 + $0x38] sm:$0xf]
        %v1973 = vld [vmem:[%s1957 + $0x3c] sm:$0xf]
        %v1990 = vunpack.c.l.b16 %v1958
        %v1991 = vunpack.c.l.b16 %v1959
        %v1992 = vunpack.c.l.b16 %v1960
        %v1993 = vunpack.c.l.b16 %v1961
        %v1994 = vunpack.c.l.b16 %v1962
        %v1995 = vunpack.c.l.b16 %v1963
        %v1996 = vunpack.c.l.b16 %v1964
        %v1997 = vunpack.c.l.b16 %v1965
        %v1998 = vunpack.c.l.b16 %v1966
        %v1999 = vunpack.c.l.b16 %v1967
        %v2000 = vunpack.c.l.b16 %v1968
        %v2001 = vunpack.c.l.b16 %v1969
        %v2002 = vunpack.c.l.b16 %v1970
        %v2003 = vunpack.c.l.b16 %v1971
        %v2004 = vunpack.c.l.b16 %v1972
        %v2005 = vunpack.c.l.b16 %v1973
        %v2006 = vpack.c.b16 %v1991, %v1990
        %v2007 = vpack.c.b16 %v1993, %v1992
        %v2008 = vpack.c.b16 %v1995, %v1994
        %v2009 = vpack.c.b16 %v1997, %v1996
        %v2010 = vpack.c.b16 %v1999, %v1998
        %v2011 = vpack.c.b16 %v2001, %v2000
        %v2012 = vpack.c.b16 %v2003, %v2002
        %v2013 = vpack.c.b16 %v2005, %v2004
        %2022 = vmatprep.subr.bf16.mxu0 0
        %2023 = vmatpush1.bf16.msra.mxu0 %v1795
        %2024 = vmatprep.subr.bf16.mxu0 0
        %2025 = vmatpush1.bf16.msra.mxu0 %v1796
        %2026 = vmatprep.subr.bf16.mxu0 0
        %2027 = vmatpush1.bf16.msra.mxu0 %v1797
        %2028 = vmatprep.subr.bf16.mxu0 0
        %2029 = vmatpush1.bf16.msra.mxu0 %v1798
        %2030 = vmatprep.subr.bf16.mxu0 0
        %2031 = vmatpush1.bf16.msra.mxu0 %v1799
        %2032 = vmatprep.subr.bf16.mxu0 0
        %2033 = vmatpush1.bf16.msra.mxu0 %v1800
        %2034 = vmatprep.subr.bf16.mxu0 0
        %2035 = vmatpush1.bf16.msra.mxu0 %v1801
        %2036 = vmatprep.subr.bf16.mxu0 0
        %2037 = vmatpush1.bf16.msra.mxu0 %v1802
        %2038 = vmatprep.subr.bf16.mxu0 0
        %2039 = vmatpush1.bf16.msra.mxu0 0
        %2040 = vmatprep.subr.bf16.mxu0 0
        %2041 = vmatpush1.bf16.msra.mxu0 0
        %2042 = vmatprep.subr.bf16.mxu0 0
        %2043 = vmatpush1.bf16.msra.mxu0 0
        %2044 = vmatprep.subr.bf16.mxu0 0
        %2045 = vmatpush1.bf16.msra.mxu0 0
        %2046 = vmatprep.subr.bf16.mxu0 0
        %2047 = vmatpush1.bf16.msra.mxu0 0
        %2048 = vmatprep.subr.bf16.mxu0 0
        %2049 = vmatpush1.bf16.msra.mxu0 0
        %2050 = vmatprep.subr.bf16.mxu0 0
        %2051 = vmatpush1.bf16.msra.mxu0 0
        %2052 = vmatprep.subr.bf16.mxu0 0
        %2053 = vmatpush1.bf16.msra.mxu0 0
        %2054 = vmatprep.mubr.bf16.mxu0 0
        %2055 = vmatmul.mubr.bf16.gmra.mrb[0].mxu0 %v2006
        %v2056 = vpop.f32.mrb[0].mxu0
        %v2057 = vadd.f32 0.0, %v2056
        %v2058 = vpop.f32.mrb[0].mxu0
        %v2059 = vpop.f32.mrb[0].mxu0
        %v2060 = vadd.f32 0.0, %v2059
        %v2061 = vpop.f32.mrb[0].mxu0
        %2062 = vmatprep.mubr.bf16.mxu0 0
        %2063 = vmatmul.mubr.bf16.gmra.mrb[0].mxu0 %v2007
        %v2064 = vpop.f32.mrb[0].mxu0
        %v2065 = vadd.f32 0.0, %v2064
        %v2066 = vpop.f32.mrb[0].mxu0
        %v2067 = vpop.f32.mrb[0].mxu0
        %v2068 = vadd.f32 0.0, %v2067
        %v2069 = vpop.f32.mrb[0].mxu0
        %2070 = vmatprep.mubr.bf16.mxu0 0
        %2071 = vmatmul.mubr.bf16.gmra.mrb[0].mxu0 %v2008
        %v2072 = vpop.f32.mrb[0].mxu0
        %v2073 = vadd.f32 0.0, %v2072
        %v2074 = vpop.f32.mrb[0].mxu0
        %v2075 = vpop.f32.mrb[0].mxu0
        %v2076 = vadd.f32 0.0, %v2075
        %v2077 = vpop.f32.mrb[0].mxu0
        %2078 = vmatprep.mubr.bf16.mxu0 0
        %2079 = vmatmul.mubr.bf16.gmra.mrb[0].mxu0 %v2009
        %v2080 = vpop.f32.mrb[0].mxu0
        %v2081 = vadd.f32 0.0, %v2080
        %v2082 = vpop.f32.mrb[0].mxu0
        %v2083 = vpop.f32.mrb[0].mxu0
        %v2084 = vadd.f32 0.0, %v2083
        %v2085 = vpop.f32.mrb[0].mxu0
        %2086 = vmatprep.mubr.bf16.mxu0 0
        %2087 = vmatmul.mubr.bf16.gmra.mrb[0].mxu0 %v2010
        %v2088 = vpop.f32.mrb[0].mxu0
        %v2089 = vadd.f32 0.0, %v2088
        %v2090 = vpop.f32.mrb[0].mxu0
        %v2091 = vpop.f32.mrb[0].mxu0
        %v2092 = vadd.f32 0.0, %v2091
        %v2093 = vpop.f32.mrb[0].mxu0
        %2094 = vmatprep.mubr.bf16.mxu0 0
        %2095 = vmatmul.mubr.bf16.gmra.mrb[0].mxu0 %v2011
        %v2096 = vpop.f32.mrb[0].mxu0
        %v2097 = vadd.f32 0.0, %v2096
        %v2098 = vpop.f32.mrb[0].mxu0
        %v2099 = vpop.f32.mrb[0].mxu0
        %v2100 = vadd.f32 0.0, %v2099
        %v2101 = vpop.f32.mrb[0].mxu0
        %2102 = vmatprep.mubr.bf16.mxu0 0
        %2103 = vmatmul.mubr.bf16.gmra.mrb[0].mxu0 %v2012
        %v2104 = vpop.f32.mrb[0].mxu0
        %v2105 = vadd.f32 0.0, %v2104
        %v2106 = vpop.f32.mrb[0].mxu0
        %v2107 = vpop.f32.mrb[0].mxu0
        %v2108 = vadd.f32 0.0, %v2107
        %v2109 = vpop.f32.mrb[0].mxu0
        %2110 = vmatprep.mubr.bf16.mxu0 0
        %2111 = vmatmul.mubr.bf16.gmra.mrb[0].mxu0 %v2013
        %v2112 = vpop.f32.mrb[0].mxu0
        %v2113 = vadd.f32 0.0, %v2112
        %v2114 = vpop.f32.mrb[0].mxu0
        %v2115 = vpop.f32.mrb[0].mxu0
        %v2116 = vadd.f32 0.0, %v2115
        %v2117 = vpop.f32.mrb[0].mxu0
        %2118 = vdwg.mxu0
        %s2119 = scalar_lea.vmem %s5, 1
        %v2120 = vld [vmem:[%s2119] sm:$0x1]
        %v2121 = vpack.c.bf16 %v2060, %v2057
        %v2122 = vpack.c.bf16 %v2068, %v2065
        %v2123 = vpack.c.bf16 %v2076, %v2073
        %v2124 = vpack.c.bf16 %v2084, %v2081
        %v2125 = vpack.c.bf16 %v2092, %v2089
        %v2126 = vpack.c.bf16 %v2100, %v2097
        %v2127 = vpack.c.bf16 %v2108, %v2105
        %v2128 = vpack.c.bf16 %v2116, %v2113
        %v2130 = vsel %vm1061, %v2121, 0
        %v2133 = vsel %vm1061, %v2122, 0
        %v2136 = vsel %vm1061, %v2123, 0
        %v2139 = vsel %vm1061, %v2124, 0
        %v2142 = vsel %vm1061, %v2125, 0
        %v2145 = vsel %vm1061, %v2126, 0
        %v2148 = vsel %vm1061, %v2127, 0
        %v2151 = vsel %vm1061, %v2128, 0
        %v2154 = vsel %vm1074, %v2120, 0
        %2156 = vmatprep.subr.bf16.mxu0 0
        %2157 = vmatpush1.bf16.msra.mxu0 %v2154
        %2158 = vmatprep.subr.bf16.mxu0 0
        %2159 = vmatpush1.bf16.msra.mxu0 0
        %2160 = vmatprep.subr.bf16.mxu0 0
        %2161 = vmatpush1.bf16.msra.mxu0 0
        %2162 = vmatprep.subr.bf16.mxu0 0
        %2163 = vmatpush1.bf16.msra.mxu0 0
        %2164 = vmatprep.subr.bf16.mxu0 0
        %2165 = vmatpush1.bf16.msra.mxu0 0
        %2166 = vmatprep.subr.bf16.mxu0 0
        %2167 = vmatpush1.bf16.msra.mxu0 0
        %2168 = vmatprep.subr.bf16.mxu0 0
        %2169 = vmatpush1.bf16.msra.mxu0 0
        %2170 = vmatprep.subr.bf16.mxu0 0
        %2171 = vmatpush1.bf16.msra.mxu0 0
        %2172 = vmatprep.subr.bf16.mxu0 0
        %2173 = vmatpush1.bf16.msra.mxu0 0
        %2174 = vmatprep.subr.bf16.mxu0 0
        %2175 = vmatpush1.bf16.msra.mxu0 0
        %2176 = vmatprep.subr.bf16.mxu0 0
        %2177 = vmatpush1.bf16.msra.mxu0 0
        %2178 = vmatprep.subr.bf16.mxu0 0
        %2179 = vmatpush1.bf16.msra.mxu0 0
        %2180 = vmatprep.subr.bf16.mxu0 0
        %2181 = vmatpush1.bf16.msra.mxu0 0
        %2182 = vmatprep.subr.bf16.mxu0 0
        %2183 = vmatpush1.bf16.msra.mxu0 0
        %2184 = vmatprep.subr.bf16.mxu0 0
        %2185 = vmatpush1.bf16.msra.mxu0 0
        %2186 = vmatprep.subr.bf16.mxu0 0
        %2187 = vmatpush1.bf16.msra.mxu0 0
        %2188 = vmatprep.mubr.bf16.mxu0 0
        %2189 = vmatmul.mubr.bf16.gmra.mrb[0].mxu0 %v2130
        %v2190 = vpop.f32.mrb[0].mxu0
        %v2191 = vadd.f32 0.0, %v2190
        %v2192 = vpop.f32.mrb[0].mxu0
        %v2193 = vpop.f32.mrb[0].mxu0
        %v2194 = vadd.f32 0.0, %v2193
        %v2195 = vpop.f32.mrb[0].mxu0
        %2196 = vmatprep.mubr.bf16.mxu0 0
        %2197 = vmatmul.mubr.bf16.gmra.mrb[0].mxu0 %v2133
        %v2198 = vpop.f32.mrb[0].mxu0
        %v2199 = vadd.f32 0.0, %v2198
        %v2200 = vpop.f32.mrb[0].mxu0
        %v2201 = vpop.f32.mrb[0].mxu0
        %v2202 = vadd.f32 0.0, %v2201
        %v2203 = vpop.f32.mrb[0].mxu0
        %2204 = vmatprep.mubr.bf16.mxu0 0
        %2205 = vmatmul.mubr.bf16.gmra.mrb[0].mxu0 %v2136
        %v2206 = vpop.f32.mrb[0].mxu0
        %v2207 = vadd.f32 0.0, %v2206
        %v2208 = vpop.f32.mrb[0].mxu0
        %v2209 = vpop.f32.mrb[0].mxu0
        %v2210 = vadd.f32 0.0, %v2209
        %v2211 = vpop.f32.mrb[0].mxu0
        %2212 = vmatprep.mubr.bf16.mxu0 0
        %2213 = vmatmul.mubr.bf16.gmra.mrb[0].mxu0 %v2139
        %v2214 = vpop.f32.mrb[0].mxu0
        %v2215 = vadd.f32 0.0, %v2214
        %v2216 = vpop.f32.mrb[0].mxu0
        %v2217 = vpop.f32.mrb[0].mxu0
        %v2218 = vadd.f32 0.0, %v2217
        %v2219 = vpop.f32.mrb[0].mxu0
        %2220 = vmatprep.mubr.bf16.mxu0 0
        %2221 = vmatmul.mubr.bf16.gmra.mrb[0].mxu0 %v2142
        %v2222 = vpop.f32.mrb[0].mxu0
        %v2223 = vadd.f32 0.0, %v2222
        %v2224 = vpop.f32.mrb[0].mxu0
        %v2225 = vpop.f32.mrb[0].mxu0
        %v2226 = vadd.f32 0.0, %v2225
        %v2227 = vpop.f32.mrb[0].mxu0
        %2228 = vmatprep.mubr.bf16.mxu0 0
        %2229 = vmatmul.mubr.bf16.gmra.mrb[0].mxu0 %v2145
        %v2230 = vpop.f32.mrb[0].mxu0
        %v2231 = vadd.f32 0.0, %v2230
        %v2232 = vpop.f32.mrb[0].mxu0
        %v2233 = vpop.f32.mrb[0].mxu0
        %v2234 = vadd.f32 0.0, %v2233
        %v2235 = vpop.f32.mrb[0].mxu0
        %2236 = vmatprep.mubr.bf16.mxu0 0
        %2237 = vmatmul.mubr.bf16.gmra.mrb[0].mxu0 %v2148
        %v2238 = vpop.f32.mrb[0].mxu0
        %v2239 = vadd.f32 0.0, %v2238
        %v2240 = vpop.f32.mrb[0].mxu0
        %v2241 = vpop.f32.mrb[0].mxu0
        %v2242 = vadd.f32 0.0, %v2241
        %v2243 = vpop.f32.mrb[0].mxu0
        %2244 = vmatprep.mubr.bf16.mxu0 0
        %2245 = vmatmul.mubr.bf16.gmra.mrb[0].mxu0 %v2151
        %v2246 = vpop.f32.mrb[0].mxu0
        %v2247 = vadd.f32 0.0, %v2246
        %v2248 = vpop.f32.mrb[0].mxu0
        %v2249 = vpop.f32.mrb[0].mxu0
        %v2250 = vadd.f32 0.0, %v2249
        %v2251 = vpop.f32.mrb[0].mxu0
        %2252 = vdwg.mxu0
        %v2254 = vsel %vm1061, %v1949, 0
        %v2257 = vsel %vm1061, %v1950, 0
        %v2260 = vsel %vm1061, %v1951, 0
        %v2263 = vsel %vm1061, %v1952, 0
        %v2266 = vsel %vm1061, %v1953, 0
        %v2269 = vsel %vm1061, %v1954, 0
        %v2272 = vsel %vm1061, %v1955, 0
        %v2275 = vsel %vm1061, %v1956, 0
        %v2278 = vsel %vm1074, %v1948, 0
        %2280 = vmatprep.subr.bf16.mxu0 0
        %2281 = vmatpush1.bf16.msra.mxu0 %v2278
        %2282 = vmatprep.subr.bf16.mxu0 0
        %2283 = vmatpush1.bf16.msra.mxu0 0
        %2284 = vmatprep.subr.bf16.mxu0 0
        %2285 = vmatpush1.bf16.msra.mxu0 0
        %2286 = vmatprep.subr.bf16.mxu0 0
        %2287 = vmatpush1.bf16.msra.mxu0 0
        %2288 = vmatprep.subr.bf16.mxu0 0
        %2289 = vmatpush1.bf16.msra.mxu0 0
        %2290 = vmatprep.subr.bf16.mxu0 0
        %2291 = vmatpush1.bf16.msra.mxu0 0
        %2292 = vmatprep.subr.bf16.mxu0 0
        %2293 = vmatpush1.bf16.msra.mxu0 0
        %2294 = vmatprep.subr.bf16.mxu0 0
        %2295 = vmatpush1.bf16.msra.mxu0 0
        %2296 = vmatprep.subr.bf16.mxu0 0
        %2297 = vmatpush1.bf16.msra.mxu0 0
        %2298 = vmatprep.subr.bf16.mxu0 0
        %2299 = vmatpush1.bf16.msra.mxu0 0
        %2300 = vmatprep.subr.bf16.mxu0 0
        %2301 = vmatpush1.bf16.msra.mxu0 0
        %2302 = vmatprep.subr.bf16.mxu0 0
        %2303 = vmatpush1.bf16.msra.mxu0 0
        %2304 = vmatprep.subr.bf16.mxu0 0
        %2305 = vmatpush1.bf16.msra.mxu0 0
        %2306 = vmatprep.subr.bf16.mxu0 0
        %2307 = vmatpush1.bf16.msra.mxu0 0
        %2308 = vmatprep.subr.bf16.mxu0 0
        %2309 = vmatpush1.bf16.msra.mxu0 0
        %2310 = vmatprep.subr.bf16.mxu0 0
        %2311 = vmatpush1.bf16.msra.mxu0 0
        %2312 = vmatprep.mubr.bf16.mxu0 0
        %2313 = vmatmul.mubr.bf16.gmra.mrb[0].mxu0 %v2254
        %v2314 = vpop.f32.mrb[0].mxu0
        %v2315 = vadd.f32 %v2191, %v2314
        %v2316 = vpop.f32.mrb[0].mxu0
        %v2317 = vpop.f32.mrb[0].mxu0
        %v2318 = vadd.f32 %v2194, %v2317
        %v2319 = vpop.f32.mrb[0].mxu0
        %2320 = vmatprep.mubr.bf16.mxu0 0
        %2321 = vmatmul.mubr.bf16.gmra.mrb[0].mxu0 %v2257
        %v2322 = vpop.f32.mrb[0].mxu0
        %v2323 = vadd.f32 %v2199, %v2322
        %v2324 = vpop.f32.mrb[0].mxu0
        %v2325 = vpop.f32.mrb[0].mxu0
        %v2326 = vadd.f32 %v2202, %v2325
        %v2327 = vpop.f32.mrb[0].mxu0
        %2328 = vmatprep.mubr.bf16.mxu0 0
        %2329 = vmatmul.mubr.bf16.gmra.mrb[0].mxu0 %v2260
        %v2330 = vpop.f32.mrb[0].mxu0
        %v2331 = vadd.f32 %v2207, %v2330
        %v2332 = vpop.f32.mrb[0].mxu0
        %v2333 = vpop.f32.mrb[0].mxu0
        %v2334 = vadd.f32 %v2210, %v2333
        %v2335 = vpop.f32.mrb[0].mxu0
        %2336 = vmatprep.mubr.bf16.mxu0 0
        %2337 = vmatmul.mubr.bf16.gmra.mrb[0].mxu0 %v2263
        %v2338 = vpop.f32.mrb[0].mxu0
        %v2339 = vadd.f32 %v2215, %v2338
        %v2340 = vpop.f32.mrb[0].mxu0
        %v2341 = vpop.f32.mrb[0].mxu0
        %v2342 = vadd.f32 %v2218, %v2341
        %v2343 = vpop.f32.mrb[0].mxu0
        %2344 = vmatprep.mubr.bf16.mxu0 0
        %2345 = vmatmul.mubr.bf16.gmra.mrb[0].mxu0 %v2266
        %v2346 = vpop.f32.mrb[0].mxu0
        %v2347 = vadd.f32 %v2223, %v2346
        %v2348 = vpop.f32.mrb[0].mxu0
        %v2349 = vpop.f32.mrb[0].mxu0
        %v2350 = vadd.f32 %v2226, %v2349
        %v2351 = vpop.f32.mrb[0].mxu0
        %2352 = vmatprep.mubr.bf16.mxu0 0
        %2353 = vmatmul.mubr.bf16.gmra.mrb[0].mxu0 %v2269
        %v2354 = vpop.f32.mrb[0].mxu0
        %v2355 = vadd.f32 %v2231, %v2354
        %v2356 = vpop.f32.mrb[0].mxu0
        %v2357 = vpop.f32.mrb[0].mxu0
        %v2358 = vadd.f32 %v2234, %v2357
        %v2359 = vpop.f32.mrb[0].mxu0
        %2360 = vmatprep.mubr.bf16.mxu0 0
        %2361 = vmatmul.mubr.bf16.gmra.mrb[0].mxu0 %v2272
        %v2362 = vpop.f32.mrb[0].mxu0
        %v2363 = vadd.f32 %v2239, %v2362
        %v2364 = vpop.f32.mrb[0].mxu0
        %v2365 = vpop.f32.mrb[0].mxu0
        %v2366 = vadd.f32 %v2242, %v2365
        %v2367 = vpop.f32.mrb[0].mxu0
        %2368 = vmatprep.mubr.bf16.mxu0 0
        %2369 = vmatmul.mubr.bf16.gmra.mrb[0].mxu0 %v2275
        %v2370 = vpop.f32.mrb[0].mxu0
        %v2371 = vadd.f32 %v2247, %v2370
        %v2372 = vpop.f32.mrb[0].mxu0
        %v2373 = vpop.f32.mrb[0].mxu0
        %v2374 = vadd.f32 %v2250, %v2373
        %v2375 = vpop.f32.mrb[0].mxu0
        %2376 = vdwg.mxu0
        %s2377 = scalar_lea.vmem [#allocation11], 128
        %v2378 = vld [vmem:[%s2377] sm:$0xf]
        %v2379 = vld [vmem:[%s2377 + $0x4] sm:$0xf]
        %v2380 = vld [vmem:[%s2377 + $0x8] sm:$0xf]
        %v2381 = vld [vmem:[%s2377 + $0xc] sm:$0xf]
        %v2382 = vld [vmem:[%s2377 + $0x10] sm:$0xf]
        %v2383 = vld [vmem:[%s2377 + $0x14] sm:$0xf]
        %v2384 = vld [vmem:[%s2377 + $0x18] sm:$0xf]
        %v2385 = vld [vmem:[%s2377 + $0x1c] sm:$0xf]
        %v2386 = vld [vmem:[%s2377 + $0x20] sm:$0xf]
        %v2387 = vld [vmem:[%s2377 + $0x24] sm:$0xf]
        %v2388 = vld [vmem:[%s2377 + $0x28] sm:$0xf]
        %v2389 = vld [vmem:[%s2377 + $0x2c] sm:$0xf]
        %v2390 = vld [vmem:[%s2377 + $0x30] sm:$0xf]
        %v2391 = vld [vmem:[%s2377 + $0x34] sm:$0xf]
        %v2392 = vld [vmem:[%s2377 + $0x38] sm:$0xf]
        %v2393 = vld [vmem:[%s2377 + $0x3c] sm:$0xf]
        %v2410 = vunpack.c.l.b16 %v2378
        %v2411 = vunpack.c.l.b16 %v2379
        %v2412 = vunpack.c.l.b16 %v2380
        %v2413 = vunpack.c.l.b16 %v2381
        %v2414 = vunpack.c.l.b16 %v2382
        %v2415 = vunpack.c.l.b16 %v2383
        %v2416 = vunpack.c.l.b16 %v2384
        %v2417 = vunpack.c.l.b16 %v2385
        %v2418 = vunpack.c.l.b16 %v2386
        %v2419 = vunpack.c.l.b16 %v2387
        %v2420 = vunpack.c.l.b16 %v2388
        %v2421 = vunpack.c.l.b16 %v2389
        %v2422 = vunpack.c.l.b16 %v2390
        %v2423 = vunpack.c.l.b16 %v2391
        %v2424 = vunpack.c.l.b16 %v2392
        %v2425 = vunpack.c.l.b16 %v2393
        %v2426 = vpack.c.b16 %v2411, %v2410
        %v2427 = vpack.c.b16 %v2413, %v2412
        %v2428 = vpack.c.b16 %v2415, %v2414
        %v2429 = vpack.c.b16 %v2417, %v2416
        %v2430 = vpack.c.b16 %v2419, %v2418
        %v2431 = vpack.c.b16 %v2421, %v2420
        %v2432 = vpack.c.b16 %v2423, %v2422
        %v2433 = vpack.c.b16 %v2425, %v2424
        %2442 = vmatprep.subr.bf16.mxu0 0
        %2443 = vmatpush1.bf16.msra.mxu0 %v1795
        %2444 = vmatprep.subr.bf16.mxu0 0
        %2445 = vmatpush1.bf16.msra.mxu0 %v1796
        %2446 = vmatprep.subr.bf16.mxu0 0
        %2447 = vmatpush1.bf16.msra.mxu0 %v1797
        %2448 = vmatprep.subr.bf16.mxu0 0
        %2449 = vmatpush1.bf16.msra.mxu0 %v1798
        %2450 = vmatprep.subr.bf16.mxu0 0
        %2451 = vmatpush1.bf16.msra.mxu0 %v1799
        %2452 = vmatprep.subr.bf16.mxu0 0
        %2453 = vmatpush1.bf16.msra.mxu0 %v1800
        %2454 = vmatprep.subr.bf16.mxu0 0
        %2455 = vmatpush1.bf16.msra.mxu0 %v1801
        %2456 = vmatprep.subr.bf16.mxu0 0
        %2457 = vmatpush1.bf16.msra.mxu0 %v1802
        %2458 = vmatprep.subr.bf16.mxu0 0
        %2459 = vmatpush1.bf16.msra.mxu0 0
        %2460 = vmatprep.subr.bf16.mxu0 0
        %2461 = vmatpush1.bf16.msra.mxu0 0
        %2462 = vmatprep.subr.bf16.mxu0 0
        %2463 = vmatpush1.bf16.msra.mxu0 0
        %2464 = vmatprep.subr.bf16.mxu0 0
        %2465 = vmatpush1.bf16.msra.mxu0 0
        %2466 = vmatprep.subr.bf16.mxu0 0
        %2467 = vmatpush1.bf16.msra.mxu0 0
        %2468 = vmatprep.subr.bf16.mxu0 0
        %2469 = vmatpush1.bf16.msra.mxu0 0
        %2470 = vmatprep.subr.bf16.mxu0 0
        %2471 = vmatpush1.bf16.msra.mxu0 0
        %2472 = vmatprep.subr.bf16.mxu0 0
        %2473 = vmatpush1.bf16.msra.mxu0 0
        %2474 = vmatprep.mubr.bf16.mxu0 0
        %2475 = vmatmul.mubr.bf16.gmra.mrb[0].mxu0 %v2426
        %v2476 = vpop.f32.mrb[0].mxu0
        %v2477 = vadd.f32 0.0, %v2476
        %v2478 = vpop.f32.mrb[0].mxu0
        %v2479 = vpop.f32.mrb[0].mxu0
        %v2480 = vadd.f32 0.0, %v2479
        %v2481 = vpop.f32.mrb[0].mxu0
        %2482 = vmatprep.mubr.bf16.mxu0 0
        %2483 = vmatmul.mubr.bf16.gmra.mrb[0].mxu0 %v2427
        %v2484 = vpop.f32.mrb[0].mxu0
        %v2485 = vadd.f32 0.0, %v2484
        %v2486 = vpop.f32.mrb[0].mxu0
        %v2487 = vpop.f32.mrb[0].mxu0
        %v2488 = vadd.f32 0.0, %v2487
        %v2489 = vpop.f32.mrb[0].mxu0
        %2490 = vmatprep.mubr.bf16.mxu0 0
        %2491 = vmatmul.mubr.bf16.gmra.mrb[0].mxu0 %v2428
        %v2492 = vpop.f32.mrb[0].mxu0
        %v2493 = vadd.f32 0.0, %v2492
        %v2494 = vpop.f32.mrb[0].mxu0
        %v2495 = vpop.f32.mrb[0].mxu0
        %v2496 = vadd.f32 0.0, %v2495
        %v2497 = vpop.f32.mrb[0].mxu0
        %2498 = vmatprep.mubr.bf16.mxu0 0
        %2499 = vmatmul.mubr.bf16.gmra.mrb[0].mxu0 %v2429
        %v2500 = vpop.f32.mrb[0].mxu0
        %v2501 = vadd.f32 0.0, %v2500
        %v2502 = vpop.f32.mrb[0].mxu0
        %v2503 = vpop.f32.mrb[0].mxu0
        %v2504 = vadd.f32 0.0, %v2503
        %v2505 = vpop.f32.mrb[0].mxu0
        %2506 = vmatprep.mubr.bf16.mxu0 0
        %2507 = vmatmul.mubr.bf16.gmra.mrb[0].mxu0 %v2430
        %v2508 = vpop.f32.mrb[0].mxu0
        %v2509 = vadd.f32 0.0, %v2508
        %v2510 = vpop.f32.mrb[0].mxu0
        %v2511 = vpop.f32.mrb[0].mxu0
        %v2512 = vadd.f32 0.0, %v2511
        %v2513 = vpop.f32.mrb[0].mxu0
        %2514 = vmatprep.mubr.bf16.mxu0 0
        %2515 = vmatmul.mubr.bf16.gmra.mrb[0].mxu0 %v2431
        %v2516 = vpop.f32.mrb[0].mxu0
        %v2517 = vadd.f32 0.0, %v2516
        %v2518 = vpop.f32.mrb[0].mxu0
        %v2519 = vpop.f32.mrb[0].mxu0
        %v2520 = vadd.f32 0.0, %v2519
        %v2521 = vpop.f32.mrb[0].mxu0
        %2522 = vmatprep.mubr.bf16.mxu0 0
        %2523 = vmatmul.mubr.bf16.gmra.mrb[0].mxu0 %v2432
        %v2524 = vpop.f32.mrb[0].mxu0
        %v2525 = vadd.f32 0.0, %v2524
        %v2526 = vpop.f32.mrb[0].mxu0
        %v2527 = vpop.f32.mrb[0].mxu0
        %v2528 = vadd.f32 0.0, %v2527
        %v2529 = vpop.f32.mrb[0].mxu0
        %2530 = vmatprep.mubr.bf16.mxu0 0
        %2531 = vmatmul.mubr.bf16.gmra.mrb[0].mxu0 %v2433
        %v2532 = vpop.f32.mrb[0].mxu0
        %v2533 = vadd.f32 0.0, %v2532
        %v2534 = vpop.f32.mrb[0].mxu0
        %v2535 = vpop.f32.mrb[0].mxu0
        %v2536 = vadd.f32 0.0, %v2535
        %v2537 = vpop.f32.mrb[0].mxu0
        %2538 = vdwg.mxu0
        %s2539 = scalar_lea.vmem %s5, 2
        %v2540 = vld [vmem:[%s2539] sm:$0x1]
        %v2541 = vpack.c.bf16 %v2480, %v2477
        %v2542 = vpack.c.bf16 %v2488, %v2485
        %v2543 = vpack.c.bf16 %v2496, %v2493
        %v2544 = vpack.c.bf16 %v2504, %v2501
        %v2545 = vpack.c.bf16 %v2512, %v2509
        %v2546 = vpack.c.bf16 %v2520, %v2517
        %v2547 = vpack.c.bf16 %v2528, %v2525
        %v2548 = vpack.c.bf16 %v2536, %v2533
        %v2550 = vsel %vm1061, %v2541, 0
        %v2553 = vsel %vm1061, %v2542, 0
        %v2556 = vsel %vm1061, %v2543, 0
        %v2559 = vsel %vm1061, %v2544, 0
        %v2562 = vsel %vm1061, %v2545, 0
        %v2565 = vsel %vm1061, %v2546, 0
        %v2568 = vsel %vm1061, %v2547, 0
        %v2571 = vsel %vm1061, %v2548, 0
        %v2574 = vsel %vm1074, %v2540, 0
        %2576 = vmatprep.subr.bf16.mxu0 0
        %2577 = vmatpush1.bf16.msra.mxu0 %v2574
        %2578 = vmatprep.subr.bf16.mxu0 0
        %2579 = vmatpush1.bf16.msra.mxu0 0
        %2580 = vmatprep.subr.bf16.mxu0 0
        %2581 = vmatpush1.bf16.msra.mxu0 0
        %2582 = vmatprep.subr.bf16.mxu0 0
        %2583 = vmatpush1.bf16.msra.mxu0 0
        %2584 = vmatprep.subr.bf16.mxu0 0
        %2585 = vmatpush1.bf16.msra.mxu0 0
        %2586 = vmatprep.subr.bf16.mxu0 0
        %2587 = vmatpush1.bf16.msra.mxu0 0
        %2588 = vmatprep.subr.bf16.mxu0 0
        %2589 = vmatpush1.bf16.msra.mxu0 0
        %2590 = vmatprep.subr.bf16.mxu0 0
        %2591 = vmatpush1.bf16.msra.mxu0 0
        %2592 = vmatprep.subr.bf16.mxu0 0
        %2593 = vmatpush1.bf16.msra.mxu0 0
        %2594 = vmatprep.subr.bf16.mxu0 0
        %2595 = vmatpush1.bf16.msra.mxu0 0
        %2596 = vmatprep.subr.bf16.mxu0 0
        %2597 = vmatpush1.bf16.msra.mxu0 0
        %2598 = vmatprep.subr.bf16.mxu0 0
        %2599 = vmatpush1.bf16.msra.mxu0 0
        %2600 = vmatprep.subr.bf16.mxu0 0
        %2601 = vmatpush1.bf16.msra.mxu0 0
        %2602 = vmatprep.subr.bf16.mxu0 0
        %2603 = vmatpush1.bf16.msra.mxu0 0
        %2604 = vmatprep.subr.bf16.mxu0 0
        %2605 = vmatpush1.bf16.msra.mxu0 0
        %2606 = vmatprep.subr.bf16.mxu0 0
        %2607 = vmatpush1.bf16.msra.mxu0 0
        %2608 = vmatprep.mubr.bf16.mxu0 0
        %2609 = vmatmul.mubr.bf16.gmra.mrb[0].mxu0 %v2550
        %v2610 = vpop.f32.mrb[0].mxu0
        %v2611 = vadd.f32 0.0, %v2610
        %v2612 = vpop.f32.mrb[0].mxu0
        %v2613 = vpop.f32.mrb[0].mxu0
        %v2614 = vadd.f32 0.0, %v2613
        %v2615 = vpop.f32.mrb[0].mxu0
        %2616 = vmatprep.mubr.bf16.mxu0 0
        %2617 = vmatmul.mubr.bf16.gmra.mrb[0].mxu0 %v2553
        %v2618 = vpop.f32.mrb[0].mxu0
        %v2619 = vadd.f32 0.0, %v2618
        %v2620 = vpop.f32.mrb[0].mxu0
        %v2621 = vpop.f32.mrb[0].mxu0
        %v2622 = vadd.f32 0.0, %v2621
        %v2623 = vpop.f32.mrb[0].mxu0
        %2624 = vmatprep.mubr.bf16.mxu0 0
        %2625 = vmatmul.mubr.bf16.gmra.mrb[0].mxu0 %v2556
        %v2626 = vpop.f32.mrb[0].mxu0
        %v2627 = vadd.f32 0.0, %v2626
        %v2628 = vpop.f32.mrb[0].mxu0
        %v2629 = vpop.f32.mrb[0].mxu0
        %v2630 = vadd.f32 0.0, %v2629
        %v2631 = vpop.f32.mrb[0].mxu0
        %2632 = vmatprep.mubr.bf16.mxu0 0
        %2633 = vmatmul.mubr.bf16.gmra.mrb[0].mxu0 %v2559
        %v2634 = vpop.f32.mrb[0].mxu0
        %v2635 = vadd.f32 0.0, %v2634
        %v2636 = vpop.f32.mrb[0].mxu0
        %v2637 = vpop.f32.mrb[0].mxu0
        %v2638 = vadd.f32 0.0, %v2637
        %v2639 = vpop.f32.mrb[0].mxu0
        %2640 = vmatprep.mubr.bf16.mxu0 0
        %2641 = vmatmul.mubr.bf16.gmra.mrb[0].mxu0 %v2562
        %v2642 = vpop.f32.mrb[0].mxu0
        %v2643 = vadd.f32 0.0, %v2642
        %v2644 = vpop.f32.mrb[0].mxu0
        %v2645 = vpop.f32.mrb[0].mxu0
        %v2646 = vadd.f32 0.0, %v2645
        %v2647 = vpop.f32.mrb[0].mxu0
        %2648 = vmatprep.mubr.bf16.mxu0 0
        %2649 = vmatmul.mubr.bf16.gmra.mrb[0].mxu0 %v2565
        %v2650 = vpop.f32.mrb[0].mxu0
        %v2651 = vadd.f32 0.0, %v2650
        %v2652 = vpop.f32.mrb[0].mxu0
        %v2653 = vpop.f32.mrb[0].mxu0
        %v2654 = vadd.f32 0.0, %v2653
        %v2655 = vpop.f32.mrb[0].mxu0
        %2656 = vmatprep.mubr.bf16.mxu0 0
        %2657 = vmatmul.mubr.bf16.gmra.mrb[0].mxu0 %v2568
        %v2658 = vpop.f32.mrb[0].mxu0
        %v2659 = vadd.f32 0.0, %v2658
        %v2660 = vpop.f32.mrb[0].mxu0
        %v2661 = vpop.f32.mrb[0].mxu0
        %v2662 = vadd.f32 0.0, %v2661
        %v2663 = vpop.f32.mrb[0].mxu0
        %2664 = vmatprep.mubr.bf16.mxu0 0
        %2665 = vmatmul.mubr.bf16.gmra.mrb[0].mxu0 %v2571
        %v2666 = vpop.f32.mrb[0].mxu0
        %v2667 = vadd.f32 0.0, %v2666
        %v2668 = vpop.f32.mrb[0].mxu0
        %v2669 = vpop.f32.mrb[0].mxu0
        %v2670 = vadd.f32 0.0, %v2669
        %v2671 = vpop.f32.mrb[0].mxu0
        %2672 = vdwg.mxu0
        %v2673 = vadd.f32 %v2315, %v2611
        %v2674 = vadd.f32 %v2318, %v2614
        %v2675 = vadd.f32 %v2323, %v2619
        %v2676 = vadd.f32 %v2326, %v2622
        %v2677 = vadd.f32 %v2331, %v2627
        %v2678 = vadd.f32 %v2334, %v2630
        %v2679 = vadd.f32 %v2339, %v2635
        %v2680 = vadd.f32 %v2342, %v2638
        %v2681 = vadd.f32 %v2347, %v2643
        %v2682 = vadd.f32 %v2350, %v2646
        %v2683 = vadd.f32 %v2355, %v2651
        %v2684 = vadd.f32 %v2358, %v2654
        %v2685 = vadd.f32 %v2363, %v2659
        %v2686 = vadd.f32 %v2366, %v2662
        %v2687 = vadd.f32 %v2371, %v2667
        %v2688 = vadd.f32 %v2374, %v2670
        %s2689 = scalar_lea.vmem [#allocation11], 192
        %v2690 = vld [vmem:[%s2689] sm:$0xf]
        %v2691 = vld [vmem:[%s2689 + $0x4] sm:$0xf]
        %v2692 = vld [vmem:[%s2689 + $0x8] sm:$0xf]
        %v2693 = vld [vmem:[%s2689 + $0xc] sm:$0xf]
        %v2694 = vld [vmem:[%s2689 + $0x10] sm:$0xf]
        %v2695 = vld [vmem:[%s2689 + $0x14] sm:$0xf]
        %v2696 = vld [vmem:[%s2689 + $0x18] sm:$0xf]
        %v2697 = vld [vmem:[%s2689 + $0x1c] sm:$0xf]
        %v2698 = vld [vmem:[%s2689 + $0x20] sm:$0xf]
        %v2699 = vld [vmem:[%s2689 + $0x24] sm:$0xf]
        %v2700 = vld [vmem:[%s2689 + $0x28] sm:$0xf]
        %v2701 = vld [vmem:[%s2689 + $0x2c] sm:$0xf]
        %v2702 = vld [vmem:[%s2689 + $0x30] sm:$0xf]
        %v2703 = vld [vmem:[%s2689 + $0x34] sm:$0xf]
        %v2704 = vld [vmem:[%s2689 + $0x38] sm:$0xf]
        %v2705 = vld [vmem:[%s2689 + $0x3c] sm:$0xf]
        %v2722 = vunpack.c.l.b16 %v2690
        %v2723 = vunpack.c.l.b16 %v2691
        %v2724 = vunpack.c.l.b16 %v2692
        %v2725 = vunpack.c.l.b16 %v2693
        %v2726 = vunpack.c.l.b16 %v2694
        %v2727 = vunpack.c.l.b16 %v2695
        %v2728 = vunpack.c.l.b16 %v2696
        %v2729 = vunpack.c.l.b16 %v2697
        %v2730 = vunpack.c.l.b16 %v2698
        %v2731 = vunpack.c.l.b16 %v2699
        %v2732 = vunpack.c.l.b16 %v2700
        %v2733 = vunpack.c.l.b16 %v2701
        %v2734 = vunpack.c.l.b16 %v2702
        %v2735 = vunpack.c.l.b16 %v2703
        %v2736 = vunpack.c.l.b16 %v2704
        %v2737 = vunpack.c.l.b16 %v2705
        %v2738 = vpack.c.b16 %v2723, %v2722
        %v2739 = vpack.c.b16 %v2725, %v2724
        %v2740 = vpack.c.b16 %v2727, %v2726
        %v2741 = vpack.c.b16 %v2729, %v2728
        %v2742 = vpack.c.b16 %v2731, %v2730
        %v2743 = vpack.c.b16 %v2733, %v2732
        %v2744 = vpack.c.b16 %v2735, %v2734
        %v2745 = vpack.c.b16 %v2737, %v2736
        %2754 = vmatprep.subr.bf16.mxu0 0
        %2755 = vmatpush1.bf16.msra.mxu0 %v1795
        %2756 = vmatprep.subr.bf16.mxu0 0
        %2757 = vmatpush1.bf16.msra.mxu0 %v1796
        %2758 = vmatprep.subr.bf16.mxu0 0
        %2759 = vmatpush1.bf16.msra.mxu0 %v1797
        %2760 = vmatprep.subr.bf16.mxu0 0
        %2761 = vmatpush1.bf16.msra.mxu0 %v1798
        %2762 = vmatprep.subr.bf16.mxu0 0
        %2763 = vmatpush1.bf16.msra.mxu0 %v1799
        %2764 = vmatprep.subr.bf16.mxu0 0
        %2765 = vmatpush1.bf16.msra.mxu0 %v1800
        %2766 = vmatprep.subr.bf16.mxu0 0
        %2767 = vmatpush1.bf16.msra.mxu0 %v1801
        %2768 = vmatprep.subr.bf16.mxu0 0
        %2769 = vmatpush1.bf16.msra.mxu0 %v1802
        %2770 = vmatprep.subr.bf16.mxu0 0
        %2771 = vmatpush1.bf16.msra.mxu0 0
        %2772 = vmatprep.subr.bf16.mxu0 0
        %2773 = vmatpush1.bf16.msra.mxu0 0
        %2774 = vmatprep.subr.bf16.mxu0 0
        %2775 = vmatpush1.bf16.msra.mxu0 0
        %2776 = vmatprep.subr.bf16.mxu0 0
        %2777 = vmatpush1.bf16.msra.mxu0 0
        %2778 = vmatprep.subr.bf16.mxu0 0
        %2779 = vmatpush1.bf16.msra.mxu0 0
        %2780 = vmatprep.subr.bf16.mxu0 0
        %2781 = vmatpush1.bf16.msra.mxu0 0
        %2782 = vmatprep.subr.bf16.mxu0 0
        %2783 = vmatpush1.bf16.msra.mxu0 0
        %2784 = vmatprep.subr.bf16.mxu0 0
        %2785 = vmatpush1.bf16.msra.mxu0 0
        %2786 = vmatprep.mubr.bf16.mxu0 0
        %2787 = vmatmul.mubr.bf16.gmra.mrb[0].mxu0 %v2738
        %v2788 = vpop.f32.mrb[0].mxu0
        %v2789 = vadd.f32 0.0, %v2788
        %v2790 = vpop.f32.mrb[0].mxu0
        %v2791 = vpop.f32.mrb[0].mxu0
        %v2792 = vadd.f32 0.0, %v2791
        %v2793 = vpop.f32.mrb[0].mxu0
        %2794 = vmatprep.mubr.bf16.mxu0 0
        %2795 = vmatmul.mubr.bf16.gmra.mrb[0].mxu0 %v2739
        %v2796 = vpop.f32.mrb[0].mxu0
        %v2797 = vadd.f32 0.0, %v2796
        %v2798 = vpop.f32.mrb[0].mxu0
        %v2799 = vpop.f32.mrb[0].mxu0
        %v2800 = vadd.f32 0.0, %v2799
        %v2801 = vpop.f32.mrb[0].mxu0
        %2802 = vmatprep.mubr.bf16.mxu0 0
        %2803 = vmatmul.mubr.bf16.gmra.mrb[0].mxu0 %v2740
        %v2804 = vpop.f32.mrb[0].mxu0
        %v2805 = vadd.f32 0.0, %v2804
        %v2806 = vpop.f32.mrb[0].mxu0
        %v2807 = vpop.f32.mrb[0].mxu0
        %v2808 = vadd.f32 0.0, %v2807
        %v2809 = vpop.f32.mrb[0].mxu0
        %2810 = vmatprep.mubr.bf16.mxu0 0
        %2811 = vmatmul.mubr.bf16.gmra.mrb[0].mxu0 %v2741
        %v2812 = vpop.f32.mrb[0].mxu0
        %v2813 = vadd.f32 0.0, %v2812
        %v2814 = vpop.f32.mrb[0].mxu0
        %v2815 = vpop.f32.mrb[0].mxu0
        %v2816 = vadd.f32 0.0, %v2815
        %v2817 = vpop.f32.mrb[0].mxu0
        %2818 = vmatprep.mubr.bf16.mxu0 0
        %2819 = vmatmul.mubr.bf16.gmra.mrb[0].mxu0 %v2742
        %v2820 = vpop.f32.mrb[0].mxu0
        %v2821 = vadd.f32 0.0, %v2820
        %v2822 = vpop.f32.mrb[0].mxu0
        %v2823 = vpop.f32.mrb[0].mxu0
        %v2824 = vadd.f32 0.0, %v2823
        %v2825 = vpop.f32.mrb[0].mxu0
        %2826 = vmatprep.mubr.bf16.mxu0 0
        %2827 = vmatmul.mubr.bf16.gmra.mrb[0].mxu0 %v2743
        %v2828 = vpop.f32.mrb[0].mxu0
        %v2829 = vadd.f32 0.0, %v2828
        %v2830 = vpop.f32.mrb[0].mxu0
        %v2831 = vpop.f32.mrb[0].mxu0
        %v2832 = vadd.f32 0.0, %v2831
        %v2833 = vpop.f32.mrb[0].mxu0
        %2834 = vmatprep.mubr.bf16.mxu0 0
        %2835 = vmatmul.mubr.bf16.gmra.mrb[0].mxu0 %v2744
        %v2836 = vpop.f32.mrb[0].mxu0
        %v2837 = vadd.f32 0.0, %v2836
        %v2838 = vpop.f32.mrb[0].mxu0
        %v2839 = vpop.f32.mrb[0].mxu0
        %v2840 = vadd.f32 0.0, %v2839
        %v2841 = vpop.f32.mrb[0].mxu0
        %2842 = vmatprep.mubr.bf16.mxu0 0
        %2843 = vmatmul.mubr.bf16.gmra.mrb[0].mxu0 %v2745
        %v2844 = vpop.f32.mrb[0].mxu0
        %v2845 = vadd.f32 0.0, %v2844
        %v2846 = vpop.f32.mrb[0].mxu0
        %v2847 = vpop.f32.mrb[0].mxu0
        %v2848 = vadd.f32 0.0, %v2847
        %v2849 = vpop.f32.mrb[0].mxu0
        %2850 = vdwg.mxu0
        %s2851 = scalar_lea.vmem %s5, 3
        %v2852 = vld [vmem:[%s2851] sm:$0x1]
        %v2853 = vpack.c.bf16 %v2792, %v2789
        %v2854 = vpack.c.bf16 %v2800, %v2797
        %v2855 = vpack.c.bf16 %v2808, %v2805
        %v2856 = vpack.c.bf16 %v2816, %v2813
        %v2857 = vpack.c.bf16 %v2824, %v2821
        %v2858 = vpack.c.bf16 %v2832, %v2829
        %v2859 = vpack.c.bf16 %v2840, %v2837
        %v2860 = vpack.c.bf16 %v2848, %v2845
        %v2862 = vsel %vm1061, %v2853, 0
        %v2865 = vsel %vm1061, %v2854, 0
        %v2868 = vsel %vm1061, %v2855, 0
        %v2871 = vsel %vm1061, %v2856, 0
        %v2874 = vsel %vm1061, %v2857, 0
        %v2877 = vsel %vm1061, %v2858, 0
        %v2880 = vsel %vm1061, %v2859, 0
        %v2883 = vsel %vm1061, %v2860, 0
        %v2886 = vsel %vm1074, %v2852, 0
        %2888 = vmatprep.subr.bf16.mxu0 0
        %2889 = vmatpush1.bf16.msra.mxu0 %v2886
        %2890 = vmatprep.subr.bf16.mxu0 0
        %2891 = vmatpush1.bf16.msra.mxu0 0
        %2892 = vmatprep.subr.bf16.mxu0 0
        %2893 = vmatpush1.bf16.msra.mxu0 0
        %2894 = vmatprep.subr.bf16.mxu0 0
        %2895 = vmatpush1.bf16.msra.mxu0 0
        %2896 = vmatprep.subr.bf16.mxu0 0
        %2897 = vmatpush1.bf16.msra.mxu0 0
        %2898 = vmatprep.subr.bf16.mxu0 0
        %2899 = vmatpush1.bf16.msra.mxu0 0
        %2900 = vmatprep.subr.bf16.mxu0 0
        %2901 = vmatpush1.bf16.msra.mxu0 0
        %2902 = vmatprep.subr.bf16.mxu0 0
        %2903 = vmatpush1.bf16.msra.mxu0 0
        %2904 = vmatprep.subr.bf16.mxu0 0
        %2905 = vmatpush1.bf16.msra.mxu0 0
        %2906 = vmatprep.subr.bf16.mxu0 0
        %2907 = vmatpush1.bf16.msra.mxu0 0
        %2908 = vmatprep.subr.bf16.mxu0 0
        %2909 = vmatpush1.bf16.msra.mxu0 0
        %2910 = vmatprep.subr.bf16.mxu0 0
        %2911 = vmatpush1.bf16.msra.mxu0 0
        %2912 = vmatprep.subr.bf16.mxu0 0
        %2913 = vmatpush1.bf16.msra.mxu0 0
        %2914 = vmatprep.subr.bf16.mxu0 0
        %2915 = vmatpush1.bf16.msra.mxu0 0
        %2916 = vmatprep.subr.bf16.mxu0 0
        %2917 = vmatpush1.bf16.msra.mxu0 0
        %2918 = vmatprep.subr.bf16.mxu0 0
        %2919 = vmatpush1.bf16.msra.mxu0 0
        %2920 = vmatprep.mubr.bf16.mxu0 0
        %2921 = vmatmul.mubr.bf16.gmra.mrb[0].mxu0 %v2862
        %v2922 = vpop.f32.mrb[0].mxu0
        %v2923 = vadd.f32 0.0, %v2922
        %v2924 = vpop.f32.mrb[0].mxu0
        %v2925 = vpop.f32.mrb[0].mxu0
        %v2926 = vadd.f32 0.0, %v2925
        %v2927 = vpop.f32.mrb[0].mxu0
        %2928 = vmatprep.mubr.bf16.mxu0 0
        %2929 = vmatmul.mubr.bf16.gmra.mrb[0].mxu0 %v2865
        %v2930 = vpop.f32.mrb[0].mxu0
        %v2931 = vadd.f32 0.0, %v2930
        %v2932 = vpop.f32.mrb[0].mxu0
        %v2933 = vpop.f32.mrb[0].mxu0
        %v2934 = vadd.f32 0.0, %v2933
        %v2935 = vpop.f32.mrb[0].mxu0
        %2936 = vmatprep.mubr.bf16.mxu0 0
        %2937 = vmatmul.mubr.bf16.gmra.mrb[0].mxu0 %v2868
        %v2938 = vpop.f32.mrb[0].mxu0
        %v2939 = vadd.f32 0.0, %v2938
        %v2940 = vpop.f32.mrb[0].mxu0
        %v2941 = vpop.f32.mrb[0].mxu0
        %v2942 = vadd.f32 0.0, %v2941
        %v2943 = vpop.f32.mrb[0].mxu0
        %2944 = vmatprep.mubr.bf16.mxu0 0
        %2945 = vmatmul.mubr.bf16.gmra.mrb[0].mxu0 %v2871
        %v2946 = vpop.f32.mrb[0].mxu0
        %v2947 = vadd.f32 0.0, %v2946
        %v2948 = vpop.f32.mrb[0].mxu0
        %v2949 = vpop.f32.mrb[0].mxu0
        %v2950 = vadd.f32 0.0, %v2949
        %v2951 = vpop.f32.mrb[0].mxu0
        %2952 = vmatprep.mubr.bf16.mxu0 0
        %2953 = vmatmul.mubr.bf16.gmra.mrb[0].mxu0 %v2874
        %v2954 = vpop.f32.mrb[0].mxu0
        %v2955 = vadd.f32 0.0, %v2954
        %v2956 = vpop.f32.mrb[0].mxu0
        %v2957 = vpop.f32.mrb[0].mxu0
        %v2958 = vadd.f32 0.0, %v2957
        %v2959 = vpop.f32.mrb[0].mxu0
        %2960 = vmatprep.mubr.bf16.mxu0 0
        %2961 = vmatmul.mubr.bf16.gmra.mrb[0].mxu0 %v2877
        %v2962 = vpop.f32.mrb[0].mxu0
        %v2963 = vadd.f32 0.0, %v2962
        %v2964 = vpop.f32.mrb[0].mxu0
        %v2965 = vpop.f32.mrb[0].mxu0
        %v2966 = vadd.f32 0.0, %v2965
        %v2967 = vpop.f32.mrb[0].mxu0
        %2968 = vmatprep.mubr.bf16.mxu0 0
        %2969 = vmatmul.mubr.bf16.gmra.mrb[0].mxu0 %v2880
        %v2970 = vpop.f32.mrb[0].mxu0
        %v2971 = vadd.f32 0.0, %v2970
        %v2972 = vpop.f32.mrb[0].mxu0
        %v2973 = vpop.f32.mrb[0].mxu0
        %v2974 = vadd.f32 0.0, %v2973
        %v2975 = vpop.f32.mrb[0].mxu0
        %2976 = vmatprep.mubr.bf16.mxu0 0
        %2977 = vmatmul.mubr.bf16.gmra.mrb[0].mxu0 %v2883
        %v2978 = vpop.f32.mrb[0].mxu0
        %v2979 = vadd.f32 0.0, %v2978
        %v2980 = vpop.f32.mrb[0].mxu0
        %v2981 = vpop.f32.mrb[0].mxu0
        %v2982 = vadd.f32 0.0, %v2981
        %v2983 = vpop.f32.mrb[0].mxu0
        %2984 = vdwg.mxu0
        %v2985 = vadd.f32 %v2673, %v2923
        %v2986 = vadd.f32 %v2674, %v2926
        %v2987 = vadd.f32 %v2675, %v2931
        %v2988 = vadd.f32 %v2676, %v2934
        %v2989 = vadd.f32 %v2677, %v2939
        %v2990 = vadd.f32 %v2678, %v2942
        %v2991 = vadd.f32 %v2679, %v2947
        %v2992 = vadd.f32 %v2680, %v2950
        %v2993 = vadd.f32 %v2681, %v2955
        %v2994 = vadd.f32 %v2682, %v2958
        %v2995 = vadd.f32 %v2683, %v2963
        %v2996 = vadd.f32 %v2684, %v2966
        %v2997 = vadd.f32 %v2685, %v2971
        %v2998 = vadd.f32 %v2686, %v2974
        %v2999 = vadd.f32 %v2687, %v2979
        %v3000 = vadd.f32 %v2688, %v2982
        %s3001 = scalar_lea.vmem [#allocation11], 256
        %v3002 = vld [vmem:[%s3001] sm:$0xf]
        %v3003 = vld [vmem:[%s3001 + $0x4] sm:$0xf]
        %v3004 = vld [vmem:[%s3001 + $0x8] sm:$0xf]
        %v3005 = vld [vmem:[%s3001 + $0xc] sm:$0xf]
        %v3006 = vld [vmem:[%s3001 + $0x10] sm:$0xf]
        %v3007 = vld [vmem:[%s3001 + $0x14] sm:$0xf]
        %v3008 = vld [vmem:[%s3001 + $0x18] sm:$0xf]
        %v3009 = vld [vmem:[%s3001 + $0x1c] sm:$0xf]
        %v3010 = vld [vmem:[%s3001 + $0x20] sm:$0xf]
        %v3011 = vld [vmem:[%s3001 + $0x24] sm:$0xf]
        %v3012 = vld [vmem:[%s3001 + $0x28] sm:$0xf]
        %v3013 = vld [vmem:[%s3001 + $0x2c] sm:$0xf]
        %v3014 = vld [vmem:[%s3001 + $0x30] sm:$0xf]
        %v3015 = vld [vmem:[%s3001 + $0x34] sm:$0xf]
        %v3016 = vld [vmem:[%s3001 + $0x38] sm:$0xf]
        %v3017 = vld [vmem:[%s3001 + $0x3c] sm:$0xf]
        %v3034 = vunpack.c.l.b16 %v3002
        %v3035 = vunpack.c.l.b16 %v3003
        %v3036 = vunpack.c.l.b16 %v3004
        %v3037 = vunpack.c.l.b16 %v3005
        %v3038 = vunpack.c.l.b16 %v3006
        %v3039 = vunpack.c.l.b16 %v3007
        %v3040 = vunpack.c.l.b16 %v3008
        %v3041 = vunpack.c.l.b16 %v3009
        %v3042 = vunpack.c.l.b16 %v3010
        %v3043 = vunpack.c.l.b16 %v3011
        %v3044 = vunpack.c.l.b16 %v3012
        %v3045 = vunpack.c.l.b16 %v3013
        %v3046 = vunpack.c.l.b16 %v3014
        %v3047 = vunpack.c.l.b16 %v3015
        %v3048 = vunpack.c.l.b16 %v3016
        %v3049 = vunpack.c.l.b16 %v3017
        %v3050 = vpack.c.b16 %v3035, %v3034
        %v3051 = vpack.c.b16 %v3037, %v3036
        %v3052 = vpack.c.b16 %v3039, %v3038
        %v3053 = vpack.c.b16 %v3041, %v3040
        %v3054 = vpack.c.b16 %v3043, %v3042
        %v3055 = vpack.c.b16 %v3045, %v3044
        %v3056 = vpack.c.b16 %v3047, %v3046
        %v3057 = vpack.c.b16 %v3049, %v3048
        %3066 = vmatprep.subr.bf16.mxu0 0
        %3067 = vmatpush1.bf16.msra.mxu0 %v1795
        %3068 = vmatprep.subr.bf16.mxu0 0
        %3069 = vmatpush1.bf16.msra.mxu0 %v1796
        %3070 = vmatprep.subr.bf16.mxu0 0
        %3071 = vmatpush1.bf16.msra.mxu0 %v1797
        %3072 = vmatprep.subr.bf16.mxu0 0
        %3073 = vmatpush1.bf16.msra.mxu0 %v1798
        %3074 = vmatprep.subr.bf16.mxu0 0
        %3075 = vmatpush1.bf16.msra.mxu0 %v1799
        %3076 = vmatprep.subr.bf16.mxu0 0
        %3077 = vmatpush1.bf16.msra.mxu0 %v1800
        %3078 = vmatprep.subr.bf16.mxu0 0
        %3079 = vmatpush1.bf16.msra.mxu0 %v1801
        %3080 = vmatprep.subr.bf16.mxu0 0
        %3081 = vmatpush1.bf16.msra.mxu0 %v1802
        %3082 = vmatprep.subr.bf16.mxu0 0
        %3083 = vmatpush1.bf16.msra.mxu0 0
        %3084 = vmatprep.subr.bf16.mxu0 0
        %3085 = vmatpush1.bf16.msra.mxu0 0
        %3086 = vmatprep.subr.bf16.mxu0 0
        %3087 = vmatpush1.bf16.msra.mxu0 0
        %3088 = vmatprep.subr.bf16.mxu0 0
        %3089 = vmatpush1.bf16.msra.mxu0 0
        %3090 = vmatprep.subr.bf16.mxu0 0
        %3091 = vmatpush1.bf16.msra.mxu0 0
        %3092 = vmatprep.subr.bf16.mxu0 0
        %3093 = vmatpush1.bf16.msra.mxu0 0
        %3094 = vmatprep.subr.bf16.mxu0 0
        %3095 = vmatpush1.bf16.msra.mxu0 0
        %3096 = vmatprep.subr.bf16.mxu0 0
        %3097 = vmatpush1.bf16.msra.mxu0 0
        %3098 = vmatprep.mubr.bf16.mxu0 0
        %3099 = vmatmul.mubr.bf16.gmra.mrb[0].mxu0 %v3050
        %v3100 = vpop.f32.mrb[0].mxu0
        %v3101 = vadd.f32 0.0, %v3100
        %v3102 = vpop.f32.mrb[0].mxu0
        %v3103 = vpop.f32.mrb[0].mxu0
        %v3104 = vadd.f32 0.0, %v3103
        %v3105 = vpop.f32.mrb[0].mxu0
        %3106 = vmatprep.mubr.bf16.mxu0 0
        %3107 = vmatmul.mubr.bf16.gmra.mrb[0].mxu0 %v3051
        %v3108 = vpop.f32.mrb[0].mxu0
        %v3109 = vadd.f32 0.0, %v3108
        %v3110 = vpop.f32.mrb[0].mxu0
        %v3111 = vpop.f32.mrb[0].mxu0
        %v3112 = vadd.f32 0.0, %v3111
        %v3113 = vpop.f32.mrb[0].mxu0
        %3114 = vmatprep.mubr.bf16.mxu0 0
        %3115 = vmatmul.mubr.bf16.gmra.mrb[0].mxu0 %v3052
        %v3116 = vpop.f32.mrb[0].mxu0
        %v3117 = vadd.f32 0.0, %v3116
        %v3118 = vpop.f32.mrb[0].mxu0
        %v3119 = vpop.f32.mrb[0].mxu0
        %v3120 = vadd.f32 0.0, %v3119
        %v3121 = vpop.f32.mrb[0].mxu0
        %3122 = vmatprep.mubr.bf16.mxu0 0
        %3123 = vmatmul.mubr.bf16.gmra.mrb[0].mxu0 %v3053
        %v3124 = vpop.f32.mrb[0].mxu0
        %v3125 = vadd.f32 0.0, %v3124
        %v3126 = vpop.f32.mrb[0].mxu0
        %v3127 = vpop.f32.mrb[0].mxu0
        %v3128 = vadd.f32 0.0, %v3127
        %v3129 = vpop.f32.mrb[0].mxu0
        %3130 = vmatprep.mubr.bf16.mxu0 0
        %3131 = vmatmul.mubr.bf16.gmra.mrb[0].mxu0 %v3054
        %v3132 = vpop.f32.mrb[0].mxu0
        %v3133 = vadd.f32 0.0, %v3132
        %v3134 = vpop.f32.mrb[0].mxu0
        %v3135 = vpop.f32.mrb[0].mxu0
        %v3136 = vadd.f32 0.0, %v3135
        %v3137 = vpop.f32.mrb[0].mxu0
        %3138 = vmatprep.mubr.bf16.mxu0 0
        %3139 = vmatmul.mubr.bf16.gmra.mrb[0].mxu0 %v3055
        %v3140 = vpop.f32.mrb[0].mxu0
        %v3141 = vadd.f32 0.0, %v3140
        %v3142 = vpop.f32.mrb[0].mxu0
        %v3143 = vpop.f32.mrb[0].mxu0
        %v3144 = vadd.f32 0.0, %v3143
        %v3145 = vpop.f32.mrb[0].mxu0
        %3146 = vmatprep.mubr.bf16.mxu0 0
        %3147 = vmatmul.mubr.bf16.gmra.mrb[0].mxu0 %v3056
        %v3148 = vpop.f32.mrb[0].mxu0
        %v3149 = vadd.f32 0.0, %v3148
        %v3150 = vpop.f32.mrb[0].mxu0
        %v3151 = vpop.f32.mrb[0].mxu0
        %v3152 = vadd.f32 0.0, %v3151
        %v3153 = vpop.f32.mrb[0].mxu0
        %3154 = vmatprep.mubr.bf16.mxu0 0
        %3155 = vmatmul.mubr.bf16.gmra.mrb[0].mxu0 %v3057
        %v3156 = vpop.f32.mrb[0].mxu0
        %v3157 = vadd.f32 0.0, %v3156
        %v3158 = vpop.f32.mrb[0].mxu0
        %v3159 = vpop.f32.mrb[0].mxu0
        %v3160 = vadd.f32 0.0, %v3159
        %v3161 = vpop.f32.mrb[0].mxu0
        %3162 = vdwg.mxu0
        %s3163 = scalar_lea.vmem %s5, 4
        %v3164 = vld [vmem:[%s3163] sm:$0x1]
        %v3165 = vpack.c.bf16 %v3104, %v3101
        %v3166 = vpack.c.bf16 %v3112, %v3109
        %v3167 = vpack.c.bf16 %v3120, %v3117
        %v3168 = vpack.c.bf16 %v3128, %v3125
        %v3169 = vpack.c.bf16 %v3136, %v3133
        %v3170 = vpack.c.bf16 %v3144, %v3141
        %v3171 = vpack.c.bf16 %v3152, %v3149
        %v3172 = vpack.c.bf16 %v3160, %v3157
        %v3174 = vsel %vm1061, %v3165, 0
        %v3177 = vsel %vm1061, %v3166, 0
        %v3180 = vsel %vm1061, %v3167, 0
        %v3183 = vsel %vm1061, %v3168, 0
        %v3186 = vsel %vm1061, %v3169, 0
        %v3189 = vsel %vm1061, %v3170, 0
        %v3192 = vsel %vm1061, %v3171, 0
        %v3195 = vsel %vm1061, %v3172, 0
        %v3198 = vsel %vm1074, %v3164, 0
        %3200 = vmatprep.subr.bf16.mxu0 0
        %3201 = vmatpush1.bf16.msra.mxu0 %v3198
        %3202 = vmatprep.subr.bf16.mxu0 0
        %3203 = vmatpush1.bf16.msra.mxu0 0
        %3204 = vmatprep.subr.bf16.mxu0 0
        %3205 = vmatpush1.bf16.msra.mxu0 0
        %3206 = vmatprep.subr.bf16.mxu0 0
        %3207 = vmatpush1.bf16.msra.mxu0 0
        %3208 = vmatprep.subr.bf16.mxu0 0
        %3209 = vmatpush1.bf16.msra.mxu0 0
        %3210 = vmatprep.subr.bf16.mxu0 0
        %3211 = vmatpush1.bf16.msra.mxu0 0
        %3212 = vmatprep.subr.bf16.mxu0 0
        %3213 = vmatpush1.bf16.msra.mxu0 0
        %3214 = vmatprep.subr.bf16.mxu0 0
        %3215 = vmatpush1.bf16.msra.mxu0 0
        %3216 = vmatprep.subr.bf16.mxu0 0
        %3217 = vmatpush1.bf16.msra.mxu0 0
        %3218 = vmatprep.subr.bf16.mxu0 0
        %3219 = vmatpush1.bf16.msra.mxu0 0
        %3220 = vmatprep.subr.bf16.mxu0 0
        %3221 = vmatpush1.bf16.msra.mxu0 0
        %3222 = vmatprep.subr.bf16.mxu0 0
        %3223 = vmatpush1.bf16.msra.mxu0 0
        %3224 = vmatprep.subr.bf16.mxu0 0
        %3225 = vmatpush1.bf16.msra.mxu0 0
        %3226 = vmatprep.subr.bf16.mxu0 0
        %3227 = vmatpush1.bf16.msra.mxu0 0
        %3228 = vmatprep.subr.bf16.mxu0 0
        %3229 = vmatpush1.bf16.msra.mxu0 0
        %3230 = vmatprep.subr.bf16.mxu0 0
        %3231 = vmatpush1.bf16.msra.mxu0 0
        %3232 = vmatprep.mubr.bf16.mxu0 0
        %3233 = vmatmul.mubr.bf16.gmra.mrb[0].mxu0 %v3174
        %v3234 = vpop.f32.mrb[0].mxu0
        %v3235 = vadd.f32 0.0, %v3234
        %v3236 = vpop.f32.mrb[0].mxu0
        %v3237 = vpop.f32.mrb[0].mxu0
        %v3238 = vadd.f32 0.0, %v3237
        %v3239 = vpop.f32.mrb[0].mxu0
        %3240 = vmatprep.mubr.bf16.mxu0 0
        %3241 = vmatmul.mubr.bf16.gmra.mrb[0].mxu0 %v3177
        %v3242 = vpop.f32.mrb[0].mxu0
        %v3243 = vadd.f32 0.0, %v3242
        %v3244 = vpop.f32.mrb[0].mxu0
        %v3245 = vpop.f32.mrb[0].mxu0
        %v3246 = vadd.f32 0.0, %v3245
        %v3247 = vpop.f32.mrb[0].mxu0
        %3248 = vmatprep.mubr.bf16.mxu0 0
        %3249 = vmatmul.mubr.bf16.gmra.mrb[0].mxu0 %v3180
        %v3250 = vpop.f32.mrb[0].mxu0
        %v3251 = vadd.f32 0.0, %v3250
        %v3252 = vpop.f32.mrb[0].mxu0
        %v3253 = vpop.f32.mrb[0].mxu0
        %v3254 = vadd.f32 0.0, %v3253
        %v3255 = vpop.f32.mrb[0].mxu0
        %3256 = vmatprep.mubr.bf16.mxu0 0
        %3257 = vmatmul.mubr.bf16.gmra.mrb[0].mxu0 %v3183
        %v3258 = vpop.f32.mrb[0].mxu0
        %v3259 = vadd.f32 0.0, %v3258
        %v3260 = vpop.f32.mrb[0].mxu0
        %v3261 = vpop.f32.mrb[0].mxu0
        %v3262 = vadd.f32 0.0, %v3261
        %v3263 = vpop.f32.mrb[0].mxu0
        %3264 = vmatprep.mubr.bf16.mxu0 0
        %3265 = vmatmul.mubr.bf16.gmra.mrb[0].mxu0 %v3186
        %v3266 = vpop.f32.mrb[0].mxu0
        %v3267 = vadd.f32 0.0, %v3266
        %v3268 = vpop.f32.mrb[0].mxu0
        %v3269 = vpop.f32.mrb[0].mxu0
        %v3270 = vadd.f32 0.0, %v3269
        %v3271 = vpop.f32.mrb[0].mxu0
        %3272 = vmatprep.mubr.bf16.mxu0 0
        %3273 = vmatmul.mubr.bf16.gmra.mrb[0].mxu0 %v3189
        %v3274 = vpop.f32.mrb[0].mxu0
        %v3275 = vadd.f32 0.0, %v3274
        %v3276 = vpop.f32.mrb[0].mxu0
        %v3277 = vpop.f32.mrb[0].mxu0
        %v3278 = vadd.f32 0.0, %v3277
        %v3279 = vpop.f32.mrb[0].mxu0
        %3280 = vmatprep.mubr.bf16.mxu0 0
        %3281 = vmatmul.mubr.bf16.gmra.mrb[0].mxu0 %v3192
        %v3282 = vpop.f32.mrb[0].mxu0
        %v3283 = vadd.f32 0.0, %v3282
        %v3284 = vpop.f32.mrb[0].mxu0
        %v3285 = vpop.f32.mrb[0].mxu0
        %v3286 = vadd.f32 0.0, %v3285
        %v3287 = vpop.f32.mrb[0].mxu0
        %3288 = vmatprep.mubr.bf16.mxu0 0
        %3289 = vmatmul.mubr.bf16.gmra.mrb[0].mxu0 %v3195
        %v3290 = vpop.f32.mrb[0].mxu0
        %v3291 = vadd.f32 0.0, %v3290
        %v3292 = vpop.f32.mrb[0].mxu0
        %v3293 = vpop.f32.mrb[0].mxu0
        %v3294 = vadd.f32 0.0, %v3293
        %v3295 = vpop.f32.mrb[0].mxu0
        %3296 = vdwg.mxu0
        %v3297 = vadd.f32 %v2985, %v3235
        %v3298 = vadd.f32 %v2986, %v3238
        %v3299 = vadd.f32 %v2987, %v3243
        %v3300 = vadd.f32 %v2988, %v3246
        %v3301 = vadd.f32 %v2989, %v3251
        %v3302 = vadd.f32 %v2990, %v3254
        %v3303 = vadd.f32 %v2991, %v3259
        %v3304 = vadd.f32 %v2992, %v3262
        %v3305 = vadd.f32 %v2993, %v3267
        %v3306 = vadd.f32 %v2994, %v3270
        %v3307 = vadd.f32 %v2995, %v3275
        %v3308 = vadd.f32 %v2996, %v3278
        %v3309 = vadd.f32 %v2997, %v3283
        %v3310 = vadd.f32 %v2998, %v3286
        %v3311 = vadd.f32 %v2999, %v3291
        %v3312 = vadd.f32 %v3000, %v3294
        %s3313 = scalar_lea.vmem [#allocation11], 320
        %v3314 = vld [vmem:[%s3313] sm:$0xf]
        %v3315 = vld [vmem:[%s3313 + $0x4] sm:$0xf]
        %v3316 = vld [vmem:[%s3313 + $0x8] sm:$0xf]
        %v3317 = vld [vmem:[%s3313 + $0xc] sm:$0xf]
        %v3318 = vld [vmem:[%s3313 + $0x10] sm:$0xf]
        %v3319 = vld [vmem:[%s3313 + $0x14] sm:$0xf]
        %v3320 = vld [vmem:[%s3313 + $0x18] sm:$0xf]
        %v3321 = vld [vmem:[%s3313 + $0x1c] sm:$0xf]
        %v3322 = vld [vmem:[%s3313 + $0x20] sm:$0xf]
        %v3323 = vld [vmem:[%s3313 + $0x24] sm:$0xf]
        %v3324 = vld [vmem:[%s3313 + $0x28] sm:$0xf]
        %v3325 = vld [vmem:[%s3313 + $0x2c] sm:$0xf]
        %v3326 = vld [vmem:[%s3313 + $0x30] sm:$0xf]
        %v3327 = vld [vmem:[%s3313 + $0x34] sm:$0xf]
        %v3328 = vld [vmem:[%s3313 + $0x38] sm:$0xf]
        %v3329 = vld [vmem:[%s3313 + $0x3c] sm:$0xf]
        %v3346 = vunpack.c.l.b16 %v3314
        %v3347 = vunpack.c.l.b16 %v3315
        %v3348 = vunpack.c.l.b16 %v3316
        %v3349 = vunpack.c.l.b16 %v3317
        %v3350 = vunpack.c.l.b16 %v3318
        %v3351 = vunpack.c.l.b16 %v3319
        %v3352 = vunpack.c.l.b16 %v3320
        %v3353 = vunpack.c.l.b16 %v3321
        %v3354 = vunpack.c.l.b16 %v3322
        %v3355 = vunpack.c.l.b16 %v3323
        %v3356 = vunpack.c.l.b16 %v3324
        %v3357 = vunpack.c.l.b16 %v3325
        %v3358 = vunpack.c.l.b16 %v3326
        %v3359 = vunpack.c.l.b16 %v3327
        %v3360 = vunpack.c.l.b16 %v3328
        %v3361 = vunpack.c.l.b16 %v3329
        %v3362 = vpack.c.b16 %v3347, %v3346
        %v3363 = vpack.c.b16 %v3349, %v3348
        %v3364 = vpack.c.b16 %v3351, %v3350
        %v3365 = vpack.c.b16 %v3353, %v3352
        %v3366 = vpack.c.b16 %v3355, %v3354
        %v3367 = vpack.c.b16 %v3357, %v3356
        %v3368 = vpack.c.b16 %v3359, %v3358
        %v3369 = vpack.c.b16 %v3361, %v3360
        %3378 = vmatprep.subr.bf16.mxu0 0
        %3379 = vmatpush1.bf16.msra.mxu0 %v1795
        %3380 = vmatprep.subr.bf16.mxu0 0
        %3381 = vmatpush1.bf16.msra.mxu0 %v1796
        %3382 = vmatprep.subr.bf16.mxu0 0
        %3383 = vmatpush1.bf16.msra.mxu0 %v1797
        %3384 = vmatprep.subr.bf16.mxu0 0
        %3385 = vmatpush1.bf16.msra.mxu0 %v1798
        %3386 = vmatprep.subr.bf16.mxu0 0
        %3387 = vmatpush1.bf16.msra.mxu0 %v1799
        %3388 = vmatprep.subr.bf16.mxu0 0
        %3389 = vmatpush1.bf16.msra.mxu0 %v1800
        %3390 = vmatprep.subr.bf16.mxu0 0
        %3391 = vmatpush1.bf16.msra.mxu0 %v1801
        %3392 = vmatprep.subr.bf16.mxu0 0
        %3393 = vmatpush1.bf16.msra.mxu0 %v1802
        %3394 = vmatprep.subr.bf16.mxu0 0
        %3395 = vmatpush1.bf16.msra.mxu0 0
        %3396 = vmatprep.subr.bf16.mxu0 0
        %3397 = vmatpush1.bf16.msra.mxu0 0
        %3398 = vmatprep.subr.bf16.mxu0 0
        %3399 = vmatpush1.bf16.msra.mxu0 0
        %3400 = vmatprep.subr.bf16.mxu0 0
        %3401 = vmatpush1.bf16.msra.mxu0 0
        %3402 = vmatprep.subr.bf16.mxu0 0
        %3403 = vmatpush1.bf16.msra.mxu0 0
        %3404 = vmatprep.subr.bf16.mxu0 0
        %3405 = vmatpush1.bf16.msra.mxu0 0
        %3406 = vmatprep.subr.bf16.mxu0 0
        %3407 = vmatpush1.bf16.msra.mxu0 0
        %3408 = vmatprep.subr.bf16.mxu0 0
        %3409 = vmatpush1.bf16.msra.mxu0 0
        %3410 = vmatprep.mubr.bf16.mxu0 0
        %3411 = vmatmul.mubr.bf16.gmra.mrb[0].mxu0 %v3362
        %v3412 = vpop.f32.mrb[0].mxu0
        %v3413 = vadd.f32 0.0, %v3412
        %v3414 = vpop.f32.mrb[0].mxu0
        %v3415 = vpop.f32.mrb[0].mxu0
        %v3416 = vadd.f32 0.0, %v3415
        %v3417 = vpop.f32.mrb[0].mxu0
        %3418 = vmatprep.mubr.bf16.mxu0 0
        %3419 = vmatmul.mubr.bf16.gmra.mrb[0].mxu0 %v3363
        %v3420 = vpop.f32.mrb[0].mxu0
        %v3421 = vadd.f32 0.0, %v3420
        %v3422 = vpop.f32.mrb[0].mxu0
        %v3423 = vpop.f32.mrb[0].mxu0
        %v3424 = vadd.f32 0.0, %v3423
        %v3425 = vpop.f32.mrb[0].mxu0
        %3426 = vmatprep.mubr.bf16.mxu0 0
        %3427 = vmatmul.mubr.bf16.gmra.mrb[0].mxu0 %v3364
        %v3428 = vpop.f32.mrb[0].mxu0
        %v3429 = vadd.f32 0.0, %v3428
        %v3430 = vpop.f32.mrb[0].mxu0
        %v3431 = vpop.f32.mrb[0].mxu0
        %v3432 = vadd.f32 0.0, %v3431
        %v3433 = vpop.f32.mrb[0].mxu0
        %3434 = vmatprep.mubr.bf16.mxu0 0
        %3435 = vmatmul.mubr.bf16.gmra.mrb[0].mxu0 %v3365
        %v3436 = vpop.f32.mrb[0].mxu0
        %v3437 = vadd.f32 0.0, %v3436
        %v3438 = vpop.f32.mrb[0].mxu0
        %v3439 = vpop.f32.mrb[0].mxu0
        %v3440 = vadd.f32 0.0, %v3439
        %v3441 = vpop.f32.mrb[0].mxu0
        %3442 = vmatprep.mubr.bf16.mxu0 0
        %3443 = vmatmul.mubr.bf16.gmra.mrb[0].mxu0 %v3366
        %v3444 = vpop.f32.mrb[0].mxu0
        %v3445 = vadd.f32 0.0, %v3444
        %v3446 = vpop.f32.mrb[0].mxu0
        %v3447 = vpop.f32.mrb[0].mxu0
        %v3448 = vadd.f32 0.0, %v3447
        %v3449 = vpop.f32.mrb[0].mxu0
        %3450 = vmatprep.mubr.bf16.mxu0 0
        %3451 = vmatmul.mubr.bf16.gmra.mrb[0].mxu0 %v3367
        %v3452 = vpop.f32.mrb[0].mxu0
        %v3453 = vadd.f32 0.0, %v3452
        %v3454 = vpop.f32.mrb[0].mxu0
        %v3455 = vpop.f32.mrb[0].mxu0
        %v3456 = vadd.f32 0.0, %v3455
        %v3457 = vpop.f32.mrb[0].mxu0
        %3458 = vmatprep.mubr.bf16.mxu0 0
        %3459 = vmatmul.mubr.bf16.gmra.mrb[0].mxu0 %v3368
        %v3460 = vpop.f32.mrb[0].mxu0
        %v3461 = vadd.f32 0.0, %v3460
        %v3462 = vpop.f32.mrb[0].mxu0
        %v3463 = vpop.f32.mrb[0].mxu0
        %v3464 = vadd.f32 0.0, %v3463
        %v3465 = vpop.f32.mrb[0].mxu0
        %3466 = vmatprep.mubr.bf16.mxu0 0
        %3467 = vmatmul.mubr.bf16.gmra.mrb[0].mxu0 %v3369
        %v3468 = vpop.f32.mrb[0].mxu0
        %v3469 = vadd.f32 0.0, %v3468
        %v3470 = vpop.f32.mrb[0].mxu0
        %v3471 = vpop.f32.mrb[0].mxu0
        %v3472 = vadd.f32 0.0, %v3471
        %v3473 = vpop.f32.mrb[0].mxu0
        %3474 = vdwg.mxu0
        %s3475 = scalar_lea.vmem %s5, 5
        %v3476 = vld [vmem:[%s3475] sm:$0x1]
        %v3477 = vpack.c.bf16 %v3416, %v3413
        %v3478 = vpack.c.bf16 %v3424, %v3421
        %v3479 = vpack.c.bf16 %v3432, %v3429
        %v3480 = vpack.c.bf16 %v3440, %v3437
        %v3481 = vpack.c.bf16 %v3448, %v3445
        %v3482 = vpack.c.bf16 %v3456, %v3453
        %v3483 = vpack.c.bf16 %v3464, %v3461
        %v3484 = vpack.c.bf16 %v3472, %v3469
        %v3486 = vsel %vm1061, %v3477, 0
        %v3489 = vsel %vm1061, %v3478, 0
        %v3492 = vsel %vm1061, %v3479, 0
        %v3495 = vsel %vm1061, %v3480, 0
        %v3498 = vsel %vm1061, %v3481, 0
        %v3501 = vsel %vm1061, %v3482, 0
        %v3504 = vsel %vm1061, %v3483, 0
        %v3507 = vsel %vm1061, %v3484, 0
        %v3510 = vsel %vm1074, %v3476, 0
        %3512 = vmatprep.subr.bf16.mxu0 0
        %3513 = vmatpush1.bf16.msra.mxu0 %v3510
        %3514 = vmatprep.subr.bf16.mxu0 0
        %3515 = vmatpush1.bf16.msra.mxu0 0
        %3516 = vmatprep.subr.bf16.mxu0 0
        %3517 = vmatpush1.bf16.msra.mxu0 0
        %3518 = vmatprep.subr.bf16.mxu0 0
        %3519 = vmatpush1.bf16.msra.mxu0 0
        %3520 = vmatprep.subr.bf16.mxu0 0
        %3521 = vmatpush1.bf16.msra.mxu0 0
        %3522 = vmatprep.subr.bf16.mxu0 0
        %3523 = vmatpush1.bf16.msra.mxu0 0
        %3524 = vmatprep.subr.bf16.mxu0 0
        %3525 = vmatpush1.bf16.msra.mxu0 0
        %3526 = vmatprep.subr.bf16.mxu0 0
        %3527 = vmatpush1.bf16.msra.mxu0 0
        %3528 = vmatprep.subr.bf16.mxu0 0
        %3529 = vmatpush1.bf16.msra.mxu0 0
        %3530 = vmatprep.subr.bf16.mxu0 0
        %3531 = vmatpush1.bf16.msra.mxu0 0
        %3532 = vmatprep.subr.bf16.mxu0 0
        %3533 = vmatpush1.bf16.msra.mxu0 0
        %3534 = vmatprep.subr.bf16.mxu0 0
        %3535 = vmatpush1.bf16.msra.mxu0 0
        %3536 = vmatprep.subr.bf16.mxu0 0
        %3537 = vmatpush1.bf16.msra.mxu0 0
        %3538 = vmatprep.subr.bf16.mxu0 0
        %3539 = vmatpush1.bf16.msra.mxu0 0
        %3540 = vmatprep.subr.bf16.mxu0 0
        %3541 = vmatpush1.bf16.msra.mxu0 0
        %3542 = vmatprep.subr.bf16.mxu0 0
        %3543 = vmatpush1.bf16.msra.mxu0 0
        %3544 = vmatprep.mubr.bf16.mxu0 0
        %3545 = vmatmul.mubr.bf16.gmra.mrb[0].mxu0 %v3486
        %v3546 = vpop.f32.mrb[0].mxu0
        %v3547 = vadd.f32 0.0, %v3546
        %v3548 = vpop.f32.mrb[0].mxu0
        %v3549 = vpop.f32.mrb[0].mxu0
        %v3550 = vadd.f32 0.0, %v3549
        %v3551 = vpop.f32.mrb[0].mxu0
        %3552 = vmatprep.mubr.bf16.mxu0 0
        %3553 = vmatmul.mubr.bf16.gmra.mrb[0].mxu0 %v3489
        %v3554 = vpop.f32.mrb[0].mxu0
        %v3555 = vadd.f32 0.0, %v3554
        %v3556 = vpop.f32.mrb[0].mxu0
        %v3557 = vpop.f32.mrb[0].mxu0
        %v3558 = vadd.f32 0.0, %v3557
        %v3559 = vpop.f32.mrb[0].mxu0
        %3560 = vmatprep.mubr.bf16.mxu0 0
        %3561 = vmatmul.mubr.bf16.gmra.mrb[0].mxu0 %v3492
        %v3562 = vpop.f32.mrb[0].mxu0
        %v3563 = vadd.f32 0.0, %v3562
        %v3564 = vpop.f32.mrb[0].mxu0
        %v3565 = vpop.f32.mrb[0].mxu0
        %v3566 = vadd.f32 0.0, %v3565
        %v3567 = vpop.f32.mrb[0].mxu0
        %3568 = vmatprep.mubr.bf16.mxu0 0
        %3569 = vmatmul.mubr.bf16.gmra.mrb[0].mxu0 %v3495
        %v3570 = vpop.f32.mrb[0].mxu0
        %v3571 = vadd.f32 0.0, %v3570
        %v3572 = vpop.f32.mrb[0].mxu0
        %v3573 = vpop.f32.mrb[0].mxu0
        %v3574 = vadd.f32 0.0, %v3573
        %v3575 = vpop.f32.mrb[0].mxu0
        %3576 = vmatprep.mubr.bf16.mxu0 0
        %3577 = vmatmul.mubr.bf16.gmra.mrb[0].mxu0 %v3498
        %v3578 = vpop.f32.mrb[0].mxu0
        %v3579 = vadd.f32 0.0, %v3578
        %v3580 = vpop.f32.mrb[0].mxu0
        %v3581 = vpop.f32.mrb[0].mxu0
        %v3582 = vadd.f32 0.0, %v3581
        %v3583 = vpop.f32.mrb[0].mxu0
        %3584 = vmatprep.mubr.bf16.mxu0 0
        %3585 = vmatmul.mubr.bf16.gmra.mrb[0].mxu0 %v3501
        %v3586 = vpop.f32.mrb[0].mxu0
        %v3587 = vadd.f32 0.0, %v3586
        %v3588 = vpop.f32.mrb[0].mxu0
        %v3589 = vpop.f32.mrb[0].mxu0
        %v3590 = vadd.f32 0.0, %v3589
        %v3591 = vpop.f32.mrb[0].mxu0
        %3592 = vmatprep.mubr.bf16.mxu0 0
        %3593 = vmatmul.mubr.bf16.gmra.mrb[0].mxu0 %v3504
        %v3594 = vpop.f32.mrb[0].mxu0
        %v3595 = vadd.f32 0.0, %v3594
        %v3596 = vpop.f32.mrb[0].mxu0
        %v3597 = vpop.f32.mrb[0].mxu0
        %v3598 = vadd.f32 0.0, %v3597
        %v3599 = vpop.f32.mrb[0].mxu0
        %3600 = vmatprep.mubr.bf16.mxu0 0
        %3601 = vmatmul.mubr.bf16.gmra.mrb[0].mxu0 %v3507
        %v3602 = vpop.f32.mrb[0].mxu0
        %v3603 = vadd.f32 0.0, %v3602
        %v3604 = vpop.f32.mrb[0].mxu0
        %v3605 = vpop.f32.mrb[0].mxu0
        %v3606 = vadd.f32 0.0, %v3605
        %v3607 = vpop.f32.mrb[0].mxu0
        %3608 = vdwg.mxu0
        %v3609 = vadd.f32 %v3297, %v3547
        %v3610 = vadd.f32 %v3298, %v3550
        %v3611 = vadd.f32 %v3299, %v3555
        %v3612 = vadd.f32 %v3300, %v3558
        %v3613 = vadd.f32 %v3301, %v3563
        %v3614 = vadd.f32 %v3302, %v3566
        %v3615 = vadd.f32 %v3303, %v3571
        %v3616 = vadd.f32 %v3304, %v3574
        %v3617 = vadd.f32 %v3305, %v3579
        %v3618 = vadd.f32 %v3306, %v3582
        %v3619 = vadd.f32 %v3307, %v3587
        %v3620 = vadd.f32 %v3308, %v3590
        %v3621 = vadd.f32 %v3309, %v3595
        %v3622 = vadd.f32 %v3310, %v3598
        %v3623 = vadd.f32 %v3311, %v3603
        %v3624 = vadd.f32 %v3312, %v3606
        %s3625 = scalar_lea.vmem [#allocation11], 384
        %v3626 = vld [vmem:[%s3625] sm:$0xf]
        %v3627 = vld [vmem:[%s3625 + $0x4] sm:$0xf]
        %v3628 = vld [vmem:[%s3625 + $0x8] sm:$0xf]
        %v3629 = vld [vmem:[%s3625 + $0xc] sm:$0xf]
        %v3630 = vld [vmem:[%s3625 + $0x10] sm:$0xf]
        %v3631 = vld [vmem:[%s3625 + $0x14] sm:$0xf]
        %v3632 = vld [vmem:[%s3625 + $0x18] sm:$0xf]
        %v3633 = vld [vmem:[%s3625 + $0x1c] sm:$0xf]
        %v3634 = vld [vmem:[%s3625 + $0x20] sm:$0xf]
        %v3635 = vld [vmem:[%s3625 + $0x24] sm:$0xf]
        %v3636 = vld [vmem:[%s3625 + $0x28] sm:$0xf]
        %v3637 = vld [vmem:[%s3625 + $0x2c] sm:$0xf]
        %v3638 = vld [vmem:[%s3625 + $0x30] sm:$0xf]
        %v3639 = vld [vmem:[%s3625 + $0x34] sm:$0xf]
        %v3640 = vld [vmem:[%s3625 + $0x38] sm:$0xf]
        %v3641 = vld [vmem:[%s3625 + $0x3c] sm:$0xf]
        %v3658 = vunpack.c.l.b16 %v3626
        %v3659 = vunpack.c.l.b16 %v3627
        %v3660 = vunpack.c.l.b16 %v3628
        %v3661 = vunpack.c.l.b16 %v3629
        %v3662 = vunpack.c.l.b16 %v3630
        %v3663 = vunpack.c.l.b16 %v3631
        %v3664 = vunpack.c.l.b16 %v3632
        %v3665 = vunpack.c.l.b16 %v3633
        %v3666 = vunpack.c.l.b16 %v3634
        %v3667 = vunpack.c.l.b16 %v3635
        %v3668 = vunpack.c.l.b16 %v3636
        %v3669 = vunpack.c.l.b16 %v3637
        %v3670 = vunpack.c.l.b16 %v3638
        %v3671 = vunpack.c.l.b16 %v3639
        %v3672 = vunpack.c.l.b16 %v3640
        %v3673 = vunpack.c.l.b16 %v3641
        %v3674 = vpack.c.b16 %v3659, %v3658
        %v3675 = vpack.c.b16 %v3661, %v3660
        %v3676 = vpack.c.b16 %v3663, %v3662
        %v3677 = vpack.c.b16 %v3665, %v3664
        %v3678 = vpack.c.b16 %v3667, %v3666
        %v3679 = vpack.c.b16 %v3669, %v3668
        %v3680 = vpack.c.b16 %v3671, %v3670
        %v3681 = vpack.c.b16 %v3673, %v3672
        %3690 = vmatprep.subr.bf16.mxu0 0
        %3691 = vmatpush1.bf16.msra.mxu0 %v1795
        %3692 = vmatprep.subr.bf16.mxu0 0
        %3693 = vmatpush1.bf16.msra.mxu0 %v1796
        %3694 = vmatprep.subr.bf16.mxu0 0
        %3695 = vmatpush1.bf16.msra.mxu0 %v1797
        %3696 = vmatprep.subr.bf16.mxu0 0
        %3697 = vmatpush1.bf16.msra.mxu0 %v1798
        %3698 = vmatprep.subr.bf16.mxu0 0
        %3699 = vmatpush1.bf16.msra.mxu0 %v1799
        %3700 = vmatprep.subr.bf16.mxu0 0
        %3701 = vmatpush1.bf16.msra.mxu0 %v1800
        %3702 = vmatprep.subr.bf16.mxu0 0
        %3703 = vmatpush1.bf16.msra.mxu0 %v1801
        %3704 = vmatprep.subr.bf16.mxu0 0
        %3705 = vmatpush1.bf16.msra.mxu0 %v1802
        %3706 = vmatprep.subr.bf16.mxu0 0
        %3707 = vmatpush1.bf16.msra.mxu0 0
        %3708 = vmatprep.subr.bf16.mxu0 0
        %3709 = vmatpush1.bf16.msra.mxu0 0
        %3710 = vmatprep.subr.bf16.mxu0 0
        %3711 = vmatpush1.bf16.msra.mxu0 0
        %3712 = vmatprep.subr.bf16.mxu0 0
        %3713 = vmatpush1.bf16.msra.mxu0 0
        %3714 = vmatprep.subr.bf16.mxu0 0
        %3715 = vmatpush1.bf16.msra.mxu0 0
        %3716 = vmatprep.subr.bf16.mxu0 0
        %3717 = vmatpush1.bf16.msra.mxu0 0
        %3718 = vmatprep.subr.bf16.mxu0 0
        %3719 = vmatpush1.bf16.msra.mxu0 0
        %3720 = vmatprep.subr.bf16.mxu0 0
        %3721 = vmatpush1.bf16.msra.mxu0 0
        %3722 = vmatprep.mubr.bf16.mxu0 0
        %3723 = vmatmul.mubr.bf16.gmra.mrb[0].mxu0 %v3674
        %v3724 = vpop.f32.mrb[0].mxu0
        %v3725 = vadd.f32 0.0, %v3724
        %v3726 = vpop.f32.mrb[0].mxu0
        %v3727 = vpop.f32.mrb[0].mxu0
        %v3728 = vadd.f32 0.0, %v3727
        %v3729 = vpop.f32.mrb[0].mxu0
        %3730 = vmatprep.mubr.bf16.mxu0 0
        %3731 = vmatmul.mubr.bf16.gmra.mrb[0].mxu0 %v3675
        %v3732 = vpop.f32.mrb[0].mxu0
        %v3733 = vadd.f32 0.0, %v3732
        %v3734 = vpop.f32.mrb[0].mxu0
        %v3735 = vpop.f32.mrb[0].mxu0
        %v3736 = vadd.f32 0.0, %v3735
        %v3737 = vpop.f32.mrb[0].mxu0
        %3738 = vmatprep.mubr.bf16.mxu0 0
        %3739 = vmatmul.mubr.bf16.gmra.mrb[0].mxu0 %v3676
        %v3740 = vpop.f32.mrb[0].mxu0
        %v3741 = vadd.f32 0.0, %v3740
        %v3742 = vpop.f32.mrb[0].mxu0
        %v3743 = vpop.f32.mrb[0].mxu0
        %v3744 = vadd.f32 0.0, %v3743
        %v3745 = vpop.f32.mrb[0].mxu0
        %3746 = vmatprep.mubr.bf16.mxu0 0
        %3747 = vmatmul.mubr.bf16.gmra.mrb[0].mxu0 %v3677
        %v3748 = vpop.f32.mrb[0].mxu0
        %v3749 = vadd.f32 0.0, %v3748
        %v3750 = vpop.f32.mrb[0].mxu0
        %v3751 = vpop.f32.mrb[0].mxu0
        %v3752 = vadd.f32 0.0, %v3751
        %v3753 = vpop.f32.mrb[0].mxu0
        %3754 = vmatprep.mubr.bf16.mxu0 0
        %3755 = vmatmul.mubr.bf16.gmra.mrb[0].mxu0 %v3678
        %v3756 = vpop.f32.mrb[0].mxu0
        %v3757 = vadd.f32 0.0, %v3756
        %v3758 = vpop.f32.mrb[0].mxu0
        %v3759 = vpop.f32.mrb[0].mxu0
        %v3760 = vadd.f32 0.0, %v3759
        %v3761 = vpop.f32.mrb[0].mxu0
        %3762 = vmatprep.mubr.bf16.mxu0 0
        %3763 = vmatmul.mubr.bf16.gmra.mrb[0].mxu0 %v3679
        %v3764 = vpop.f32.mrb[0].mxu0
        %v3765 = vadd.f32 0.0, %v3764
        %v3766 = vpop.f32.mrb[0].mxu0
        %v3767 = vpop.f32.mrb[0].mxu0
        %v3768 = vadd.f32 0.0, %v3767
        %v3769 = vpop.f32.mrb[0].mxu0
        %3770 = vmatprep.mubr.bf16.mxu0 0
        %3771 = vmatmul.mubr.bf16.gmra.mrb[0].mxu0 %v3680
        %v3772 = vpop.f32.mrb[0].mxu0
        %v3773 = vadd.f32 0.0, %v3772
        %v3774 = vpop.f32.mrb[0].mxu0
        %v3775 = vpop.f32.mrb[0].mxu0
        %v3776 = vadd.f32 0.0, %v3775
        %v3777 = vpop.f32.mrb[0].mxu0
        %3778 = vmatprep.mubr.bf16.mxu0 0
        %3779 = vmatmul.mubr.bf16.gmra.mrb[0].mxu0 %v3681
        %v3780 = vpop.f32.mrb[0].mxu0
        %v3781 = vadd.f32 0.0, %v3780
        %v3782 = vpop.f32.mrb[0].mxu0
        %v3783 = vpop.f32.mrb[0].mxu0
        %v3784 = vadd.f32 0.0, %v3783
        %v3785 = vpop.f32.mrb[0].mxu0
        %3786 = vdwg.mxu0
        %s3787 = scalar_lea.vmem %s5, 6
        %v3788 = vld [vmem:[%s3787] sm:$0x1]
        %v3789 = vpack.c.bf16 %v3728, %v3725
        %v3790 = vpack.c.bf16 %v3736, %v3733
        %v3791 = vpack.c.bf16 %v3744, %v3741
        %v3792 = vpack.c.bf16 %v3752, %v3749
        %v3793 = vpack.c.bf16 %v3760, %v3757
        %v3794 = vpack.c.bf16 %v3768, %v3765
        %v3795 = vpack.c.bf16 %v3776, %v3773
        %v3796 = vpack.c.bf16 %v3784, %v3781
        %v3798 = vsel %vm1061, %v3789, 0
        %v3801 = vsel %vm1061, %v3790, 0
        %v3804 = vsel %vm1061, %v3791, 0
        %v3807 = vsel %vm1061, %v3792, 0
        %v3810 = vsel %vm1061, %v3793, 0
        %v3813 = vsel %vm1061, %v3794, 0
        %v3816 = vsel %vm1061, %v3795, 0
        %v3819 = vsel %vm1061, %v3796, 0
        %v3822 = vsel %vm1074, %v3788, 0
        %3824 = vmatprep.subr.bf16.mxu0 0
        %3825 = vmatpush1.bf16.msra.mxu0 %v3822
        %3826 = vmatprep.subr.bf16.mxu0 0
        %3827 = vmatpush1.bf16.msra.mxu0 0
        %3828 = vmatprep.subr.bf16.mxu0 0
        %3829 = vmatpush1.bf16.msra.mxu0 0
        %3830 = vmatprep.subr.bf16.mxu0 0
        %3831 = vmatpush1.bf16.msra.mxu0 0
        %3832 = vmatprep.subr.bf16.mxu0 0
        %3833 = vmatpush1.bf16.msra.mxu0 0
        %3834 = vmatprep.subr.bf16.mxu0 0
        %3835 = vmatpush1.bf16.msra.mxu0 0
        %3836 = vmatprep.subr.bf16.mxu0 0
        %3837 = vmatpush1.bf16.msra.mxu0 0
        %3838 = vmatprep.subr.bf16.mxu0 0
        %3839 = vmatpush1.bf16.msra.mxu0 0
        %3840 = vmatprep.subr.bf16.mxu0 0
        %3841 = vmatpush1.bf16.msra.mxu0 0
        %3842 = vmatprep.subr.bf16.mxu0 0
        %3843 = vmatpush1.bf16.msra.mxu0 0
        %3844 = vmatprep.subr.bf16.mxu0 0
        %3845 = vmatpush1.bf16.msra.mxu0 0
        %3846 = vmatprep.subr.bf16.mxu0 0
        %3847 = vmatpush1.bf16.msra.mxu0 0
        %3848 = vmatprep.subr.bf16.mxu0 0
        %3849 = vmatpush1.bf16.msra.mxu0 0
        %3850 = vmatprep.subr.bf16.mxu0 0
        %3851 = vmatpush1.bf16.msra.mxu0 0
        %3852 = vmatprep.subr.bf16.mxu0 0
        %3853 = vmatpush1.bf16.msra.mxu0 0
        %3854 = vmatprep.subr.bf16.mxu0 0
        %3855 = vmatpush1.bf16.msra.mxu0 0
        %3856 = vmatprep.mubr.bf16.mxu0 0
        %3857 = vmatmul.mubr.bf16.gmra.mrb[0].mxu0 %v3798
        %v3858 = vpop.f32.mrb[0].mxu0
        %v3859 = vadd.f32 0.0, %v3858
        %v3860 = vpop.f32.mrb[0].mxu0
        %v3861 = vpop.f32.mrb[0].mxu0
        %v3862 = vadd.f32 0.0, %v3861
        %v3863 = vpop.f32.mrb[0].mxu0
        %3864 = vmatprep.mubr.bf16.mxu0 0
        %3865 = vmatmul.mubr.bf16.gmra.mrb[0].mxu0 %v3801
        %v3866 = vpop.f32.mrb[0].mxu0
        %v3867 = vadd.f32 0.0, %v3866
        %v3868 = vpop.f32.mrb[0].mxu0
        %v3869 = vpop.f32.mrb[0].mxu0
        %v3870 = vadd.f32 0.0, %v3869
        %v3871 = vpop.f32.mrb[0].mxu0
        %3872 = vmatprep.mubr.bf16.mxu0 0
        %3873 = vmatmul.mubr.bf16.gmra.mrb[0].mxu0 %v3804
        %v3874 = vpop.f32.mrb[0].mxu0
        %v3875 = vadd.f32 0.0, %v3874
        %v3876 = vpop.f32.mrb[0].mxu0
        %v3877 = vpop.f32.mrb[0].mxu0
        %v3878 = vadd.f32 0.0, %v3877
        %v3879 = vpop.f32.mrb[0].mxu0
        %3880 = vmatprep.mubr.bf16.mxu0 0
        %3881 = vmatmul.mubr.bf16.gmra.mrb[0].mxu0 %v3807
        %v3882 = vpop.f32.mrb[0].mxu0
        %v3883 = vadd.f32 0.0, %v3882
        %v3884 = vpop.f32.mrb[0].mxu0
        %v3885 = vpop.f32.mrb[0].mxu0
        %v3886 = vadd.f32 0.0, %v3885
        %v3887 = vpop.f32.mrb[0].mxu0
        %3888 = vmatprep.mubr.bf16.mxu0 0
        %3889 = vmatmul.mubr.bf16.gmra.mrb[0].mxu0 %v3810
        %v3890 = vpop.f32.mrb[0].mxu0
        %v3891 = vadd.f32 0.0, %v3890
        %v3892 = vpop.f32.mrb[0].mxu0
        %v3893 = vpop.f32.mrb[0].mxu0
        %v3894 = vadd.f32 0.0, %v3893
        %v3895 = vpop.f32.mrb[0].mxu0
        %3896 = vmatprep.mubr.bf16.mxu0 0
        %3897 = vmatmul.mubr.bf16.gmra.mrb[0].mxu0 %v3813
        %v3898 = vpop.f32.mrb[0].mxu0
        %v3899 = vadd.f32 0.0, %v3898
        %v3900 = vpop.f32.mrb[0].mxu0
        %v3901 = vpop.f32.mrb[0].mxu0
        %v3902 = vadd.f32 0.0, %v3901
        %v3903 = vpop.f32.mrb[0].mxu0
        %3904 = vmatprep.mubr.bf16.mxu0 0
        %3905 = vmatmul.mubr.bf16.gmra.mrb[0].mxu0 %v3816
        %v3906 = vpop.f32.mrb[0].mxu0
        %v3907 = vadd.f32 0.0, %v3906
        %v3908 = vpop.f32.mrb[0].mxu0
        %v3909 = vpop.f32.mrb[0].mxu0
        %v3910 = vadd.f32 0.0, %v3909
        %v3911 = vpop.f32.mrb[0].mxu0
        %3912 = vmatprep.mubr.bf16.mxu0 0
        %3913 = vmatmul.mubr.bf16.gmra.mrb[0].mxu0 %v3819
        %v3914 = vpop.f32.mrb[0].mxu0
        %v3915 = vadd.f32 0.0, %v3914
        %v3916 = vpop.f32.mrb[0].mxu0
        %v3917 = vpop.f32.mrb[0].mxu0
        %v3918 = vadd.f32 0.0, %v3917
        %v3919 = vpop.f32.mrb[0].mxu0
        %3920 = vdwg.mxu0
        %v3921 = vadd.f32 %v3609, %v3859
        %v3922 = vadd.f32 %v3610, %v3862
        %v3923 = vadd.f32 %v3611, %v3867
        %v3924 = vadd.f32 %v3612, %v3870
        %v3925 = vadd.f32 %v3613, %v3875
        %v3926 = vadd.f32 %v3614, %v3878
        %v3927 = vadd.f32 %v3615, %v3883
        %v3928 = vadd.f32 %v3616, %v3886
        %v3929 = vadd.f32 %v3617, %v3891
        %v3930 = vadd.f32 %v3618, %v3894
        %v3931 = vadd.f32 %v3619, %v3899
        %v3932 = vadd.f32 %v3620, %v3902
        %v3933 = vadd.f32 %v3621, %v3907
        %v3934 = vadd.f32 %v3622, %v3910
        %v3935 = vadd.f32 %v3623, %v3915
        %v3936 = vadd.f32 %v3624, %v3918
        %s3937 = scalar_lea.vmem [#allocation11], 448
        %v3938 = vld [vmem:[%s3937] sm:$0xf]
        %v3939 = vld [vmem:[%s3937 + $0x4] sm:$0xf]
        %v3940 = vld [vmem:[%s3937 + $0x8] sm:$0xf]
        %v3941 = vld [vmem:[%s3937 + $0xc] sm:$0xf]
        %v3942 = vld [vmem:[%s3937 + $0x10] sm:$0xf]
        %v3943 = vld [vmem:[%s3937 + $0x14] sm:$0xf]
        %v3944 = vld [vmem:[%s3937 + $0x18] sm:$0xf]
        %v3945 = vld [vmem:[%s3937 + $0x1c] sm:$0xf]
        %v3946 = vld [vmem:[%s3937 + $0x20] sm:$0xf]
        %v3947 = vld [vmem:[%s3937 + $0x24] sm:$0xf]
        %v3948 = vld [vmem:[%s3937 + $0x28] sm:$0xf]
        %v3949 = vld [vmem:[%s3937 + $0x2c] sm:$0xf]
        %v3950 = vld [vmem:[%s3937 + $0x30] sm:$0xf]
        %v3951 = vld [vmem:[%s3937 + $0x34] sm:$0xf]
        %v3952 = vld [vmem:[%s3937 + $0x38] sm:$0xf]
        %v3953 = vld [vmem:[%s3937 + $0x3c] sm:$0xf]
        %v3970 = vunpack.c.l.b16 %v3938
        %v3971 = vunpack.c.l.b16 %v3939
        %v3972 = vunpack.c.l.b16 %v3940
        %v3973 = vunpack.c.l.b16 %v3941
        %v3974 = vunpack.c.l.b16 %v3942
        %v3975 = vunpack.c.l.b16 %v3943
        %v3976 = vunpack.c.l.b16 %v3944
        %v3977 = vunpack.c.l.b16 %v3945
        %v3978 = vunpack.c.l.b16 %v3946
        %v3979 = vunpack.c.l.b16 %v3947
        %v3980 = vunpack.c.l.b16 %v3948
        %v3981 = vunpack.c.l.b16 %v3949
        %v3982 = vunpack.c.l.b16 %v3950
        %v3983 = vunpack.c.l.b16 %v3951
        %v3984 = vunpack.c.l.b16 %v3952
        %v3985 = vunpack.c.l.b16 %v3953
        %v3986 = vpack.c.b16 %v3971, %v3970
        %v3987 = vpack.c.b16 %v3973, %v3972
        %v3988 = vpack.c.b16 %v3975, %v3974
        %v3989 = vpack.c.b16 %v3977, %v3976
        %v3990 = vpack.c.b16 %v3979, %v3978
        %v3991 = vpack.c.b16 %v3981, %v3980
        %v3992 = vpack.c.b16 %v3983, %v3982
        %v3993 = vpack.c.b16 %v3985, %v3984
        %4002 = vmatprep.subr.bf16.mxu0 0
        %4003 = vmatpush1.bf16.msra.mxu0 %v1795
        %4004 = vmatprep.subr.bf16.mxu0 0
        %4005 = vmatpush1.bf16.msra.mxu0 %v1796
        %4006 = vmatprep.subr.bf16.mxu0 0
        %4007 = vmatpush1.bf16.msra.mxu0 %v1797
        %4008 = vmatprep.subr.bf16.mxu0 0
        %4009 = vmatpush1.bf16.msra.mxu0 %v1798
        %4010 = vmatprep.subr.bf16.mxu0 0
        %4011 = vmatpush1.bf16.msra.mxu0 %v1799
        %4012 = vmatprep.subr.bf16.mxu0 0
        %4013 = vmatpush1.bf16.msra.mxu0 %v1800
        %4014 = vmatprep.subr.bf16.mxu0 0
        %4015 = vmatpush1.bf16.msra.mxu0 %v1801
        %4016 = vmatprep.subr.bf16.mxu0 0
        %4017 = vmatpush1.bf16.msra.mxu0 %v1802
        %4018 = vmatprep.subr.bf16.mxu0 0
        %4019 = vmatpush1.bf16.msra.mxu0 0
        %4020 = vmatprep.subr.bf16.mxu0 0
        %4021 = vmatpush1.bf16.msra.mxu0 0
        %4022 = vmatprep.subr.bf16.mxu0 0
        %4023 = vmatpush1.bf16.msra.mxu0 0
        %4024 = vmatprep.subr.bf16.mxu0 0
        %4025 = vmatpush1.bf16.msra.mxu0 0
        %4026 = vmatprep.subr.bf16.mxu0 0
        %4027 = vmatpush1.bf16.msra.mxu0 0
        %4028 = vmatprep.subr.bf16.mxu0 0
        %4029 = vmatpush1.bf16.msra.mxu0 0
        %4030 = vmatprep.subr.bf16.mxu0 0
        %4031 = vmatpush1.bf16.msra.mxu0 0
        %4032 = vmatprep.subr.bf16.mxu0 0
        %4033 = vmatpush1.bf16.msra.mxu0 0
        %4034 = vmatprep.mubr.bf16.mxu0 0
        %4035 = vmatmul.mubr.bf16.gmra.mrb[0].mxu0 %v3986
        %v4036 = vpop.f32.mrb[0].mxu0
        %v4037 = vadd.f32 0.0, %v4036
        %v4038 = vpop.f32.mrb[0].mxu0
        %v4039 = vpop.f32.mrb[0].mxu0
        %v4040 = vadd.f32 0.0, %v4039
        %v4041 = vpop.f32.mrb[0].mxu0
        %4042 = vmatprep.mubr.bf16.mxu0 0
        %4043 = vmatmul.mubr.bf16.gmra.mrb[0].mxu0 %v3987
        %v4044 = vpop.f32.mrb[0].mxu0
        %v4045 = vadd.f32 0.0, %v4044
        %v4046 = vpop.f32.mrb[0].mxu0
        %v4047 = vpop.f32.mrb[0].mxu0
        %v4048 = vadd.f32 0.0, %v4047
        %v4049 = vpop.f32.mrb[0].mxu0
        %4050 = vmatprep.mubr.bf16.mxu0 0
        %4051 = vmatmul.mubr.bf16.gmra.mrb[0].mxu0 %v3988
        %v4052 = vpop.f32.mrb[0].mxu0
        %v4053 = vadd.f32 0.0, %v4052
        %v4054 = vpop.f32.mrb[0].mxu0
        %v4055 = vpop.f32.mrb[0].mxu0
        %v4056 = vadd.f32 0.0, %v4055
        %v4057 = vpop.f32.mrb[0].mxu0
        %4058 = vmatprep.mubr.bf16.mxu0 0
        %4059 = vmatmul.mubr.bf16.gmra.mrb[0].mxu0 %v3989
        %v4060 = vpop.f32.mrb[0].mxu0
        %v4061 = vadd.f32 0.0, %v4060
        %v4062 = vpop.f32.mrb[0].mxu0
        %v4063 = vpop.f32.mrb[0].mxu0
        %v4064 = vadd.f32 0.0, %v4063
        %v4065 = vpop.f32.mrb[0].mxu0
        %4066 = vmatprep.mubr.bf16.mxu0 0
        %4067 = vmatmul.mubr.bf16.gmra.mrb[0].mxu0 %v3990
        %v4068 = vpop.f32.mrb[0].mxu0
        %v4069 = vadd.f32 0.0, %v4068
        %v4070 = vpop.f32.mrb[0].mxu0
        %v4071 = vpop.f32.mrb[0].mxu0
        %v4072 = vadd.f32 0.0, %v4071
        %v4073 = vpop.f32.mrb[0].mxu0
        %4074 = vmatprep.mubr.bf16.mxu0 0
        %4075 = vmatmul.mubr.bf16.gmra.mrb[0].mxu0 %v3991
        %v4076 = vpop.f32.mrb[0].mxu0
        %v4077 = vadd.f32 0.0, %v4076
        %v4078 = vpop.f32.mrb[0].mxu0
        %v4079 = vpop.f32.mrb[0].mxu0
        %v4080 = vadd.f32 0.0, %v4079
        %v4081 = vpop.f32.mrb[0].mxu0
        %4082 = vmatprep.mubr.bf16.mxu0 0
        %4083 = vmatmul.mubr.bf16.gmra.mrb[0].mxu0 %v3992
        %v4084 = vpop.f32.mrb[0].mxu0
        %v4085 = vadd.f32 0.0, %v4084
        %v4086 = vpop.f32.mrb[0].mxu0
        %v4087 = vpop.f32.mrb[0].mxu0
        %v4088 = vadd.f32 0.0, %v4087
        %v4089 = vpop.f32.mrb[0].mxu0
        %4090 = vmatprep.mubr.bf16.mxu0 0
        %4091 = vmatmul.mubr.bf16.gmra.mrb[0].mxu0 %v3993
        %v4092 = vpop.f32.mrb[0].mxu0
        %v4093 = vadd.f32 0.0, %v4092
        %v4094 = vpop.f32.mrb[0].mxu0
        %v4095 = vpop.f32.mrb[0].mxu0
        %v4096 = vadd.f32 0.0, %v4095
        %v4097 = vpop.f32.mrb[0].mxu0
        %4098 = vdwg.mxu0
        %s4099 = scalar_lea.vmem %s5, 7
        %v4100 = vld [vmem:[%s4099] sm:$0x1]
        %v4101 = vpack.c.bf16 %v4040, %v4037
        %v4102 = vpack.c.bf16 %v4048, %v4045
        %v4103 = vpack.c.bf16 %v4056, %v4053
        %v4104 = vpack.c.bf16 %v4064, %v4061
        %v4105 = vpack.c.bf16 %v4072, %v4069
        %v4106 = vpack.c.bf16 %v4080, %v4077
        %v4107 = vpack.c.bf16 %v4088, %v4085
        %v4108 = vpack.c.bf16 %v4096, %v4093
        %v4110 = vsel %vm1061, %v4101, 0
        %v4113 = vsel %vm1061, %v4102, 0
        %v4116 = vsel %vm1061, %v4103, 0
        %v4119 = vsel %vm1061, %v4104, 0
        %v4122 = vsel %vm1061, %v4105, 0
        %v4125 = vsel %vm1061, %v4106, 0
        %v4128 = vsel %vm1061, %v4107, 0
        %v4131 = vsel %vm1061, %v4108, 0
        %v4134 = vsel %vm1074, %v4100, 0
        %4136 = vmatprep.subr.bf16.mxu0 0
        %4137 = vmatpush1.bf16.msra.mxu0 %v4134
        %4138 = vmatprep.subr.bf16.mxu0 0
        %4139 = vmatpush1.bf16.msra.mxu0 0
        %4140 = vmatprep.subr.bf16.mxu0 0
        %4141 = vmatpush1.bf16.msra.mxu0 0
        %4142 = vmatprep.subr.bf16.mxu0 0
        %4143 = vmatpush1.bf16.msra.mxu0 0
        %4144 = vmatprep.subr.bf16.mxu0 0
        %4145 = vmatpush1.bf16.msra.mxu0 0
        %4146 = vmatprep.subr.bf16.mxu0 0
        %4147 = vmatpush1.bf16.msra.mxu0 0
        %4148 = vmatprep.subr.bf16.mxu0 0
        %4149 = vmatpush1.bf16.msra.mxu0 0
        %4150 = vmatprep.subr.bf16.mxu0 0
        %4151 = vmatpush1.bf16.msra.mxu0 0
        %4152 = vmatprep.subr.bf16.mxu0 0
        %4153 = vmatpush1.bf16.msra.mxu0 0
        %4154 = vmatprep.subr.bf16.mxu0 0
        %4155 = vmatpush1.bf16.msra.mxu0 0
        %4156 = vmatprep.subr.bf16.mxu0 0
        %4157 = vmatpush1.bf16.msra.mxu0 0
        %4158 = vmatprep.subr.bf16.mxu0 0
        %4159 = vmatpush1.bf16.msra.mxu0 0
        %4160 = vmatprep.subr.bf16.mxu0 0
        %4161 = vmatpush1.bf16.msra.mxu0 0
        %4162 = vmatprep.subr.bf16.mxu0 0
        %4163 = vmatpush1.bf16.msra.mxu0 0
        %4164 = vmatprep.subr.bf16.mxu0 0
        %4165 = vmatpush1.bf16.msra.mxu0 0
        %4166 = vmatprep.subr.bf16.mxu0 0
        %4167 = vmatpush1.bf16.msra.mxu0 0
        %4168 = vmatprep.mubr.bf16.mxu0 0
        %4169 = vmatmul.mubr.bf16.gmra.mrb[0].mxu0 %v4110
        %v4170 = vpop.f32.mrb[0].mxu0
        %v4171 = vadd.f32 0.0, %v4170
        %v4172 = vpop.f32.mrb[0].mxu0
        %v4173 = vpop.f32.mrb[0].mxu0
        %v4174 = vadd.f32 0.0, %v4173
        %v4175 = vpop.f32.mrb[0].mxu0
        %4176 = vmatprep.mubr.bf16.mxu0 0
        %4177 = vmatmul.mubr.bf16.gmra.mrb[0].mxu0 %v4113
        %v4178 = vpop.f32.mrb[0].mxu0
        %v4179 = vadd.f32 0.0, %v4178
        %v4180 = vpop.f32.mrb[0].mxu0
        %v4181 = vpop.f32.mrb[0].mxu0
        %v4182 = vadd.f32 0.0, %v4181
        %v4183 = vpop.f32.mrb[0].mxu0
        %4184 = vmatprep.mubr.bf16.mxu0 0
        %4185 = vmatmul.mubr.bf16.gmra.mrb[0].mxu0 %v4116
        %v4186 = vpop.f32.mrb[0].mxu0
        %v4187 = vadd.f32 0.0, %v4186
        %v4188 = vpop.f32.mrb[0].mxu0
        %v4189 = vpop.f32.mrb[0].mxu0
        %v4190 = vadd.f32 0.0, %v4189
        %v4191 = vpop.f32.mrb[0].mxu0
        %4192 = vmatprep.mubr.bf16.mxu0 0
        %4193 = vmatmul.mubr.bf16.gmra.mrb[0].mxu0 %v4119
        %v4194 = vpop.f32.mrb[0].mxu0
        %v4195 = vadd.f32 0.0, %v4194
        %v4196 = vpop.f32.mrb[0].mxu0
        %v4197 = vpop.f32.mrb[0].mxu0
        %v4198 = vadd.f32 0.0, %v4197
        %v4199 = vpop.f32.mrb[0].mxu0
        %4200 = vmatprep.mubr.bf16.mxu0 0
        %4201 = vmatmul.mubr.bf16.gmra.mrb[0].mxu0 %v4122
        %v4202 = vpop.f32.mrb[0].mxu0
        %v4203 = vadd.f32 0.0, %v4202
        %v4204 = vpop.f32.mrb[0].mxu0
        %v4205 = vpop.f32.mrb[0].mxu0
        %v4206 = vadd.f32 0.0, %v4205
        %v4207 = vpop.f32.mrb[0].mxu0
        %4208 = vmatprep.mubr.bf16.mxu0 0
        %4209 = vmatmul.mubr.bf16.gmra.mrb[0].mxu0 %v4125
        %v4210 = vpop.f32.mrb[0].mxu0
        %v4211 = vadd.f32 0.0, %v4210
        %v4212 = vpop.f32.mrb[0].mxu0
        %v4213 = vpop.f32.mrb[0].mxu0
        %v4214 = vadd.f32 0.0, %v4213
        %v4215 = vpop.f32.mrb[0].mxu0
        %4216 = vmatprep.mubr.bf16.mxu0 0
        %4217 = vmatmul.mubr.bf16.gmra.mrb[0].mxu0 %v4128
        %v4218 = vpop.f32.mrb[0].mxu0
        %v4219 = vadd.f32 0.0, %v4218
        %v4220 = vpop.f32.mrb[0].mxu0
        %v4221 = vpop.f32.mrb[0].mxu0
        %v4222 = vadd.f32 0.0, %v4221
        %v4223 = vpop.f32.mrb[0].mxu0
        %4224 = vmatprep.mubr.bf16.mxu0 0
        %4225 = vmatmul.mubr.bf16.gmra.mrb[0].mxu0 %v4131
        %v4226 = vpop.f32.mrb[0].mxu0
        %v4227 = vadd.f32 0.0, %v4226
        %v4228 = vpop.f32.mrb[0].mxu0
        %v4229 = vpop.f32.mrb[0].mxu0
        %v4230 = vadd.f32 0.0, %v4229
        %v4231 = vpop.f32.mrb[0].mxu0
        %4232 = vdwg.mxu0
        %v4233 = vadd.f32 %v3921, %v4171
        %v4234 = vadd.f32 %v3922, %v4174
        %v4235 = vadd.f32 %v3923, %v4179
        %v4236 = vadd.f32 %v3924, %v4182
        %v4237 = vadd.f32 %v3925, %v4187
        %v4238 = vadd.f32 %v3926, %v4190
        %v4239 = vadd.f32 %v3927, %v4195
        %v4240 = vadd.f32 %v3928, %v4198
        %v4241 = vadd.f32 %v3929, %v4203
        %v4242 = vadd.f32 %v3930, %v4206
        %v4243 = vadd.f32 %v3931, %v4211
        %v4244 = vadd.f32 %v3932, %v4214
        %v4245 = vadd.f32 %v3933, %v4219
        %v4246 = vadd.f32 %v3934, %v4222
        %v4247 = vadd.f32 %v3935, %v4227
        %v4248 = vadd.f32 %v3936, %v4230
        %s4249 = scalar_lea.vmem [#allocation11], 512
        %v4250 = vld [vmem:[%s4249] sm:$0xf]
        %v4251 = vld [vmem:[%s4249 + $0x4] sm:$0xf]
        %v4252 = vld [vmem:[%s4249 + $0x8] sm:$0xf]
        %v4253 = vld [vmem:[%s4249 + $0xc] sm:$0xf]
        %v4254 = vld [vmem:[%s4249 + $0x10] sm:$0xf]
        %v4255 = vld [vmem:[%s4249 + $0x14] sm:$0xf]
        %v4256 = vld [vmem:[%s4249 + $0x18] sm:$0xf]
        %v4257 = vld [vmem:[%s4249 + $0x1c] sm:$0xf]
        %v4258 = vld [vmem:[%s4249 + $0x20] sm:$0xf]
        %v4259 = vld [vmem:[%s4249 + $0x24] sm:$0xf]
        %v4260 = vld [vmem:[%s4249 + $0x28] sm:$0xf]
        %v4261 = vld [vmem:[%s4249 + $0x2c] sm:$0xf]
        %v4262 = vld [vmem:[%s4249 + $0x30] sm:$0xf]
        %v4263 = vld [vmem:[%s4249 + $0x34] sm:$0xf]
        %v4264 = vld [vmem:[%s4249 + $0x38] sm:$0xf]
        %v4265 = vld [vmem:[%s4249 + $0x3c] sm:$0xf]
        %v4282 = vunpack.c.l.b16 %v4250
        %v4283 = vunpack.c.l.b16 %v4251
        %v4284 = vunpack.c.l.b16 %v4252
        %v4285 = vunpack.c.l.b16 %v4253
        %v4286 = vunpack.c.l.b16 %v4254
        %v4287 = vunpack.c.l.b16 %v4255
        %v4288 = vunpack.c.l.b16 %v4256
        %v4289 = vunpack.c.l.b16 %v4257
        %v4290 = vunpack.c.l.b16 %v4258
        %v4291 = vunpack.c.l.b16 %v4259
        %v4292 = vunpack.c.l.b16 %v4260
        %v4293 = vunpack.c.l.b16 %v4261
        %v4294 = vunpack.c.l.b16 %v4262
        %v4295 = vunpack.c.l.b16 %v4263
        %v4296 = vunpack.c.l.b16 %v4264
        %v4297 = vunpack.c.l.b16 %v4265
        %v4298 = vpack.c.b16 %v4283, %v4282
        %v4299 = vpack.c.b16 %v4285, %v4284
        %v4300 = vpack.c.b16 %v4287, %v4286
        %v4301 = vpack.c.b16 %v4289, %v4288
        %v4302 = vpack.c.b16 %v4291, %v4290
        %v4303 = vpack.c.b16 %v4293, %v4292
        %v4304 = vpack.c.b16 %v4295, %v4294
        %v4305 = vpack.c.b16 %v4297, %v4296
        %4314 = vmatprep.subr.bf16.mxu0 0
        %4315 = vmatpush1.bf16.msra.mxu0 %v1795
        %4316 = vmatprep.subr.bf16.mxu0 0
        %4317 = vmatpush1.bf16.msra.mxu0 %v1796
        %4318 = vmatprep.subr.bf16.mxu0 0
        %4319 = vmatpush1.bf16.msra.mxu0 %v1797
        %4320 = vmatprep.subr.bf16.mxu0 0
        %4321 = vmatpush1.bf16.msra.mxu0 %v1798
        %4322 = vmatprep.subr.bf16.mxu0 0
        %4323 = vmatpush1.bf16.msra.mxu0 %v1799
        %4324 = vmatprep.subr.bf16.mxu0 0
        %4325 = vmatpush1.bf16.msra.mxu0 %v1800
        %4326 = vmatprep.subr.bf16.mxu0 0
        %4327 = vmatpush1.bf16.msra.mxu0 %v1801
        %4328 = vmatprep.subr.bf16.mxu0 0
        %4329 = vmatpush1.bf16.msra.mxu0 %v1802
        %4330 = vmatprep.subr.bf16.mxu0 0
        %4331 = vmatpush1.bf16.msra.mxu0 0
        %4332 = vmatprep.subr.bf16.mxu0 0
        %4333 = vmatpush1.bf16.msra.mxu0 0
        %4334 = vmatprep.subr.bf16.mxu0 0
        %4335 = vmatpush1.bf16.msra.mxu0 0
        %4336 = vmatprep.subr.bf16.mxu0 0
        %4337 = vmatpush1.bf16.msra.mxu0 0
        %4338 = vmatprep.subr.bf16.mxu0 0
        %4339 = vmatpush1.bf16.msra.mxu0 0
        %4340 = vmatprep.subr.bf16.mxu0 0
        %4341 = vmatpush1.bf16.msra.mxu0 0
        %4342 = vmatprep.subr.bf16.mxu0 0
        %4343 = vmatpush1.bf16.msra.mxu0 0
        %4344 = vmatprep.subr.bf16.mxu0 0
        %4345 = vmatpush1.bf16.msra.mxu0 0
        %4346 = vmatprep.mubr.bf16.mxu0 0
        %4347 = vmatmul.mubr.bf16.gmra.mrb[0].mxu0 %v4298
        %v4348 = vpop.f32.mrb[0].mxu0
        %v4349 = vadd.f32 0.0, %v4348
        %v4350 = vpop.f32.mrb[0].mxu0
        %v4351 = vpop.f32.mrb[0].mxu0
        %v4352 = vadd.f32 0.0, %v4351
        %v4353 = vpop.f32.mrb[0].mxu0
        %4354 = vmatprep.mubr.bf16.mxu0 0
        %4355 = vmatmul.mubr.bf16.gmra.mrb[0].mxu0 %v4299
        %v4356 = vpop.f32.mrb[0].mxu0
        %v4357 = vadd.f32 0.0, %v4356
        %v4358 = vpop.f32.mrb[0].mxu0
        %v4359 = vpop.f32.mrb[0].mxu0
        %v4360 = vadd.f32 0.0, %v4359
        %v4361 = vpop.f32.mrb[0].mxu0
        %4362 = vmatprep.mubr.bf16.mxu0 0
        %4363 = vmatmul.mubr.bf16.gmra.mrb[0].mxu0 %v4300
        %v4364 = vpop.f32.mrb[0].mxu0
        %v4365 = vadd.f32 0.0, %v4364
        %v4366 = vpop.f32.mrb[0].mxu0
        %v4367 = vpop.f32.mrb[0].mxu0
        %v4368 = vadd.f32 0.0, %v4367
        %v4369 = vpop.f32.mrb[0].mxu0
        %4370 = vmatprep.mubr.bf16.mxu0 0
        %4371 = vmatmul.mubr.bf16.gmra.mrb[0].mxu0 %v4301
        %v4372 = vpop.f32.mrb[0].mxu0
        %v4373 = vadd.f32 0.0, %v4372
        %v4374 = vpop.f32.mrb[0].mxu0
        %v4375 = vpop.f32.mrb[0].mxu0
        %v4376 = vadd.f32 0.0, %v4375
        %v4377 = vpop.f32.mrb[0].mxu0
        %4378 = vmatprep.mubr.bf16.mxu0 0
        %4379 = vmatmul.mubr.bf16.gmra.mrb[0].mxu0 %v4302
        %v4380 = vpop.f32.mrb[0].mxu0
        %v4381 = vadd.f32 0.0, %v4380
        %v4382 = vpop.f32.mrb[0].mxu0
        %v4383 = vpop.f32.mrb[0].mxu0
        %v4384 = vadd.f32 0.0, %v4383
        %v4385 = vpop.f32.mrb[0].mxu0
        %4386 = vmatprep.mubr.bf16.mxu0 0
        %4387 = vmatmul.mubr.bf16.gmra.mrb[0].mxu0 %v4303
        %v4388 = vpop.f32.mrb[0].mxu0
        %v4389 = vadd.f32 0.0, %v4388
        %v4390 = vpop.f32.mrb[0].mxu0
        %v4391 = vpop.f32.mrb[0].mxu0
        %v4392 = vadd.f32 0.0, %v4391
        %v4393 = vpop.f32.mrb[0].mxu0
        %4394 = vmatprep.mubr.bf16.mxu0 0
        %4395 = vmatmul.mubr.bf16.gmra.mrb[0].mxu0 %v4304
        %v4396 = vpop.f32.mrb[0].mxu0
        %v4397 = vadd.f32 0.0, %v4396
        %v4398 = vpop.f32.mrb[0].mxu0
        %v4399 = vpop.f32.mrb[0].mxu0
        %v4400 = vadd.f32 0.0, %v4399
        %v4401 = vpop.f32.mrb[0].mxu0
        %4402 = vmatprep.mubr.bf16.mxu0 0
        %4403 = vmatmul.mubr.bf16.gmra.mrb[0].mxu0 %v4305
        %v4404 = vpop.f32.mrb[0].mxu0
        %v4405 = vadd.f32 0.0, %v4404
        %v4406 = vpop.f32.mrb[0].mxu0
        %v4407 = vpop.f32.mrb[0].mxu0
        %v4408 = vadd.f32 0.0, %v4407
        %v4409 = vpop.f32.mrb[0].mxu0
        %4410 = vdwg.mxu0
        %s4411 = scalar_lea.vmem %s5, 8
        %v4412 = vld [vmem:[%s4411] sm:$0x1]
        %v4413 = vpack.c.bf16 %v4352, %v4349
        %v4414 = vpack.c.bf16 %v4360, %v4357
        %v4415 = vpack.c.bf16 %v4368, %v4365
        %v4416 = vpack.c.bf16 %v4376, %v4373
        %v4417 = vpack.c.bf16 %v4384, %v4381
        %v4418 = vpack.c.bf16 %v4392, %v4389
        %v4419 = vpack.c.bf16 %v4400, %v4397
        %v4420 = vpack.c.bf16 %v4408, %v4405
        %v4422 = vsel %vm1061, %v4413, 0
        %v4425 = vsel %vm1061, %v4414, 0
        %v4428 = vsel %vm1061, %v4415, 0
        %v4431 = vsel %vm1061, %v4416, 0
        %v4434 = vsel %vm1061, %v4417, 0
        %v4437 = vsel %vm1061, %v4418, 0
        %v4440 = vsel %vm1061, %v4419, 0
        %v4443 = vsel %vm1061, %v4420, 0
        %v4446 = vsel %vm1074, %v4412, 0
        %4448 = vmatprep.subr.bf16.mxu0 0
        %4449 = vmatpush1.bf16.msra.mxu0 %v4446
        %4450 = vmatprep.subr.bf16.mxu0 0
        %4451 = vmatpush1.bf16.msra.mxu0 0
        %4452 = vmatprep.subr.bf16.mxu0 0
        %4453 = vmatpush1.bf16.msra.mxu0 0
        %4454 = vmatprep.subr.bf16.mxu0 0
        %4455 = vmatpush1.bf16.msra.mxu0 0
        %4456 = vmatprep.subr.bf16.mxu0 0
        %4457 = vmatpush1.bf16.msra.mxu0 0
        %4458 = vmatprep.subr.bf16.mxu0 0
        %4459 = vmatpush1.bf16.msra.mxu0 0
        %4460 = vmatprep.subr.bf16.mxu0 0
        %4461 = vmatpush1.bf16.msra.mxu0 0
        %4462 = vmatprep.subr.bf16.mxu0 0
        %4463 = vmatpush1.bf16.msra.mxu0 0
        %4464 = vmatprep.subr.bf16.mxu0 0
        %4465 = vmatpush1.bf16.msra.mxu0 0
        %4466 = vmatprep.subr.bf16.mxu0 0
        %4467 = vmatpush1.bf16.msra.mxu0 0
        %4468 = vmatprep.subr.bf16.mxu0 0
        %4469 = vmatpush1.bf16.msra.mxu0 0
        %4470 = vmatprep.subr.bf16.mxu0 0
        %4471 = vmatpush1.bf16.msra.mxu0 0
        %4472 = vmatprep.subr.bf16.mxu0 0
        %4473 = vmatpush1.bf16.msra.mxu0 0
        %4474 = vmatprep.subr.bf16.mxu0 0
        %4475 = vmatpush1.bf16.msra.mxu0 0
        %4476 = vmatprep.subr.bf16.mxu0 0
        %4477 = vmatpush1.bf16.msra.mxu0 0
        %4478 = vmatprep.subr.bf16.mxu0 0
        %4479 = vmatpush1.bf16.msra.mxu0 0
        %4480 = vmatprep.mubr.bf16.mxu0 0
        %4481 = vmatmul.mubr.bf16.gmra.mrb[0].mxu0 %v4422
        %v4482 = vpop.f32.mrb[0].mxu0
        %v4483 = vadd.f32 0.0, %v4482
        %v4484 = vpop.f32.mrb[0].mxu0
        %v4485 = vpop.f32.mrb[0].mxu0
        %v4486 = vadd.f32 0.0, %v4485
        %v4487 = vpop.f32.mrb[0].mxu0
        %4488 = vmatprep.mubr.bf16.mxu0 0
        %4489 = vmatmul.mubr.bf16.gmra.mrb[0].mxu0 %v4425
        %v4490 = vpop.f32.mrb[0].mxu0
        %v4491 = vadd.f32 0.0, %v4490
        %v4492 = vpop.f32.mrb[0].mxu0
        %v4493 = vpop.f32.mrb[0].mxu0
        %v4494 = vadd.f32 0.0, %v4493
        %v4495 = vpop.f32.mrb[0].mxu0
        %4496 = vmatprep.mubr.bf16.mxu0 0
        %4497 = vmatmul.mubr.bf16.gmra.mrb[0].mxu0 %v4428
        %v4498 = vpop.f32.mrb[0].mxu0
        %v4499 = vadd.f32 0.0, %v4498
        %v4500 = vpop.f32.mrb[0].mxu0
        %v4501 = vpop.f32.mrb[0].mxu0
        %v4502 = vadd.f32 0.0, %v4501
        %v4503 = vpop.f32.mrb[0].mxu0
        %4504 = vmatprep.mubr.bf16.mxu0 0
        %4505 = vmatmul.mubr.bf16.gmra.mrb[0].mxu0 %v4431
        %v4506 = vpop.f32.mrb[0].mxu0
        %v4507 = vadd.f32 0.0, %v4506
        %v4508 = vpop.f32.mrb[0].mxu0
        %v4509 = vpop.f32.mrb[0].mxu0
        %v4510 = vadd.f32 0.0, %v4509
        %v4511 = vpop.f32.mrb[0].mxu0
        %4512 = vmatprep.mubr.bf16.mxu0 0
        %4513 = vmatmul.mubr.bf16.gmra.mrb[0].mxu0 %v4434
        %v4514 = vpop.f32.mrb[0].mxu0
        %v4515 = vadd.f32 0.0, %v4514
        %v4516 = vpop.f32.mrb[0].mxu0
        %v4517 = vpop.f32.mrb[0].mxu0
        %v4518 = vadd.f32 0.0, %v4517
        %v4519 = vpop.f32.mrb[0].mxu0
        %4520 = vmatprep.mubr.bf16.mxu0 0
        %4521 = vmatmul.mubr.bf16.gmra.mrb[0].mxu0 %v4437
        %v4522 = vpop.f32.mrb[0].mxu0
        %v4523 = vadd.f32 0.0, %v4522
        %v4524 = vpop.f32.mrb[0].mxu0
        %v4525 = vpop.f32.mrb[0].mxu0
        %v4526 = vadd.f32 0.0, %v4525
        %v4527 = vpop.f32.mrb[0].mxu0
        %4528 = vmatprep.mubr.bf16.mxu0 0
        %4529 = vmatmul.mubr.bf16.gmra.mrb[0].mxu0 %v4440
        %v4530 = vpop.f32.mrb[0].mxu0
        %v4531 = vadd.f32 0.0, %v4530
        %v4532 = vpop.f32.mrb[0].mxu0
        %v4533 = vpop.f32.mrb[0].mxu0
        %v4534 = vadd.f32 0.0, %v4533
        %v4535 = vpop.f32.mrb[0].mxu0
        %4536 = vmatprep.mubr.bf16.mxu0 0
        %4537 = vmatmul.mubr.bf16.gmra.mrb[0].mxu0 %v4443
        %v4538 = vpop.f32.mrb[0].mxu0
        %v4539 = vadd.f32 0.0, %v4538
        %v4540 = vpop.f32.mrb[0].mxu0
        %v4541 = vpop.f32.mrb[0].mxu0
        %v4542 = vadd.f32 0.0, %v4541
        %v4543 = vpop.f32.mrb[0].mxu0
        %4544 = vdwg.mxu0
        %v4545 = vadd.f32 %v4233, %v4483
        %v4546 = vadd.f32 %v4234, %v4486
        %v4547 = vadd.f32 %v4235, %v4491
        %v4548 = vadd.f32 %v4236, %v4494
        %v4549 = vadd.f32 %v4237, %v4499
        %v4550 = vadd.f32 %v4238, %v4502
        %v4551 = vadd.f32 %v4239, %v4507
        %v4552 = vadd.f32 %v4240, %v4510
        %v4553 = vadd.f32 %v4241, %v4515
        %v4554 = vadd.f32 %v4242, %v4518
        %v4555 = vadd.f32 %v4243, %v4523
        %v4556 = vadd.f32 %v4244, %v4526
        %v4557 = vadd.f32 %v4245, %v4531
        %v4558 = vadd.f32 %v4246, %v4534
        %v4559 = vadd.f32 %v4247, %v4539
        %v4560 = vadd.f32 %v4248, %v4542
        %v4561 = vld [vmem:[%s6] sm:$0x1]
        %v4563 = vlaneseq
        %v4564 = vshrl.u32 %v4563, 7
        %v4565 = vsub.s32 0, %v4564
        %v4566 = vrot.slane %v4561, %v4565
        %v4568 = vadd.f32 %v4545, %v4566
        %v4569 = vadd.f32 %v4546, %v4566
        %v4570 = vadd.f32 %v4547, %v4566
        %v4571 = vadd.f32 %v4548, %v4566
        %v4572 = vadd.f32 %v4549, %v4566
        %v4573 = vadd.f32 %v4550, %v4566
        %v4574 = vadd.f32 %v4551, %v4566
        %v4575 = vadd.f32 %v4552, %v4566
        %v4576 = vadd.f32 %v4553, %v4566
        %v4577 = vadd.f32 %v4554, %v4566
        %v4578 = vadd.f32 %v4555, %v4566
        %v4579 = vadd.f32 %v4556, %v4566
        %v4580 = vadd.f32 %v4557, %v4566
        %v4581 = vadd.f32 %v4558, %v4566
        %v4582 = vadd.f32 %v4559, %v4566
        %v4583 = vadd.f32 %v4560, %v4566
        %v4584 = vmax.f32 %v4568, 0.0
        %v4585 = vmax.f32 %v4569, 0.0
        %v4586 = vmax.f32 %v4570, 0.0
        %v4587 = vmax.f32 %v4571, 0.0
        %v4588 = vmax.f32 %v4572, 0.0
        %v4589 = vmax.f32 %v4573, 0.0
        %v4590 = vmax.f32 %v4574, 0.0
        %v4591 = vmax.f32 %v4575, 0.0
        %v4592 = vmax.f32 %v4576, 0.0
        %v4593 = vmax.f32 %v4577, 0.0
        %v4594 = vmax.f32 %v4578, 0.0
        %v4595 = vmax.f32 %v4579, 0.0
        %v4596 = vmax.f32 %v4580, 0.0
        %v4597 = vmax.f32 %v4581, 0.0
        %v4598 = vmax.f32 %v4582, 0.0
        %v4599 = vmax.f32 %v4583, 0.0
        %v4600 = vld [vmem:[%s7] sm:$0xf]
        %v4601 = vld [vmem:[%s7 + $0x4] sm:$0xf]
        %v4602 = vld [vmem:[%s7 + $0x8] sm:$0xf]
        %v4603 = vld [vmem:[%s7 + $0xc] sm:$0xf]
        %v4604 = vpack.c.bf16 %v4585, %v4584
        %v4605 = vpack.c.bf16 %v4587, %v4586
        %v4606 = vpack.c.bf16 %v4589, %v4588
        %v4607 = vpack.c.bf16 %v4591, %v4590
        %v4608 = vpack.c.bf16 %v4593, %v4592
        %v4609 = vpack.c.bf16 %v4595, %v4594
        %v4610 = vpack.c.bf16 %v4597, %v4596
        %v4611 = vpack.c.bf16 %v4599, %v4598
        %v4612 = vld [vmem:[#allocation8] sm:$0x1]
        %v4614 = vlaneseq
        %v4615 = vshrl.u32 %v4614, 7
        %v4616 = vsub.s32 0, %v4615
        %v4617 = vrot.slane %v4612, %v4616
        %v4623 = vunpack.c.l.b16 %v4600
        %v4624 = vunpack.c.l.b16 %v4601
        %v4625 = vunpack.c.l.b16 %v4602
        %v4626 = vunpack.c.l.b16 %v4603
        %v4627 = vpack.c.b16 %v4624, %v4623
        %v4628 = vpack.c.b16 %v4626, %v4625
        %vm4631 = vcmask 261120
        %v4633 = vsel %vm4631, %v4604, 0
        %v4636 = vsel %vm4631, %v4605, 0
        %v4639 = vsel %vm4631, %v4606, 0
        %v4642 = vsel %vm4631, %v4607, 0
        %v4645 = vsel %vm4631, %v4608, 0
        %v4648 = vsel %vm4631, %v4609, 0
        %v4651 = vsel %vm4631, %v4610, 0
        %v4654 = vsel %vm4631, %v4611, 0
        %4656 = vmatprep.subr.bf16.mxu0 0
        %4657 = vmatpush1.bf16.msra.mxu0 %v4627
        %4658 = vmatprep.subr.bf16.mxu0 0
        %4659 = vmatpush1.bf16.msra.mxu0 %v4628
        %4660 = vmatprep.subr.bf16.mxu0 0
        %4661 = vmatpush1.bf16.msra.mxu0 0
        %4662 = vmatprep.subr.bf16.mxu0 0
        %4663 = vmatpush1.bf16.msra.mxu0 0
        %4664 = vmatprep.subr.bf16.mxu0 0
        %4665 = vmatpush1.bf16.msra.mxu0 0
        %4666 = vmatprep.subr.bf16.mxu0 0
        %4667 = vmatpush1.bf16.msra.mxu0 0
        %4668 = vmatprep.subr.bf16.mxu0 0
        %4669 = vmatpush1.bf16.msra.mxu0 0
        %4670 = vmatprep.subr.bf16.mxu0 0
        %4671 = vmatpush1.bf16.msra.mxu0 0
        %4672 = vmatprep.subr.bf16.mxu0 0
        %4673 = vmatpush1.bf16.msra.mxu0 0
        %4674 = vmatprep.subr.bf16.mxu0 0
        %4675 = vmatpush1.bf16.msra.mxu0 0
        %4676 = vmatprep.subr.bf16.mxu0 0
        %4677 = vmatpush1.bf16.msra.mxu0 0
        %4678 = vmatprep.subr.bf16.mxu0 0
        %4679 = vmatpush1.bf16.msra.mxu0 0
        %4680 = vmatprep.subr.bf16.mxu0 0
        %4681 = vmatpush1.bf16.msra.mxu0 0
        %4682 = vmatprep.subr.bf16.mxu0 0
        %4683 = vmatpush1.bf16.msra.mxu0 0
        %4684 = vmatprep.subr.bf16.mxu0 0
        %4685 = vmatpush1.bf16.msra.mxu0 0
        %4686 = vmatprep.subr.bf16.mxu0 0
        %4687 = vmatpush1.bf16.msra.mxu0 0
        %4688 = vmatprep.mubr.bf16.mxu0 0
        %4689 = vmatmul.mubr.bf16.gmra.mrb[0].mxu0 %v4633
        %v4690 = vpop.f32.mrb[0].mxu0
        %v4691 = vadd.f32 %v4617, %v4690
        %v4692 = vpop.f32.mrb[0].mxu0
        %v4693 = vpop.f32.mrb[0].mxu0
        %v4694 = vadd.f32 %v4617, %v4693
        %v4695 = vpop.f32.mrb[0].mxu0
        %4696 = vmatprep.mubr.bf16.mxu0 0
        %4697 = vmatmul.mubr.bf16.gmra.mrb[0].mxu0 %v4636
        %v4698 = vpop.f32.mrb[0].mxu0
        %v4699 = vadd.f32 %v4617, %v4698
        %v4700 = vpop.f32.mrb[0].mxu0
        %v4701 = vpop.f32.mrb[0].mxu0
        %v4702 = vadd.f32 %v4617, %v4701
        %v4703 = vpop.f32.mrb[0].mxu0
        %4704 = vmatprep.mubr.bf16.mxu0 0
        %4705 = vmatmul.mubr.bf16.gmra.mrb[0].mxu0 %v4639
        %v4706 = vpop.f32.mrb[0].mxu0
        %v4707 = vadd.f32 %v4617, %v4706
        %v4708 = vpop.f32.mrb[0].mxu0
        %v4709 = vpop.f32.mrb[0].mxu0
        %v4710 = vadd.f32 %v4617, %v4709
        %v4711 = vpop.f32.mrb[0].mxu0
        %4712 = vmatprep.mubr.bf16.mxu0 0
        %4713 = vmatmul.mubr.bf16.gmra.mrb[0].mxu0 %v4642
        %v4714 = vpop.f32.mrb[0].mxu0
        %v4715 = vadd.f32 %v4617, %v4714
        %v4716 = vpop.f32.mrb[0].mxu0
        %v4717 = vpop.f32.mrb[0].mxu0
        %v4718 = vadd.f32 %v4617, %v4717
        %v4719 = vpop.f32.mrb[0].mxu0
        %4720 = vmatprep.mubr.bf16.mxu0 0
        %4721 = vmatmul.mubr.bf16.gmra.mrb[0].mxu0 %v4645
        %v4722 = vpop.f32.mrb[0].mxu0
        %v4723 = vadd.f32 %v4617, %v4722
        %v4724 = vpop.f32.mrb[0].mxu0
        %v4725 = vpop.f32.mrb[0].mxu0
        %v4726 = vadd.f32 %v4617, %v4725
        %v4727 = vpop.f32.mrb[0].mxu0
        %4728 = vmatprep.mubr.bf16.mxu0 0
        %4729 = vmatmul.mubr.bf16.gmra.mrb[0].mxu0 %v4648
        %v4730 = vpop.f32.mrb[0].mxu0
        %v4731 = vadd.f32 %v4617, %v4730
        %v4732 = vpop.f32.mrb[0].mxu0
        %v4733 = vpop.f32.mrb[0].mxu0
        %v4734 = vadd.f32 %v4617, %v4733
        %v4735 = vpop.f32.mrb[0].mxu0
        %4736 = vmatprep.mubr.bf16.mxu0 0
        %4737 = vmatmul.mubr.bf16.gmra.mrb[0].mxu0 %v4651
        %v4738 = vpop.f32.mrb[0].mxu0
        %v4739 = vadd.f32 %v4617, %v4738
        %v4740 = vpop.f32.mrb[0].mxu0
        %v4741 = vpop.f32.mrb[0].mxu0
        %v4742 = vadd.f32 %v4617, %v4741
        %v4743 = vpop.f32.mrb[0].mxu0
        %4744 = vmatprep.mubr.bf16.mxu0 0
        %4745 = vmatmul.mubr.bf16.gmra.mrb[0].mxu0 %v4654
        %v4746 = vpop.f32.mrb[0].mxu0
        %v4747 = vadd.f32 %v4617, %v4746
        %v4748 = vpop.f32.mrb[0].mxu0
        %v4749 = vpop.f32.mrb[0].mxu0
        %v4750 = vadd.f32 %v4617, %v4749
        %v4751 = vpop.f32.mrb[0].mxu0
        %4752 = vdwg.mxu0
        %v4753 = vmax.f32 %v4691, 0.0
        %v4754 = vmax.f32 %v4694, 0.0
        %v4755 = vmax.f32 %v4699, 0.0
        %v4756 = vmax.f32 %v4702, 0.0
        %v4757 = vmax.f32 %v4707, 0.0
        %v4758 = vmax.f32 %v4710, 0.0
        %v4759 = vmax.f32 %v4715, 0.0
        %v4760 = vmax.f32 %v4718, 0.0
        %v4761 = vmax.f32 %v4723, 0.0
        %v4762 = vmax.f32 %v4726, 0.0
        %v4763 = vmax.f32 %v4731, 0.0
        %v4764 = vmax.f32 %v4734, 0.0
        %v4765 = vmax.f32 %v4739, 0.0
        %v4766 = vmax.f32 %v4742, 0.0
        %v4767 = vmax.f32 %v4747, 0.0
        %v4768 = vmax.f32 %v4750, 0.0
        %v4769 = vpack.c.bf16 %v4754, %v4753
        %v4770 = vpack.c.bf16 %v4756, %v4755
        %v4771 = vpack.c.bf16 %v4758, %v4757
        %v4772 = vpack.c.bf16 %v4760, %v4759
        %v4773 = vpack.c.bf16 %v4762, %v4761
        %v4774 = vpack.c.bf16 %v4764, %v4763
        %v4775 = vpack.c.bf16 %v4766, %v4765
        %v4776 = vpack.c.bf16 %v4768, %v4767
        %4777 = vmatprep.subr.bf16.mxu0 0
        %4778 = vmatpush1.bf16.msra.mxu0 %v4769
        %4779 = vmatprep.subr.bf16.mxu0 0
        %4780 = vmatpush1.bf16.msra.mxu0 %v4770
        %4781 = vmatprep.subr.bf16.mxu0 0
        %4782 = vmatpush1.bf16.msra.mxu0 %v4771
        %4783 = vmatprep.subr.bf16.mxu0 0
        %4784 = vmatpush1.bf16.msra.mxu0 %v4772
        %4785 = vmatprep.subr.bf16.mxu0 0
        %4786 = vmatpush1.bf16.msra.mxu0 %v4773
        %4787 = vmatprep.subr.bf16.mxu0 0
        %4788 = vmatpush1.bf16.msra.mxu0 %v4774
        %4789 = vmatprep.subr.bf16.mxu0 0
        %4790 = vmatpush1.bf16.msra.mxu0 %v4775
        %4791 = vmatprep.subr.bf16.mxu0 0
        %4792 = vmatpush1.bf16.msra.mxu0 %v4776
        %4793 = vmatprep.subr.bf16.mxu0 0
        %4794 = vmatpush1.bf16.msra.mxu0 0
        %4795 = vmatprep.subr.bf16.mxu0 0
        %4796 = vmatpush1.bf16.msra.mxu0 0
        %4797 = vmatprep.subr.bf16.mxu0 0
        %4798 = vmatpush1.bf16.msra.mxu0 0
        %4799 = vmatprep.subr.bf16.mxu0 0
        %4800 = vmatpush1.bf16.msra.mxu0 0
        %4801 = vmatprep.subr.bf16.mxu0 0
        %4802 = vmatpush1.bf16.msra.mxu0 0
        %4803 = vmatprep.subr.bf16.mxu0 0
        %4804 = vmatpush1.bf16.msra.mxu0 0
        %4805 = vmatprep.subr.bf16.mxu0 0
        %4806 = vmatpush1.bf16.msra.mxu0 0
        %4807 = vmatprep.subr.bf16.mxu0 0
        %4808 = vmatpush1.bf16.msra.mxu0 0
        %4809 = vmatprep.mubr.bf16.mxu0 0
        %4810 = vmatmul.mubr.bf16.gmra.mrb[0].mxu0 %v1835
        %v4811 = vpop.f32.mrb[0].mxu0
        %v4812 = vadd.f32 0.0, %v4811
        %v4813 = vpop.f32.mrb[0].mxu0
        %v4814 = vpop.f32.mrb[0].mxu0
        %v4815 = vadd.f32 0.0, %v4814
        %v4816 = vpop.f32.mrb[0].mxu0
        %4817 = vmatprep.mubr.bf16.mxu0 0
        %4818 = vmatmul.mubr.bf16.gmra.mrb[0].mxu0 %v1836
        %v4819 = vpop.f32.mrb[0].mxu0
        %v4820 = vadd.f32 0.0, %v4819
        %v4821 = vpop.f32.mrb[0].mxu0
        %v4822 = vpop.f32.mrb[0].mxu0
        %v4823 = vadd.f32 0.0, %v4822
        %v4824 = vpop.f32.mrb[0].mxu0
        %4825 = vmatprep.mubr.bf16.mxu0 0
        %4826 = vmatmul.mubr.bf16.gmra.mrb[0].mxu0 %v1837
        %v4827 = vpop.f32.mrb[0].mxu0
        %v4828 = vadd.f32 0.0, %v4827
        %v4829 = vpop.f32.mrb[0].mxu0
        %v4830 = vpop.f32.mrb[0].mxu0
        %v4831 = vadd.f32 0.0, %v4830
        %v4832 = vpop.f32.mrb[0].mxu0
        %4833 = vmatprep.mubr.bf16.mxu0 0
        %4834 = vmatmul.mubr.bf16.gmra.mrb[0].mxu0 %v1838
        %v4835 = vpop.f32.mrb[0].mxu0
        %v4836 = vadd.f32 0.0, %v4835
        %v4837 = vpop.f32.mrb[0].mxu0
        %v4838 = vpop.f32.mrb[0].mxu0
        %v4839 = vadd.f32 0.0, %v4838
        %v4840 = vpop.f32.mrb[0].mxu0
        %4841 = vmatprep.mubr.bf16.mxu0 0
        %4842 = vmatmul.mubr.bf16.gmra.mrb[0].mxu0 %v1839
        %v4843 = vpop.f32.mrb[0].mxu0
        %v4844 = vadd.f32 0.0, %v4843
        %v4845 = vpop.f32.mrb[0].mxu0
        %v4846 = vpop.f32.mrb[0].mxu0
        %v4847 = vadd.f32 0.0, %v4846
        %v4848 = vpop.f32.mrb[0].mxu0
        %4849 = vmatprep.mubr.bf16.mxu0 0
        %4850 = vmatmul.mubr.bf16.gmra.mrb[0].mxu0 %v1840
        %v4851 = vpop.f32.mrb[0].mxu0
        %v4852 = vadd.f32 0.0, %v4851
        %v4853 = vpop.f32.mrb[0].mxu0
        %v4854 = vpop.f32.mrb[0].mxu0
        %v4855 = vadd.f32 0.0, %v4854
        %v4856 = vpop.f32.mrb[0].mxu0
        %4857 = vmatprep.mubr.bf16.mxu0 0
        %4858 = vmatmul.mubr.bf16.gmra.mrb[0].mxu0 %v1841
        %v4859 = vpop.f32.mrb[0].mxu0
        %v4860 = vadd.f32 0.0, %v4859
        %v4861 = vpop.f32.mrb[0].mxu0
        %v4862 = vpop.f32.mrb[0].mxu0
        %v4863 = vadd.f32 0.0, %v4862
        %v4864 = vpop.f32.mrb[0].mxu0
        %4865 = vmatprep.mubr.bf16.mxu0 0
        %4866 = vmatmul.mubr.bf16.gmra.mrb[0].mxu0 %v1842
        %v4867 = vpop.f32.mrb[0].mxu0
        %v4868 = vadd.f32 0.0, %v4867
        %v4869 = vpop.f32.mrb[0].mxu0
        %v4870 = vpop.f32.mrb[0].mxu0
        %v4871 = vadd.f32 0.0, %v4870
        %v4872 = vpop.f32.mrb[0].mxu0
        %4873 = vdwg.mxu0
        %v4874 = vld [vmem:[%s9] sm:$0x1]
        %v4875 = vpack.c.bf16 %v4815, %v4812
        %v4876 = vpack.c.bf16 %v4823, %v4820
        %v4877 = vpack.c.bf16 %v4831, %v4828
        %v4878 = vpack.c.bf16 %v4839, %v4836
        %v4879 = vpack.c.bf16 %v4847, %v4844
        %v4880 = vpack.c.bf16 %v4855, %v4852
        %v4881 = vpack.c.bf16 %v4863, %v4860
        %v4882 = vpack.c.bf16 %v4871, %v4868
        %4883 = vmatprep.subr.bf16.mxu0 0
        %4884 = vmatpush1.bf16.msra.mxu0 %v4769
        %4885 = vmatprep.subr.bf16.mxu0 0
        %4886 = vmatpush1.bf16.msra.mxu0 %v4770
        %4887 = vmatprep.subr.bf16.mxu0 0
        %4888 = vmatpush1.bf16.msra.mxu0 %v4771
        %4889 = vmatprep.subr.bf16.mxu0 0
        %4890 = vmatpush1.bf16.msra.mxu0 %v4772
        %4891 = vmatprep.subr.bf16.mxu0 0
        %4892 = vmatpush1.bf16.msra.mxu0 %v4773
        %4893 = vmatprep.subr.bf16.mxu0 0
        %4894 = vmatpush1.bf16.msra.mxu0 %v4774
        %4895 = vmatprep.subr.bf16.mxu0 0
        %4896 = vmatpush1.bf16.msra.mxu0 %v4775
        %4897 = vmatprep.subr.bf16.mxu0 0
        %4898 = vmatpush1.bf16.msra.mxu0 %v4776
        %4899 = vmatprep.subr.bf16.mxu0 0
        %4900 = vmatpush1.bf16.msra.mxu0 0
        %4901 = vmatprep.subr.bf16.mxu0 0
        %4902 = vmatpush1.bf16.msra.mxu0 0
        %4903 = vmatprep.subr.bf16.mxu0 0
        %4904 = vmatpush1.bf16.msra.mxu0 0
        %4905 = vmatprep.subr.bf16.mxu0 0
        %4906 = vmatpush1.bf16.msra.mxu0 0
        %4907 = vmatprep.subr.bf16.mxu0 0
        %4908 = vmatpush1.bf16.msra.mxu0 0
        %4909 = vmatprep.subr.bf16.mxu0 0
        %4910 = vmatpush1.bf16.msra.mxu0 0
        %4911 = vmatprep.subr.bf16.mxu0 0
        %4912 = vmatpush1.bf16.msra.mxu0 0
        %4913 = vmatprep.subr.bf16.mxu0 0
        %4914 = vmatpush1.bf16.msra.mxu0 0
        %4915 = vmatprep.mubr.bf16.mxu0 0
        %4916 = vmatmul.mubr.bf16.gmra.mrb[0].mxu0 %v2006
        %v4917 = vpop.f32.mrb[0].mxu0
        %v4918 = vadd.f32 0.0, %v4917
        %v4919 = vpop.f32.mrb[0].mxu0
        %v4920 = vpop.f32.mrb[0].mxu0
        %v4921 = vadd.f32 0.0, %v4920
        %v4922 = vpop.f32.mrb[0].mxu0
        %4923 = vmatprep.mubr.bf16.mxu0 0
        %4924 = vmatmul.mubr.bf16.gmra.mrb[0].mxu0 %v2007
        %v4925 = vpop.f32.mrb[0].mxu0
        %v4926 = vadd.f32 0.0, %v4925
        %v4927 = vpop.f32.mrb[0].mxu0
        %v4928 = vpop.f32.mrb[0].mxu0
        %v4929 = vadd.f32 0.0, %v4928
        %v4930 = vpop.f32.mrb[0].mxu0
        %4931 = vmatprep.mubr.bf16.mxu0 0
        %4932 = vmatmul.mubr.bf16.gmra.mrb[0].mxu0 %v2008
        %v4933 = vpop.f32.mrb[0].mxu0
        %v4934 = vadd.f32 0.0, %v4933
        %v4935 = vpop.f32.mrb[0].mxu0
        %v4936 = vpop.f32.mrb[0].mxu0
        %v4937 = vadd.f32 0.0, %v4936
        %v4938 = vpop.f32.mrb[0].mxu0
        %4939 = vmatprep.mubr.bf16.mxu0 0
        %4940 = vmatmul.mubr.bf16.gmra.mrb[0].mxu0 %v2009
        %v4941 = vpop.f32.mrb[0].mxu0
        %v4942 = vadd.f32 0.0, %v4941
        %v4943 = vpop.f32.mrb[0].mxu0
        %v4944 = vpop.f32.mrb[0].mxu0
        %v4945 = vadd.f32 0.0, %v4944
        %v4946 = vpop.f32.mrb[0].mxu0
        %4947 = vmatprep.mubr.bf16.mxu0 0
        %4948 = vmatmul.mubr.bf16.gmra.mrb[0].mxu0 %v2010
        %v4949 = vpop.f32.mrb[0].mxu0
        %v4950 = vadd.f32 0.0, %v4949
        %v4951 = vpop.f32.mrb[0].mxu0
        %v4952 = vpop.f32.mrb[0].mxu0
        %v4953 = vadd.f32 0.0, %v4952
        %v4954 = vpop.f32.mrb[0].mxu0
        %4955 = vmatprep.mubr.bf16.mxu0 0
        %4956 = vmatmul.mubr.bf16.gmra.mrb[0].mxu0 %v2011
        %v4957 = vpop.f32.mrb[0].mxu0
        %v4958 = vadd.f32 0.0, %v4957
        %v4959 = vpop.f32.mrb[0].mxu0
        %v4960 = vpop.f32.mrb[0].mxu0
        %v4961 = vadd.f32 0.0, %v4960
        %v4962 = vpop.f32.mrb[0].mxu0
        %4963 = vmatprep.mubr.bf16.mxu0 0
        %4964 = vmatmul.mubr.bf16.gmra.mrb[0].mxu0 %v2012
        %v4965 = vpop.f32.mrb[0].mxu0
        %v4966 = vadd.f32 0.0, %v4965
        %v4967 = vpop.f32.mrb[0].mxu0
        %v4968 = vpop.f32.mrb[0].mxu0
        %v4969 = vadd.f32 0.0, %v4968
        %v4970 = vpop.f32.mrb[0].mxu0
        %4971 = vmatprep.mubr.bf16.mxu0 0
        %4972 = vmatmul.mubr.bf16.gmra.mrb[0].mxu0 %v2013
        %v4973 = vpop.f32.mrb[0].mxu0
        %v4974 = vadd.f32 0.0, %v4973
        %v4975 = vpop.f32.mrb[0].mxu0
        %v4976 = vpop.f32.mrb[0].mxu0
        %v4977 = vadd.f32 0.0, %v4976
        %v4978 = vpop.f32.mrb[0].mxu0
        %4979 = vdwg.mxu0
        %s4980 = scalar_lea.vmem %s9, 1
        %v4981 = vld [vmem:[%s4980] sm:$0x1]
        %v4982 = vpack.c.bf16 %v4921, %v4918
        %v4983 = vpack.c.bf16 %v4929, %v4926
        %v4984 = vpack.c.bf16 %v4937, %v4934
        %v4985 = vpack.c.bf16 %v4945, %v4942
        %v4986 = vpack.c.bf16 %v4953, %v4950
        %v4987 = vpack.c.bf16 %v4961, %v4958
        %v4988 = vpack.c.bf16 %v4969, %v4966
        %v4989 = vpack.c.bf16 %v4977, %v4974
        %v4991 = vsel %vm1061, %v4982, 0
        %v4994 = vsel %vm1061, %v4983, 0
        %v4997 = vsel %vm1061, %v4984, 0
        %v5000 = vsel %vm1061, %v4985, 0
        %v5003 = vsel %vm1061, %v4986, 0
        %v5006 = vsel %vm1061, %v4987, 0
        %v5009 = vsel %vm1061, %v4988, 0
        %v5012 = vsel %vm1061, %v4989, 0
        %v5015 = vsel %vm1074, %v4981, 0
        %5017 = vmatprep.subr.bf16.mxu0 0
        %5018 = vmatpush1.bf16.msra.mxu0 %v5015
        %5019 = vmatprep.subr.bf16.mxu0 0
        %5020 = vmatpush1.bf16.msra.mxu0 0
        %5021 = vmatprep.subr.bf16.mxu0 0
        %5022 = vmatpush1.bf16.msra.mxu0 0
        %5023 = vmatprep.subr.bf16.mxu0 0
        %5024 = vmatpush1.bf16.msra.mxu0 0
        %5025 = vmatprep.subr.bf16.mxu0 0
        %5026 = vmatpush1.bf16.msra.mxu0 0
        %5027 = vmatprep.subr.bf16.mxu0 0
        %5028 = vmatpush1.bf16.msra.mxu0 0
        %5029 = vmatprep.subr.bf16.mxu0 0
        %5030 = vmatpush1.bf16.msra.mxu0 0
        %5031 = vmatprep.subr.bf16.mxu0 0
        %5032 = vmatpush1.bf16.msra.mxu0 0
        %5033 = vmatprep.subr.bf16.mxu0 0
        %5034 = vmatpush1.bf16.msra.mxu0 0
        %5035 = vmatprep.subr.bf16.mxu0 0
        %5036 = vmatpush1.bf16.msra.mxu0 0
        %5037 = vmatprep.subr.bf16.mxu0 0
        %5038 = vmatpush1.bf16.msra.mxu0 0
        %5039 = vmatprep.subr.bf16.mxu0 0
        %5040 = vmatpush1.bf16.msra.mxu0 0
        %5041 = vmatprep.subr.bf16.mxu0 0
        %5042 = vmatpush1.bf16.msra.mxu0 0
        %5043 = vmatprep.subr.bf16.mxu0 0
        %5044 = vmatpush1.bf16.msra.mxu0 0
        %5045 = vmatprep.subr.bf16.mxu0 0
        %5046 = vmatpush1.bf16.msra.mxu0 0
        %5047 = vmatprep.subr.bf16.mxu0 0
        %5048 = vmatpush1.bf16.msra.mxu0 0
        %5049 = vmatprep.mubr.bf16.mxu0 0
        %5050 = vmatmul.mubr.bf16.gmra.mrb[0].mxu0 %v4991
        %v5051 = vpop.f32.mrb[0].mxu0
        %v5052 = vadd.f32 0.0, %v5051
        %v5053 = vpop.f32.mrb[0].mxu0
        %v5054 = vpop.f32.mrb[0].mxu0
        %v5055 = vadd.f32 0.0, %v5054
        %v5056 = vpop.f32.mrb[0].mxu0
        %5057 = vmatprep.mubr.bf16.mxu0 0
        %5058 = vmatmul.mubr.bf16.gmra.mrb[0].mxu0 %v4994
        %v5059 = vpop.f32.mrb[0].mxu0
        %v5060 = vadd.f32 0.0, %v5059
        %v5061 = vpop.f32.mrb[0].mxu0
        %v5062 = vpop.f32.mrb[0].mxu0
        %v5063 = vadd.f32 0.0, %v5062
        %v5064 = vpop.f32.mrb[0].mxu0
        %5065 = vmatprep.mubr.bf16.mxu0 0
        %5066 = vmatmul.mubr.bf16.gmra.mrb[0].mxu0 %v4997
        %v5067 = vpop.f32.mrb[0].mxu0
        %v5068 = vadd.f32 0.0, %v5067
        %v5069 = vpop.f32.mrb[0].mxu0
        %v5070 = vpop.f32.mrb[0].mxu0
        %v5071 = vadd.f32 0.0, %v5070
        %v5072 = vpop.f32.mrb[0].mxu0
        %5073 = vmatprep.mubr.bf16.mxu0 0
        %5074 = vmatmul.mubr.bf16.gmra.mrb[0].mxu0 %v5000
        %v5075 = vpop.f32.mrb[0].mxu0
        %v5076 = vadd.f32 0.0, %v5075
        %v5077 = vpop.f32.mrb[0].mxu0
        %v5078 = vpop.f32.mrb[0].mxu0
        %v5079 = vadd.f32 0.0, %v5078
        %v5080 = vpop.f32.mrb[0].mxu0
        %5081 = vmatprep.mubr.bf16.mxu0 0
        %5082 = vmatmul.mubr.bf16.gmra.mrb[0].mxu0 %v5003
        %v5083 = vpop.f32.mrb[0].mxu0
        %v5084 = vadd.f32 0.0, %v5083
        %v5085 = vpop.f32.mrb[0].mxu0
        %v5086 = vpop.f32.mrb[0].mxu0
        %v5087 = vadd.f32 0.0, %v5086
        %v5088 = vpop.f32.mrb[0].mxu0
        %5089 = vmatprep.mubr.bf16.mxu0 0
        %5090 = vmatmul.mubr.bf16.gmra.mrb[0].mxu0 %v5006
        %v5091 = vpop.f32.mrb[0].mxu0
        %v5092 = vadd.f32 0.0, %v5091
        %v5093 = vpop.f32.mrb[0].mxu0
        %v5094 = vpop.f32.mrb[0].mxu0
        %v5095 = vadd.f32 0.0, %v5094
        %v5096 = vpop.f32.mrb[0].mxu0
        %5097 = vmatprep.mubr.bf16.mxu0 0
        %5098 = vmatmul.mubr.bf16.gmra.mrb[0].mxu0 %v5009
        %v5099 = vpop.f32.mrb[0].mxu0
        %v5100 = vadd.f32 0.0, %v5099
        %v5101 = vpop.f32.mrb[0].mxu0
        %v5102 = vpop.f32.mrb[0].mxu0
        %v5103 = vadd.f32 0.0, %v5102
        %v5104 = vpop.f32.mrb[0].mxu0
        %5105 = vmatprep.mubr.bf16.mxu0 0
        %5106 = vmatmul.mubr.bf16.gmra.mrb[0].mxu0 %v5012
        %v5107 = vpop.f32.mrb[0].mxu0
        %v5108 = vadd.f32 0.0, %v5107
        %v5109 = vpop.f32.mrb[0].mxu0
        %v5110 = vpop.f32.mrb[0].mxu0
        %v5111 = vadd.f32 0.0, %v5110
        %v5112 = vpop.f32.mrb[0].mxu0
        %5113 = vdwg.mxu0
        %v5115 = vsel %vm1061, %v4875, 0
        %v5118 = vsel %vm1061, %v4876, 0
        %v5121 = vsel %vm1061, %v4877, 0
        %v5124 = vsel %vm1061, %v4878, 0
        %v5127 = vsel %vm1061, %v4879, 0
        %v5130 = vsel %vm1061, %v4880, 0
        %v5133 = vsel %vm1061, %v4881, 0
        %v5136 = vsel %vm1061, %v4882, 0
        %v5139 = vsel %vm1074, %v4874, 0
        %5141 = vmatprep.subr.bf16.mxu0 0
        %5142 = vmatpush1.bf16.msra.mxu0 %v5139
        %5143 = vmatprep.subr.bf16.mxu0 0
        %5144 = vmatpush1.bf16.msra.mxu0 0
        %5145 = vmatprep.subr.bf16.mxu0 0
        %5146 = vmatpush1.bf16.msra.mxu0 0
        %5147 = vmatprep.subr.bf16.mxu0 0
        %5148 = vmatpush1.bf16.msra.mxu0 0
        %5149 = vmatprep.subr.bf16.mxu0 0
        %5150 = vmatpush1.bf16.msra.mxu0 0
        %5151 = vmatprep.subr.bf16.mxu0 0
        %5152 = vmatpush1.bf16.msra.mxu0 0
        %5153 = vmatprep.subr.bf16.mxu0 0
        %5154 = vmatpush1.bf16.msra.mxu0 0
        %5155 = vmatprep.subr.bf16.mxu0 0
        %5156 = vmatpush1.bf16.msra.mxu0 0
        %5157 = vmatprep.subr.bf16.mxu0 0
        %5158 = vmatpush1.bf16.msra.mxu0 0
        %5159 = vmatprep.subr.bf16.mxu0 0
        %5160 = vmatpush1.bf16.msra.mxu0 0
        %5161 = vmatprep.subr.bf16.mxu0 0
        %5162 = vmatpush1.bf16.msra.mxu0 0
        %5163 = vmatprep.subr.bf16.mxu0 0
        %5164 = vmatpush1.bf16.msra.mxu0 0
        %5165 = vmatprep.subr.bf16.mxu0 0
        %5166 = vmatpush1.bf16.msra.mxu0 0
        %5167 = vmatprep.subr.bf16.mxu0 0
        %5168 = vmatpush1.bf16.msra.mxu0 0
        %5169 = vmatprep.subr.bf16.mxu0 0
        %5170 = vmatpush1.bf16.msra.mxu0 0
        %5171 = vmatprep.subr.bf16.mxu0 0
        %5172 = vmatpush1.bf16.msra.mxu0 0
        %5173 = vmatprep.mubr.bf16.mxu0 0
        %5174 = vmatmul.mubr.bf16.gmra.mrb[0].mxu0 %v5115
        %v5175 = vpop.f32.mrb[0].mxu0
        %v5176 = vadd.f32 %v5052, %v5175
        %v5177 = vpop.f32.mrb[0].mxu0
        %v5178 = vpop.f32.mrb[0].mxu0
        %v5179 = vadd.f32 %v5055, %v5178
        %v5180 = vpop.f32.mrb[0].mxu0
        %5181 = vmatprep.mubr.bf16.mxu0 0
        %5182 = vmatmul.mubr.bf16.gmra.mrb[0].mxu0 %v5118
        %v5183 = vpop.f32.mrb[0].mxu0
        %v5184 = vadd.f32 %v5060, %v5183
        %v5185 = vpop.f32.mrb[0].mxu0
        %v5186 = vpop.f32.mrb[0].mxu0
        %v5187 = vadd.f32 %v5063, %v5186
        %v5188 = vpop.f32.mrb[0].mxu0
        %5189 = vmatprep.mubr.bf16.mxu0 0
        %5190 = vmatmul.mubr.bf16.gmra.mrb[0].mxu0 %v5121
        %v5191 = vpop.f32.mrb[0].mxu0
        %v5192 = vadd.f32 %v5068, %v5191
        %v5193 = vpop.f32.mrb[0].mxu0
        %v5194 = vpop.f32.mrb[0].mxu0
        %v5195 = vadd.f32 %v5071, %v5194
        %v5196 = vpop.f32.mrb[0].mxu0
        %5197 = vmatprep.mubr.bf16.mxu0 0
        %5198 = vmatmul.mubr.bf16.gmra.mrb[0].mxu0 %v5124
        %v5199 = vpop.f32.mrb[0].mxu0
        %v5200 = vadd.f32 %v5076, %v5199
        %v5201 = vpop.f32.mrb[0].mxu0
        %v5202 = vpop.f32.mrb[0].mxu0
        %v5203 = vadd.f32 %v5079, %v5202
        %v5204 = vpop.f32.mrb[0].mxu0
        %5205 = vmatprep.mubr.bf16.mxu0 0
        %5206 = vmatmul.mubr.bf16.gmra.mrb[0].mxu0 %v5127
        %v5207 = vpop.f32.mrb[0].mxu0
        %v5208 = vadd.f32 %v5084, %v5207
        %v5209 = vpop.f32.mrb[0].mxu0
        %v5210 = vpop.f32.mrb[0].mxu0
        %v5211 = vadd.f32 %v5087, %v5210
        %v5212 = vpop.f32.mrb[0].mxu0
        %5213 = vmatprep.mubr.bf16.mxu0 0
        %5214 = vmatmul.mubr.bf16.gmra.mrb[0].mxu0 %v5130
        %v5215 = vpop.f32.mrb[0].mxu0
        %v5216 = vadd.f32 %v5092, %v5215
        %v5217 = vpop.f32.mrb[0].mxu0
        %v5218 = vpop.f32.mrb[0].mxu0
        %v5219 = vadd.f32 %v5095, %v5218
        %v5220 = vpop.f32.mrb[0].mxu0
        %5221 = vmatprep.mubr.bf16.mxu0 0
        %5222 = vmatmul.mubr.bf16.gmra.mrb[0].mxu0 %v5133
        %v5223 = vpop.f32.mrb[0].mxu0
        %v5224 = vadd.f32 %v5100, %v5223
        %v5225 = vpop.f32.mrb[0].mxu0
        %v5226 = vpop.f32.mrb[0].mxu0
        %v5227 = vadd.f32 %v5103, %v5226
        %v5228 = vpop.f32.mrb[0].mxu0
        %5229 = vmatprep.mubr.bf16.mxu0 0
        %5230 = vmatmul.mubr.bf16.gmra.mrb[0].mxu0 %v5136
        %v5231 = vpop.f32.mrb[0].mxu0
        %v5232 = vadd.f32 %v5108, %v5231
        %v5233 = vpop.f32.mrb[0].mxu0
        %v5234 = vpop.f32.mrb[0].mxu0
        %v5235 = vadd.f32 %v5111, %v5234
        %v5236 = vpop.f32.mrb[0].mxu0
        %5237 = vdwg.mxu0
        %5238 = vmatprep.subr.bf16.mxu0 0
        %5239 = vmatpush1.bf16.msra.mxu0 %v4769
        %5240 = vmatprep.subr.bf16.mxu0 0
        %5241 = vmatpush1.bf16.msra.mxu0 %v4770
        %5242 = vmatprep.subr.bf16.mxu0 0
        %5243 = vmatpush1.bf16.msra.mxu0 %v4771
        %5244 = vmatprep.subr.bf16.mxu0 0
        %5245 = vmatpush1.bf16.msra.mxu0 %v4772
        %5246 = vmatprep.subr.bf16.mxu0 0
        %5247 = vmatpush1.bf16.msra.mxu0 %v4773
        %5248 = vmatprep.subr.bf16.mxu0 0
        %5249 = vmatpush1.bf16.msra.mxu0 %v4774
        %5250 = vmatprep.subr.bf16.mxu0 0
        %5251 = vmatpush1.bf16.msra.mxu0 %v4775
        %5252 = vmatprep.subr.bf16.mxu0 0
        %5253 = vmatpush1.bf16.msra.mxu0 %v4776
        %5254 = vmatprep.subr.bf16.mxu0 0
        %5255 = vmatpush1.bf16.msra.mxu0 0
        %5256 = vmatprep.subr.bf16.mxu0 0
        %5257 = vmatpush1.bf16.msra.mxu0 0
        %5258 = vmatprep.subr.bf16.mxu0 0
        %5259 = vmatpush1.bf16.msra.mxu0 0
        %5260 = vmatprep.subr.bf16.mxu0 0
        %5261 = vmatpush1.bf16.msra.mxu0 0
        %5262 = vmatprep.subr.bf16.mxu0 0
        %5263 = vmatpush1.bf16.msra.mxu0 0
        %5264 = vmatprep.subr.bf16.mxu0 0
        %5265 = vmatpush1.bf16.msra.mxu0 0
        %5266 = vmatprep.subr.bf16.mxu0 0
        %5267 = vmatpush1.bf16.msra.mxu0 0
        %5268 = vmatprep.subr.bf16.mxu0 0
        %5269 = vmatpush1.bf16.msra.mxu0 0
        %5270 = vmatprep.mubr.bf16.mxu0 0
        %5271 = vmatmul.mubr.bf16.gmra.mrb[0].mxu0 %v2426
        %v5272 = vpop.f32.mrb[0].mxu0
        %v5273 = vadd.f32 0.0, %v5272
        %v5274 = vpop.f32.mrb[0].mxu0
        %v5275 = vpop.f32.mrb[0].mxu0
        %v5276 = vadd.f32 0.0, %v5275
        %v5277 = vpop.f32.mrb[0].mxu0
        %5278 = vmatprep.mubr.bf16.mxu0 0
        %5279 = vmatmul.mubr.bf16.gmra.mrb[0].mxu0 %v2427
        %v5280 = vpop.f32.mrb[0].mxu0
        %v5281 = vadd.f32 0.0, %v5280
        %v5282 = vpop.f32.mrb[0].mxu0
        %v5283 = vpop.f32.mrb[0].mxu0
        %v5284 = vadd.f32 0.0, %v5283
        %v5285 = vpop.f32.mrb[0].mxu0
        %5286 = vmatprep.mubr.bf16.mxu0 0
        %5287 = vmatmul.mubr.bf16.gmra.mrb[0].mxu0 %v2428
        %v5288 = vpop.f32.mrb[0].mxu0
        %v5289 = vadd.f32 0.0, %v5288
        %v5290 = vpop.f32.mrb[0].mxu0
        %v5291 = vpop.f32.mrb[0].mxu0
        %v5292 = vadd.f32 0.0, %v5291
        %v5293 = vpop.f32.mrb[0].mxu0
        %5294 = vmatprep.mubr.bf16.mxu0 0
        %5295 = vmatmul.mubr.bf16.gmra.mrb[0].mxu0 %v2429
        %v5296 = vpop.f32.mrb[0].mxu0
        %v5297 = vadd.f32 0.0, %v5296
        %v5298 = vpop.f32.mrb[0].mxu0
        %v5299 = vpop.f32.mrb[0].mxu0
        %v5300 = vadd.f32 0.0, %v5299
        %v5301 = vpop.f32.mrb[0].mxu0
        %5302 = vmatprep.mubr.bf16.mxu0 0
        %5303 = vmatmul.mubr.bf16.gmra.mrb[0].mxu0 %v2430
        %v5304 = vpop.f32.mrb[0].mxu0
        %v5305 = vadd.f32 0.0, %v5304
        %v5306 = vpop.f32.mrb[0].mxu0
        %v5307 = vpop.f32.mrb[0].mxu0
        %v5308 = vadd.f32 0.0, %v5307
        %v5309 = vpop.f32.mrb[0].mxu0
        %5310 = vmatprep.mubr.bf16.mxu0 0
        %5311 = vmatmul.mubr.bf16.gmra.mrb[0].mxu0 %v2431
        %v5312 = vpop.f32.mrb[0].mxu0
        %v5313 = vadd.f32 0.0, %v5312
        %v5314 = vpop.f32.mrb[0].mxu0
        %v5315 = vpop.f32.mrb[0].mxu0
        %v5316 = vadd.f32 0.0, %v5315
        %v5317 = vpop.f32.mrb[0].mxu0
        %5318 = vmatprep.mubr.bf16.mxu0 0
        %5319 = vmatmul.mubr.bf16.gmra.mrb[0].mxu0 %v2432
        %v5320 = vpop.f32.mrb[0].mxu0
        %v5321 = vadd.f32 0.0, %v5320
        %v5322 = vpop.f32.mrb[0].mxu0
        %v5323 = vpop.f32.mrb[0].mxu0
        %v5324 = vadd.f32 0.0, %v5323
        %v5325 = vpop.f32.mrb[0].mxu0
        %5326 = vmatprep.mubr.bf16.mxu0 0
        %5327 = vmatmul.mubr.bf16.gmra.mrb[0].mxu0 %v2433
        %v5328 = vpop.f32.mrb[0].mxu0
        %v5329 = vadd.f32 0.0, %v5328
        %v5330 = vpop.f32.mrb[0].mxu0
        %v5331 = vpop.f32.mrb[0].mxu0
        %v5332 = vadd.f32 0.0, %v5331
        %v5333 = vpop.f32.mrb[0].mxu0
        %5334 = vdwg.mxu0
        %s5335 = scalar_lea.vmem %s9, 2
        %v5336 = vld [vmem:[%s5335] sm:$0x1]
        %v5337 = vpack.c.bf16 %v5276, %v5273
        %v5338 = vpack.c.bf16 %v5284, %v5281
        %v5339 = vpack.c.bf16 %v5292, %v5289
        %v5340 = vpack.c.bf16 %v5300, %v5297
        %v5341 = vpack.c.bf16 %v5308, %v5305
        %v5342 = vpack.c.bf16 %v5316, %v5313
        %v5343 = vpack.c.bf16 %v5324, %v5321
        %v5344 = vpack.c.bf16 %v5332, %v5329
        %v5346 = vsel %vm1061, %v5337, 0
        %v5349 = vsel %vm1061, %v5338, 0
        %v5352 = vsel %vm1061, %v5339, 0
        %v5355 = vsel %vm1061, %v5340, 0
        %v5358 = vsel %vm1061, %v5341, 0
        %v5361 = vsel %vm1061, %v5342, 0
        %v5364 = vsel %vm1061, %v5343, 0
        %v5367 = vsel %vm1061, %v5344, 0
        %v5370 = vsel %vm1074, %v5336, 0
        %5372 = vmatprep.subr.bf16.mxu0 0
        %5373 = vmatpush1.bf16.msra.mxu0 %v5370
        %5374 = vmatprep.subr.bf16.mxu0 0
        %5375 = vmatpush1.bf16.msra.mxu0 0
        %5376 = vmatprep.subr.bf16.mxu0 0
        %5377 = vmatpush1.bf16.msra.mxu0 0
        %5378 = vmatprep.subr.bf16.mxu0 0
        %5379 = vmatpush1.bf16.msra.mxu0 0
        %5380 = vmatprep.subr.bf16.mxu0 0
        %5381 = vmatpush1.bf16.msra.mxu0 0
        %5382 = vmatprep.subr.bf16.mxu0 0
        %5383 = vmatpush1.bf16.msra.mxu0 0
        %5384 = vmatprep.subr.bf16.mxu0 0
        %5385 = vmatpush1.bf16.msra.mxu0 0
        %5386 = vmatprep.subr.bf16.mxu0 0
        %5387 = vmatpush1.bf16.msra.mxu0 0
        %5388 = vmatprep.subr.bf16.mxu0 0
        %5389 = vmatpush1.bf16.msra.mxu0 0
        %5390 = vmatprep.subr.bf16.mxu0 0
        %5391 = vmatpush1.bf16.msra.mxu0 0
        %5392 = vmatprep.subr.bf16.mxu0 0
        %5393 = vmatpush1.bf16.msra.mxu0 0
        %5394 = vmatprep.subr.bf16.mxu0 0
        %5395 = vmatpush1.bf16.msra.mxu0 0
        %5396 = vmatprep.subr.bf16.mxu0 0
        %5397 = vmatpush1.bf16.msra.mxu0 0
        %5398 = vmatprep.subr.bf16.mxu0 0
        %5399 = vmatpush1.bf16.msra.mxu0 0
        %5400 = vmatprep.subr.bf16.mxu0 0
        %5401 = vmatpush1.bf16.msra.mxu0 0
        %5402 = vmatprep.subr.bf16.mxu0 0
        %5403 = vmatpush1.bf16.msra.mxu0 0
        %5404 = vmatprep.mubr.bf16.mxu0 0
        %5405 = vmatmul.mubr.bf16.gmra.mrb[0].mxu0 %v5346
        %v5406 = vpop.f32.mrb[0].mxu0
        %v5407 = vadd.f32 0.0, %v5406
        %v5408 = vpop.f32.mrb[0].mxu0
        %v5409 = vpop.f32.mrb[0].mxu0
        %v5410 = vadd.f32 0.0, %v5409
        %v5411 = vpop.f32.mrb[0].mxu0
        %5412 = vmatprep.mubr.bf16.mxu0 0
        %5413 = vmatmul.mubr.bf16.gmra.mrb[0].mxu0 %v5349
        %v5414 = vpop.f32.mrb[0].mxu0
        %v5415 = vadd.f32 0.0, %v5414
        %v5416 = vpop.f32.mrb[0].mxu0
        %v5417 = vpop.f32.mrb[0].mxu0
        %v5418 = vadd.f32 0.0, %v5417
        %v5419 = vpop.f32.mrb[0].mxu0
        %5420 = vmatprep.mubr.bf16.mxu0 0
        %5421 = vmatmul.mubr.bf16.gmra.mrb[0].mxu0 %v5352
        %v5422 = vpop.f32.mrb[0].mxu0
        %v5423 = vadd.f32 0.0, %v5422
        %v5424 = vpop.f32.mrb[0].mxu0
        %v5425 = vpop.f32.mrb[0].mxu0
        %v5426 = vadd.f32 0.0, %v5425
        %v5427 = vpop.f32.mrb[0].mxu0
        %5428 = vmatprep.mubr.bf16.mxu0 0
        %5429 = vmatmul.mubr.bf16.gmra.mrb[0].mxu0 %v5355
        %v5430 = vpop.f32.mrb[0].mxu0
        %v5431 = vadd.f32 0.0, %v5430
        %v5432 = vpop.f32.mrb[0].mxu0
        %v5433 = vpop.f32.mrb[0].mxu0
        %v5434 = vadd.f32 0.0, %v5433
        %v5435 = vpop.f32.mrb[0].mxu0
        %5436 = vmatprep.mubr.bf16.mxu0 0
        %5437 = vmatmul.mubr.bf16.gmra.mrb[0].mxu0 %v5358
        %v5438 = vpop.f32.mrb[0].mxu0
        %v5439 = vadd.f32 0.0, %v5438
        %v5440 = vpop.f32.mrb[0].mxu0
        %v5441 = vpop.f32.mrb[0].mxu0
        %v5442 = vadd.f32 0.0, %v5441
        %v5443 = vpop.f32.mrb[0].mxu0
        %5444 = vmatprep.mubr.bf16.mxu0 0
        %5445 = vmatmul.mubr.bf16.gmra.mrb[0].mxu0 %v5361
        %v5446 = vpop.f32.mrb[0].mxu0
        %v5447 = vadd.f32 0.0, %v5446
        %v5448 = vpop.f32.mrb[0].mxu0
        %v5449 = vpop.f32.mrb[0].mxu0
        %v5450 = vadd.f32 0.0, %v5449
        %v5451 = vpop.f32.mrb[0].mxu0
        %5452 = vmatprep.mubr.bf16.mxu0 0
        %5453 = vmatmul.mubr.bf16.gmra.mrb[0].mxu0 %v5364
        %v5454 = vpop.f32.mrb[0].mxu0
        %v5455 = vadd.f32 0.0, %v5454
        %v5456 = vpop.f32.mrb[0].mxu0
        %v5457 = vpop.f32.mrb[0].mxu0
        %v5458 = vadd.f32 0.0, %v5457
        %v5459 = vpop.f32.mrb[0].mxu0
        %5460 = vmatprep.mubr.bf16.mxu0 0
        %5461 = vmatmul.mubr.bf16.gmra.mrb[0].mxu0 %v5367
        %v5462 = vpop.f32.mrb[0].mxu0
        %v5463 = vadd.f32 0.0, %v5462
        %v5464 = vpop.f32.mrb[0].mxu0
        %v5465 = vpop.f32.mrb[0].mxu0
        %v5466 = vadd.f32 0.0, %v5465
        %v5467 = vpop.f32.mrb[0].mxu0
        %5468 = vdwg.mxu0
        %v5469 = vadd.f32 %v5176, %v5407
        %v5470 = vadd.f32 %v5179, %v5410
        %v5471 = vadd.f32 %v5184, %v5415
        %v5472 = vadd.f32 %v5187, %v5418
        %v5473 = vadd.f32 %v5192, %v5423
        %v5474 = vadd.f32 %v5195, %v5426
        %v5475 = vadd.f32 %v5200, %v5431
        %v5476 = vadd.f32 %v5203, %v5434
        %v5477 = vadd.f32 %v5208, %v5439
        %v5478 = vadd.f32 %v5211, %v5442
        %v5479 = vadd.f32 %v5216, %v5447
        %v5480 = vadd.f32 %v5219, %v5450
        %v5481 = vadd.f32 %v5224, %v5455
        %v5482 = vadd.f32 %v5227, %v5458
        %v5483 = vadd.f32 %v5232, %v5463
        %v5484 = vadd.f32 %v5235, %v5466
        %5485 = vmatprep.subr.bf16.mxu0 0
        %5486 = vmatpush1.bf16.msra.mxu0 %v4769
        %5487 = vmatprep.subr.bf16.mxu0 0
        %5488 = vmatpush1.bf16.msra.mxu0 %v4770
        %5489 = vmatprep.subr.bf16.mxu0 0
        %5490 = vmatpush1.bf16.msra.mxu0 %v4771
        %5491 = vmatprep.subr.bf16.mxu0 0
        %5492 = vmatpush1.bf16.msra.mxu0 %v4772
        %5493 = vmatprep.subr.bf16.mxu0 0
        %5494 = vmatpush1.bf16.msra.mxu0 %v4773
        %5495 = vmatprep.subr.bf16.mxu0 0
        %5496 = vmatpush1.bf16.msra.mxu0 %v4774
        %5497 = vmatprep.subr.bf16.mxu0 0
        %5498 = vmatpush1.bf16.msra.mxu0 %v4775
        %5499 = vmatprep.subr.bf16.mxu0 0
        %5500 = vmatpush1.bf16.msra.mxu0 %v4776
        %5501 = vmatprep.subr.bf16.mxu0 0
        %5502 = vmatpush1.bf16.msra.mxu0 0
        %5503 = vmatprep.subr.bf16.mxu0 0
        %5504 = vmatpush1.bf16.msra.mxu0 0
        %5505 = vmatprep.subr.bf16.mxu0 0
        %5506 = vmatpush1.bf16.msra.mxu0 0
        %5507 = vmatprep.subr.bf16.mxu0 0
        %5508 = vmatpush1.bf16.msra.mxu0 0
        %5509 = vmatprep.subr.bf16.mxu0 0
        %5510 = vmatpush1.bf16.msra.mxu0 0
        %5511 = vmatprep.subr.bf16.mxu0 0
        %5512 = vmatpush1.bf16.msra.mxu0 0
        %5513 = vmatprep.subr.bf16.mxu0 0
        %5514 = vmatpush1.bf16.msra.mxu0 0
        %5515 = vmatprep.subr.bf16.mxu0 0
        %5516 = vmatpush1.bf16.msra.mxu0 0
        %5517 = vmatprep.mubr.bf16.mxu0 0
        %5518 = vmatmul.mubr.bf16.gmra.mrb[0].mxu0 %v2738
        %v5519 = vpop.f32.mrb[0].mxu0
        %v5520 = vadd.f32 0.0, %v5519
        %v5521 = vpop.f32.mrb[0].mxu0
        %v5522 = vpop.f32.mrb[0].mxu0
        %v5523 = vadd.f32 0.0, %v5522
        %v5524 = vpop.f32.mrb[0].mxu0
        %5525 = vmatprep.mubr.bf16.mxu0 0
        %5526 = vmatmul.mubr.bf16.gmra.mrb[0].mxu0 %v2739
        %v5527 = vpop.f32.mrb[0].mxu0
        %v5528 = vadd.f32 0.0, %v5527
        %v5529 = vpop.f32.mrb[0].mxu0
        %v5530 = vpop.f32.mrb[0].mxu0
        %v5531 = vadd.f32 0.0, %v5530
        %v5532 = vpop.f32.mrb[0].mxu0
        %5533 = vmatprep.mubr.bf16.mxu0 0
        %5534 = vmatmul.mubr.bf16.gmra.mrb[0].mxu0 %v2740
        %v5535 = vpop.f32.mrb[0].mxu0
        %v5536 = vadd.f32 0.0, %v5535
        %v5537 = vpop.f32.mrb[0].mxu0
        %v5538 = vpop.f32.mrb[0].mxu0
        %v5539 = vadd.f32 0.0, %v5538
        %v5540 = vpop.f32.mrb[0].mxu0
        %5541 = vmatprep.mubr.bf16.mxu0 0
        %5542 = vmatmul.mubr.bf16.gmra.mrb[0].mxu0 %v2741
        %v5543 = vpop.f32.mrb[0].mxu0
        %v5544 = vadd.f32 0.0, %v5543
        %v5545 = vpop.f32.mrb[0].mxu0
        %v5546 = vpop.f32.mrb[0].mxu0
        %v5547 = vadd.f32 0.0, %v5546
        %v5548 = vpop.f32.mrb[0].mxu0
        %5549 = vmatprep.mubr.bf16.mxu0 0
        %5550 = vmatmul.mubr.bf16.gmra.mrb[0].mxu0 %v2742
        %v5551 = vpop.f32.mrb[0].mxu0
        %v5552 = vadd.f32 0.0, %v5551
        %v5553 = vpop.f32.mrb[0].mxu0
        %v5554 = vpop.f32.mrb[0].mxu0
        %v5555 = vadd.f32 0.0, %v5554
        %v5556 = vpop.f32.mrb[0].mxu0
        %5557 = vmatprep.mubr.bf16.mxu0 0
        %5558 = vmatmul.mubr.bf16.gmra.mrb[0].mxu0 %v2743
        %v5559 = vpop.f32.mrb[0].mxu0
        %v5560 = vadd.f32 0.0, %v5559
        %v5561 = vpop.f32.mrb[0].mxu0
        %v5562 = vpop.f32.mrb[0].mxu0
        %v5563 = vadd.f32 0.0, %v5562
        %v5564 = vpop.f32.mrb[0].mxu0
        %5565 = vmatprep.mubr.bf16.mxu0 0
        %5566 = vmatmul.mubr.bf16.gmra.mrb[0].mxu0 %v2744
        %v5567 = vpop.f32.mrb[0].mxu0
        %v5568 = vadd.f32 0.0, %v5567
        %v5569 = vpop.f32.mrb[0].mxu0
        %v5570 = vpop.f32.mrb[0].mxu0
        %v5571 = vadd.f32 0.0, %v5570
        %v5572 = vpop.f32.mrb[0].mxu0
        %5573 = vmatprep.mubr.bf16.mxu0 0
        %5574 = vmatmul.mubr.bf16.gmra.mrb[0].mxu0 %v2745
        %v5575 = vpop.f32.mrb[0].mxu0
        %v5576 = vadd.f32 0.0, %v5575
        %v5577 = vpop.f32.mrb[0].mxu0
        %v5578 = vpop.f32.mrb[0].mxu0
        %v5579 = vadd.f32 0.0, %v5578
        %v5580 = vpop.f32.mrb[0].mxu0
        %5581 = vdwg.mxu0
        %s5582 = scalar_lea.vmem %s9, 3
        %v5583 = vld [vmem:[%s5582] sm:$0x1]
        %v5584 = vpack.c.bf16 %v5523, %v5520
        %v5585 = vpack.c.bf16 %v5531, %v5528
        %v5586 = vpack.c.bf16 %v5539, %v5536
        %v5587 = vpack.c.bf16 %v5547, %v5544
        %v5588 = vpack.c.bf16 %v5555, %v5552
        %v5589 = vpack.c.bf16 %v5563, %v5560
        %v5590 = vpack.c.bf16 %v5571, %v5568
        %v5591 = vpack.c.bf16 %v5579, %v5576
        %v5593 = vsel %vm1061, %v5584, 0
        %v5596 = vsel %vm1061, %v5585, 0
        %v5599 = vsel %vm1061, %v5586, 0
        %v5602 = vsel %vm1061, %v5587, 0
        %v5605 = vsel %vm1061, %v5588, 0
        %v5608 = vsel %vm1061, %v5589, 0
        %v5611 = vsel %vm1061, %v5590, 0
        %v5614 = vsel %vm1061, %v5591, 0
        %v5617 = vsel %vm1074, %v5583, 0
        %5619 = vmatprep.subr.bf16.mxu0 0
        %5620 = vmatpush1.bf16.msra.mxu0 %v5617
        %5621 = vmatprep.subr.bf16.mxu0 0
        %5622 = vmatpush1.bf16.msra.mxu0 0
        %5623 = vmatprep.subr.bf16.mxu0 0
        %5624 = vmatpush1.bf16.msra.mxu0 0
        %5625 = vmatprep.subr.bf16.mxu0 0
        %5626 = vmatpush1.bf16.msra.mxu0 0
        %5627 = vmatprep.subr.bf16.mxu0 0
        %5628 = vmatpush1.bf16.msra.mxu0 0
        %5629 = vmatprep.subr.bf16.mxu0 0
        %5630 = vmatpush1.bf16.msra.mxu0 0
        %5631 = vmatprep.subr.bf16.mxu0 0
        %5632 = vmatpush1.bf16.msra.mxu0 0
        %5633 = vmatprep.subr.bf16.mxu0 0
        %5634 = vmatpush1.bf16.msra.mxu0 0
        %5635 = vmatprep.subr.bf16.mxu0 0
        %5636 = vmatpush1.bf16.msra.mxu0 0
        %5637 = vmatprep.subr.bf16.mxu0 0
        %5638 = vmatpush1.bf16.msra.mxu0 0
        %5639 = vmatprep.subr.bf16.mxu0 0
        %5640 = vmatpush1.bf16.msra.mxu0 0
        %5641 = vmatprep.subr.bf16.mxu0 0
        %5642 = vmatpush1.bf16.msra.mxu0 0
        %5643 = vmatprep.subr.bf16.mxu0 0
        %5644 = vmatpush1.bf16.msra.mxu0 0
        %5645 = vmatprep.subr.bf16.mxu0 0
        %5646 = vmatpush1.bf16.msra.mxu0 0
        %5647 = vmatprep.subr.bf16.mxu0 0
        %5648 = vmatpush1.bf16.msra.mxu0 0
        %5649 = vmatprep.subr.bf16.mxu0 0
        %5650 = vmatpush1.bf16.msra.mxu0 0
        %5651 = vmatprep.mubr.bf16.mxu0 0
        %5652 = vmatmul.mubr.bf16.gmra.mrb[0].mxu0 %v5593
        %v5653 = vpop.f32.mrb[0].mxu0
        %v5654 = vadd.f32 0.0, %v5653
        %v5655 = vpop.f32.mrb[0].mxu0
        %v5656 = vpop.f32.mrb[0].mxu0
        %v5657 = vadd.f32 0.0, %v5656
        %v5658 = vpop.f32.mrb[0].mxu0
        %5659 = vmatprep.mubr.bf16.mxu0 0
        %5660 = vmatmul.mubr.bf16.gmra.mrb[0].mxu0 %v5596
        %v5661 = vpop.f32.mrb[0].mxu0
        %v5662 = vadd.f32 0.0, %v5661
        %v5663 = vpop.f32.mrb[0].mxu0
        %v5664 = vpop.f32.mrb[0].mxu0
        %v5665 = vadd.f32 0.0, %v5664
        %v5666 = vpop.f32.mrb[0].mxu0
        %5667 = vmatprep.mubr.bf16.mxu0 0
        %5668 = vmatmul.mubr.bf16.gmra.mrb[0].mxu0 %v5599
        %v5669 = vpop.f32.mrb[0].mxu0
        %v5670 = vadd.f32 0.0, %v5669
        %v5671 = vpop.f32.mrb[0].mxu0
        %v5672 = vpop.f32.mrb[0].mxu0
        %v5673 = vadd.f32 0.0, %v5672
        %v5674 = vpop.f32.mrb[0].mxu0
        %5675 = vmatprep.mubr.bf16.mxu0 0
        %5676 = vmatmul.mubr.bf16.gmra.mrb[0].mxu0 %v5602
        %v5677 = vpop.f32.mrb[0].mxu0
        %v5678 = vadd.f32 0.0, %v5677
        %v5679 = vpop.f32.mrb[0].mxu0
        %v5680 = vpop.f32.mrb[0].mxu0
        %v5681 = vadd.f32 0.0, %v5680
        %v5682 = vpop.f32.mrb[0].mxu0
        %5683 = vmatprep.mubr.bf16.mxu0 0
        %5684 = vmatmul.mubr.bf16.gmra.mrb[0].mxu0 %v5605
        %v5685 = vpop.f32.mrb[0].mxu0
        %v5686 = vadd.f32 0.0, %v5685
        %v5687 = vpop.f32.mrb[0].mxu0
        %v5688 = vpop.f32.mrb[0].mxu0
        %v5689 = vadd.f32 0.0, %v5688
        %v5690 = vpop.f32.mrb[0].mxu0
        %5691 = vmatprep.mubr.bf16.mxu0 0
        %5692 = vmatmul.mubr.bf16.gmra.mrb[0].mxu0 %v5608
        %v5693 = vpop.f32.mrb[0].mxu0
        %v5694 = vadd.f32 0.0, %v5693
        %v5695 = vpop.f32.mrb[0].mxu0
        %v5696 = vpop.f32.mrb[0].mxu0
        %v5697 = vadd.f32 0.0, %v5696
        %v5698 = vpop.f32.mrb[0].mxu0
        %5699 = vmatprep.mubr.bf16.mxu0 0
        %5700 = vmatmul.mubr.bf16.gmra.mrb[0].mxu0 %v5611
        %v5701 = vpop.f32.mrb[0].mxu0
        %v5702 = vadd.f32 0.0, %v5701
        %v5703 = vpop.f32.mrb[0].mxu0
        %v5704 = vpop.f32.mrb[0].mxu0
        %v5705 = vadd.f32 0.0, %v5704
        %v5706 = vpop.f32.mrb[0].mxu0
        %5707 = vmatprep.mubr.bf16.mxu0 0
        %5708 = vmatmul.mubr.bf16.gmra.mrb[0].mxu0 %v5614
        %v5709 = vpop.f32.mrb[0].mxu0
        %v5710 = vadd.f32 0.0, %v5709
        %v5711 = vpop.f32.mrb[0].mxu0
        %v5712 = vpop.f32.mrb[0].mxu0
        %v5713 = vadd.f32 0.0, %v5712
        %v5714 = vpop.f32.mrb[0].mxu0
        %5715 = vdwg.mxu0
        %v5716 = vadd.f32 %v5469, %v5654
        %v5717 = vadd.f32 %v5470, %v5657
        %v5718 = vadd.f32 %v5471, %v5662
        %v5719 = vadd.f32 %v5472, %v5665
        %v5720 = vadd.f32 %v5473, %v5670
        %v5721 = vadd.f32 %v5474, %v5673
        %v5722 = vadd.f32 %v5475, %v5678
        %v5723 = vadd.f32 %v5476, %v5681
        %v5724 = vadd.f32 %v5477, %v5686
        %v5725 = vadd.f32 %v5478, %v5689
        %v5726 = vadd.f32 %v5479, %v5694
        %v5727 = vadd.f32 %v5480, %v5697
        %v5728 = vadd.f32 %v5481, %v5702
        %v5729 = vadd.f32 %v5482, %v5705
        %v5730 = vadd.f32 %v5483, %v5710
        %v5731 = vadd.f32 %v5484, %v5713
        %5732 = vmatprep.subr.bf16.mxu0 0
        %5733 = vmatpush1.bf16.msra.mxu0 %v4769
        %5734 = vmatprep.subr.bf16.mxu0 0
        %5735 = vmatpush1.bf16.msra.mxu0 %v4770
        %5736 = vmatprep.subr.bf16.mxu0 0
        %5737 = vmatpush1.bf16.msra.mxu0 %v4771
        %5738 = vmatprep.subr.bf16.mxu0 0
        %5739 = vmatpush1.bf16.msra.mxu0 %v4772
        %5740 = vmatprep.subr.bf16.mxu0 0
        %5741 = vmatpush1.bf16.msra.mxu0 %v4773
        %5742 = vmatprep.subr.bf16.mxu0 0
        %5743 = vmatpush1.bf16.msra.mxu0 %v4774
        %5744 = vmatprep.subr.bf16.mxu0 0
        %5745 = vmatpush1.bf16.msra.mxu0 %v4775
        %5746 = vmatprep.subr.bf16.mxu0 0
        %5747 = vmatpush1.bf16.msra.mxu0 %v4776
        %5748 = vmatprep.subr.bf16.mxu0 0
        %5749 = vmatpush1.bf16.msra.mxu0 0
        %5750 = vmatprep.subr.bf16.mxu0 0
        %5751 = vmatpush1.bf16.msra.mxu0 0
        %5752 = vmatprep.subr.bf16.mxu0 0
        %5753 = vmatpush1.bf16.msra.mxu0 0
        %5754 = vmatprep.subr.bf16.mxu0 0
        %5755 = vmatpush1.bf16.msra.mxu0 0
        %5756 = vmatprep.subr.bf16.mxu0 0
        %5757 = vmatpush1.bf16.msra.mxu0 0
        %5758 = vmatprep.subr.bf16.mxu0 0
        %5759 = vmatpush1.bf16.msra.mxu0 0
        %5760 = vmatprep.subr.bf16.mxu0 0
        %5761 = vmatpush1.bf16.msra.mxu0 0
        %5762 = vmatprep.subr.bf16.mxu0 0
        %5763 = vmatpush1.bf16.msra.mxu0 0
        %5764 = vmatprep.mubr.bf16.mxu0 0
        %5765 = vmatmul.mubr.bf16.gmra.mrb[0].mxu0 %v3050
        %v5766 = vpop.f32.mrb[0].mxu0
        %v5767 = vadd.f32 0.0, %v5766
        %v5768 = vpop.f32.mrb[0].mxu0
        %v5769 = vpop.f32.mrb[0].mxu0
        %v5770 = vadd.f32 0.0, %v5769
        %v5771 = vpop.f32.mrb[0].mxu0
        %5772 = vmatprep.mubr.bf16.mxu0 0
        %5773 = vmatmul.mubr.bf16.gmra.mrb[0].mxu0 %v3051
        %v5774 = vpop.f32.mrb[0].mxu0
        %v5775 = vadd.f32 0.0, %v5774
        %v5776 = vpop.f32.mrb[0].mxu0
        %v5777 = vpop.f32.mrb[0].mxu0
        %v5778 = vadd.f32 0.0, %v5777
        %v5779 = vpop.f32.mrb[0].mxu0
        %5780 = vmatprep.mubr.bf16.mxu0 0
        %5781 = vmatmul.mubr.bf16.gmra.mrb[0].mxu0 %v3052
        %v5782 = vpop.f32.mrb[0].mxu0
        %v5783 = vadd.f32 0.0, %v5782
        %v5784 = vpop.f32.mrb[0].mxu0
        %v5785 = vpop.f32.mrb[0].mxu0
        %v5786 = vadd.f32 0.0, %v5785
        %v5787 = vpop.f32.mrb[0].mxu0
        %5788 = vmatprep.mubr.bf16.mxu0 0
        %5789 = vmatmul.mubr.bf16.gmra.mrb[0].mxu0 %v3053
        %v5790 = vpop.f32.mrb[0].mxu0
        %v5791 = vadd.f32 0.0, %v5790
        %v5792 = vpop.f32.mrb[0].mxu0
        %v5793 = vpop.f32.mrb[0].mxu0
        %v5794 = vadd.f32 0.0, %v5793
        %v5795 = vpop.f32.mrb[0].mxu0
        %5796 = vmatprep.mubr.bf16.mxu0 0
        %5797 = vmatmul.mubr.bf16.gmra.mrb[0].mxu0 %v3054
        %v5798 = vpop.f32.mrb[0].mxu0
        %v5799 = vadd.f32 0.0, %v5798
        %v5800 = vpop.f32.mrb[0].mxu0
        %v5801 = vpop.f32.mrb[0].mxu0
        %v5802 = vadd.f32 0.0, %v5801
        %v5803 = vpop.f32.mrb[0].mxu0
        %5804 = vmatprep.mubr.bf16.mxu0 0
        %5805 = vmatmul.mubr.bf16.gmra.mrb[0].mxu0 %v3055
        %v5806 = vpop.f32.mrb[0].mxu0
        %v5807 = vadd.f32 0.0, %v5806
        %v5808 = vpop.f32.mrb[0].mxu0
        %v5809 = vpop.f32.mrb[0].mxu0
        %v5810 = vadd.f32 0.0, %v5809
        %v5811 = vpop.f32.mrb[0].mxu0
        %5812 = vmatprep.mubr.bf16.mxu0 0
        %5813 = vmatmul.mubr.bf16.gmra.mrb[0].mxu0 %v3056
        %v5814 = vpop.f32.mrb[0].mxu0
        %v5815 = vadd.f32 0.0, %v5814
        %v5816 = vpop.f32.mrb[0].mxu0
        %v5817 = vpop.f32.mrb[0].mxu0
        %v5818 = vadd.f32 0.0, %v5817
        %v5819 = vpop.f32.mrb[0].mxu0
        %5820 = vmatprep.mubr.bf16.mxu0 0
        %5821 = vmatmul.mubr.bf16.gmra.mrb[0].mxu0 %v3057
        %v5822 = vpop.f32.mrb[0].mxu0
        %v5823 = vadd.f32 0.0, %v5822
        %v5824 = vpop.f32.mrb[0].mxu0
        %v5825 = vpop.f32.mrb[0].mxu0
        %v5826 = vadd.f32 0.0, %v5825
        %v5827 = vpop.f32.mrb[0].mxu0
        %5828 = vdwg.mxu0
        %s5829 = scalar_lea.vmem %s9, 4
        %v5830 = vld [vmem:[%s5829] sm:$0x1]
        %v5831 = vpack.c.bf16 %v5770, %v5767
        %v5832 = vpack.c.bf16 %v5778, %v5775
        %v5833 = vpack.c.bf16 %v5786, %v5783
        %v5834 = vpack.c.bf16 %v5794, %v5791
        %v5835 = vpack.c.bf16 %v5802, %v5799
        %v5836 = vpack.c.bf16 %v5810, %v5807
        %v5837 = vpack.c.bf16 %v5818, %v5815
        %v5838 = vpack.c.bf16 %v5826, %v5823
        %v5840 = vsel %vm1061, %v5831, 0
        %v5843 = vsel %vm1061, %v5832, 0
        %v5846 = vsel %vm1061, %v5833, 0
        %v5849 = vsel %vm1061, %v5834, 0
        %v5852 = vsel %vm1061, %v5835, 0
        %v5855 = vsel %vm1061, %v5836, 0
        %v5858 = vsel %vm1061, %v5837, 0
        %v5861 = vsel %vm1061, %v5838, 0
        %v5864 = vsel %vm1074, %v5830, 0
        %5866 = vmatprep.subr.bf16.mxu0 0
        %5867 = vmatpush1.bf16.msra.mxu0 %v5864
        %5868 = vmatprep.subr.bf16.mxu0 0
        %5869 = vmatpush1.bf16.msra.mxu0 0
        %5870 = vmatprep.subr.bf16.mxu0 0
        %5871 = vmatpush1.bf16.msra.mxu0 0
        %5872 = vmatprep.subr.bf16.mxu0 0
        %5873 = vmatpush1.bf16.msra.mxu0 0
        %5874 = vmatprep.subr.bf16.mxu0 0
        %5875 = vmatpush1.bf16.msra.mxu0 0
        %5876 = vmatprep.subr.bf16.mxu0 0
        %5877 = vmatpush1.bf16.msra.mxu0 0
        %5878 = vmatprep.subr.bf16.mxu0 0
        %5879 = vmatpush1.bf16.msra.mxu0 0
        %5880 = vmatprep.subr.bf16.mxu0 0
        %5881 = vmatpush1.bf16.msra.mxu0 0
        %5882 = vmatprep.subr.bf16.mxu0 0
        %5883 = vmatpush1.bf16.msra.mxu0 0
        %5884 = vmatprep.subr.bf16.mxu0 0
        %5885 = vmatpush1.bf16.msra.mxu0 0
        %5886 = vmatprep.subr.bf16.mxu0 0
        %5887 = vmatpush1.bf16.msra.mxu0 0
        %5888 = vmatprep.subr.bf16.mxu0 0
        %5889 = vmatpush1.bf16.msra.mxu0 0
        %5890 = vmatprep.subr.bf16.mxu0 0
        %5891 = vmatpush1.bf16.msra.mxu0 0
        %5892 = vmatprep.subr.bf16.mxu0 0
        %5893 = vmatpush1.bf16.msra.mxu0 0
        %5894 = vmatprep.subr.bf16.mxu0 0
        %5895 = vmatpush1.bf16.msra.mxu0 0
        %5896 = vmatprep.subr.bf16.mxu0 0
        %5897 = vmatpush1.bf16.msra.mxu0 0
        %5898 = vmatprep.mubr.bf16.mxu0 0
        %5899 = vmatmul.mubr.bf16.gmra.mrb[0].mxu0 %v5840
        %v5900 = vpop.f32.mrb[0].mxu0
        %v5901 = vadd.f32 0.0, %v5900
        %v5902 = vpop.f32.mrb[0].mxu0
        %v5903 = vpop.f32.mrb[0].mxu0
        %v5904 = vadd.f32 0.0, %v5903
        %v5905 = vpop.f32.mrb[0].mxu0
        %5906 = vmatprep.mubr.bf16.mxu0 0
        %5907 = vmatmul.mubr.bf16.gmra.mrb[0].mxu0 %v5843
        %v5908 = vpop.f32.mrb[0].mxu0
        %v5909 = vadd.f32 0.0, %v5908
        %v5910 = vpop.f32.mrb[0].mxu0
        %v5911 = vpop.f32.mrb[0].mxu0
        %v5912 = vadd.f32 0.0, %v5911
        %v5913 = vpop.f32.mrb[0].mxu0
        %5914 = vmatprep.mubr.bf16.mxu0 0
        %5915 = vmatmul.mubr.bf16.gmra.mrb[0].mxu0 %v5846
        %v5916 = vpop.f32.mrb[0].mxu0
        %v5917 = vadd.f32 0.0, %v5916
        %v5918 = vpop.f32.mrb[0].mxu0
        %v5919 = vpop.f32.mrb[0].mxu0
        %v5920 = vadd.f32 0.0, %v5919
        %v5921 = vpop.f32.mrb[0].mxu0
        %5922 = vmatprep.mubr.bf16.mxu0 0
        %5923 = vmatmul.mubr.bf16.gmra.mrb[0].mxu0 %v5849
        %v5924 = vpop.f32.mrb[0].mxu0
        %v5925 = vadd.f32 0.0, %v5924
        %v5926 = vpop.f32.mrb[0].mxu0
        %v5927 = vpop.f32.mrb[0].mxu0
        %v5928 = vadd.f32 0.0, %v5927
        %v5929 = vpop.f32.mrb[0].mxu0
        %5930 = vmatprep.mubr.bf16.mxu0 0
        %5931 = vmatmul.mubr.bf16.gmra.mrb[0].mxu0 %v5852
        %v5932 = vpop.f32.mrb[0].mxu0
        %v5933 = vadd.f32 0.0, %v5932
        %v5934 = vpop.f32.mrb[0].mxu0
        %v5935 = vpop.f32.mrb[0].mxu0
        %v5936 = vadd.f32 0.0, %v5935
        %v5937 = vpop.f32.mrb[0].mxu0
        %5938 = vmatprep.mubr.bf16.mxu0 0
        %5939 = vmatmul.mubr.bf16.gmra.mrb[0].mxu0 %v5855
        %v5940 = vpop.f32.mrb[0].mxu0
        %v5941 = vadd.f32 0.0, %v5940
        %v5942 = vpop.f32.mrb[0].mxu0
        %v5943 = vpop.f32.mrb[0].mxu0
        %v5944 = vadd.f32 0.0, %v5943
        %v5945 = vpop.f32.mrb[0].mxu0
        %5946 = vmatprep.mubr.bf16.mxu0 0
        %5947 = vmatmul.mubr.bf16.gmra.mrb[0].mxu0 %v5858
        %v5948 = vpop.f32.mrb[0].mxu0
        %v5949 = vadd.f32 0.0, %v5948
        %v5950 = vpop.f32.mrb[0].mxu0
        %v5951 = vpop.f32.mrb[0].mxu0
        %v5952 = vadd.f32 0.0, %v5951
        %v5953 = vpop.f32.mrb[0].mxu0
        %5954 = vmatprep.mubr.bf16.mxu0 0
        %5955 = vmatmul.mubr.bf16.gmra.mrb[0].mxu0 %v5861
        %v5956 = vpop.f32.mrb[0].mxu0
        %v5957 = vadd.f32 0.0, %v5956
        %v5958 = vpop.f32.mrb[0].mxu0
        %v5959 = vpop.f32.mrb[0].mxu0
        %v5960 = vadd.f32 0.0, %v5959
        %v5961 = vpop.f32.mrb[0].mxu0
        %5962 = vdwg.mxu0
        %v5963 = vadd.f32 %v5716, %v5901
        %v5964 = vadd.f32 %v5717, %v5904
        %v5965 = vadd.f32 %v5718, %v5909
        %v5966 = vadd.f32 %v5719, %v5912
        %v5967 = vadd.f32 %v5720, %v5917
        %v5968 = vadd.f32 %v5721, %v5920
        %v5969 = vadd.f32 %v5722, %v5925
        %v5970 = vadd.f32 %v5723, %v5928
        %v5971 = vadd.f32 %v5724, %v5933
        %v5972 = vadd.f32 %v5725, %v5936
        %v5973 = vadd.f32 %v5726, %v5941
        %v5974 = vadd.f32 %v5727, %v5944
        %v5975 = vadd.f32 %v5728, %v5949
        %v5976 = vadd.f32 %v5729, %v5952
        %v5977 = vadd.f32 %v5730, %v5957
        %v5978 = vadd.f32 %v5731, %v5960
        %5979 = vmatprep.subr.bf16.mxu0 0
        %5980 = vmatpush1.bf16.msra.mxu0 %v4769
        %5981 = vmatprep.subr.bf16.mxu0 0
        %5982 = vmatpush1.bf16.msra.mxu0 %v4770
        %5983 = vmatprep.subr.bf16.mxu0 0
        %5984 = vmatpush1.bf16.msra.mxu0 %v4771
        %5985 = vmatprep.subr.bf16.mxu0 0
        %5986 = vmatpush1.bf16.msra.mxu0 %v4772
        %5987 = vmatprep.subr.bf16.mxu0 0
        %5988 = vmatpush1.bf16.msra.mxu0 %v4773
        %5989 = vmatprep.subr.bf16.mxu0 0
        %5990 = vmatpush1.bf16.msra.mxu0 %v4774
        %5991 = vmatprep.subr.bf16.mxu0 0
        %5992 = vmatpush1.bf16.msra.mxu0 %v4775
        %5993 = vmatprep.subr.bf16.mxu0 0
        %5994 = vmatpush1.bf16.msra.mxu0 %v4776
        %5995 = vmatprep.subr.bf16.mxu0 0
        %5996 = vmatpush1.bf16.msra.mxu0 0
        %5997 = vmatprep.subr.bf16.mxu0 0
        %5998 = vmatpush1.bf16.msra.mxu0 0
        %5999 = vmatprep.subr.bf16.mxu0 0
        %6000 = vmatpush1.bf16.msra.mxu0 0
        %6001 = vmatprep.subr.bf16.mxu0 0
        %6002 = vmatpush1.bf16.msra.mxu0 0
        %6003 = vmatprep.subr.bf16.mxu0 0
        %6004 = vmatpush1.bf16.msra.mxu0 0
        %6005 = vmatprep.subr.bf16.mxu0 0
        %6006 = vmatpush1.bf16.msra.mxu0 0
        %6007 = vmatprep.subr.bf16.mxu0 0
        %6008 = vmatpush1.bf16.msra.mxu0 0
        %6009 = vmatprep.subr.bf16.mxu0 0
        %6010 = vmatpush1.bf16.msra.mxu0 0
        %6011 = vmatprep.mubr.bf16.mxu0 0
        %6012 = vmatmul.mubr.bf16.gmra.mrb[0].mxu0 %v3362
        %v6013 = vpop.f32.mrb[0].mxu0
        %v6014 = vadd.f32 0.0, %v6013
        %v6015 = vpop.f32.mrb[0].mxu0
        %v6016 = vpop.f32.mrb[0].mxu0
        %v6017 = vadd.f32 0.0, %v6016
        %v6018 = vpop.f32.mrb[0].mxu0
        %6019 = vmatprep.mubr.bf16.mxu0 0
        %6020 = vmatmul.mubr.bf16.gmra.mrb[0].mxu0 %v3363
        %v6021 = vpop.f32.mrb[0].mxu0
        %v6022 = vadd.f32 0.0, %v6021
        %v6023 = vpop.f32.mrb[0].mxu0
        %v6024 = vpop.f32.mrb[0].mxu0
        %v6025 = vadd.f32 0.0, %v6024
        %v6026 = vpop.f32.mrb[0].mxu0
        %6027 = vmatprep.mubr.bf16.mxu0 0
        %6028 = vmatmul.mubr.bf16.gmra.mrb[0].mxu0 %v3364
        %v6029 = vpop.f32.mrb[0].mxu0
        %v6030 = vadd.f32 0.0, %v6029
        %v6031 = vpop.f32.mrb[0].mxu0
        %v6032 = vpop.f32.mrb[0].mxu0
        %v6033 = vadd.f32 0.0, %v6032
        %v6034 = vpop.f32.mrb[0].mxu0
        %6035 = vmatprep.mubr.bf16.mxu0 0
        %6036 = vmatmul.mubr.bf16.gmra.mrb[0].mxu0 %v3365
        %v6037 = vpop.f32.mrb[0].mxu0
        %v6038 = vadd.f32 0.0, %v6037
        %v6039 = vpop.f32.mrb[0].mxu0
        %v6040 = vpop.f32.mrb[0].mxu0
        %v6041 = vadd.f32 0.0, %v6040
        %v6042 = vpop.f32.mrb[0].mxu0
        %6043 = vmatprep.mubr.bf16.mxu0 0
        %6044 = vmatmul.mubr.bf16.gmra.mrb[0].mxu0 %v3366
        %v6045 = vpop.f32.mrb[0].mxu0
        %v6046 = vadd.f32 0.0, %v6045
        %v6047 = vpop.f32.mrb[0].mxu0
        %v6048 = vpop.f32.mrb[0].mxu0
        %v6049 = vadd.f32 0.0, %v6048
        %v6050 = vpop.f32.mrb[0].mxu0
        %6051 = vmatprep.mubr.bf16.mxu0 0
        %6052 = vmatmul.mubr.bf16.gmra.mrb[0].mxu0 %v3367
        %v6053 = vpop.f32.mrb[0].mxu0
        %v6054 = vadd.f32 0.0, %v6053
        %v6055 = vpop.f32.mrb[0].mxu0
        %v6056 = vpop.f32.mrb[0].mxu0
        %v6057 = vadd.f32 0.0, %v6056
        %v6058 = vpop.f32.mrb[0].mxu0
        %6059 = vmatprep.mubr.bf16.mxu0 0
        %6060 = vmatmul.mubr.bf16.gmra.mrb[0].mxu0 %v3368
        %v6061 = vpop.f32.mrb[0].mxu0
        %v6062 = vadd.f32 0.0, %v6061
        %v6063 = vpop.f32.mrb[0].mxu0
        %v6064 = vpop.f32.mrb[0].mxu0
        %v6065 = vadd.f32 0.0, %v6064
        %v6066 = vpop.f32.mrb[0].mxu0
        %6067 = vmatprep.mubr.bf16.mxu0 0
        %6068 = vmatmul.mubr.bf16.gmra.mrb[0].mxu0 %v3369
        %v6069 = vpop.f32.mrb[0].mxu0
        %v6070 = vadd.f32 0.0, %v6069
        %v6071 = vpop.f32.mrb[0].mxu0
        %v6072 = vpop.f32.mrb[0].mxu0
        %v6073 = vadd.f32 0.0, %v6072
        %v6074 = vpop.f32.mrb[0].mxu0
        %6075 = vdwg.mxu0
        %s6076 = scalar_lea.vmem %s9, 5
        %v6077 = vld [vmem:[%s6076] sm:$0x1]
        %v6078 = vpack.c.bf16 %v6017, %v6014
        %v6079 = vpack.c.bf16 %v6025, %v6022
        %v6080 = vpack.c.bf16 %v6033, %v6030
        %v6081 = vpack.c.bf16 %v6041, %v6038
        %v6082 = vpack.c.bf16 %v6049, %v6046
        %v6083 = vpack.c.bf16 %v6057, %v6054
        %v6084 = vpack.c.bf16 %v6065, %v6062
        %v6085 = vpack.c.bf16 %v6073, %v6070
        %v6087 = vsel %vm1061, %v6078, 0
        %v6090 = vsel %vm1061, %v6079, 0
        %v6093 = vsel %vm1061, %v6080, 0
        %v6096 = vsel %vm1061, %v6081, 0
        %v6099 = vsel %vm1061, %v6082, 0
        %v6102 = vsel %vm1061, %v6083, 0
        %v6105 = vsel %vm1061, %v6084, 0
        %v6108 = vsel %vm1061, %v6085, 0
        %v6111 = vsel %vm1074, %v6077, 0
        %6113 = vmatprep.subr.bf16.mxu0 0
        %6114 = vmatpush1.bf16.msra.mxu0 %v6111
        %6115 = vmatprep.subr.bf16.mxu0 0
        %6116 = vmatpush1.bf16.msra.mxu0 0
        %6117 = vmatprep.subr.bf16.mxu0 0
        %6118 = vmatpush1.bf16.msra.mxu0 0
        %6119 = vmatprep.subr.bf16.mxu0 0
        %6120 = vmatpush1.bf16.msra.mxu0 0
        %6121 = vmatprep.subr.bf16.mxu0 0
        %6122 = vmatpush1.bf16.msra.mxu0 0
        %6123 = vmatprep.subr.bf16.mxu0 0
        %6124 = vmatpush1.bf16.msra.mxu0 0
        %6125 = vmatprep.subr.bf16.mxu0 0
        %6126 = vmatpush1.bf16.msra.mxu0 0
        %6127 = vmatprep.subr.bf16.mxu0 0
        %6128 = vmatpush1.bf16.msra.mxu0 0
        %6129 = vmatprep.subr.bf16.mxu0 0
        %6130 = vmatpush1.bf16.msra.mxu0 0
        %6131 = vmatprep.subr.bf16.mxu0 0
        %6132 = vmatpush1.bf16.msra.mxu0 0
        %6133 = vmatprep.subr.bf16.mxu0 0
        %6134 = vmatpush1.bf16.msra.mxu0 0
        %6135 = vmatprep.subr.bf16.mxu0 0
        %6136 = vmatpush1.bf16.msra.mxu0 0
        %6137 = vmatprep.subr.bf16.mxu0 0
        %6138 = vmatpush1.bf16.msra.mxu0 0
        %6139 = vmatprep.subr.bf16.mxu0 0
        %6140 = vmatpush1.bf16.msra.mxu0 0
        %6141 = vmatprep.subr.bf16.mxu0 0
        %6142 = vmatpush1.bf16.msra.mxu0 0
        %6143 = vmatprep.subr.bf16.mxu0 0
        %6144 = vmatpush1.bf16.msra.mxu0 0
        %6145 = vmatprep.mubr.bf16.mxu0 0
        %6146 = vmatmul.mubr.bf16.gmra.mrb[0].mxu0 %v6087
        %v6147 = vpop.f32.mrb[0].mxu0
        %v6148 = vadd.f32 0.0, %v6147
        %v6149 = vpop.f32.mrb[0].mxu0
        %v6150 = vpop.f32.mrb[0].mxu0
        %v6151 = vadd.f32 0.0, %v6150
        %v6152 = vpop.f32.mrb[0].mxu0
        %6153 = vmatprep.mubr.bf16.mxu0 0
        %6154 = vmatmul.mubr.bf16.gmra.mrb[0].mxu0 %v6090
        %v6155 = vpop.f32.mrb[0].mxu0
        %v6156 = vadd.f32 0.0, %v6155
        %v6157 = vpop.f32.mrb[0].mxu0
        %v6158 = vpop.f32.mrb[0].mxu0
        %v6159 = vadd.f32 0.0, %v6158
        %v6160 = vpop.f32.mrb[0].mxu0
        %6161 = vmatprep.mubr.bf16.mxu0 0
        %6162 = vmatmul.mubr.bf16.gmra.mrb[0].mxu0 %v6093
        %v6163 = vpop.f32.mrb[0].mxu0
        %v6164 = vadd.f32 0.0, %v6163
        %v6165 = vpop.f32.mrb[0].mxu0
        %v6166 = vpop.f32.mrb[0].mxu0
        %v6167 = vadd.f32 0.0, %v6166
        %v6168 = vpop.f32.mrb[0].mxu0
        %6169 = vmatprep.mubr.bf16.mxu0 0
        %6170 = vmatmul.mubr.bf16.gmra.mrb[0].mxu0 %v6096
        %v6171 = vpop.f32.mrb[0].mxu0
        %v6172 = vadd.f32 0.0, %v6171
        %v6173 = vpop.f32.mrb[0].mxu0
        %v6174 = vpop.f32.mrb[0].mxu0
        %v6175 = vadd.f32 0.0, %v6174
        %v6176 = vpop.f32.mrb[0].mxu0
        %6177 = vmatprep.mubr.bf16.mxu0 0
        %6178 = vmatmul.mubr.bf16.gmra.mrb[0].mxu0 %v6099
        %v6179 = vpop.f32.mrb[0].mxu0
        %v6180 = vadd.f32 0.0, %v6179
        %v6181 = vpop.f32.mrb[0].mxu0
        %v6182 = vpop.f32.mrb[0].mxu0
        %v6183 = vadd.f32 0.0, %v6182
        %v6184 = vpop.f32.mrb[0].mxu0
        %6185 = vmatprep.mubr.bf16.mxu0 0
        %6186 = vmatmul.mubr.bf16.gmra.mrb[0].mxu0 %v6102
        %v6187 = vpop.f32.mrb[0].mxu0
        %v6188 = vadd.f32 0.0, %v6187
        %v6189 = vpop.f32.mrb[0].mxu0
        %v6190 = vpop.f32.mrb[0].mxu0
        %v6191 = vadd.f32 0.0, %v6190
        %v6192 = vpop.f32.mrb[0].mxu0
        %6193 = vmatprep.mubr.bf16.mxu0 0
        %6194 = vmatmul.mubr.bf16.gmra.mrb[0].mxu0 %v6105
        %v6195 = vpop.f32.mrb[0].mxu0
        %v6196 = vadd.f32 0.0, %v6195
        %v6197 = vpop.f32.mrb[0].mxu0
        %v6198 = vpop.f32.mrb[0].mxu0
        %v6199 = vadd.f32 0.0, %v6198
        %v6200 = vpop.f32.mrb[0].mxu0
        %6201 = vmatprep.mubr.bf16.mxu0 0
        %6202 = vmatmul.mubr.bf16.gmra.mrb[0].mxu0 %v6108
        %v6203 = vpop.f32.mrb[0].mxu0
        %v6204 = vadd.f32 0.0, %v6203
        %v6205 = vpop.f32.mrb[0].mxu0
        %v6206 = vpop.f32.mrb[0].mxu0
        %v6207 = vadd.f32 0.0, %v6206
        %v6208 = vpop.f32.mrb[0].mxu0
        %6209 = vdwg.mxu0
        %v6210 = vadd.f32 %v5963, %v6148
        %v6211 = vadd.f32 %v5964, %v6151
        %v6212 = vadd.f32 %v5965, %v6156
        %v6213 = vadd.f32 %v5966, %v6159
        %v6214 = vadd.f32 %v5967, %v6164
        %v6215 = vadd.f32 %v5968, %v6167
        %v6216 = vadd.f32 %v5969, %v6172
        %v6217 = vadd.f32 %v5970, %v6175
        %v6218 = vadd.f32 %v5971, %v6180
        %v6219 = vadd.f32 %v5972, %v6183
        %v6220 = vadd.f32 %v5973, %v6188
        %v6221 = vadd.f32 %v5974, %v6191
        %v6222 = vadd.f32 %v5975, %v6196
        %v6223 = vadd.f32 %v5976, %v6199
        %v6224 = vadd.f32 %v5977, %v6204
        %v6225 = vadd.f32 %v5978, %v6207
        %6226 = vmatprep.subr.bf16.mxu0 0
        %6227 = vmatpush1.bf16.msra.mxu0 %v4769
        %6228 = vmatprep.subr.bf16.mxu0 0
        %6229 = vmatpush1.bf16.msra.mxu0 %v4770
        %6230 = vmatprep.subr.bf16.mxu0 0
        %6231 = vmatpush1.bf16.msra.mxu0 %v4771
        %6232 = vmatprep.subr.bf16.mxu0 0
        %6233 = vmatpush1.bf16.msra.mxu0 %v4772
        %6234 = vmatprep.subr.bf16.mxu0 0
        %6235 = vmatpush1.bf16.msra.mxu0 %v4773
        %6236 = vmatprep.subr.bf16.mxu0 0
        %6237 = vmatpush1.bf16.msra.mxu0 %v4774
        %6238 = vmatprep.subr.bf16.mxu0 0
        %6239 = vmatpush1.bf16.msra.mxu0 %v4775
        %6240 = vmatprep.subr.bf16.mxu0 0
        %6241 = vmatpush1.bf16.msra.mxu0 %v4776
        %6242 = vmatprep.subr.bf16.mxu0 0
        %6243 = vmatpush1.bf16.msra.mxu0 0
        %6244 = vmatprep.subr.bf16.mxu0 0
        %6245 = vmatpush1.bf16.msra.mxu0 0
        %6246 = vmatprep.subr.bf16.mxu0 0
        %6247 = vmatpush1.bf16.msra.mxu0 0
        %6248 = vmatprep.subr.bf16.mxu0 0
        %6249 = vmatpush1.bf16.msra.mxu0 0
        %6250 = vmatprep.subr.bf16.mxu0 0
        %6251 = vmatpush1.bf16.msra.mxu0 0
        %6252 = vmatprep.subr.bf16.mxu0 0
        %6253 = vmatpush1.bf16.msra.mxu0 0
        %6254 = vmatprep.subr.bf16.mxu0 0
        %6255 = vmatpush1.bf16.msra.mxu0 0
        %6256 = vmatprep.subr.bf16.mxu0 0
        %6257 = vmatpush1.bf16.msra.mxu0 0
        %6258 = vmatprep.mubr.bf16.mxu0 0
        %6259 = vmatmul.mubr.bf16.gmra.mrb[0].mxu0 %v3674
        %v6260 = vpop.f32.mrb[0].mxu0
        %v6261 = vadd.f32 0.0, %v6260
        %v6262 = vpop.f32.mrb[0].mxu0
        %v6263 = vpop.f32.mrb[0].mxu0
        %v6264 = vadd.f32 0.0, %v6263
        %v6265 = vpop.f32.mrb[0].mxu0
        %6266 = vmatprep.mubr.bf16.mxu0 0
        %6267 = vmatmul.mubr.bf16.gmra.mrb[0].mxu0 %v3675
        %v6268 = vpop.f32.mrb[0].mxu0
        %v6269 = vadd.f32 0.0, %v6268
        %v6270 = vpop.f32.mrb[0].mxu0
        %v6271 = vpop.f32.mrb[0].mxu0
        %v6272 = vadd.f32 0.0, %v6271
        %v6273 = vpop.f32.mrb[0].mxu0
        %6274 = vmatprep.mubr.bf16.mxu0 0
        %6275 = vmatmul.mubr.bf16.gmra.mrb[0].mxu0 %v3676
        %v6276 = vpop.f32.mrb[0].mxu0
        %v6277 = vadd.f32 0.0, %v6276
        %v6278 = vpop.f32.mrb[0].mxu0
        %v6279 = vpop.f32.mrb[0].mxu0
        %v6280 = vadd.f32 0.0, %v6279
        %v6281 = vpop.f32.mrb[0].mxu0
        %6282 = vmatprep.mubr.bf16.mxu0 0
        %6283 = vmatmul.mubr.bf16.gmra.mrb[0].mxu0 %v3677
        %v6284 = vpop.f32.mrb[0].mxu0
        %v6285 = vadd.f32 0.0, %v6284
        %v6286 = vpop.f32.mrb[0].mxu0
        %v6287 = vpop.f32.mrb[0].mxu0
        %v6288 = vadd.f32 0.0, %v6287
        %v6289 = vpop.f32.mrb[0].mxu0
        %6290 = vmatprep.mubr.bf16.mxu0 0
        %6291 = vmatmul.mubr.bf16.gmra.mrb[0].mxu0 %v3678
        %v6292 = vpop.f32.mrb[0].mxu0
        %v6293 = vadd.f32 0.0, %v6292
        %v6294 = vpop.f32.mrb[0].mxu0
        %v6295 = vpop.f32.mrb[0].mxu0
        %v6296 = vadd.f32 0.0, %v6295
        %v6297 = vpop.f32.mrb[0].mxu0
        %6298 = vmatprep.mubr.bf16.mxu0 0
        %6299 = vmatmul.mubr.bf16.gmra.mrb[0].mxu0 %v3679
        %v6300 = vpop.f32.mrb[0].mxu0
        %v6301 = vadd.f32 0.0, %v6300
        %v6302 = vpop.f32.mrb[0].mxu0
        %v6303 = vpop.f32.mrb[0].mxu0
        %v6304 = vadd.f32 0.0, %v6303
        %v6305 = vpop.f32.mrb[0].mxu0
        %6306 = vmatprep.mubr.bf16.mxu0 0
        %6307 = vmatmul.mubr.bf16.gmra.mrb[0].mxu0 %v3680
        %v6308 = vpop.f32.mrb[0].mxu0
        %v6309 = vadd.f32 0.0, %v6308
        %v6310 = vpop.f32.mrb[0].mxu0
        %v6311 = vpop.f32.mrb[0].mxu0
        %v6312 = vadd.f32 0.0, %v6311
        %v6313 = vpop.f32.mrb[0].mxu0
        %6314 = vmatprep.mubr.bf16.mxu0 0
        %6315 = vmatmul.mubr.bf16.gmra.mrb[0].mxu0 %v3681
        %v6316 = vpop.f32.mrb[0].mxu0
        %v6317 = vadd.f32 0.0, %v6316
        %v6318 = vpop.f32.mrb[0].mxu0
        %v6319 = vpop.f32.mrb[0].mxu0
        %v6320 = vadd.f32 0.0, %v6319
        %v6321 = vpop.f32.mrb[0].mxu0
        %6322 = vdwg.mxu0
        %s6323 = scalar_lea.vmem %s9, 6
        %v6324 = vld [vmem:[%s6323] sm:$0x1]
        %v6325 = vpack.c.bf16 %v6264, %v6261
        %v6326 = vpack.c.bf16 %v6272, %v6269
        %v6327 = vpack.c.bf16 %v6280, %v6277
        %v6328 = vpack.c.bf16 %v6288, %v6285
        %v6329 = vpack.c.bf16 %v6296, %v6293
        %v6330 = vpack.c.bf16 %v6304, %v6301
        %v6331 = vpack.c.bf16 %v6312, %v6309
        %v6332 = vpack.c.bf16 %v6320, %v6317
        %v6334 = vsel %vm1061, %v6325, 0
        %v6337 = vsel %vm1061, %v6326, 0
        %v6340 = vsel %vm1061, %v6327, 0
        %v6343 = vsel %vm1061, %v6328, 0
        %v6346 = vsel %vm1061, %v6329, 0
        %v6349 = vsel %vm1061, %v6330, 0
        %v6352 = vsel %vm1061, %v6331, 0
        %v6355 = vsel %vm1061, %v6332, 0
        %v6358 = vsel %vm1074, %v6324, 0
        %6360 = vmatprep.subr.bf16.mxu0 0
        %6361 = vmatpush1.bf16.msra.mxu0 %v6358
        %6362 = vmatprep.subr.bf16.mxu0 0
        %6363 = vmatpush1.bf16.msra.mxu0 0
        %6364 = vmatprep.subr.bf16.mxu0 0
        %6365 = vmatpush1.bf16.msra.mxu0 0
        %6366 = vmatprep.subr.bf16.mxu0 0
        %6367 = vmatpush1.bf16.msra.mxu0 0
        %6368 = vmatprep.subr.bf16.mxu0 0
        %6369 = vmatpush1.bf16.msra.mxu0 0
        %6370 = vmatprep.subr.bf16.mxu0 0
        %6371 = vmatpush1.bf16.msra.mxu0 0
        %6372 = vmatprep.subr.bf16.mxu0 0
        %6373 = vmatpush1.bf16.msra.mxu0 0
        %6374 = vmatprep.subr.bf16.mxu0 0
        %6375 = vmatpush1.bf16.msra.mxu0 0
        %6376 = vmatprep.subr.bf16.mxu0 0
        %6377 = vmatpush1.bf16.msra.mxu0 0
        %6378 = vmatprep.subr.bf16.mxu0 0
        %6379 = vmatpush1.bf16.msra.mxu0 0
        %6380 = vmatprep.subr.bf16.mxu0 0
        %6381 = vmatpush1.bf16.msra.mxu0 0
        %6382 = vmatprep.subr.bf16.mxu0 0
        %6383 = vmatpush1.bf16.msra.mxu0 0
        %6384 = vmatprep.subr.bf16.mxu0 0
        %6385 = vmatpush1.bf16.msra.mxu0 0
        %6386 = vmatprep.subr.bf16.mxu0 0
        %6387 = vmatpush1.bf16.msra.mxu0 0
        %6388 = vmatprep.subr.bf16.mxu0 0
        %6389 = vmatpush1.bf16.msra.mxu0 0
        %6390 = vmatprep.subr.bf16.mxu0 0
        %6391 = vmatpush1.bf16.msra.mxu0 0
        %6392 = vmatprep.mubr.bf16.mxu0 0
        %6393 = vmatmul.mubr.bf16.gmra.mrb[0].mxu0 %v6334
        %v6394 = vpop.f32.mrb[0].mxu0
        %v6395 = vadd.f32 0.0, %v6394
        %v6396 = vpop.f32.mrb[0].mxu0
        %v6397 = vpop.f32.mrb[0].mxu0
        %v6398 = vadd.f32 0.0, %v6397
        %v6399 = vpop.f32.mrb[0].mxu0
        %6400 = vmatprep.mubr.bf16.mxu0 0
        %6401 = vmatmul.mubr.bf16.gmra.mrb[0].mxu0 %v6337
        %v6402 = vpop.f32.mrb[0].mxu0
        %v6403 = vadd.f32 0.0, %v6402
        %v6404 = vpop.f32.mrb[0].mxu0
        %v6405 = vpop.f32.mrb[0].mxu0
        %v6406 = vadd.f32 0.0, %v6405
        %v6407 = vpop.f32.mrb[0].mxu0
        %6408 = vmatprep.mubr.bf16.mxu0 0
        %6409 = vmatmul.mubr.bf16.gmra.mrb[0].mxu0 %v6340
        %v6410 = vpop.f32.mrb[0].mxu0
        %v6411 = vadd.f32 0.0, %v6410
        %v6412 = vpop.f32.mrb[0].mxu0
        %v6413 = vpop.f32.mrb[0].mxu0
        %v6414 = vadd.f32 0.0, %v6413
        %v6415 = vpop.f32.mrb[0].mxu0
        %6416 = vmatprep.mubr.bf16.mxu0 0
        %6417 = vmatmul.mubr.bf16.gmra.mrb[0].mxu0 %v6343
        %v6418 = vpop.f32.mrb[0].mxu0
        %v6419 = vadd.f32 0.0, %v6418
        %v6420 = vpop.f32.mrb[0].mxu0
        %v6421 = vpop.f32.mrb[0].mxu0
        %v6422 = vadd.f32 0.0, %v6421
        %v6423 = vpop.f32.mrb[0].mxu0
        %6424 = vmatprep.mubr.bf16.mxu0 0
        %6425 = vmatmul.mubr.bf16.gmra.mrb[0].mxu0 %v6346
        %v6426 = vpop.f32.mrb[0].mxu0
        %v6427 = vadd.f32 0.0, %v6426
        %v6428 = vpop.f32.mrb[0].mxu0
        %v6429 = vpop.f32.mrb[0].mxu0
        %v6430 = vadd.f32 0.0, %v6429
        %v6431 = vpop.f32.mrb[0].mxu0
        %6432 = vmatprep.mubr.bf16.mxu0 0
        %6433 = vmatmul.mubr.bf16.gmra.mrb[0].mxu0 %v6349
        %v6434 = vpop.f32.mrb[0].mxu0
        %v6435 = vadd.f32 0.0, %v6434
        %v6436 = vpop.f32.mrb[0].mxu0
        %v6437 = vpop.f32.mrb[0].mxu0
        %v6438 = vadd.f32 0.0, %v6437
        %v6439 = vpop.f32.mrb[0].mxu0
        %6440 = vmatprep.mubr.bf16.mxu0 0
        %6441 = vmatmul.mubr.bf16.gmra.mrb[0].mxu0 %v6352
        %v6442 = vpop.f32.mrb[0].mxu0
        %v6443 = vadd.f32 0.0, %v6442
        %v6444 = vpop.f32.mrb[0].mxu0
        %v6445 = vpop.f32.mrb[0].mxu0
        %v6446 = vadd.f32 0.0, %v6445
        %v6447 = vpop.f32.mrb[0].mxu0
        %6448 = vmatprep.mubr.bf16.mxu0 0
        %6449 = vmatmul.mubr.bf16.gmra.mrb[0].mxu0 %v6355
        %v6450 = vpop.f32.mrb[0].mxu0
        %v6451 = vadd.f32 0.0, %v6450
        %v6452 = vpop.f32.mrb[0].mxu0
        %v6453 = vpop.f32.mrb[0].mxu0
        %v6454 = vadd.f32 0.0, %v6453
        %v6455 = vpop.f32.mrb[0].mxu0
        %6456 = vdwg.mxu0
        %v6457 = vadd.f32 %v6210, %v6395
        %v6458 = vadd.f32 %v6211, %v6398
        %v6459 = vadd.f32 %v6212, %v6403
        %v6460 = vadd.f32 %v6213, %v6406
        %v6461 = vadd.f32 %v6214, %v6411
        %v6462 = vadd.f32 %v6215, %v6414
        %v6463 = vadd.f32 %v6216, %v6419
        %v6464 = vadd.f32 %v6217, %v6422
        %v6465 = vadd.f32 %v6218, %v6427
        %v6466 = vadd.f32 %v6219, %v6430
        %v6467 = vadd.f32 %v6220, %v6435
        %v6468 = vadd.f32 %v6221, %v6438
        %v6469 = vadd.f32 %v6222, %v6443
        %v6470 = vadd.f32 %v6223, %v6446
        %v6471 = vadd.f32 %v6224, %v6451
        %v6472 = vadd.f32 %v6225, %v6454
        %6473 = vmatprep.subr.bf16.mxu0 0
        %6474 = vmatpush1.bf16.msra.mxu0 %v4769
        %6475 = vmatprep.subr.bf16.mxu0 0
        %6476 = vmatpush1.bf16.msra.mxu0 %v4770
        %6477 = vmatprep.subr.bf16.mxu0 0
        %6478 = vmatpush1.bf16.msra.mxu0 %v4771
        %6479 = vmatprep.subr.bf16.mxu0 0
        %6480 = vmatpush1.bf16.msra.mxu0 %v4772
        %6481 = vmatprep.subr.bf16.mxu0 0
        %6482 = vmatpush1.bf16.msra.mxu0 %v4773
        %6483 = vmatprep.subr.bf16.mxu0 0
        %6484 = vmatpush1.bf16.msra.mxu0 %v4774
        %6485 = vmatprep.subr.bf16.mxu0 0
        %6486 = vmatpush1.bf16.msra.mxu0 %v4775
        %6487 = vmatprep.subr.bf16.mxu0 0
        %6488 = vmatpush1.bf16.msra.mxu0 %v4776
        %6489 = vmatprep.subr.bf16.mxu0 0
        %6490 = vmatpush1.bf16.msra.mxu0 0
        %6491 = vmatprep.subr.bf16.mxu0 0
        %6492 = vmatpush1.bf16.msra.mxu0 0
        %6493 = vmatprep.subr.bf16.mxu0 0
        %6494 = vmatpush1.bf16.msra.mxu0 0
        %6495 = vmatprep.subr.bf16.mxu0 0
        %6496 = vmatpush1.bf16.msra.mxu0 0
        %6497 = vmatprep.subr.bf16.mxu0 0
        %6498 = vmatpush1.bf16.msra.mxu0 0
        %6499 = vmatprep.subr.bf16.mxu0 0
        %6500 = vmatpush1.bf16.msra.mxu0 0
        %6501 = vmatprep.subr.bf16.mxu0 0
        %6502 = vmatpush1.bf16.msra.mxu0 0
        %6503 = vmatprep.subr.bf16.mxu0 0
        %6504 = vmatpush1.bf16.msra.mxu0 0
        %6505 = vmatprep.mubr.bf16.mxu0 0
        %6506 = vmatmul.mubr.bf16.gmra.mrb[0].mxu0 %v3986
        %v6507 = vpop.f32.mrb[0].mxu0
        %v6508 = vadd.f32 0.0, %v6507
        %v6509 = vpop.f32.mrb[0].mxu0
        %v6510 = vpop.f32.mrb[0].mxu0
        %v6511 = vadd.f32 0.0, %v6510
        %v6512 = vpop.f32.mrb[0].mxu0
        %6513 = vmatprep.mubr.bf16.mxu0 0
        %6514 = vmatmul.mubr.bf16.gmra.mrb[0].mxu0 %v3987
        %v6515 = vpop.f32.mrb[0].mxu0
        %v6516 = vadd.f32 0.0, %v6515
        %v6517 = vpop.f32.mrb[0].mxu0
        %v6518 = vpop.f32.mrb[0].mxu0
        %v6519 = vadd.f32 0.0, %v6518
        %v6520 = vpop.f32.mrb[0].mxu0
        %6521 = vmatprep.mubr.bf16.mxu0 0
        %6522 = vmatmul.mubr.bf16.gmra.mrb[0].mxu0 %v3988
        %v6523 = vpop.f32.mrb[0].mxu0
        %v6524 = vadd.f32 0.0, %v6523
        %v6525 = vpop.f32.mrb[0].mxu0
        %v6526 = vpop.f32.mrb[0].mxu0
        %v6527 = vadd.f32 0.0, %v6526
        %v6528 = vpop.f32.mrb[0].mxu0
        %6529 = vmatprep.mubr.bf16.mxu0 0
        %6530 = vmatmul.mubr.bf16.gmra.mrb[0].mxu0 %v3989
        %v6531 = vpop.f32.mrb[0].mxu0
        %v6532 = vadd.f32 0.0, %v6531
        %v6533 = vpop.f32.mrb[0].mxu0
        %v6534 = vpop.f32.mrb[0].mxu0
        %v6535 = vadd.f32 0.0, %v6534
        %v6536 = vpop.f32.mrb[0].mxu0
        %6537 = vmatprep.mubr.bf16.mxu0 0
        %6538 = vmatmul.mubr.bf16.gmra.mrb[0].mxu0 %v3990
        %v6539 = vpop.f32.mrb[0].mxu0
        %v6540 = vadd.f32 0.0, %v6539
        %v6541 = vpop.f32.mrb[0].mxu0
        %v6542 = vpop.f32.mrb[0].mxu0
        %v6543 = vadd.f32 0.0, %v6542
        %v6544 = vpop.f32.mrb[0].mxu0
        %6545 = vmatprep.mubr.bf16.mxu0 0
        %6546 = vmatmul.mubr.bf16.gmra.mrb[0].mxu0 %v3991
        %v6547 = vpop.f32.mrb[0].mxu0
        %v6548 = vadd.f32 0.0, %v6547
        %v6549 = vpop.f32.mrb[0].mxu0
        %v6550 = vpop.f32.mrb[0].mxu0
        %v6551 = vadd.f32 0.0, %v6550
        %v6552 = vpop.f32.mrb[0].mxu0
        %6553 = vmatprep.mubr.bf16.mxu0 0
        %6554 = vmatmul.mubr.bf16.gmra.mrb[0].mxu0 %v3992
        %v6555 = vpop.f32.mrb[0].mxu0
        %v6556 = vadd.f32 0.0, %v6555
        %v6557 = vpop.f32.mrb[0].mxu0
        %v6558 = vpop.f32.mrb[0].mxu0
        %v6559 = vadd.f32 0.0, %v6558
        %v6560 = vpop.f32.mrb[0].mxu0
        %6561 = vmatprep.mubr.bf16.mxu0 0
        %6562 = vmatmul.mubr.bf16.gmra.mrb[0].mxu0 %v3993
        %v6563 = vpop.f32.mrb[0].mxu0
        %v6564 = vadd.f32 0.0, %v6563
        %v6565 = vpop.f32.mrb[0].mxu0
        %v6566 = vpop.f32.mrb[0].mxu0
        %v6567 = vadd.f32 0.0, %v6566
        %v6568 = vpop.f32.mrb[0].mxu0
        %6569 = vdwg.mxu0
        %s6570 = scalar_lea.vmem %s9, 7
        %v6571 = vld [vmem:[%s6570] sm:$0x1]
        %v6572 = vpack.c.bf16 %v6511, %v6508
        %v6573 = vpack.c.bf16 %v6519, %v6516
        %v6574 = vpack.c.bf16 %v6527, %v6524
        %v6575 = vpack.c.bf16 %v6535, %v6532
        %v6576 = vpack.c.bf16 %v6543, %v6540
        %v6577 = vpack.c.bf16 %v6551, %v6548
        %v6578 = vpack.c.bf16 %v6559, %v6556
        %v6579 = vpack.c.bf16 %v6567, %v6564
        %v6581 = vsel %vm1061, %v6572, 0
        %v6584 = vsel %vm1061, %v6573, 0
        %v6587 = vsel %vm1061, %v6574, 0
        %v6590 = vsel %vm1061, %v6575, 0
        %v6593 = vsel %vm1061, %v6576, 0
        %v6596 = vsel %vm1061, %v6577, 0
        %v6599 = vsel %vm1061, %v6578, 0
        %v6602 = vsel %vm1061, %v6579, 0
        %v6605 = vsel %vm1074, %v6571, 0
        %6607 = vmatprep.subr.bf16.mxu0 0
        %6608 = vmatpush1.bf16.msra.mxu0 %v6605
        %6609 = vmatprep.subr.bf16.mxu0 0
        %6610 = vmatpush1.bf16.msra.mxu0 0
        %6611 = vmatprep.subr.bf16.mxu0 0
        %6612 = vmatpush1.bf16.msra.mxu0 0
        %6613 = vmatprep.subr.bf16.mxu0 0
        %6614 = vmatpush1.bf16.msra.mxu0 0
        %6615 = vmatprep.subr.bf16.mxu0 0
        %6616 = vmatpush1.bf16.msra.mxu0 0
        %6617 = vmatprep.subr.bf16.mxu0 0
        %6618 = vmatpush1.bf16.msra.mxu0 0
        %6619 = vmatprep.subr.bf16.mxu0 0
        %6620 = vmatpush1.bf16.msra.mxu0 0
        %6621 = vmatprep.subr.bf16.mxu0 0
        %6622 = vmatpush1.bf16.msra.mxu0 0
        %6623 = vmatprep.subr.bf16.mxu0 0
        %6624 = vmatpush1.bf16.msra.mxu0 0
        %6625 = vmatprep.subr.bf16.mxu0 0
        %6626 = vmatpush1.bf16.msra.mxu0 0
        %6627 = vmatprep.subr.bf16.mxu0 0
        %6628 = vmatpush1.bf16.msra.mxu0 0
        %6629 = vmatprep.subr.bf16.mxu0 0
        %6630 = vmatpush1.bf16.msra.mxu0 0
        %6631 = vmatprep.subr.bf16.mxu0 0
        %6632 = vmatpush1.bf16.msra.mxu0 0
        %6633 = vmatprep.subr.bf16.mxu0 0
        %6634 = vmatpush1.bf16.msra.mxu0 0
        %6635 = vmatprep.subr.bf16.mxu0 0
        %6636 = vmatpush1.bf16.msra.mxu0 0
        %6637 = vmatprep.subr.bf16.mxu0 0
        %6638 = vmatpush1.bf16.msra.mxu0 0
        %6639 = vmatprep.mubr.bf16.mxu0 0
        %6640 = vmatmul.mubr.bf16.gmra.mrb[0].mxu0 %v6581
        %v6641 = vpop.f32.mrb[0].mxu0
        %v6642 = vadd.f32 0.0, %v6641
        %v6643 = vpop.f32.mrb[0].mxu0
        %v6644 = vpop.f32.mrb[0].mxu0
        %v6645 = vadd.f32 0.0, %v6644
        %v6646 = vpop.f32.mrb[0].mxu0
        %6647 = vmatprep.mubr.bf16.mxu0 0
        %6648 = vmatmul.mubr.bf16.gmra.mrb[0].mxu0 %v6584
        %v6649 = vpop.f32.mrb[0].mxu0
        %v6650 = vadd.f32 0.0, %v6649
        %v6651 = vpop.f32.mrb[0].mxu0
        %v6652 = vpop.f32.mrb[0].mxu0
        %v6653 = vadd.f32 0.0, %v6652
        %v6654 = vpop.f32.mrb[0].mxu0
        %6655 = vmatprep.mubr.bf16.mxu0 0
        %6656 = vmatmul.mubr.bf16.gmra.mrb[0].mxu0 %v6587
        %v6657 = vpop.f32.mrb[0].mxu0
        %v6658 = vadd.f32 0.0, %v6657
        %v6659 = vpop.f32.mrb[0].mxu0
        %v6660 = vpop.f32.mrb[0].mxu0
        %v6661 = vadd.f32 0.0, %v6660
        %v6662 = vpop.f32.mrb[0].mxu0
        %6663 = vmatprep.mubr.bf16.mxu0 0
        %6664 = vmatmul.mubr.bf16.gmra.mrb[0].mxu0 %v6590
        %v6665 = vpop.f32.mrb[0].mxu0
        %v6666 = vadd.f32 0.0, %v6665
        %v6667 = vpop.f32.mrb[0].mxu0
        %v6668 = vpop.f32.mrb[0].mxu0
        %v6669 = vadd.f32 0.0, %v6668
        %v6670 = vpop.f32.mrb[0].mxu0
        %6671 = vmatprep.mubr.bf16.mxu0 0
        %6672 = vmatmul.mubr.bf16.gmra.mrb[0].mxu0 %v6593
        %v6673 = vpop.f32.mrb[0].mxu0
        %v6674 = vadd.f32 0.0, %v6673
        %v6675 = vpop.f32.mrb[0].mxu0
        %v6676 = vpop.f32.mrb[0].mxu0
        %v6677 = vadd.f32 0.0, %v6676
        %v6678 = vpop.f32.mrb[0].mxu0
        %6679 = vmatprep.mubr.bf16.mxu0 0
        %6680 = vmatmul.mubr.bf16.gmra.mrb[0].mxu0 %v6596
        %v6681 = vpop.f32.mrb[0].mxu0
        %v6682 = vadd.f32 0.0, %v6681
        %v6683 = vpop.f32.mrb[0].mxu0
        %v6684 = vpop.f32.mrb[0].mxu0
        %v6685 = vadd.f32 0.0, %v6684
        %v6686 = vpop.f32.mrb[0].mxu0
        %6687 = vmatprep.mubr.bf16.mxu0 0
        %6688 = vmatmul.mubr.bf16.gmra.mrb[0].mxu0 %v6599
        %v6689 = vpop.f32.mrb[0].mxu0
        %v6690 = vadd.f32 0.0, %v6689
        %v6691 = vpop.f32.mrb[0].mxu0
        %v6692 = vpop.f32.mrb[0].mxu0
        %v6693 = vadd.f32 0.0, %v6692
        %v6694 = vpop.f32.mrb[0].mxu0
        %6695 = vmatprep.mubr.bf16.mxu0 0
        %6696 = vmatmul.mubr.bf16.gmra.mrb[0].mxu0 %v6602
        %v6697 = vpop.f32.mrb[0].mxu0
        %v6698 = vadd.f32 0.0, %v6697
        %v6699 = vpop.f32.mrb[0].mxu0
        %v6700 = vpop.f32.mrb[0].mxu0
        %v6701 = vadd.f32 0.0, %v6700
        %v6702 = vpop.f32.mrb[0].mxu0
        %6703 = vdwg.mxu0
        %v6704 = vadd.f32 %v6457, %v6642
        %v6705 = vadd.f32 %v6458, %v6645
        %v6706 = vadd.f32 %v6459, %v6650
        %v6707 = vadd.f32 %v6460, %v6653
        %v6708 = vadd.f32 %v6461, %v6658
        %v6709 = vadd.f32 %v6462, %v6661
        %v6710 = vadd.f32 %v6463, %v6666
        %v6711 = vadd.f32 %v6464, %v6669
        %v6712 = vadd.f32 %v6465, %v6674
        %v6713 = vadd.f32 %v6466, %v6677
        %v6714 = vadd.f32 %v6467, %v6682
        %v6715 = vadd.f32 %v6468, %v6685
        %v6716 = vadd.f32 %v6469, %v6690
        %v6717 = vadd.f32 %v6470, %v6693
        %v6718 = vadd.f32 %v6471, %v6698
        %v6719 = vadd.f32 %v6472, %v6701
        %6720 = vmatprep.subr.bf16.mxu0 0
        %6721 = vmatpush1.bf16.msra.mxu0 %v4769
        %6722 = vmatprep.subr.bf16.mxu0 0
        %6723 = vmatpush1.bf16.msra.mxu0 %v4770
        %6724 = vmatprep.subr.bf16.mxu0 0
        %6725 = vmatpush1.bf16.msra.mxu0 %v4771
        %6726 = vmatprep.subr.bf16.mxu0 0
        %6727 = vmatpush1.bf16.msra.mxu0 %v4772
        %6728 = vmatprep.subr.bf16.mxu0 0
        %6729 = vmatpush1.bf16.msra.mxu0 %v4773
        %6730 = vmatprep.subr.bf16.mxu0 0
        %6731 = vmatpush1.bf16.msra.mxu0 %v4774
        %6732 = vmatprep.subr.bf16.mxu0 0
        %6733 = vmatpush1.bf16.msra.mxu0 %v4775
        %6734 = vmatprep.subr.bf16.mxu0 0
        %6735 = vmatpush1.bf16.msra.mxu0 %v4776
        %6736 = vmatprep.subr.bf16.mxu0 0
        %6737 = vmatpush1.bf16.msra.mxu0 0
        %6738 = vmatprep.subr.bf16.mxu0 0
        %6739 = vmatpush1.bf16.msra.mxu0 0
        %6740 = vmatprep.subr.bf16.mxu0 0
        %6741 = vmatpush1.bf16.msra.mxu0 0
        %6742 = vmatprep.subr.bf16.mxu0 0
        %6743 = vmatpush1.bf16.msra.mxu0 0
        %6744 = vmatprep.subr.bf16.mxu0 0
        %6745 = vmatpush1.bf16.msra.mxu0 0
        %6746 = vmatprep.subr.bf16.mxu0 0
        %6747 = vmatpush1.bf16.msra.mxu0 0
        %6748 = vmatprep.subr.bf16.mxu0 0
        %6749 = vmatpush1.bf16.msra.mxu0 0
        %6750 = vmatprep.subr.bf16.mxu0 0
        %6751 = vmatpush1.bf16.msra.mxu0 0
        %6752 = vmatprep.mubr.bf16.mxu0 0
        %6753 = vmatmul.mubr.bf16.gmra.mrb[0].mxu0 %v4298
        %v6754 = vpop.f32.mrb[0].mxu0
        %v6755 = vadd.f32 0.0, %v6754
        %v6756 = vpop.f32.mrb[0].mxu0
        %v6757 = vpop.f32.mrb[0].mxu0
        %v6758 = vadd.f32 0.0, %v6757
        %v6759 = vpop.f32.mrb[0].mxu0
        %6760 = vmatprep.mubr.bf16.mxu0 0
        %6761 = vmatmul.mubr.bf16.gmra.mrb[0].mxu0 %v4299
        %v6762 = vpop.f32.mrb[0].mxu0
        %v6763 = vadd.f32 0.0, %v6762
        %v6764 = vpop.f32.mrb[0].mxu0
        %v6765 = vpop.f32.mrb[0].mxu0
        %v6766 = vadd.f32 0.0, %v6765
        %v6767 = vpop.f32.mrb[0].mxu0
        %6768 = vmatprep.mubr.bf16.mxu0 0
        %6769 = vmatmul.mubr.bf16.gmra.mrb[0].mxu0 %v4300
        %v6770 = vpop.f32.mrb[0].mxu0
        %v6771 = vadd.f32 0.0, %v6770
        %v6772 = vpop.f32.mrb[0].mxu0
        %v6773 = vpop.f32.mrb[0].mxu0
        %v6774 = vadd.f32 0.0, %v6773
        %v6775 = vpop.f32.mrb[0].mxu0
        %6776 = vmatprep.mubr.bf16.mxu0 0
        %6777 = vmatmul.mubr.bf16.gmra.mrb[0].mxu0 %v4301
        %v6778 = vpop.f32.mrb[0].mxu0
        %v6779 = vadd.f32 0.0, %v6778
        %v6780 = vpop.f32.mrb[0].mxu0
        %v6781 = vpop.f32.mrb[0].mxu0
        %v6782 = vadd.f32 0.0, %v6781
        %v6783 = vpop.f32.mrb[0].mxu0
        %6784 = vmatprep.mubr.bf16.mxu0 0
        %6785 = vmatmul.mubr.bf16.gmra.mrb[0].mxu0 %v4302
        %v6786 = vpop.f32.mrb[0].mxu0
        %v6787 = vadd.f32 0.0, %v6786
        %v6788 = vpop.f32.mrb[0].mxu0
        %v6789 = vpop.f32.mrb[0].mxu0
        %v6790 = vadd.f32 0.0, %v6789
        %v6791 = vpop.f32.mrb[0].mxu0
        %6792 = vmatprep.mubr.bf16.mxu0 0
        %6793 = vmatmul.mubr.bf16.gmra.mrb[0].mxu0 %v4303
        %v6794 = vpop.f32.mrb[0].mxu0
        %v6795 = vadd.f32 0.0, %v6794
        %v6796 = vpop.f32.mrb[0].mxu0
        %v6797 = vpop.f32.mrb[0].mxu0
        %v6798 = vadd.f32 0.0, %v6797
        %v6799 = vpop.f32.mrb[0].mxu0
        %6800 = vmatprep.mubr.bf16.mxu0 0
        %6801 = vmatmul.mubr.bf16.gmra.mrb[0].mxu0 %v4304
        %v6802 = vpop.f32.mrb[0].mxu0
        %v6803 = vadd.f32 0.0, %v6802
        %v6804 = vpop.f32.mrb[0].mxu0
        %v6805 = vpop.f32.mrb[0].mxu0
        %v6806 = vadd.f32 0.0, %v6805
        %v6807 = vpop.f32.mrb[0].mxu0
        %6808 = vmatprep.mubr.bf16.mxu0 0
        %6809 = vmatmul.mubr.bf16.gmra.mrb[0].mxu0 %v4305
        %v6810 = vpop.f32.mrb[0].mxu0
        %v6811 = vadd.f32 0.0, %v6810
        %v6812 = vpop.f32.mrb[0].mxu0
        %v6813 = vpop.f32.mrb[0].mxu0
        %v6814 = vadd.f32 0.0, %v6813
        %v6815 = vpop.f32.mrb[0].mxu0
        %6816 = vdwg.mxu0
        %s6817 = scalar_lea.vmem %s9, 8
        %v6818 = vld [vmem:[%s6817] sm:$0x1]
        %v6819 = vpack.c.bf16 %v6758, %v6755
        %v6820 = vpack.c.bf16 %v6766, %v6763
        %v6821 = vpack.c.bf16 %v6774, %v6771
        %v6822 = vpack.c.bf16 %v6782, %v6779
        %v6823 = vpack.c.bf16 %v6790, %v6787
        %v6824 = vpack.c.bf16 %v6798, %v6795
        %v6825 = vpack.c.bf16 %v6806, %v6803
        %v6826 = vpack.c.bf16 %v6814, %v6811
        %v6828 = vsel %vm1061, %v6819, 0
        %v6831 = vsel %vm1061, %v6820, 0
        %v6834 = vsel %vm1061, %v6821, 0
        %v6837 = vsel %vm1061, %v6822, 0
        %v6840 = vsel %vm1061, %v6823, 0
        %v6843 = vsel %vm1061, %v6824, 0
        %v6846 = vsel %vm1061, %v6825, 0
        %v6849 = vsel %vm1061, %v6826, 0
        %v6852 = vsel %vm1074, %v6818, 0
        %6854 = vmatprep.subr.bf16.mxu0 0
        %6855 = vmatpush1.bf16.msra.mxu0 %v6852
        %6856 = vmatprep.subr.bf16.mxu0 0
        %6857 = vmatpush1.bf16.msra.mxu0 0
        %6858 = vmatprep.subr.bf16.mxu0 0
        %6859 = vmatpush1.bf16.msra.mxu0 0
        %6860 = vmatprep.subr.bf16.mxu0 0
        %6861 = vmatpush1.bf16.msra.mxu0 0
        %6862 = vmatprep.subr.bf16.mxu0 0
        %6863 = vmatpush1.bf16.msra.mxu0 0
        %6864 = vmatprep.subr.bf16.mxu0 0
        %6865 = vmatpush1.bf16.msra.mxu0 0
        %6866 = vmatprep.subr.bf16.mxu0 0
        %6867 = vmatpush1.bf16.msra.mxu0 0
        %6868 = vmatprep.subr.bf16.mxu0 0
        %6869 = vmatpush1.bf16.msra.mxu0 0
        %6870 = vmatprep.subr.bf16.mxu0 0
        %6871 = vmatpush1.bf16.msra.mxu0 0
        %6872 = vmatprep.subr.bf16.mxu0 0
        %6873 = vmatpush1.bf16.msra.mxu0 0
        %6874 = vmatprep.subr.bf16.mxu0 0
        %6875 = vmatpush1.bf16.msra.mxu0 0
        %6876 = vmatprep.subr.bf16.mxu0 0
        %6877 = vmatpush1.bf16.msra.mxu0 0
        %6878 = vmatprep.subr.bf16.mxu0 0
        %6879 = vmatpush1.bf16.msra.mxu0 0
        %6880 = vmatprep.subr.bf16.mxu0 0
        %6881 = vmatpush1.bf16.msra.mxu0 0
        %6882 = vmatprep.subr.bf16.mxu0 0
        %6883 = vmatpush1.bf16.msra.mxu0 0
        %6884 = vmatprep.subr.bf16.mxu0 0
        %6885 = vmatpush1.bf16.msra.mxu0 0
        %6886 = vmatprep.mubr.bf16.mxu0 0
        %6887 = vmatmul.mubr.bf16.gmra.mrb[0].mxu0 %v6828
        %v6888 = vpop.f32.mrb[0].mxu0
        %v6889 = vadd.f32 0.0, %v6888
        %v6890 = vpop.f32.mrb[0].mxu0
        %v6891 = vpop.f32.mrb[0].mxu0
        %v6892 = vadd.f32 0.0, %v6891
        %v6893 = vpop.f32.mrb[0].mxu0
        %6894 = vmatprep.mubr.bf16.mxu0 0
        %6895 = vmatmul.mubr.bf16.gmra.mrb[0].mxu0 %v6831
        %v6896 = vpop.f32.mrb[0].mxu0
        %v6897 = vadd.f32 0.0, %v6896
        %v6898 = vpop.f32.mrb[0].mxu0
        %v6899 = vpop.f32.mrb[0].mxu0
        %v6900 = vadd.f32 0.0, %v6899
        %v6901 = vpop.f32.mrb[0].mxu0
        %6902 = vmatprep.mubr.bf16.mxu0 0
        %6903 = vmatmul.mubr.bf16.gmra.mrb[0].mxu0 %v6834
        %v6904 = vpop.f32.mrb[0].mxu0
        %v6905 = vadd.f32 0.0, %v6904
        %v6906 = vpop.f32.mrb[0].mxu0
        %v6907 = vpop.f32.mrb[0].mxu0
        %v6908 = vadd.f32 0.0, %v6907
        %v6909 = vpop.f32.mrb[0].mxu0
        %6910 = vmatprep.mubr.bf16.mxu0 0
        %6911 = vmatmul.mubr.bf16.gmra.mrb[0].mxu0 %v6837
        %v6912 = vpop.f32.mrb[0].mxu0
        %v6913 = vadd.f32 0.0, %v6912
        %v6914 = vpop.f32.mrb[0].mxu0
        %v6915 = vpop.f32.mrb[0].mxu0
        %v6916 = vadd.f32 0.0, %v6915
        %v6917 = vpop.f32.mrb[0].mxu0
        %6918 = vmatprep.mubr.bf16.mxu0 0
        %6919 = vmatmul.mubr.bf16.gmra.mrb[0].mxu0 %v6840
        %v6920 = vpop.f32.mrb[0].mxu0
        %v6921 = vadd.f32 0.0, %v6920
        %v6922 = vpop.f32.mrb[0].mxu0
        %v6923 = vpop.f32.mrb[0].mxu0
        %v6924 = vadd.f32 0.0, %v6923
        %v6925 = vpop.f32.mrb[0].mxu0
        %6926 = vmatprep.mubr.bf16.mxu0 0
        %6927 = vmatmul.mubr.bf16.gmra.mrb[0].mxu0 %v6843
        %v6928 = vpop.f32.mrb[0].mxu0
        %v6929 = vadd.f32 0.0, %v6928
        %v6930 = vpop.f32.mrb[0].mxu0
        %v6931 = vpop.f32.mrb[0].mxu0
        %v6932 = vadd.f32 0.0, %v6931
        %v6933 = vpop.f32.mrb[0].mxu0
        %6934 = vmatprep.mubr.bf16.mxu0 0
        %6935 = vmatmul.mubr.bf16.gmra.mrb[0].mxu0 %v6846
        %v6936 = vpop.f32.mrb[0].mxu0
        %v6937 = vadd.f32 0.0, %v6936
        %v6938 = vpop.f32.mrb[0].mxu0
        %v6939 = vpop.f32.mrb[0].mxu0
        %v6940 = vadd.f32 0.0, %v6939
        %v6941 = vpop.f32.mrb[0].mxu0
        %6942 = vmatprep.mubr.bf16.mxu0 0
        %6943 = vmatmul.mubr.bf16.gmra.mrb[0].mxu0 %v6849
        %v6944 = vpop.f32.mrb[0].mxu0
        %v6945 = vadd.f32 0.0, %v6944
        %v6946 = vpop.f32.mrb[0].mxu0
        %v6947 = vpop.f32.mrb[0].mxu0
        %v6948 = vadd.f32 0.0, %v6947
        %v6949 = vpop.f32.mrb[0].mxu0
        %6950 = vdwg.mxu0
        %v6951 = vadd.f32 %v6704, %v6889
        %v6952 = vadd.f32 %v6705, %v6892
        %v6953 = vadd.f32 %v6706, %v6897
        %v6954 = vadd.f32 %v6707, %v6900
        %v6955 = vadd.f32 %v6708, %v6905
        %v6956 = vadd.f32 %v6709, %v6908
        %v6957 = vadd.f32 %v6710, %v6913
        %v6958 = vadd.f32 %v6711, %v6916
        %v6959 = vadd.f32 %v6712, %v6921
        %v6960 = vadd.f32 %v6713, %v6924
        %v6961 = vadd.f32 %v6714, %v6929
        %v6962 = vadd.f32 %v6715, %v6932
        %v6963 = vadd.f32 %v6716, %v6937
        %v6964 = vadd.f32 %v6717, %v6940
        %v6965 = vadd.f32 %v6718, %v6945
        %v6966 = vadd.f32 %v6719, %v6948
        %v6967 = vld [vmem:[%s10] sm:$0x1]
        %v6969 = vlaneseq
        %v6970 = vshrl.u32 %v6969, 7
        %v6971 = vsub.s32 0, %v6970
        %v6972 = vrot.slane %v6967, %v6971
        %v6974 = vadd.f32 %v6951, %v6972
        %v6975 = vadd.f32 %v6952, %v6972
        %v6976 = vadd.f32 %v6953, %v6972
        %v6977 = vadd.f32 %v6954, %v6972
        %v6978 = vadd.f32 %v6955, %v6972
        %v6979 = vadd.f32 %v6956, %v6972
        %v6980 = vadd.f32 %v6957, %v6972
        %v6981 = vadd.f32 %v6958, %v6972
        %v6982 = vadd.f32 %v6959, %v6972
        %v6983 = vadd.f32 %v6960, %v6972
        %v6984 = vadd.f32 %v6961, %v6972
        %v6985 = vadd.f32 %v6962, %v6972
        %v6986 = vadd.f32 %v6963, %v6972
        %v6987 = vadd.f32 %v6964, %v6972
        %v6988 = vadd.f32 %v6965, %v6972
        %v6989 = vadd.f32 %v6966, %v6972
        %v6990 = vmax.f32 %v6974, 0.0
        %v6991 = vmax.f32 %v6975, 0.0
        %v6992 = vmax.f32 %v6976, 0.0
        %v6993 = vmax.f32 %v6977, 0.0
        %v6994 = vmax.f32 %v6978, 0.0
        %v6995 = vmax.f32 %v6979, 0.0
        %v6996 = vmax.f32 %v6980, 0.0
        %v6997 = vmax.f32 %v6981, 0.0
        %v6998 = vmax.f32 %v6982, 0.0
        %v6999 = vmax.f32 %v6983, 0.0
        %v7000 = vmax.f32 %v6984, 0.0
        %v7001 = vmax.f32 %v6985, 0.0
        %v7002 = vmax.f32 %v6986, 0.0
        %v7003 = vmax.f32 %v6987, 0.0
        %v7004 = vmax.f32 %v6988, 0.0
        %v7005 = vmax.f32 %v6989, 0.0
        %v7006 = vld [vmem:[#allocation9] sm:$0x1]
        %v7008 = vlaneseq
        %v7009 = vshrl.u32 %v7008, 7
        %v7010 = vsub.s32 0, %v7009
        %v7011 = vrot.slane %v7006, %v7010
        %v7013 = vmul.f32 %v6990, %v7011
        %v7014 = vmul.f32 %v6991, %v7011
        %v7015 = vmul.f32 %v6992, %v7011
        %v7016 = vmul.f32 %v6993, %v7011
        %v7017 = vmul.f32 %v6994, %v7011
        %v7018 = vmul.f32 %v6995, %v7011
        %v7019 = vmul.f32 %v6996, %v7011
        %v7020 = vmul.f32 %v6997, %v7011
        %v7021 = vmul.f32 %v6998, %v7011
        %v7022 = vmul.f32 %v6999, %v7011
        %v7023 = vmul.f32 %v7000, %v7011
        %v7024 = vmul.f32 %v7001, %v7011
        %v7025 = vmul.f32 %v7002, %v7011
        %v7026 = vmul.f32 %v7003, %v7011
        %v7027 = vmul.f32 %v7004, %v7011
        %v7028 = vmul.f32 %v7005, %v7011
        %v7029 = vsel %vm4631, %v7013, 0.0
        %7030 = vadd.xlane.f32.xlu0 %v7029
        %v7031 = vpop.xlane.xlu0 %7030
        %v7032 = vsel %vm4631, %v7014, 0.0
        %7033 = vadd.xlane.f32.xlu0 %v7032
        %v7034 = vpop.xlane.xlu0 %7033
        %v7035 = vsel %vm4631, %v7015, 0.0
        %7036 = vadd.xlane.f32.xlu0 %v7035
        %v7037 = vpop.xlane.xlu0 %7036
        %v7038 = vsel %vm4631, %v7016, 0.0
        %7039 = vadd.xlane.f32.xlu0 %v7038
        %v7040 = vpop.xlane.xlu0 %7039
        %v7041 = vsel %vm4631, %v7017, 0.0
        %7042 = vadd.xlane.f32.xlu0 %v7041
        %v7043 = vpop.xlane.xlu0 %7042
        %v7044 = vsel %vm4631, %v7018, 0.0
        %7045 = vadd.xlane.f32.xlu0 %v7044
        %v7046 = vpop.xlane.xlu0 %7045
        %v7047 = vsel %vm4631, %v7019, 0.0
        %7048 = vadd.xlane.f32.xlu0 %v7047
        %v7049 = vpop.xlane.xlu0 %7048
        %v7050 = vsel %vm4631, %v7020, 0.0
        %7051 = vadd.xlane.f32.xlu0 %v7050
        %v7052 = vpop.xlane.xlu0 %7051
        %v7053 = vsel %vm4631, %v7021, 0.0
        %7054 = vadd.xlane.f32.xlu0 %v7053
        %v7055 = vpop.xlane.xlu0 %7054
        %v7056 = vsel %vm4631, %v7022, 0.0
        %7057 = vadd.xlane.f32.xlu0 %v7056
        %v7058 = vpop.xlane.xlu0 %7057
        %v7059 = vsel %vm4631, %v7023, 0.0
        %7060 = vadd.xlane.f32.xlu0 %v7059
        %v7061 = vpop.xlane.xlu0 %7060
        %v7062 = vsel %vm4631, %v7024, 0.0
        %7063 = vadd.xlane.f32.xlu0 %v7062
        %v7064 = vpop.xlane.xlu0 %7063
        %v7065 = vsel %vm4631, %v7025, 0.0
        %7066 = vadd.xlane.f32.xlu0 %v7065
        %v7067 = vpop.xlane.xlu0 %7066
        %v7068 = vsel %vm4631, %v7026, 0.0
        %7069 = vadd.xlane.f32.xlu0 %v7068
        %v7070 = vpop.xlane.xlu0 %7069
        %v7071 = vsel %vm4631, %v7027, 0.0
        %7072 = vadd.xlane.f32.xlu0 %v7071
        %v7073 = vpop.xlane.xlu0 %7072
        %v7074 = vsel %vm4631, %v7028, 0.0
        %7075 = vadd.xlane.f32.xlu0 %v7074
        %v7076 = vpop.xlane.xlu0 %7075
        %v7077 = vld [vmem:[#allocation2] sm:$0x1]
        %v7079 = vlaneseq
        %v7080 = vshrl.u32 %v7079, 7
        %v7081 = vsub.s32 0, %v7080
        %v7082 = vrot.slane %v7077, %v7081
        %v7084 = vadd.f32 %v7031, %v7082
        %v7085 = vadd.f32 %v7034, %v7082
        %v7086 = vadd.f32 %v7037, %v7082
        %v7087 = vadd.f32 %v7040, %v7082
        %v7088 = vadd.f32 %v7043, %v7082
        %v7089 = vadd.f32 %v7046, %v7082
        %v7090 = vadd.f32 %v7049, %v7082
        %v7091 = vadd.f32 %v7052, %v7082
        %v7092 = vadd.f32 %v7055, %v7082
        %v7093 = vadd.f32 %v7058, %v7082
        %v7094 = vadd.f32 %v7061, %v7082
        %v7095 = vadd.f32 %v7064, %v7082
        %v7096 = vadd.f32 %v7067, %v7082
        %v7097 = vadd.f32 %v7070, %v7082
        %v7098 = vadd.f32 %v7073, %v7082
        %v7099 = vadd.f32 %v7076, %v7082
        %v7100 = vmul.f32 %v7084, 0.5
        %v7101 = vmul.f32 %v7085, 0.5
        %v7102 = vmul.f32 %v7086, 0.5
        %v7103 = vmul.f32 %v7087, 0.5
        %v7104 = vmul.f32 %v7088, 0.5
        %v7105 = vmul.f32 %v7089, 0.5
        %v7106 = vmul.f32 %v7090, 0.5
        %v7107 = vmul.f32 %v7091, 0.5
        %v7108 = vmul.f32 %v7092, 0.5
        %v7109 = vmul.f32 %v7093, 0.5
        %v7110 = vmul.f32 %v7094, 0.5
        %v7111 = vmul.f32 %v7095, 0.5
        %v7112 = vmul.f32 %v7096, 0.5
        %v7113 = vmul.f32 %v7097, 0.5
        %v7114 = vmul.f32 %v7098, 0.5
        %v7115 = vmul.f32 %v7099, 0.5
        %v7116 = vtanh.pop %v7100
        %v7117 = vtanh.pop %v7101
        %v7118 = vtanh.pop %v7102
        %v7119 = vtanh.pop %v7103
        %v7120 = vtanh.pop %v7104
        %v7121 = vtanh.pop %v7105
        %v7122 = vtanh.pop %v7106
        %v7123 = vtanh.pop %v7107
        %v7124 = vtanh.pop %v7108
        %v7125 = vtanh.pop %v7109
        %v7126 = vtanh.pop %v7110
        %v7127 = vtanh.pop %v7111
        %v7128 = vtanh.pop %v7112
        %v7129 = vtanh.pop %v7113
        %v7130 = vtanh.pop %v7114
        %v7131 = vtanh.pop %v7115
        %v7132 = vadd.f32 %v7116, 1.0
        %v7133 = vadd.f32 %v7117, 1.0
        %v7134 = vadd.f32 %v7118, 1.0
        %v7135 = vadd.f32 %v7119, 1.0
        %v7136 = vadd.f32 %v7120, 1.0
        %v7137 = vadd.f32 %v7121, 1.0
        %v7138 = vadd.f32 %v7122, 1.0
        %v7139 = vadd.f32 %v7123, 1.0
        %v7140 = vadd.f32 %v7124, 1.0
        %v7141 = vadd.f32 %v7125, 1.0
        %v7142 = vadd.f32 %v7126, 1.0
        %v7143 = vadd.f32 %v7127, 1.0
        %v7144 = vadd.f32 %v7128, 1.0
        %v7145 = vadd.f32 %v7129, 1.0
        %v7146 = vadd.f32 %v7130, 1.0
        %v7147 = vadd.f32 %v7131, 1.0
        %v7148 = vmul.f32 %v7132, 0.5
        %v7149 = vmul.f32 %v7133, 0.5
        %v7150 = vmul.f32 %v7134, 0.5
        %v7151 = vmul.f32 %v7135, 0.5
        %v7152 = vmul.f32 %v7136, 0.5
        %v7153 = vmul.f32 %v7137, 0.5
        %v7154 = vmul.f32 %v7138, 0.5
        %v7155 = vmul.f32 %v7139, 0.5
        %v7156 = vmul.f32 %v7140, 0.5
        %v7157 = vmul.f32 %v7141, 0.5
        %v7158 = vmul.f32 %v7142, 0.5
        %v7159 = vmul.f32 %v7143, 0.5
        %v7160 = vmul.f32 %v7144, 0.5
        %v7161 = vmul.f32 %v7145, 0.5
        %v7162 = vmul.f32 %v7146, 0.5
        %v7163 = vmul.f32 %v7147, 0.5
        %v7164 = vld [vmem:[%s19] sm:$0xff]
        %v7165 = vld [vmem:[%s19 + $0x8] sm:$0xff]
        %v7166 = vld [vmem:[%s19 + $0x10] sm:$0xff]
        %v7167 = vld [vmem:[%s19 + $0x18] sm:$0xff]
        %v7168 = vld [vmem:[%s19 + $0x20] sm:$0xff]
        %v7169 = vld [vmem:[%s19 + $0x28] sm:$0xff]
        %v7170 = vld [vmem:[%s19 + $0x30] sm:$0xff]
        %v7171 = vld [vmem:[%s19 + $0x38] sm:$0xff]
        %v7172 = vld [vmem:[%s19 + $0x40] sm:$0xff]
        %v7173 = vld [vmem:[%s19 + $0x48] sm:$0xff]
        %v7174 = vld [vmem:[%s19 + $0x50] sm:$0xff]
        %v7175 = vld [vmem:[%s19 + $0x58] sm:$0xff]
        %v7176 = vld [vmem:[%s19 + $0x60] sm:$0xff]
        %v7177 = vld [vmem:[%s19 + $0x68] sm:$0xff]
        %v7178 = vld [vmem:[%s19 + $0x70] sm:$0xff]
        %v7179 = vld [vmem:[%s19 + $0x78] sm:$0xff]
        %7181 = vset.pattern.permute.xlu0 0
        %7182 = vperm.xlu0 %7181, %v7148
        %v7183 = vpop.permute.xlu0 %7182
        %7186 = vset.pattern.permute.xlu0 0
        %7187 = vperm.xlu0 %7186, %v7149
        %v7188 = vpop.permute.xlu0 %7187
        %7191 = vset.pattern.permute.xlu0 0
        %7192 = vperm.xlu0 %7191, %v7150
        %v7193 = vpop.permute.xlu0 %7192
        %7196 = vset.pattern.permute.xlu0 0
        %7197 = vperm.xlu0 %7196, %v7151
        %v7198 = vpop.permute.xlu0 %7197
        %7201 = vset.pattern.permute.xlu0 0
        %7202 = vperm.xlu0 %7201, %v7152
        %v7203 = vpop.permute.xlu0 %7202
        %7206 = vset.pattern.permute.xlu0 0
        %7207 = vperm.xlu0 %7206, %v7153
        %v7208 = vpop.permute.xlu0 %7207
        %7211 = vset.pattern.permute.xlu0 0
        %7212 = vperm.xlu0 %7211, %v7154
        %v7213 = vpop.permute.xlu0 %7212
        %7216 = vset.pattern.permute.xlu0 0
        %7217 = vperm.xlu0 %7216, %v7155
        %v7218 = vpop.permute.xlu0 %7217
        %7221 = vset.pattern.permute.xlu0 0
        %7222 = vperm.xlu0 %7221, %v7156
        %v7223 = vpop.permute.xlu0 %7222
        %7226 = vset.pattern.permute.xlu0 0
        %7227 = vperm.xlu0 %7226, %v7157
        %v7228 = vpop.permute.xlu0 %7227
        %7231 = vset.pattern.permute.xlu0 0
        %7232 = vperm.xlu0 %7231, %v7158
        %v7233 = vpop.permute.xlu0 %7232
        %7236 = vset.pattern.permute.xlu0 0
        %7237 = vperm.xlu0 %7236, %v7159
        %v7238 = vpop.permute.xlu0 %7237
        %7241 = vset.pattern.permute.xlu0 0
        %7242 = vperm.xlu0 %7241, %v7160
        %v7243 = vpop.permute.xlu0 %7242
        %7246 = vset.pattern.permute.xlu0 0
        %7247 = vperm.xlu0 %7246, %v7161
        %v7248 = vpop.permute.xlu0 %7247
        %7251 = vset.pattern.permute.xlu0 0
        %7252 = vperm.xlu0 %7251, %v7162
        %v7253 = vpop.permute.xlu0 %7252
        %7256 = vset.pattern.permute.xlu0 0
        %7257 = vperm.xlu0 %7256, %v7163
        %v7258 = vpop.permute.xlu0 %7257
        %v7260 = vmul.f32 %v7183, %v7164
        %v7261 = vmul.f32 %v7188, %v7165
        %v7262 = vmul.f32 %v7193, %v7166
        %v7263 = vmul.f32 %v7198, %v7167
        %v7264 = vmul.f32 %v7203, %v7168
        %v7265 = vmul.f32 %v7208, %v7169
        %v7266 = vmul.f32 %v7213, %v7170
        %v7267 = vmul.f32 %v7218, %v7171
        %v7268 = vmul.f32 %v7223, %v7172
        %v7269 = vmul.f32 %v7228, %v7173
        %v7270 = vmul.f32 %v7233, %v7174
        %v7271 = vmul.f32 %v7238, %v7175
        %v7272 = vmul.f32 %v7243, %v7176
        %v7273 = vmul.f32 %v7248, %v7177
        %v7274 = vmul.f32 %v7253, %v7178
        %v7275 = vmul.f32 %v7258, %v7179
        %v7276 = vld [vmem:[#allocation12] sm:$0xff]
        %7277 = vmatprep.subr.mxu0 0.0
        %7278 = vmatpush1.msra.mxu0 %v7260
        %7279 = vmatprep.subr.mxu0 0.0
        %7280 = vmatpush1.msra.mxu0 %v7261
        %7281 = vmatprep.subr.mxu0 0.0
        %7282 = vmatpush1.msra.mxu0 %v7262
        %7283 = vmatprep.subr.mxu0 0.0
        %7284 = vmatpush1.msra.mxu0 %v7263
        %7285 = vmatprep.subr.mxu0 0.0
        %7286 = vmatpush1.msra.mxu0 %v7264
        %7287 = vmatprep.subr.mxu0 0.0
        %7288 = vmatpush1.msra.mxu0 %v7265
        %7289 = vmatprep.subr.mxu0 0.0
        %7290 = vmatpush1.msra.mxu0 %v7266
        %7291 = vmatprep.subr.mxu0 0.0
        %7292 = vmatpush1.msra.mxu0 %v7267
        %7293 = vmatprep.subr.mxu0 0.0
        %7294 = vmatpush1.msra.mxu0 %v7268
        %7295 = vmatprep.subr.mxu0 0.0
        %7296 = vmatpush1.msra.mxu0 %v7269
        %7297 = vmatprep.subr.mxu0 0.0
        %7298 = vmatpush1.msra.mxu0 %v7270
        %7299 = vmatprep.subr.mxu0 0.0
        %7300 = vmatpush1.msra.mxu0 %v7271
        %7301 = vmatprep.subr.mxu0 0.0
        %7302 = vmatpush1.msra.mxu0 %v7272
        %7303 = vmatprep.subr.mxu0 0.0
        %7304 = vmatpush1.msra.mxu0 %v7273
        %7305 = vmatprep.subr.mxu0 0.0
        %7306 = vmatpush1.msra.mxu0 %v7274
        %7307 = vmatprep.subr.mxu0 0.0
        %7308 = vmatpush1.msra.mxu0 %v7275
        %7309 = vmatprep.subr.mxu0 0.0
        %7310 = vmatpush1.msra.mxu0 0.0
        %7311 = vmatprep.subr.mxu0 0.0
        %7312 = vmatpush1.msra.mxu0 0.0
        %7313 = vmatprep.subr.mxu0 0.0
        %7314 = vmatpush1.msra.mxu0 0.0
        %7315 = vmatprep.subr.mxu0 0.0
        %7316 = vmatpush1.msra.mxu0 0.0
        %7317 = vmatprep.subr.mxu0 0.0
        %7318 = vmatpush1.msra.mxu0 0.0
        %7319 = vmatprep.subr.mxu0 0.0
        %7320 = vmatpush1.msra.mxu0 0.0
        %7321 = vmatprep.subr.mxu0 0.0
        %7322 = vmatpush1.msra.mxu0 0.0
        %7323 = vmatprep.subr.mxu0 0.0
        %7324 = vmatpush1.msra.mxu0 0.0
        %7325 = vmatprep.subr.mxu0 0.0
        %7326 = vmatpush1.msra.mxu0 0.0
        %7327 = vmatprep.subr.mxu0 0.0
        %7328 = vmatpush1.msra.mxu0 0.0
        %7329 = vmatprep.subr.mxu0 0.0
        %7330 = vmatpush1.msra.mxu0 0.0
        %7331 = vmatprep.subr.mxu0 0.0
        %7332 = vmatpush1.msra.mxu0 0.0
        %7333 = vmatprep.subr.mxu0 0.0
        %7334 = vmatpush1.msra.mxu0 0.0
        %7335 = vmatprep.subr.mxu0 0.0
        %7336 = vmatpush1.msra.mxu0 0.0
        %7337 = vmatprep.subr.mxu0 0.0
        %7338 = vmatpush1.msra.mxu0 0.0
        %7339 = vmatprep.subr.mxu0 0.0
        %7340 = vmatpush1.msra.mxu0 0.0
        %7341 = vmatprep.mubr.f32.mxu0 0.0
        %7342 = vmatmul.mubr.f32.gmra.mrb[0].mxu0 %v7276
        %v7343 = vpop.f32.mrb[0].mxu0
        %v7344 = vadd.f32 0.0, %v7343
        %v7345 = vpop.f32.mrb[0].mxu0
        %7346 = vdwg.mxu0
        %vm7347 = vcmask 113664
        %7348 = vst.msk [vmem:[%s702] sm:$0xff] %vm7347, %v7344
        %s7349 = sand.u32 %s473, 1
        %s7350 = scalar_lea.sflag [#allocation5], %s7349
        %s7351 = sand.u32 %s473, 1
        %s7352 = smul.addr %s7351, 8
        %s7353 = scalar_lea.vmem [#allocation14], %s7352
        // Predicated region
        $region125: #{l2_reflect_head_forward.1} parent=99 // pred_check
          %p7354 = pneg %p483
        $region126: #{l2_reflect_head_forward.1} parent=99 // pred_check_branch
          %7356 = sbr.rel (%p7354) target = $region128
        $region127: #{l2_reflect_head_forward.1} parent=99 // pred_region
          %s7358 = ssub.s32 128, 128
          %7359 = vsyncadd %s7350, %s7358
          %s7360 = smul.addr %s40, 128
          %s7361 = scalar_lea.hbm %s20, %s7360
          %s7363 = sshll.u32 %s7353, 4
          %s7364 = int_to_ptr.vmem [resolvable:$true] %s7363
          %7366 = dma.vmem_to_hbm [thread:$0]  %s7364, 128, %s7361, %s7350
        $region128: #{l2_reflect_head_forward.1} parent=99 // pred_fallthru
          _
      $region100: #{l2_reflect_head_forward.1} parent=5 // pred_fallthru
        _
      %p7367 = scmp.le.s32.totalorder 2, %s35
      // Predicated region
      $region129: #{l2_reflect_head_forward.1} parent=5 // pred_check
        %p7368 = pneg %p7367
      $region130: #{l2_reflect_head_forward.1} parent=5 // pred_check_branch
        %7370 = sbr.rel (%p7368) target = $region132
      $region131: #{l2_reflect_head_forward.1} parent=5 // pred_region
        %s7371 = ssub.s32 %s35, 2
        // Predicated region
        $region133: #{l2_reflect_head_forward.1} parent=131 // pred_check
          %p7372 = pneg %p489
        $region134: #{l2_reflect_head_forward.1} parent=131 // pred_check_branch
          %7374 = sbr.rel (%p7372) target = $region136
        $region135: #{l2_reflect_head_forward.1} parent=131 // pred_region
          %s7375 = sand.u32 %s474, 1
          %s7376 = scalar_lea.sflag [#allocation5], %s7375
          %s7377 = sand.u32 %s474, 1
          %s7378 = smul.addr %s7377, 8
          %s7379 = scalar_lea.vmem [#allocation14], %s7378
          %7380 = dma.done %s7376, 128
        $region136: #{l2_reflect_head_forward.1} parent=131 // pred_fallthru
          _
      $region132: #{l2_reflect_head_forward.1} parent=5 // pred_fallthru
        _
    $region6: #{l2_reflect_head_forward.1} parent=1 // loop_footer
      %s39 = sadd.s32 1, %s35
    $region7: #{l2_reflect_head_forward.1} parent=1 // loop_footer_branch
      %34 = sbr.rel target = $region3
    $region8: #{l2_reflect_head_forward.1} parent=1 // loop_exit
      _
    %7381 = vsyncpa [#allocation4], 1
    %s7382 = scalar_lea.sflag [#allocation4], 1
    %7383 = vsyncpa %s7382, 1
    %7384 = vsyncpa [#allocation7], 1
    %7385 = vsyncpa [#allocation10], 1
    %7386 = vsyncpa [#allocation13], 1
    %7387 = vsyncpa [#allocation5], 1
    %s7388 = scalar_lea.sflag [#allocation5], 1
    %7389 = vsyncpa %s7388, 1

</llo_original>
